<compile_context>
chip_gen: v6e
topology: v6e:2x2x1
jax: 0.10.0
libtpu: 0.0.40
codegen_flags: <defaults>
</compile_context>

<pallas_src>
import functools
import numpy as np
import jax
import jax.numpy as jnp
from jax import lax
from jax.experimental import pallas as pl
from jax.experimental.pallas import tpu as pltpu

BN_EPS = 1e-5  # torch BatchNorm3d default
_VMEM = pl.BlockSpec(memory_space=pltpu.MemorySpace.VMEM)


# ---------------------------------------------------------------------------
# Host-side (numpy) constant builders: gather matrices & interpolation weights
# ---------------------------------------------------------------------------
def _flat(idx, dims):
    f = 0
    for i, d in zip(idx, dims):
        f = f * d + i
    return f


def _pool_selector(in_dims, axis, k, stride, pad):
    """Stacked gather matrix for a 1-D max-pool along `axis` of the row-major
    flattened in_dims space.  Tap j occupies rows [j*n_out, (j+1)*n_out).
    Out-of-bounds taps are all-zero rows (exact for post-ReLU data, since every
    window contains at least one valid element)."""
    in_size = in_dims[axis]
    out_size = (in_size + 2 * pad - k) // stride + 1
    out_dims = tuple(out_size if a == axis else s for a, s in enumerate(in_dims))
    n_in = int(np.prod(in_dims))
    n_out = int(np.prod(out_dims))
    sel = np.zeros((k * n_out, n_in), np.float32)
    for out_idx in np.ndindex(*out_dims):
        o = _flat(out_idx, out_dims)
        for j in range(k):
            src = out_idx[axis] * stride - pad + j
            if 0 <= src < in_size:
                src_idx = tuple(src if a == axis else v for a, v in enumerate(out_idx))
                sel[j * n_out + o, _flat(src_idx, in_dims)] = 1.0
    return sel, out_dims


def _conv_tap_selector(batch, size, k, pad):
    """Stacked per-tap shift matrices for a stride-1 'same' 3-D conv on a
    (batch, size, size, size) row-major flattened space.  Tap t=(kd*k+kh)*k+kw
    occupies rows [t*n, (t+1)*n); OOB sources are zero rows (== zero padding)."""
    n = batch * size ** 3
    sel = np.zeros((k ** 3 * n, n), np.float32)
    for b in range(batch):
        for od in range(size):
            for oh in range(size):
                for ow in range(size):
                    o = ((b * size + od) * size + oh) * size + ow
                    for kd in range(k):
                        for kh in range(k):
                            for kw in range(k):
                                t = (kd * k + kh) * k + kw
                                sd = od + kd - pad
                                sh = oh + kh - pad
                                sw = ow + kw - pad
                                if 0 <= sd < size and 0 <= sh < size and 0 <= sw < size:
                                    s = ((b * size + sd) * size + sh) * size + sw
                                    sel[t * n + o, s] = 1.0
    return sel


@functools.lru_cache(maxsize=None)
def _encoder_selectors(batch):
    dims = (batch, 6, 6, 6)
    sel_w, dims = _pool_selector(dims, 3, 3, 2, 1)   # MaxPool1 along W: 6 -> 3
    sel_h, dims = _pool_selector(dims, 2, 3, 2, 1)   # MaxPool1 along H: 6 -> 3
    sel_d, dims = _pool_selector(dims, 1, 3, 2, 1)   # MaxPool1 along D: 6 -> 3
    assert dims == (batch, 3, 3, 3)
    sel_c2 = _conv_tap_selector(batch, 3, 3, 1)      # conv2 tap gather (27 taps)
    return sel_w, sel_h, sel_d, sel_c2


def _linear_interp_matrix(in_size, out_size):
    """PyTorch Upsample(mode='trilinear', align_corners=False) 1-D weights."""
    m = np.zeros((out_size, in_size), np.float32)
    if in_size == 1:
        m[:, 0] = 1.0
        return m
    scale = in_size / out_size
    for i in range(out_size):
        src = max((i + 0.5) * scale - 0.5, 0.0)
        x0 = min(int(np.floor(src)), in_size - 1)
        x1 = min(x0 + 1, in_size - 1)
        w = src - x0
        m[i, x0] += 1.0 - w
        m[i, x1] += w
    return m


def _trilinear_matrix(in_size, out_size):
    m = _linear_interp_matrix(in_size, out_size)
    return np.kron(np.kron(m, m), m)  # (out^3, in^3)


# ---------------------------------------------------------------------------
# The fused Pallas kernel (whole forward pass, everything VMEM-resident)
# ---------------------------------------------------------------------------
def _vae_kernel(p1_ref, w1_ref, b1_ref, g1_ref, be1_ref,
                selw_ref, selh_ref, seld_ref, selc2_ref,
                w2_ref, b2_ref, g2_ref, be2_ref,
                wh_ref, bh_ref, eps_ref,
                wlin_ref, blin_ref, wdec_ref, bdec_ref,
                y_ref, zm_ref, zs_ref, *, batch):
    f32 = jnp.float32

    def bn_train(y, gamma, beta):
        # training-mode BatchNorm: biased batch statistics over all rows (N*D*H*W)
        mean = jnp.mean(y, axis=0, keepdims=True)
        var = jnp.mean((y - mean) ** 2, axis=0, keepdims=True)
        return (y - mean) * lax.rsqrt(var + BN_EPS) * gamma + beta

    # ---- conv1 (1->16, k3, p1) as im2col GEMM + BN + ReLU ---------------- #
    a = jnp.dot(p1_ref[...], w1_ref[...], preferred_element_type=f32) + b1_ref[...]
    a = jnp.maximum(bn_train(a, g1_ref[...], be1_ref[...]), 0.0)        # (B*216, 16)

    # ---- MaxPool3d(3, stride=2, padding=1): separable W -> H -> D pools -- #
    for sel_ref in (selw_ref, selh_ref, seld_ref):
        g = jnp.dot(sel_ref[...], a, preferred_element_type=f32)        # (3*n, 16)
        n = g.shape[0] // 3
        a = jnp.maximum(jnp.maximum(g[0:n, :], g[n:2 * n, :]), g[2 * n:3 * n, :])
    # a: (B*27, 16)

    # ---- conv2 (16->32, k3, p1): gathered taps x per-tap weights + BN + ReLU
    rows = batch * 27
    p2 = jnp.dot(selc2_ref[...], a, preferred_element_type=f32)         # (27*B*27, 16)
    a2 = jnp.zeros((rows, 32), f32) + b2_ref[...]
    for t in range(27):
        a2 = a2 + jnp.dot(p2[t * rows:(t + 1) * rows, :], w2_ref[t],
                          preferred_element_type=f32)
    a2 = jnp.maximum(bn_train(a2, g2_ref[...], be2_ref[...]), 0.0)      # (B*27, 32)

    # ---- MaxPool3d(3, stride=3): window covers the whole 3^3 volume ------ #
    zf = jnp.concatenate(
        [jnp.max(a2[b * 27:(b + 1) * 27, :], axis=0, keepdims=True) for b in range(batch)],
        axis=0)                                                         # (B, 32)

    # ---- VAE heads (fused into one GEMM) + reparameterisation ------------ #
    heads = jnp.dot(zf, wh_ref[...], preferred_element_type=f32) + bh_ref[...]   # (B, 64)
    z_mean = heads[:, 0:32]
    z_log_sigma = heads[:, 32:64]
    z = z_mean + jnp.exp(z_log_sigma) * eps_ref[...]

    # ---- decoder: Linear + ReLU, then the folded lane-dense linear tail -- #
    h = jnp.maximum(jnp.dot(z, wlin_ref[...], preferred_element_type=f32)
                    + blin_ref[...], 0.0)
    y = jnp.dot(h, wdec_ref[...], preferred_element_type=f32) + bdec_ref[...]    # (B, 128)

    y_ref[...] = y            # lane-dense (128-wide) unmasked store
    zm_ref[...] = z_mean
    zs_ref[...] = z_log_sigma


# ---------------------------------------------------------------------------
# Wrapper: preamble (conv1 im2col, weight re-layout, decoder fold) + pallas_call
# ---------------------------------------------------------------------------
def vae_forward(x_ncdhw, params):
    """Forward pass; returns (y, z_mean, z_log_sigma) like the torch VAE."""
    B, C, D, H, W = x_ncdhw.shape
    assert (C, D, H, W) == (1, 6, 6, 6), "spatial size 6 => encoder bottleneck is (B,32,1,1,1)"
    x = x_ncdhw.reshape(B, D, H, W).astype(jnp.float32)

    # conv1 im2col (the only XLA preamble: 27 shifted slabs of a ~4 KiB tensor)
    xp = jnp.pad(x, ((0, 0), (1, 1), (1, 1), (1, 1)))
    slabs = [xp[:, kd:kd + 6, kh:kh + 6, kw:kw + 6]
             for kd in range(3) for kh in range(3) for kw in range(3)]
    p1 = jnp.stack(slabs, axis=-1).reshape(B * 216, 27)

    sel_w, sel_h, sel_d, sel_c2 = (jnp.asarray(s) for s in _encoder_selectors(B))

    # torch conv weights -> GEMM layouts (tap-major, Cin, Cout)
    w1 = jnp.transpose(params['conv1_w'], (2, 3, 4, 1, 0)).reshape(27, 16)
    w2 = jnp.transpose(params['conv2_w'], (2, 3, 4, 1, 0)).reshape(27, 16, 32)

    # fused VAE heads: z_mean and z_log_sigma share one (32, 64) GEMM
    wh = jnp.concatenate([params['zm_w'].T, params['zs_w'].T], axis=1).astype(jnp.float32)
    bh = jnp.concatenate([params['zm_b'], params['zs_b']]).astype(jnp.float32)

    # decoder tail fold: 1x1x1 conv (32->16) -> trilinear 1->3 (exact replication)
    # -> 1x1x1 conv (16->1) -> trilinear 3->5.  All linear => one GEMM; padded to
    # 128 columns for a lane-dense output store (sliced back to 125 below).
    w2m = params['up2_w'].reshape(16, 32).T                       # (32, 16)
    w1m = params['up1_w'].reshape(1, 16).T                        # (16, 1)
    rs = jnp.asarray(_trilinear_matrix(3, 5).sum(axis=1))         # (125,), rows sum to 1
    wdec = (w2m @ w1m) * rs[None, :]                              # (32, 125)
    bdec = ((params['up2_b'] @ w1m)[0] + params['up1_b'][0]) * rs  # (125,)
    wdec = jnp.pad(wdec, ((0, 0), (0, 3)))                        # (32, 128)
    bdec = jnp.pad(bdec, (0, 3))                                  # (128,)

    row = lambda v: jnp.asarray(v, jnp.float32).reshape(1, -1)

    operands = (
        p1, w1, row(params['conv1_b']), row(params['bn1_g']), row(params['bn1_b']),
        sel_w, sel_h, sel_d, sel_c2, w2,
        row(params['conv2_b']), row(params['bn2_g']), row(params['bn2_b']),
        wh, row(bh),
        row(params['epsilon']),
        params['lin_w'].T.astype(jnp.float32), row(params['lin_b']),
        wdec.astype(jnp.float32), row(bdec),
    )

    y_pad, z_mean, z_log_sigma = pl.pallas_call(
        functools.partial(_vae_kernel, batch=B),
        out_shape=(jax.ShapeDtypeStruct((B, 128), jnp.float32),
                   jax.ShapeDtypeStruct((B, 32), jnp.float32),
                   jax.ShapeDtypeStruct((B, 32), jnp.float32)),
        in_specs=[_VMEM] * len(operands),
        out_specs=(_VMEM, _VMEM, _VMEM),
        compiler_params=pltpu.CompilerParams(vmem_limit_bytes=32 * 1024 * 1024),
    )(*operands)

    return y_pad[:, :125].reshape(B, 1, 5, 5, 5), z_mean, z_log_sigma


# ---------------------------------------------------------------------------
# Pure-JAX reference (lax.conv / reduce_window / explicit interpolation)
# ---------------------------------------------------------------------------
def vae_reference(x_ncdhw, params):
    B = x_ncdhw.shape[0]
    hi = lax.Precision.HIGHEST

    def conv_bn_relu(h, w, b, g, beta):
        y = lax.conv_general_dilated(
            h, w, window_strides=(1, 1, 1), padding=[(1, 1)] * 3,
            dimension_numbers=('NCDHW', 'OIDHW', 'NCDHW'), precision=hi)
        y = y + b.reshape(1, -1, 1, 1, 1)
        mean = jnp.mean(y, axis=(0, 2, 3, 4), keepdims=True)
        var = jnp.mean((y - mean) ** 2, axis=(0, 2, 3, 4), keepdims=True)
        y = (y - mean) * lax.rsqrt(var + BN_EPS) * g.reshape(1, -1, 1, 1, 1) \
            + beta.reshape(1, -1, 1, 1, 1)
        return jnp.maximum(y, 0.0)

    h = conv_bn_relu(x_ncdhw.astype(jnp.float32), params['conv1_w'], params['conv1_b'],
                     params['bn1_g'], params['bn1_b'])
    h = lax.reduce_window(h, -jnp.inf, lax.max, (1, 1, 3, 3, 3), (1, 1, 2, 2, 2),
                          [(0, 0), (0, 0), (1, 1), (1, 1), (1, 1)])
    h = conv_bn_relu(h, params['conv2_w'], params['conv2_b'],
                     params['bn2_g'], params['bn2_b'])
    h = lax.reduce_window(h, -jnp.inf, lax.max, (1, 1, 3, 3, 3), (1, 1, 3, 3, 3),
                          [(0, 0)] * 5)
    zf = h.reshape(B, 32)
    z_mean = jnp.dot(zf, params['zm_w'].T, precision=hi) + params['zm_b']
    z_log_sigma = jnp.dot(zf, params['zs_w'].T, precision=hi) + params['zs_b']
    z = z_mean + jnp.exp(z_log_sigma) * params['epsilon']

    hd = jnp.maximum(jnp.dot(z, params['lin_w'].T, precision=hi) + params['lin_b'], 0.0)
    v = jnp.dot(hd, params['up2_w'].reshape(16, 32).T, precision=hi) + params['up2_b']
    u13 = jnp.asarray(_trilinear_matrix(1, 3))                               # (27, 1)
    vol3 = jnp.einsum('pq,bqc->bpc', u13, v[:, None, :], precision=hi)       # (B, 27, 16)
    y3 = jnp.einsum('bpc,co->bpo', vol3, params['up1_w'].reshape(1, 16).T,
                    precision=hi) + params['up1_b']                          # (B, 27, 1)
    u35 = jnp.asarray(_trilinear_matrix(3, 5))                               # (125, 27)
    y5 = jnp.einsum('op,bp->bo', u35, y3[..., 0], precision=hi)              # (B, 125)
    return y5.reshape(B, 1, 5, 5, 5), z_mean, z_log_sigma


# ---------------------------------------------------------------------------
# Parameter init (mimics the torch module's uniform re-init; values arbitrary)
# ---------------------------------------------------------------------------
def init_params(key):
    ks = jax.random.split(key, 19)

    def u(k, shape, fan):
        bound = 1.0 / np.sqrt(fan)
        return jax.random.uniform(k, shape, jnp.float32, -bound, bound)

    return {
        'conv1_w': u(ks[0], (16, 1, 3, 3, 3), 16), 'conv1_b': u(ks[1], (16,), 16),
        'bn1_g': u(ks[2], (16,), 16), 'bn1_b': u(ks[3], (16,), 16),
        'conv2_w': u(ks[4], (32, 16, 3, 3, 3), 32), 'conv2_b': u(ks[5], (32,), 32),
        'bn2_g': u(ks[6], (32,), 32), 'bn2_b': u(ks[7], (32,), 32),
        'zm_w': u(ks[8], (32, 32), 32), 'zm_b': u(ks[9], (32,), 32),
        'zs_w': u(ks[10], (32, 32), 32), 'zs_b': u(ks[11], (32,), 32),
        'epsilon': jax.random.normal(ks[12], (1, 32), jnp.float32),  # fixed buffer
        'lin_w': u(ks[13], (32, 32), 32), 'lin_b': u(ks[14], (32,), 32),
        'up2_w': u(ks[15], (16, 32, 1, 1, 1), 16), 'up2_b': u(ks[16], (16,), 16),
        'up1_w': u(ks[17], (1, 16, 1, 1, 1), 1), 'up1_b': u(ks[18], (1,), 1),
    }


if __name__ == "__main__":
    key = jax.random.PRNGKey(0)
    k_param, k_data = jax.random.split(key)
    params = init_params(k_param)

    # (B=2, C=1, D=H=W=6): spatial 6 makes the flattened encoder output exactly 32
    x = jax.random.uniform(k_data, (2, 1, 6, 6, 6), jnp.float32)

    fwd = jax.jit(vae_forward)
    y, z_mean, z_log_sigma = jax.block_until_ready(fwd(x, params))

    assert y.shape == (2, 1, 5, 5, 5), y.shape
    assert z_mean.shape == (2, 32) and z_log_sigma.shape == (2, 32)
    assert bool(jnp.all(jnp.isfinite(y)))

    # numerical check against a pure-JAX reference of the same module
    y_ref, zm_ref, zs_ref = jax.jit(vae_reference)(x, params)
    np.testing.assert_allclose(np.asarray(z_mean), np.asarray(zm_ref), rtol=2e-2, atol=2e-2)
    np.testing.assert_allclose(np.asarray(z_log_sigma), np.asarray(zs_ref), rtol=2e-2, atol=2e-2)
    np.testing.assert_allclose(np.asarray(y), np.asarray(y_ref), rtol=2e-2, atol=2e-2)

    # TODO(synk): BatchNorm running-stat updates (training-mode side effect) are
    # not modeled; they do not affect the forward output.
    print("KERNEL_OK")
</pallas_src>

<mosaic_0001>
module attributes {stable_mosaic.version = 11 : i64} {
  func.func @_vae_kernel(%arg0: memref<432x27xf32, #tpu.memory_space<vmem>>, %arg1: memref<27x16xf32, #tpu.memory_space<vmem>>, %arg2: memref<1x16xf32, #tpu.memory_space<vmem>>, %arg3: memref<1x16xf32, #tpu.memory_space<vmem>>, %arg4: memref<1x16xf32, #tpu.memory_space<vmem>>, %arg5: memref<648x432xf32, #tpu.memory_space<vmem>>, %arg6: memref<324x216xf32, #tpu.memory_space<vmem>>, %arg7: memref<162x108xf32, #tpu.memory_space<vmem>>, %arg8: memref<1458x54xf32, #tpu.memory_space<vmem>>, %arg9: memref<27x16x32xf32, #tpu.memory_space<vmem>>, %arg10: memref<1x32xf32, #tpu.memory_space<vmem>>, %arg11: memref<1x32xf32, #tpu.memory_space<vmem>>, %arg12: memref<1x32xf32, #tpu.memory_space<vmem>>, %arg13: memref<32x64xf32, #tpu.memory_space<vmem>>, %arg14: memref<1x64xf32, #tpu.memory_space<vmem>>, %arg15: memref<1x32xf32, #tpu.memory_space<vmem>>, %arg16: memref<32x32xf32, #tpu.memory_space<vmem>>, %arg17: memref<1x32xf32, #tpu.memory_space<vmem>>, %arg18: memref<32x128xf32, #tpu.memory_space<vmem>>, %arg19: memref<1x128xf32, #tpu.memory_space<vmem>>, %arg20: memref<2x128xf32, #tpu.memory_space<vmem>>, %arg21: memref<2x32xf32, #tpu.memory_space<vmem>>, %arg22: memref<2x32xf32, #tpu.memory_space<vmem>>) attributes {dimension_semantics = [], scalar_prefetch = 0 : i64, scratch_operands = 0 : i64, tpu.core_type = #tpu.core_type<tc>} {
    %c0 = arith.constant 0 : index
    %c0_0 = arith.constant 0 : index
    %0 = vector.load %arg0[%c0, %c0_0] : memref<432x27xf32, #tpu.memory_space<vmem>>, vector<432x27xf32>
    %c0_1 = arith.constant 0 : index
    %c0_2 = arith.constant 0 : index
    %1 = vector.load %arg1[%c0_1, %c0_2] : memref<27x16xf32, #tpu.memory_space<vmem>>, vector<27x16xf32>
    %cst = arith.constant dense<0.000000e+00> : vector<432x16xf32>
    %2 = tpu.matmul %0, %1, %cst {dimension_numbers = #tpu.dot_dimension_numbers<[1], [0], [0], [1], [0, 0, 1, 1], [], []>} : vector<432x27xf32>, vector<27x16xf32>, vector<432x16xf32> -> vector<432x16xf32>
    %c0_3 = arith.constant 0 : index
    %c0_4 = arith.constant 0 : index
    %3 = vector.load %arg2[%c0_3, %c0_4] : memref<1x16xf32, #tpu.memory_space<vmem>>, vector<1x16xf32>
    %4 = vector.broadcast %3 : vector<1x16xf32> to vector<432x16xf32>
    %5 = arith.addf %2, %4 : vector<432x16xf32>
    %c0_5 = arith.constant 0 : index
    %c0_6 = arith.constant 0 : index
    %6 = vector.load %arg3[%c0_5, %c0_6] : memref<1x16xf32, #tpu.memory_space<vmem>>, vector<1x16xf32>
    %c0_7 = arith.constant 0 : index
    %c0_8 = arith.constant 0 : index
    %7 = vector.load %arg4[%c0_7, %c0_8] : memref<1x16xf32, #tpu.memory_space<vmem>>, vector<1x16xf32>
    %cst_9 = arith.constant dense<0.000000e+00> : vector<16xf32>
    %8 = vector.multi_reduction <add>, %5, %cst_9 [0] : vector<432x16xf32> to vector<16xf32>
    %9 = vector.shape_cast %8 : vector<16xf32> to vector<1x16xf32>
    %cst_10 = arith.constant 4.320000e+02 : f32
    %10 = vector.broadcast %cst_10 : f32 to vector<1x16xf32>
    %11 = arith.divf %9, %10 : vector<1x16xf32>
    %12 = vector.broadcast %11 : vector<1x16xf32> to vector<432x16xf32>
    %13 = arith.subf %5, %12 : vector<432x16xf32>
    %14 = arith.mulf %13, %13 : vector<432x16xf32>
    %cst_11 = arith.constant dense<0.000000e+00> : vector<16xf32>
    %15 = vector.multi_reduction <add>, %14, %cst_11 [0] : vector<432x16xf32> to vector<16xf32>
    %16 = vector.shape_cast %15 : vector<16xf32> to vector<1x16xf32>
    %cst_12 = arith.constant 4.320000e+02 : f32
    %17 = vector.broadcast %cst_12 : f32 to vector<1x16xf32>
    %18 = arith.divf %16, %17 : vector<1x16xf32>
    %19 = vector.broadcast %11 : vector<1x16xf32> to vector<432x16xf32>
    %20 = arith.subf %5, %19 : vector<432x16xf32>
    %cst_13 = arith.constant 9.99999974E-6 : f32
    %21 = vector.broadcast %cst_13 : f32 to vector<1x16xf32>
    %22 = arith.addf %18, %21 : vector<1x16xf32>
    %23 = math.rsqrt %22 : vector<1x16xf32>
    %24 = vector.broadcast %23 : vector<1x16xf32> to vector<432x16xf32>
    %25 = arith.mulf %20, %24 : vector<432x16xf32>
    %26 = vector.broadcast %6 : vector<1x16xf32> to vector<432x16xf32>
    %27 = arith.mulf %25, %26 : vector<432x16xf32>
    %28 = vector.broadcast %7 : vector<1x16xf32> to vector<432x16xf32>
    %29 = arith.addf %27, %28 : vector<432x16xf32>
    %cst_14 = arith.constant 0.000000e+00 : f32
    %30 = vector.broadcast %cst_14 : f32 to vector<432x16xf32>
    %31 = arith.maximumf %29, %30 : vector<432x16xf32>
    %c0_15 = arith.constant 0 : index
    %c0_16 = arith.constant 0 : index
    %32 = vector.load %arg5[%c0_15, %c0_16] : memref<648x432xf32, #tpu.memory_space<vmem>>, vector<648x432xf32>
    %cst_17 = arith.constant dense<0.000000e+00> : vector<648x16xf32>
    %33 = tpu.matmul %32, %31, %cst_17 {dimension_numbers = #tpu.dot_dimension_numbers<[1], [0], [0], [1], [0, 0, 1, 1], [], []>} : vector<648x432xf32>, vector<432x16xf32>, vector<648x16xf32> -> vector<648x16xf32>
    %34 = vector.extract_strided_slice %33 {offsets = [0, 0], sizes = [216, 16], strides = [1, 1]} : vector<648x16xf32> to vector<216x16xf32>
    %35 = vector.extract_strided_slice %33 {offsets = [216, 0], sizes = [216, 16], strides = [1, 1]} : vector<648x16xf32> to vector<216x16xf32>
    %36 = arith.maximumf %34, %35 : vector<216x16xf32>
    %37 = vector.extract_strided_slice %33 {offsets = [432, 0], sizes = [216, 16], strides = [1, 1]} : vector<648x16xf32> to vector<216x16xf32>
    %38 = arith.maximumf %36, %37 : vector<216x16xf32>
    %c0_18 = arith.constant 0 : index
    %c0_19 = arith.constant 0 : index
    %39 = vector.load %arg6[%c0_18, %c0_19] : memref<324x216xf32, #tpu.memory_space<vmem>>, vector<324x216xf32>
    %cst_20 = arith.constant dense<0.000000e+00> : vector<324x16xf32>
    %40 = tpu.matmul %39, %38, %cst_20 {dimension_numbers = #tpu.dot_dimension_numbers<[1], [0], [0], [1], [0, 0, 1, 1], [], []>} : vector<324x216xf32>, vector<216x16xf32>, vector<324x16xf32> -> vector<324x16xf32>
    %41 = vector.extract_strided_slice %40 {offsets = [0, 0], sizes = [108, 16], strides = [1, 1]} : vector<324x16xf32> to vector<108x16xf32>
    %42 = vector.extract_strided_slice %40 {offsets = [108, 0], sizes = [108, 16], strides = [1, 1]} : vector<324x16xf32> to vector<108x16xf32>
    %43 = arith.maximumf %41, %42 : vector<108x16xf32>
    %44 = vector.extract_strided_slice %40 {offsets = [216, 0], sizes = [108, 16], strides = [1, 1]} : vector<324x16xf32> to vector<108x16xf32>
    %45 = arith.maximumf %43, %44 : vector<108x16xf32>
    %c0_21 = arith.constant 0 : index
    %c0_22 = arith.constant 0 : index
    %46 = vector.load %arg7[%c0_21, %c0_22] : memref<162x108xf32, #tpu.memory_space<vmem>>, vector<162x108xf32>
    %cst_23 = arith.constant dense<0.000000e+00> : vector<162x16xf32>
    %47 = tpu.matmul %46, %45, %cst_23 {dimension_numbers = #tpu.dot_dimension_numbers<[1], [0], [0], [1], [0, 0, 1, 1], [], []>} : vector<162x108xf32>, vector<108x16xf32>, vector<162x16xf32> -> vector<162x16xf32>
    %48 = vector.extract_strided_slice %47 {offsets = [0, 0], sizes = [54, 16], strides = [1, 1]} : vector<162x16xf32> to vector<54x16xf32>
    %49 = vector.extract_strided_slice %47 {offsets = [54, 0], sizes = [54, 16], strides = [1, 1]} : vector<162x16xf32> to vector<54x16xf32>
    %50 = arith.maximumf %48, %49 : vector<54x16xf32>
    %51 = vector.extract_strided_slice %47 {offsets = [108, 0], sizes = [54, 16], strides = [1, 1]} : vector<162x16xf32> to vector<54x16xf32>
    %52 = arith.maximumf %50, %51 : vector<54x16xf32>
    %c0_24 = arith.constant 0 : index
    %c0_25 = arith.constant 0 : index
    %53 = vector.load %arg8[%c0_24, %c0_25] : memref<1458x54xf32, #tpu.memory_space<vmem>>, vector<1458x54xf32>
    %cst_26 = arith.constant dense<0.000000e+00> : vector<1458x16xf32>
    %54 = tpu.matmul %53, %52, %cst_26 {dimension_numbers = #tpu.dot_dimension_numbers<[1], [0], [0], [1], [0, 0, 1, 1], [], []>} : vector<1458x54xf32>, vector<54x16xf32>, vector<1458x16xf32> -> vector<1458x16xf32>
    %cst_27 = arith.constant 0.000000e+00 : f32
    %55 = vector.broadcast %cst_27 : f32 to vector<54x32xf32>
    %c0_28 = arith.constant 0 : index
    %c0_29 = arith.constant 0 : index
    %56 = vector.load %arg10[%c0_28, %c0_29] : memref<1x32xf32, #tpu.memory_space<vmem>>, vector<1x32xf32>
    %57 = vector.broadcast %56 : vector<1x32xf32> to vector<54x32xf32>
    %58 = arith.addf %55, %57 : vector<54x32xf32>
    %59 = vector.extract_strided_slice %54 {offsets = [0, 0], sizes = [54, 16], strides = [1, 1]} : vector<1458x16xf32> to vector<54x16xf32>
    %c0_30 = arith.constant 0 : index
    %c0_31 = arith.constant 0 : index
    %c0_32 = arith.constant 0 : index
    %60 = vector.load %arg9[%c0_30, %c0_31, %c0_32] : memref<27x16x32xf32, #tpu.memory_space<vmem>>, vector<1x16x32xf32>
    %61 = vector.shape_cast %60 : vector<1x16x32xf32> to vector<16x32xf32>
    %cst_33 = arith.constant dense<0.000000e+00> : vector<54x32xf32>
    %62 = tpu.matmul %59, %61, %cst_33 {dimension_numbers = #tpu.dot_dimension_numbers<[1], [0], [0], [1], [0, 0, 1, 1], [], []>} : vector<54x16xf32>, vector<16x32xf32>, vector<54x32xf32> -> vector<54x32xf32>
    %63 = arith.addf %58, %62 : vector<54x32xf32>
    %64 = vector.extract_strided_slice %54 {offsets = [54, 0], sizes = [54, 16], strides = [1, 1]} : vector<1458x16xf32> to vector<54x16xf32>
    %c1 = arith.constant 1 : index
    %c0_34 = arith.constant 0 : index
    %c0_35 = arith.constant 0 : index
    %65 = vector.load %arg9[%c1, %c0_34, %c0_35] : memref<27x16x32xf32, #tpu.memory_space<vmem>>, vector<1x16x32xf32>
    %66 = vector.shape_cast %65 : vector<1x16x32xf32> to vector<16x32xf32>
    %cst_36 = arith.constant dense<0.000000e+00> : vector<54x32xf32>
    %67 = tpu.matmul %64, %66, %cst_36 {dimension_numbers = #tpu.dot_dimension_numbers<[1], [0], [0], [1], [0, 0, 1, 1], [], []>} : vector<54x16xf32>, vector<16x32xf32>, vector<54x32xf32> -> vector<54x32xf32>
    %68 = arith.addf %63, %67 : vector<54x32xf32>
    %69 = vector.extract_strided_slice %54 {offsets = [108, 0], sizes = [54, 16], strides = [1, 1]} : vector<1458x16xf32> to vector<54x16xf32>
    %c2 = arith.constant 2 : index
    %c0_37 = arith.constant 0 : index
    %c0_38 = arith.constant 0 : index
    %70 = vector.load %arg9[%c2, %c0_37, %c0_38] : memref<27x16x32xf32, #tpu.memory_space<vmem>>, vector<1x16x32xf32>
    %71 = vector.shape_cast %70 : vector<1x16x32xf32> to vector<16x32xf32>
    %cst_39 = arith.constant dense<0.000000e+00> : vector<54x32xf32>
    %72 = tpu.matmul %69, %71, %cst_39 {dimension_numbers = #tpu.dot_dimension_numbers<[1], [0], [0], [1], [0, 0, 1, 1], [], []>} : vector<54x16xf32>, vector<16x32xf32>, vector<54x32xf32> -> vector<54x32xf32>
    %73 = arith.addf %68, %72 : vector<54x32xf32>
    %74 = vector.extract_strided_slice %54 {offsets = [162, 0], sizes = [54, 16], strides = [1, 1]} : vector<1458x16xf32> to vector<54x16xf32>
    %c3 = arith.constant 3 : index
    %c0_40 = arith.constant 0 : index
    %c0_41 = arith.constant 0 : index
    %75 = vector.load %arg9[%c3, %c0_40, %c0_41] : memref<27x16x32xf32, #tpu.memory_space<vmem>>, vector<1x16x32xf32>
    %76 = vector.shape_cast %75 : vector<1x16x32xf32> to vector<16x32xf32>
    %cst_42 = arith.constant dense<0.000000e+00> : vector<54x32xf32>
    %77 = tpu.matmul %74, %76, %cst_42 {dimension_numbers = #tpu.dot_dimension_numbers<[1], [0], [0], [1], [0, 0, 1, 1], [], []>} : vector<54x16xf32>, vector<16x32xf32>, vector<54x32xf32> -> vector<54x32xf32>
    %78 = arith.addf %73, %77 : vector<54x32xf32>
    %79 = vector.extract_strided_slice %54 {offsets = [216, 0], sizes = [54, 16], strides = [1, 1]} : vector<1458x16xf32> to vector<54x16xf32>
    %c4 = arith.constant 4 : index
    %c0_43 = arith.constant 0 : index
    %c0_44 = arith.constant 0 : index
    %80 = vector.load %arg9[%c4, %c0_43, %c0_44] : memref<27x16x32xf32, #tpu.memory_space<vmem>>, vector<1x16x32xf32>
    %81 = vector.shape_cast %80 : vector<1x16x32xf32> to vector<16x32xf32>
    %cst_45 = arith.constant dense<0.000000e+00> : vector<54x32xf32>
    %82 = tpu.matmul %79, %81, %cst_45 {dimension_numbers = #tpu.dot_dimension_numbers<[1], [0], [0], [1], [0, 0, 1, 1], [], []>} : vector<54x16xf32>, vector<16x32xf32>, vector<54x32xf32> -> vector<54x32xf32>
    %83 = arith.addf %78, %82 : vector<54x32xf32>
    %84 = vector.extract_strided_slice %54 {offsets = [270, 0], sizes = [54, 16], strides = [1, 1]} : vector<1458x16xf32> to vector<54x16xf32>
    %c5 = arith.constant 5 : index
    %c0_46 = arith.constant 0 : index
    %c0_47 = arith.constant 0 : index
    %85 = vector.load %arg9[%c5, %c0_46, %c0_47] : memref<27x16x32xf32, #tpu.memory_space<vmem>>, vector<1x16x32xf32>
    %86 = vector.shape_cast %85 : vector<1x16x32xf32> to vector<16x32xf32>
    %cst_48 = arith.constant dense<0.000000e+00> : vector<54x32xf32>
    %87 = tpu.matmul %84, %86, %cst_48 {dimension_numbers = #tpu.dot_dimension_numbers<[1], [0], [0], [1], [0, 0, 1, 1], [], []>} : vector<54x16xf32>, vector<16x32xf32>, vector<54x32xf32> -> vector<54x32xf32>
    %88 = arith.addf %83, %87 : vector<54x32xf32>
    %89 = vector.extract_strided_slice %54 {offsets = [324, 0], sizes = [54, 16], strides = [1, 1]} : vector<1458x16xf32> to vector<54x16xf32>
    %c6 = arith.constant 6 : index
    %c0_49 = arith.constant 0 : index
    %c0_50 = arith.constant 0 : index
    %90 = vector.load %arg9[%c6, %c0_49, %c0_50] : memref<27x16x32xf32, #tpu.memory_space<vmem>>, vector<1x16x32xf32>
    %91 = vector.shape_cast %90 : vector<1x16x32xf32> to vector<16x32xf32>
    %cst_51 = arith.constant dense<0.000000e+00> : vector<54x32xf32>
    %92 = tpu.matmul %89, %91, %cst_51 {dimension_numbers = #tpu.dot_dimension_numbers<[1], [0], [0], [1], [0, 0, 1, 1], [], []>} : vector<54x16xf32>, vector<16x32xf32>, vector<54x32xf32> -> vector<54x32xf32>
    %93 = arith.addf %88, %92 : vector<54x32xf32>
    %94 = vector.extract_strided_slice %54 {offsets = [378, 0], sizes = [54, 16], strides = [1, 1]} : vector<1458x16xf32> to vector<54x16xf32>
    %c7 = arith.constant 7 : index
    %c0_52 = arith.constant 0 : index
    %c0_53 = arith.constant 0 : index
    %95 = vector.load %arg9[%c7, %c0_52, %c0_53] : memref<27x16x32xf32, #tpu.memory_space<vmem>>, vector<1x16x32xf32>
    %96 = vector.shape_cast %95 : vector<1x16x32xf32> to vector<16x32xf32>
    %cst_54 = arith.constant dense<0.000000e+00> : vector<54x32xf32>
    %97 = tpu.matmul %94, %96, %cst_54 {dimension_numbers = #tpu.dot_dimension_numbers<[1], [0], [0], [1], [0, 0, 1, 1], [], []>} : vector<54x16xf32>, vector<16x32xf32>, vector<54x32xf32> -> vector<54x32xf32>
    %98 = arith.addf %93, %97 : vector<54x32xf32>
    %99 = vector.extract_strided_slice %54 {offsets = [432, 0], sizes = [54, 16], strides = [1, 1]} : vector<1458x16xf32> to vector<54x16xf32>
    %c8 = arith.constant 8 : index
    %c0_55 = arith.constant 0 : index
    %c0_56 = arith.constant 0 : index
    %100 = vector.load %arg9[%c8, %c0_55, %c0_56] : memref<27x16x32xf32, #tpu.memory_space<vmem>>, vector<1x16x32xf32>
    %101 = vector.shape_cast %100 : vector<1x16x32xf32> to vector<16x32xf32>
    %cst_57 = arith.constant dense<0.000000e+00> : vector<54x32xf32>
    %102 = tpu.matmul %99, %101, %cst_57 {dimension_numbers = #tpu.dot_dimension_numbers<[1], [0], [0], [1], [0, 0, 1, 1], [], []>} : vector<54x16xf32>, vector<16x32xf32>, vector<54x32xf32> -> vector<54x32xf32>
    %103 = arith.addf %98, %102 : vector<54x32xf32>
    %104 = vector.extract_strided_slice %54 {offsets = [486, 0], sizes = [54, 16], strides = [1, 1]} : vector<1458x16xf32> to vector<54x16xf32>
    %c9 = arith.constant 9 : index
    %c0_58 = arith.constant 0 : index
    %c0_59 = arith.constant 0 : index
    %105 = vector.load %arg9[%c9, %c0_58, %c0_59] : memref<27x16x32xf32, #tpu.memory_space<vmem>>, vector<1x16x32xf32>
    %106 = vector.shape_cast %105 : vector<1x16x32xf32> to vector<16x32xf32>
    %cst_60 = arith.constant dense<0.000000e+00> : vector<54x32xf32>
    %107 = tpu.matmul %104, %106, %cst_60 {dimension_numbers = #tpu.dot_dimension_numbers<[1], [0], [0], [1], [0, 0, 1, 1], [], []>} : vector<54x16xf32>, vector<16x32xf32>, vector<54x32xf32> -> vector<54x32xf32>
    %108 = arith.addf %103, %107 : vector<54x32xf32>
    %109 = vector.extract_strided_slice %54 {offsets = [540, 0], sizes = [54, 16], strides = [1, 1]} : vector<1458x16xf32> to vector<54x16xf32>
    %c10 = arith.constant 10 : index
    %c0_61 = arith.constant 0 : index
    %c0_62 = arith.constant 0 : index
    %110 = vector.load %arg9[%c10, %c0_61, %c0_62] : memref<27x16x32xf32, #tpu.memory_space<vmem>>, vector<1x16x32xf32>
    %111 = vector.shape_cast %110 : vector<1x16x32xf32> to vector<16x32xf32>
    %cst_63 = arith.constant dense<0.000000e+00> : vector<54x32xf32>
    %112 = tpu.matmul %109, %111, %cst_63 {dimension_numbers = #tpu.dot_dimension_numbers<[1], [0], [0], [1], [0, 0, 1, 1], [], []>} : vector<54x16xf32>, vector<16x32xf32>, vector<54x32xf32> -> vector<54x32xf32>
    %113 = arith.addf %108, %112 : vector<54x32xf32>
    %114 = vector.extract_strided_slice %54 {offsets = [594, 0], sizes = [54, 16], strides = [1, 1]} : vector<1458x16xf32> to vector<54x16xf32>
    %c11 = arith.constant 11 : index
    %c0_64 = arith.constant 0 : index
    %c0_65 = arith.constant 0 : index
    %115 = vector.load %arg9[%c11, %c0_64, %c0_65] : memref<27x16x32xf32, #tpu.memory_space<vmem>>, vector<1x16x32xf32>
    %116 = vector.shape_cast %115 : vector<1x16x32xf32> to vector<16x32xf32>
    %cst_66 = arith.constant dense<0.000000e+00> : vector<54x32xf32>
    %117 = tpu.matmul %114, %116, %cst_66 {dimension_numbers = #tpu.dot_dimension_numbers<[1], [0], [0], [1], [0, 0, 1, 1], [], []>} : vector<54x16xf32>, vector<16x32xf32>, vector<54x32xf32> -> vector<54x32xf32>
    %118 = arith.addf %113, %117 : vector<54x32xf32>
    %119 = vector.extract_strided_slice %54 {offsets = [648, 0], sizes = [54, 16], strides = [1, 1]} : vector<1458x16xf32> to vector<54x16xf32>
    %c12 = arith.constant 12 : index
    %c0_67 = arith.constant 0 : index
    %c0_68 = arith.constant 0 : index
    %120 = vector.load %arg9[%c12, %c0_67, %c0_68] : memref<27x16x32xf32, #tpu.memory_space<vmem>>, vector<1x16x32xf32>
    %121 = vector.shape_cast %120 : vector<1x16x32xf32> to vector<16x32xf32>
    %cst_69 = arith.constant dense<0.000000e+00> : vector<54x32xf32>
    %122 = tpu.matmul %119, %121, %cst_69 {dimension_numbers = #tpu.dot_dimension_numbers<[1], [0], [0], [1], [0, 0, 1, 1], [], []>} : vector<54x16xf32>, vector<16x32xf32>, vector<54x32xf32> -> vector<54x32xf32>
    %123 = arith.addf %118, %122 : vector<54x32xf32>
    %124 = vector.extract_strided_slice %54 {offsets = [702, 0], sizes = [54, 16], strides = [1, 1]} : vector<1458x16xf32> to vector<54x16xf32>
    %c13 = arith.constant 13 : index
    %c0_70 = arith.constant 0 : index
    %c0_71 = arith.constant 0 : index
    %125 = vector.load %arg9[%c13, %c0_70, %c0_71] : memref<27x16x32xf32, #tpu.memory_space<vmem>>, vector<1x16x32xf32>
    %126 = vector.shape_cast %125 : vector<1x16x32xf32> to vector<16x32xf32>
    %cst_72 = arith.constant dense<0.000000e+00> : vector<54x32xf32>
    %127 = tpu.matmul %124, %126, %cst_72 {dimension_numbers = #tpu.dot_dimension_numbers<[1], [0], [0], [1], [0, 0, 1, 1], [], []>} : vector<54x16xf32>, vector<16x32xf32>, vector<54x32xf32> -> vector<54x32xf32>
    %128 = arith.addf %123, %127 : vector<54x32xf32>
    %129 = vector.extract_strided_slice %54 {offsets = [756, 0], sizes = [54, 16], strides = [1, 1]} : vector<1458x16xf32> to vector<54x16xf32>
    %c14 = arith.constant 14 : index
    %c0_73 = arith.constant 0 : index
    %c0_74 = arith.constant 0 : index
    %130 = vector.load %arg9[%c14, %c0_73, %c0_74] : memref<27x16x32xf32, #tpu.memory_space<vmem>>, vector<1x16x32xf32>
    %131 = vector.shape_cast %130 : vector<1x16x32xf32> to vector<16x32xf32>
    %cst_75 = arith.constant dense<0.000000e+00> : vector<54x32xf32>
    %132 = tpu.matmul %129, %131, %cst_75 {dimension_numbers = #tpu.dot_dimension_numbers<[1], [0], [0], [1], [0, 0, 1, 1], [], []>} : vector<54x16xf32>, vector<16x32xf32>, vector<54x32xf32> -> vector<54x32xf32>
    %133 = arith.addf %128, %132 : vector<54x32xf32>
    %134 = vector.extract_strided_slice %54 {offsets = [810, 0], sizes = [54, 16], strides = [1, 1]} : vector<1458x16xf32> to vector<54x16xf32>
    %c15 = arith.constant 15 : index
    %c0_76 = arith.constant 0 : index
    %c0_77 = arith.constant 0 : index
    %135 = vector.load %arg9[%c15, %c0_76, %c0_77] : memref<27x16x32xf32, #tpu.memory_space<vmem>>, vector<1x16x32xf32>
    %136 = vector.shape_cast %135 : vector<1x16x32xf32> to vector<16x32xf32>
    %cst_78 = arith.constant dense<0.000000e+00> : vector<54x32xf32>
    %137 = tpu.matmul %134, %136, %cst_78 {dimension_numbers = #tpu.dot_dimension_numbers<[1], [0], [0], [1], [0, 0, 1, 1], [], []>} : vector<54x16xf32>, vector<16x32xf32>, vector<54x32xf32> -> vector<54x32xf32>
    %138 = arith.addf %133, %137 : vector<54x32xf32>
    %139 = vector.extract_strided_slice %54 {offsets = [864, 0], sizes = [54, 16], strides = [1, 1]} : vector<1458x16xf32> to vector<54x16xf32>
    %c16 = arith.constant 16 : index
    %c0_79 = arith.constant 0 : index
    %c0_80 = arith.constant 0 : index
    %140 = vector.load %arg9[%c16, %c0_79, %c0_80] : memref<27x16x32xf32, #tpu.memory_space<vmem>>, vector<1x16x32xf32>
    %141 = vector.shape_cast %140 : vector<1x16x32xf32> to vector<16x32xf32>
    %cst_81 = arith.constant dense<0.000000e+00> : vector<54x32xf32>
    %142 = tpu.matmul %139, %141, %cst_81 {dimension_numbers = #tpu.dot_dimension_numbers<[1], [0], [0], [1], [0, 0, 1, 1], [], []>} : vector<54x16xf32>, vector<16x32xf32>, vector<54x32xf32> -> vector<54x32xf32>
    %143 = arith.addf %138, %142 : vector<54x32xf32>
    %144 = vector.extract_strided_slice %54 {offsets = [918, 0], sizes = [54, 16], strides = [1, 1]} : vector<1458x16xf32> to vector<54x16xf32>
    %c17 = arith.constant 17 : index
    %c0_82 = arith.constant 0 : index
    %c0_83 = arith.constant 0 : index
    %145 = vector.load %arg9[%c17, %c0_82, %c0_83] : memref<27x16x32xf32, #tpu.memory_space<vmem>>, vector<1x16x32xf32>
    %146 = vector.shape_cast %145 : vector<1x16x32xf32> to vector<16x32xf32>
    %cst_84 = arith.constant dense<0.000000e+00> : vector<54x32xf32>
    %147 = tpu.matmul %144, %146, %cst_84 {dimension_numbers = #tpu.dot_dimension_numbers<[1], [0], [0], [1], [0, 0, 1, 1], [], []>} : vector<54x16xf32>, vector<16x32xf32>, vector<54x32xf32> -> vector<54x32xf32>
    %148 = arith.addf %143, %147 : vector<54x32xf32>
    %149 = vector.extract_strided_slice %54 {offsets = [972, 0], sizes = [54, 16], strides = [1, 1]} : vector<1458x16xf32> to vector<54x16xf32>
    %c18 = arith.constant 18 : index
    %c0_85 = arith.constant 0 : index
    %c0_86 = arith.constant 0 : index
    %150 = vector.load %arg9[%c18, %c0_85, %c0_86] : memref<27x16x32xf32, #tpu.memory_space<vmem>>, vector<1x16x32xf32>
    %151 = vector.shape_cast %150 : vector<1x16x32xf32> to vector<16x32xf32>
    %cst_87 = arith.constant dense<0.000000e+00> : vector<54x32xf32>
    %152 = tpu.matmul %149, %151, %cst_87 {dimension_numbers = #tpu.dot_dimension_numbers<[1], [0], [0], [1], [0, 0, 1, 1], [], []>} : vector<54x16xf32>, vector<16x32xf32>, vector<54x32xf32> -> vector<54x32xf32>
    %153 = arith.addf %148, %152 : vector<54x32xf32>
    %154 = vector.extract_strided_slice %54 {offsets = [1026, 0], sizes = [54, 16], strides = [1, 1]} : vector<1458x16xf32> to vector<54x16xf32>
    %c19 = arith.constant 19 : index
    %c0_88 = arith.constant 0 : index
    %c0_89 = arith.constant 0 : index
    %155 = vector.load %arg9[%c19, %c0_88, %c0_89] : memref<27x16x32xf32, #tpu.memory_space<vmem>>, vector<1x16x32xf32>
    %156 = vector.shape_cast %155 : vector<1x16x32xf32> to vector<16x32xf32>
    %cst_90 = arith.constant dense<0.000000e+00> : vector<54x32xf32>
    %157 = tpu.matmul %154, %156, %cst_90 {dimension_numbers = #tpu.dot_dimension_numbers<[1], [0], [0], [1], [0, 0, 1, 1], [], []>} : vector<54x16xf32>, vector<16x32xf32>, vector<54x32xf32> -> vector<54x32xf32>
    %158 = arith.addf %153, %157 : vector<54x32xf32>
    %159 = vector.extract_strided_slice %54 {offsets = [1080, 0], sizes = [54, 16], strides = [1, 1]} : vector<1458x16xf32> to vector<54x16xf32>
    %c20 = arith.constant 20 : index
    %c0_91 = arith.constant 0 : index
    %c0_92 = arith.constant 0 : index
    %160 = vector.load %arg9[%c20, %c0_91, %c0_92] : memref<27x16x32xf32, #tpu.memory_space<vmem>>, vector<1x16x32xf32>
    %161 = vector.shape_cast %160 : vector<1x16x32xf32> to vector<16x32xf32>
    %cst_93 = arith.constant dense<0.000000e+00> : vector<54x32xf32>
    %162 = tpu.matmul %159, %161, %cst_93 {dimension_numbers = #tpu.dot_dimension_numbers<[1], [0], [0], [1], [0, 0, 1, 1], [], []>} : vector<54x16xf32>, vector<16x32xf32>, vector<54x32xf32> -> vector<54x32xf32>
    %163 = arith.addf %158, %162 : vector<54x32xf32>
    %164 = vector.extract_strided_slice %54 {offsets = [1134, 0], sizes = [54, 16], strides = [1, 1]} : vector<1458x16xf32> to vector<54x16xf32>
    %c21 = arith.constant 21 : index
    %c0_94 = arith.constant 0 : index
    %c0_95 = arith.constant 0 : index
    %165 = vector.load %arg9[%c21, %c0_94, %c0_95] : memref<27x16x32xf32, #tpu.memory_space<vmem>>, vector<1x16x32xf32>
    %166 = vector.shape_cast %165 : vector<1x16x32xf32> to vector<16x32xf32>
    %cst_96 = arith.constant dense<0.000000e+00> : vector<54x32xf32>
    %167 = tpu.matmul %164, %166, %cst_96 {dimension_numbers = #tpu.dot_dimension_numbers<[1], [0], [0], [1], [0, 0, 1, 1], [], []>} : vector<54x16xf32>, vector<16x32xf32>, vector<54x32xf32> -> vector<54x32xf32>
    %168 = arith.addf %163, %167 : vector<54x32xf32>
    %169 = vector.extract_strided_slice %54 {offsets = [1188, 0], sizes = [54, 16], strides = [1, 1]} : vector<1458x16xf32> to vector<54x16xf32>
    %c22 = arith.constant 22 : index
    %c0_97 = arith.constant 0 : index
    %c0_98 = arith.constant 0 : index
    %170 = vector.load %arg9[%c22, %c0_97, %c0_98] : memref<27x16x32xf32, #tpu.memory_space<vmem>>, vector<1x16x32xf32>
    %171 = vector.shape_cast %170 : vector<1x16x32xf32> to vector<16x32xf32>
    %cst_99 = arith.constant dense<0.000000e+00> : vector<54x32xf32>
    %172 = tpu.matmul %169, %171, %cst_99 {dimension_numbers = #tpu.dot_dimension_numbers<[1], [0], [0], [1], [0, 0, 1, 1], [], []>} : vector<54x16xf32>, vector<16x32xf32>, vector<54x32xf32> -> vector<54x32xf32>
    %173 = arith.addf %168, %172 : vector<54x32xf32>
    %174 = vector.extract_strided_slice %54 {offsets = [1242, 0], sizes = [54, 16], strides = [1, 1]} : vector<1458x16xf32> to vector<54x16xf32>
    %c23 = arith.constant 23 : index
    %c0_100 = arith.constant 0 : index
    %c0_101 = arith.constant 0 : index
    %175 = vector.load %arg9[%c23, %c0_100, %c0_101] : memref<27x16x32xf32, #tpu.memory_space<vmem>>, vector<1x16x32xf32>
    %176 = vector.shape_cast %175 : vector<1x16x32xf32> to vector<16x32xf32>
    %cst_102 = arith.constant dense<0.000000e+00> : vector<54x32xf32>
    %177 = tpu.matmul %174, %176, %cst_102 {dimension_numbers = #tpu.dot_dimension_numbers<[1], [0], [0], [1], [0, 0, 1, 1], [], []>} : vector<54x16xf32>, vector<16x32xf32>, vector<54x32xf32> -> vector<54x32xf32>
    %178 = arith.addf %173, %177 : vector<54x32xf32>
    %179 = vector.extract_strided_slice %54 {offsets = [1296, 0], sizes = [54, 16], strides = [1, 1]} : vector<1458x16xf32> to vector<54x16xf32>
    %c24 = arith.constant 24 : index
    %c0_103 = arith.constant 0 : index
    %c0_104 = arith.constant 0 : index
    %180 = vector.load %arg9[%c24, %c0_103, %c0_104] : memref<27x16x32xf32, #tpu.memory_space<vmem>>, vector<1x16x32xf32>
    %181 = vector.shape_cast %180 : vector<1x16x32xf32> to vector<16x32xf32>
    %cst_105 = arith.constant dense<0.000000e+00> : vector<54x32xf32>
    %182 = tpu.matmul %179, %181, %cst_105 {dimension_numbers = #tpu.dot_dimension_numbers<[1], [0], [0], [1], [0, 0, 1, 1], [], []>} : vector<54x16xf32>, vector<16x32xf32>, vector<54x32xf32> -> vector<54x32xf32>
    %183 = arith.addf %178, %182 : vector<54x32xf32>
    %184 = vector.extract_strided_slice %54 {offsets = [1350, 0], sizes = [54, 16], strides = [1, 1]} : vector<1458x16xf32> to vector<54x16xf32>
    %c25 = arith.constant 25 : index
    %c0_106 = arith.constant 0 : index
    %c0_107 = arith.constant 0 : index
    %185 = vector.load %arg9[%c25, %c0_106, %c0_107] : memref<27x16x32xf32, #tpu.memory_space<vmem>>, vector<1x16x32xf32>
    %186 = vector.shape_cast %185 : vector<1x16x32xf32> to vector<16x32xf32>
    %cst_108 = arith.constant dense<0.000000e+00> : vector<54x32xf32>
    %187 = tpu.matmul %184, %186, %cst_108 {dimension_numbers = #tpu.dot_dimension_numbers<[1], [0], [0], [1], [0, 0, 1, 1], [], []>} : vector<54x16xf32>, vector<16x32xf32>, vector<54x32xf32> -> vector<54x32xf32>
    %188 = arith.addf %183, %187 : vector<54x32xf32>
    %189 = vector.extract_strided_slice %54 {offsets = [1404, 0], sizes = [54, 16], strides = [1, 1]} : vector<1458x16xf32> to vector<54x16xf32>
    %c26 = arith.constant 26 : index
    %c0_109 = arith.constant 0 : index
    %c0_110 = arith.constant 0 : index
    %190 = vector.load %arg9[%c26, %c0_109, %c0_110] : memref<27x16x32xf32, #tpu.memory_space<vmem>>, vector<1x16x32xf32>
    %191 = vector.shape_cast %190 : vector<1x16x32xf32> to vector<16x32xf32>
    %cst_111 = arith.constant dense<0.000000e+00> : vector<54x32xf32>
    %192 = tpu.matmul %189, %191, %cst_111 {dimension_numbers = #tpu.dot_dimension_numbers<[1], [0], [0], [1], [0, 0, 1, 1], [], []>} : vector<54x16xf32>, vector<16x32xf32>, vector<54x32xf32> -> vector<54x32xf32>
    %193 = arith.addf %188, %192 : vector<54x32xf32>
    %c0_112 = arith.constant 0 : index
    %c0_113 = arith.constant 0 : index
    %194 = vector.load %arg11[%c0_112, %c0_113] : memref<1x32xf32, #tpu.memory_space<vmem>>, vector<1x32xf32>
    %c0_114 = arith.constant 0 : index
    %c0_115 = arith.constant 0 : index
    %195 = vector.load %arg12[%c0_114, %c0_115] : memref<1x32xf32, #tpu.memory_space<vmem>>, vector<1x32xf32>
    %cst_116 = arith.constant dense<0.000000e+00> : vector<32xf32>
    %196 = vector.multi_reduction <add>, %193, %cst_116 [0] : vector<54x32xf32> to vector<32xf32>
    %197 = vector.shape_cast %196 : vector<32xf32> to vector<1x32xf32>
    %cst_117 = arith.constant 5.400000e+01 : f32
    %198 = vector.broadcast %cst_117 : f32 to vector<1x32xf32>
    %199 = arith.divf %197, %198 : vector<1x32xf32>
    %200 = vector.broadcast %199 : vector<1x32xf32> to vector<54x32xf32>
    %201 = arith.subf %193, %200 : vector<54x32xf32>
    %202 = arith.mulf %201, %201 : vector<54x32xf32>
    %cst_118 = arith.constant dense<0.000000e+00> : vector<32xf32>
    %203 = vector.multi_reduction <add>, %202, %cst_118 [0] : vector<54x32xf32> to vector<32xf32>
    %204 = vector.shape_cast %203 : vector<32xf32> to vector<1x32xf32>
    %cst_119 = arith.constant 5.400000e+01 : f32
    %205 = vector.broadcast %cst_119 : f32 to vector<1x32xf32>
    %206 = arith.divf %204, %205 : vector<1x32xf32>
    %207 = vector.broadcast %199 : vector<1x32xf32> to vector<54x32xf32>
    %208 = arith.subf %193, %207 : vector<54x32xf32>
    %cst_120 = arith.constant 9.99999974E-6 : f32
    %209 = vector.broadcast %cst_120 : f32 to vector<1x32xf32>
    %210 = arith.addf %206, %209 : vector<1x32xf32>
    %211 = math.rsqrt %210 : vector<1x32xf32>
    %212 = vector.broadcast %211 : vector<1x32xf32> to vector<54x32xf32>
    %213 = arith.mulf %208, %212 : vector<54x32xf32>
    %214 = vector.broadcast %194 : vector<1x32xf32> to vector<54x32xf32>
    %215 = arith.mulf %213, %214 : vector<54x32xf32>
    %216 = vector.broadcast %195 : vector<1x32xf32> to vector<54x32xf32>
    %217 = arith.addf %215, %216 : vector<54x32xf32>
    %cst_121 = arith.constant 0.000000e+00 : f32
    %218 = vector.broadcast %cst_121 : f32 to vector<54x32xf32>
    %219 = arith.maximumf %217, %218 : vector<54x32xf32>
    %220 = vector.extract_strided_slice %219 {offsets = [0, 0], sizes = [27, 32], strides = [1, 1]} : vector<54x32xf32> to vector<27x32xf32>
    %cst_122 = arith.constant dense<0xFF800000> : vector<32xf32>
    %221 = vector.multi_reduction <maximumf>, %220, %cst_122 [0] : vector<27x32xf32> to vector<32xf32>
    %222 = vector.shape_cast %221 : vector<32xf32> to vector<1x32xf32>
    %223 = vector.extract_strided_slice %219 {offsets = [27, 0], sizes = [27, 32], strides = [1, 1]} : vector<54x32xf32> to vector<27x32xf32>
    %cst_123 = arith.constant dense<0xFF800000> : vector<32xf32>
    %224 = vector.multi_reduction <maximumf>, %223, %cst_123 [0] : vector<27x32xf32> to vector<32xf32>
    %225 = vector.shape_cast %224 : vector<32xf32> to vector<1x32xf32>
    %226 = tpu.concatenate %222, %225 in 0 : vector<1x32xf32>, vector<1x32xf32> -> vector<2x32xf32>
    %c0_124 = arith.constant 0 : index
    %c0_125 = arith.constant 0 : index
    %227 = vector.load %arg13[%c0_124, %c0_125] : memref<32x64xf32, #tpu.memory_space<vmem>>, vector<32x64xf32>
    %cst_126 = arith.constant dense<0.000000e+00> : vector<2x64xf32>
    %228 = tpu.matmul %226, %227, %cst_126 {dimension_numbers = #tpu.dot_dimension_numbers<[1], [0], [0], [1], [0, 0, 1, 1], [], []>} : vector<2x32xf32>, vector<32x64xf32>, vector<2x64xf32> -> vector<2x64xf32>
    %c0_127 = arith.constant 0 : index
    %c0_128 = arith.constant 0 : index
    %229 = vector.load %arg14[%c0_127, %c0_128] : memref<1x64xf32, #tpu.memory_space<vmem>>, vector<1x64xf32>
    %230 = vector.broadcast %229 : vector<1x64xf32> to vector<2x64xf32>
    %231 = arith.addf %228, %230 : vector<2x64xf32>
    %232 = vector.extract_strided_slice %231 {offsets = [0, 0], sizes = [2, 32], strides = [1, 1]} : vector<2x64xf32> to vector<2x32xf32>
    %233 = vector.extract_strided_slice %231 {offsets = [0, 32], sizes = [2, 32], strides = [1, 1]} : vector<2x64xf32> to vector<2x32xf32>
    %234 = math.exp %233 : vector<2x32xf32>
    %c0_129 = arith.constant 0 : index
    %c0_130 = arith.constant 0 : index
    %235 = vector.load %arg15[%c0_129, %c0_130] : memref<1x32xf32, #tpu.memory_space<vmem>>, vector<1x32xf32>
    %236 = vector.broadcast %235 : vector<1x32xf32> to vector<2x32xf32>
    %237 = arith.mulf %234, %236 : vector<2x32xf32>
    %238 = arith.addf %232, %237 : vector<2x32xf32>
    %c0_131 = arith.constant 0 : index
    %c0_132 = arith.constant 0 : index
    %239 = vector.load %arg16[%c0_131, %c0_132] : memref<32x32xf32, #tpu.memory_space<vmem>>, vector<32x32xf32>
    %cst_133 = arith.constant dense<0.000000e+00> : vector<2x32xf32>
    %240 = tpu.matmul %238, %239, %cst_133 {dimension_numbers = #tpu.dot_dimension_numbers<[1], [0], [0], [1], [0, 0, 1, 1], [], []>} : vector<2x32xf32>, vector<32x32xf32>, vector<2x32xf32> -> vector<2x32xf32>
    %c0_134 = arith.constant 0 : index
    %c0_135 = arith.constant 0 : index
    %241 = vector.load %arg17[%c0_134, %c0_135] : memref<1x32xf32, #tpu.memory_space<vmem>>, vector<1x32xf32>
    %242 = vector.broadcast %241 : vector<1x32xf32> to vector<2x32xf32>
    %243 = arith.addf %240, %242 : vector<2x32xf32>
    %cst_136 = arith.constant 0.000000e+00 : f32
    %244 = vector.broadcast %cst_136 : f32 to vector<2x32xf32>
    %245 = arith.maximumf %243, %244 : vector<2x32xf32>
    %c0_137 = arith.constant 0 : index
    %c0_138 = arith.constant 0 : index
    %246 = vector.load %arg18[%c0_137, %c0_138] : memref<32x128xf32, #tpu.memory_space<vmem>>, vector<32x128xf32>
    %cst_139 = arith.constant dense<0.000000e+00> : vector<2x128xf32>
    %247 = tpu.matmul %245, %246, %cst_139 {dimension_numbers = #tpu.dot_dimension_numbers<[1], [0], [0], [1], [0, 0, 1, 1], [], []>} : vector<2x32xf32>, vector<32x128xf32>, vector<2x128xf32> -> vector<2x128xf32>
    %c0_140 = arith.constant 0 : index
    %c0_141 = arith.constant 0 : index
    %248 = vector.load %arg19[%c0_140, %c0_141] : memref<1x128xf32, #tpu.memory_space<vmem>>, vector<1x128xf32>
    %249 = vector.broadcast %248 : vector<1x128xf32> to vector<2x128xf32>
    %250 = arith.addf %247, %249 : vector<2x128xf32>
    %c0_142 = arith.constant 0 : index
    %c0_143 = arith.constant 0 : index
    %251 = vector.load %arg20[%c0_142, %c0_143] : memref<2x128xf32, #tpu.memory_space<vmem>>, vector<2x128xf32>
    tpu.vector_store %arg20[%c0_142, %c0_143], %250 {strides = array<i32>} : memref<2x128xf32, #tpu.memory_space<vmem>>, vector<2x128xf32>,
    %c0_144 = arith.constant 0 : index
    %c0_145 = arith.constant 0 : index
    %252 = vector.load %arg21[%c0_144, %c0_145] : memref<2x32xf32, #tpu.memory_space<vmem>>, vector<2x32xf32>
    tpu.vector_store %arg21[%c0_144, %c0_145], %232 {strides = array<i32>} : memref<2x32xf32, #tpu.memory_space<vmem>>, vector<2x32xf32>,
    %c0_146 = arith.constant 0 : index
    %c0_147 = arith.constant 0 : index
    %253 = vector.load %arg22[%c0_146, %c0_147] : memref<2x32xf32, #tpu.memory_space<vmem>>, vector<2x32xf32>
    tpu.vector_store %arg22[%c0_146, %c0_147], %233 {strides = array<i32>} : memref<2x32xf32, #tpu.memory_space<vmem>>, vector<2x32xf32>,
    return
  }
}

</mosaic_0001>

<llo_original>
// kernel: vae_forward.1
$region0: #{vae_forward.1}
  #allocation0 [shape = 'u32[]', space=smem, size = 0x4, offset = 0x4, fixed_abs, tag = 'smem constant byte address 0x4 - core index']
  #allocation1 [shape = 'u32[144,128]{1,0:T(1,128)}', space=vmem, size = 0x12000, scoped, tag = 'internal scratch']
  %s0 = inlined_call_operand.vmem [shape: f32[432,27], index: 0, kind: input, shape index: {}]
  %s1 = inlined_call_operand.vmem [shape: f32[27,16], index: 1, kind: input, shape index: {}]
  %s2 = inlined_call_operand.vmem [shape: f32[1,16], index: 2, kind: input, shape index: {}]
  %s3 = inlined_call_operand.vmem [shape: f32[1,16], index: 3, kind: input, shape index: {}]
  %s4 = inlined_call_operand.vmem [shape: f32[1,16], index: 4, kind: input, shape index: {}]
  %s5 = inlined_call_operand.vmem [shape: f32[648,432], index: 5, kind: input, shape index: {}]
  %s6 = inlined_call_operand.vmem [shape: f32[324,216], index: 6, kind: input, shape index: {}]
  %s7 = inlined_call_operand.vmem [shape: f32[162,108], index: 7, kind: input, shape index: {}]
  %s8 = inlined_call_operand.vmem [shape: f32[1458,54], index: 8, kind: input, shape index: {}]
  %s9 = inlined_call_operand.vmem [shape: f32[27,16,32], index: 9, kind: input, shape index: {}]
  %s10 = inlined_call_operand.vmem [shape: f32[1,32], index: 10, kind: input, shape index: {}]
  %s11 = inlined_call_operand.vmem [shape: f32[1,32], index: 11, kind: input, shape index: {}]
  %s12 = inlined_call_operand.vmem [shape: f32[1,32], index: 12, kind: input, shape index: {}]
  %s13 = inlined_call_operand.vmem [shape: f32[32,64], index: 13, kind: input, shape index: {}]
  %s14 = inlined_call_operand.vmem [shape: f32[1,64], index: 14, kind: input, shape index: {}]
  %s15 = inlined_call_operand.vmem [shape: f32[1,32], index: 15, kind: input, shape index: {}]
  %s16 = inlined_call_operand.vmem [shape: f32[32,32], index: 16, kind: input, shape index: {}]
  %s17 = inlined_call_operand.vmem [shape: f32[1,32], index: 17, kind: input, shape index: {}]
  %s18 = inlined_call_operand.vmem [shape: f32[32,128], index: 18, kind: input, shape index: {}]
  %s19 = inlined_call_operand.vmem [shape: f32[1,128], index: 19, kind: input, shape index: {}]
  %s20 = inlined_call_operand.vmem [shape: f32[2,128], index: 20, kind: output, shape index: {0}]
  %s21 = inlined_call_operand.hbm [shape: f32[2,32], index: 21, kind: output, shape index: {1}]
  %s22 = inlined_call_operand.hbm [shape: f32[2,32], index: 22, kind: output, shape index: {2}]
  %23 = xla_tuple %s20, %s21, %s22
  %s24 = sld [smem:[#allocation0]]
  $region106: #{vae_forward.1} parent=0
    _
  %s26 = ssub.s32 1, %s24
  %s27 = scalar_select 0, %s26, %s24
  $region1: #{vae_forward.1} parent=0
    #allocation2 [shape = 'u8[1024]{0}', space=vmem, size = 0x400, scoped, tag = 'output window, operand 1, single buffered']
    #allocation3 [shape = 's32[1]{0}', space=sflag, size = 0x4, scoped, tag = 'scoped memory for vae_forward.1']
    #allocation4 [shape = 'u8[1024]{0}', space=vmem, size = 0x400, scoped, tag = 'output window, operand 2, single buffered']
    #allocation5 [shape = 's32[1]{0}', space=sflag, size = 0x4, scoped, tag = 'scoped memory for vae_forward.1']
    %28 = vsyncpa [#allocation3], 0
    %29 = vsyncpa [#allocation5], 0
    // Predicated region
    $region2: #{vae_forward.1} parent=1 // pred_check
      _
    $region3: #{vae_forward.1} parent=1 // pred_check_branch
      %31 = sbr.rel (0) target = $region5
    $region4: #{vae_forward.1} parent=1 // pred_region
      _
    $region5: #{vae_forward.1} parent=1 // pred_fallthru
      _
    // Predicated region
    $region6: #{vae_forward.1} parent=1 // pred_check
      _
    $region7: #{vae_forward.1} parent=1 // pred_check_branch
      %33 = sbr.rel (0) target = $region9
    $region8: #{vae_forward.1} parent=1 // pred_region
      _
    $region9: #{vae_forward.1} parent=1 // pred_fallthru
      _
    // Predicated region
    $region10: #{vae_forward.1} parent=1 // pred_check
      _
    $region11: #{vae_forward.1} parent=1 // pred_check_branch
      %35 = sbr.rel (0) target = $region13
    $region12: #{vae_forward.1} parent=1 // pred_region
      _
    $region13: #{vae_forward.1} parent=1 // pred_fallthru
      _
    // Predicated region
    $region14: #{vae_forward.1} parent=1 // pred_check
      _
    $region15: #{vae_forward.1} parent=1 // pred_check_branch
      %37 = sbr.rel (0) target = $region17
    $region16: #{vae_forward.1} parent=1 // pred_region
      _
    $region17: #{vae_forward.1} parent=1 // pred_fallthru
      _
    // Predicated region
    $region18: #{vae_forward.1} parent=1 // pred_check
      _
    $region19: #{vae_forward.1} parent=1 // pred_check_branch
      %39 = sbr.rel (0) target = $region21
    $region20: #{vae_forward.1} parent=1 // pred_region
      _
    $region21: #{vae_forward.1} parent=1 // pred_fallthru
      _
    // Predicated region
    $region22: #{vae_forward.1} parent=1 // pred_check
      _
    $region23: #{vae_forward.1} parent=1 // pred_check_branch
      %41 = sbr.rel (0) target = $region25
    $region24: #{vae_forward.1} parent=1 // pred_region
      _
    $region25: #{vae_forward.1} parent=1 // pred_fallthru
      _
    // Predicated region
    $region26: #{vae_forward.1} parent=1 // pred_check
      _
    $region27: #{vae_forward.1} parent=1 // pred_check_branch
      %43 = sbr.rel (0) target = $region29
    $region28: #{vae_forward.1} parent=1 // pred_region
      _
    $region29: #{vae_forward.1} parent=1 // pred_fallthru
      _
    // Predicated region
    $region30: #{vae_forward.1} parent=1 // pred_check
      _
    $region31: #{vae_forward.1} parent=1 // pred_check_branch
      %45 = sbr.rel (0) target = $region33
    $region32: #{vae_forward.1} parent=1 // pred_region
      _
    $region33: #{vae_forward.1} parent=1 // pred_fallthru
      _
    // Predicated region
    $region34: #{vae_forward.1} parent=1 // pred_check
      _
    $region35: #{vae_forward.1} parent=1 // pred_check_branch
      %47 = sbr.rel (0) target = $region37
    $region36: #{vae_forward.1} parent=1 // pred_region
      _
    $region37: #{vae_forward.1} parent=1 // pred_fallthru
      _
    // Predicated region
    $region38: #{vae_forward.1} parent=1 // pred_check
      _
    $region39: #{vae_forward.1} parent=1 // pred_check_branch
      %49 = sbr.rel (0) target = $region41
    $region40: #{vae_forward.1} parent=1 // pred_region
      _
    $region41: #{vae_forward.1} parent=1 // pred_fallthru
      _
    // Predicated region
    $region42: #{vae_forward.1} parent=1 // pred_check
      _
    $region43: #{vae_forward.1} parent=1 // pred_check_branch
      %51 = sbr.rel (0) target = $region45
    $region44: #{vae_forward.1} parent=1 // pred_region
      _
    $region45: #{vae_forward.1} parent=1 // pred_fallthru
      _
    // Predicated region
    $region46: #{vae_forward.1} parent=1 // pred_check
      _
    $region47: #{vae_forward.1} parent=1 // pred_check_branch
      %53 = sbr.rel (0) target = $region49
    $region48: #{vae_forward.1} parent=1 // pred_region
      _
    $region49: #{vae_forward.1} parent=1 // pred_fallthru
      _
    // Predicated region
    $region50: #{vae_forward.1} parent=1 // pred_check
      _
    $region51: #{vae_forward.1} parent=1 // pred_check_branch
      %55 = sbr.rel (0) target = $region53
    $region52: #{vae_forward.1} parent=1 // pred_region
      _
    $region53: #{vae_forward.1} parent=1 // pred_fallthru
      _
    // Predicated region
    $region54: #{vae_forward.1} parent=1 // pred_check
      _
    $region55: #{vae_forward.1} parent=1 // pred_check_branch
      %57 = sbr.rel (0) target = $region57
    $region56: #{vae_forward.1} parent=1 // pred_region
      _
    $region57: #{vae_forward.1} parent=1 // pred_fallthru
      _
    // Predicated region
    $region58: #{vae_forward.1} parent=1 // pred_check
      _
    $region59: #{vae_forward.1} parent=1 // pred_check_branch
      %59 = sbr.rel (0) target = $region61
    $region60: #{vae_forward.1} parent=1 // pred_region
      _
    $region61: #{vae_forward.1} parent=1 // pred_fallthru
      _
    // Predicated region
    $region62: #{vae_forward.1} parent=1 // pred_check
      _
    $region63: #{vae_forward.1} parent=1 // pred_check_branch
      %61 = sbr.rel (0) target = $region65
    $region64: #{vae_forward.1} parent=1 // pred_region
      _
    $region65: #{vae_forward.1} parent=1 // pred_fallthru
      _
    // Predicated region
    $region66: #{vae_forward.1} parent=1 // pred_check
      _
    $region67: #{vae_forward.1} parent=1 // pred_check_branch
      %63 = sbr.rel (0) target = $region69
    $region68: #{vae_forward.1} parent=1 // pred_region
      _
    $region69: #{vae_forward.1} parent=1 // pred_fallthru
      _
    // Predicated region
    $region70: #{vae_forward.1} parent=1 // pred_check
      _
    $region71: #{vae_forward.1} parent=1 // pred_check_branch
      %65 = sbr.rel (0) target = $region73
    $region72: #{vae_forward.1} parent=1 // pred_region
      _
    $region73: #{vae_forward.1} parent=1 // pred_fallthru
      _
    // Predicated region
    $region74: #{vae_forward.1} parent=1 // pred_check
      _
    $region75: #{vae_forward.1} parent=1 // pred_check_branch
      %67 = sbr.rel (0) target = $region77
    $region76: #{vae_forward.1} parent=1 // pred_region
      _
    $region77: #{vae_forward.1} parent=1 // pred_fallthru
      _
    // Predicated region
    $region78: #{vae_forward.1} parent=1 // pred_check
      _
    $region79: #{vae_forward.1} parent=1 // pred_check_branch
      %69 = sbr.rel (0) target = $region81
    $region80: #{vae_forward.1} parent=1 // pred_region
      _
    $region81: #{vae_forward.1} parent=1 // pred_fallthru
      _
    %v70 = vld [vmem:[%s0] sm:$0xff]
    %v71 = vld [vmem:[%s0 + $0x8] sm:$0xff]
    %v72 = vld [vmem:[%s0 + $0x10] sm:$0xff]
    %v73 = vld [vmem:[%s0 + $0x18] sm:$0xff]
    %v74 = vld [vmem:[%s0 + $0x20] sm:$0xff]
    %v75 = vld [vmem:[%s0 + $0x28] sm:$0xff]
    %v76 = vld [vmem:[%s0 + $0x30] sm:$0xff]
    %v77 = vld [vmem:[%s0 + $0x38] sm:$0xff]
    %v78 = vld [vmem:[%s0 + $0x40] sm:$0xff]
    %v79 = vld [vmem:[%s0 + $0x48] sm:$0xff]
    %v80 = vld [vmem:[%s0 + $0x50] sm:$0xff]
    %v81 = vld [vmem:[%s0 + $0x58] sm:$0xff]
    %v82 = vld [vmem:[%s0 + $0x60] sm:$0xff]
    %v83 = vld [vmem:[%s0 + $0x68] sm:$0xff]
    %v84 = vld [vmem:[%s0 + $0x70] sm:$0xff]
    %v85 = vld [vmem:[%s0 + $0x78] sm:$0xff]
    %v86 = vld [vmem:[%s0 + $0x80] sm:$0xff]
    %v87 = vld [vmem:[%s0 + $0x88] sm:$0xff]
    %v88 = vld [vmem:[%s0 + $0x90] sm:$0xff]
    %v89 = vld [vmem:[%s0 + $0x98] sm:$0xff]
    %v90 = vld [vmem:[%s0 + $0xa0] sm:$0xff]
    %v91 = vld [vmem:[%s0 + $0xa8] sm:$0xff]
    %v92 = vld [vmem:[%s0 + $0xb0] sm:$0xff]
    %v93 = vld [vmem:[%s0 + $0xb8] sm:$0xff]
    %v94 = vld [vmem:[%s0 + $0xc0] sm:$0xff]
    %v95 = vld [vmem:[%s0 + $0xc8] sm:$0xff]
    %v96 = vld [vmem:[%s0 + $0xd0] sm:$0xff]
    %v97 = vld [vmem:[%s0 + $0xd8] sm:$0xff]
    %v98 = vld [vmem:[%s0 + $0xe0] sm:$0xff]
    %v99 = vld [vmem:[%s0 + $0xe8] sm:$0xff]
    %v100 = vld [vmem:[%s0 + $0xf0] sm:$0xff]
    %v101 = vld [vmem:[%s0 + $0xf8] sm:$0xff]
    %v102 = vld [vmem:[%s0 + $0x100] sm:$0xff]
    %v103 = vld [vmem:[%s0 + $0x108] sm:$0xff]
    %v104 = vld [vmem:[%s0 + $0x110] sm:$0xff]
    %v105 = vld [vmem:[%s0 + $0x118] sm:$0xff]
    %v106 = vld [vmem:[%s0 + $0x120] sm:$0xff]
    %v107 = vld [vmem:[%s0 + $0x128] sm:$0xff]
    %v108 = vld [vmem:[%s0 + $0x130] sm:$0xff]
    %v109 = vld [vmem:[%s0 + $0x138] sm:$0xff]
    %v110 = vld [vmem:[%s0 + $0x140] sm:$0xff]
    %v111 = vld [vmem:[%s0 + $0x148] sm:$0xff]
    %v112 = vld [vmem:[%s0 + $0x150] sm:$0xff]
    %v113 = vld [vmem:[%s0 + $0x158] sm:$0xff]
    %v114 = vld [vmem:[%s0 + $0x160] sm:$0xff]
    %v115 = vld [vmem:[%s0 + $0x168] sm:$0xff]
    %v116 = vld [vmem:[%s0 + $0x170] sm:$0xff]
    %v117 = vld [vmem:[%s0 + $0x178] sm:$0xff]
    %v118 = vld [vmem:[%s0 + $0x180] sm:$0xff]
    %v119 = vld [vmem:[%s0 + $0x188] sm:$0xff]
    %v120 = vld [vmem:[%s0 + $0x190] sm:$0xff]
    %v121 = vld [vmem:[%s0 + $0x198] sm:$0xff]
    %v122 = vld [vmem:[%s0 + $0x1a0] sm:$0xff]
    %v123 = vld [vmem:[%s0 + $0x1a8] sm:$0xff]
    %v124 = vld [vmem:[%s1] sm:$0xff]
    %v125 = vld [vmem:[%s1 + $0x8] sm:$0xff]
    %v126 = vld [vmem:[%s1 + $0x10] sm:$0xff]
    %v127 = vld [vmem:[%s1 + $0x18] sm:$0x7]
    %v128 = vld [vmem:[%s2] sm:$0x1]
    %v130 = vlaneseq
    %v131 = vshrl.u32 %v130, 7
    %v132 = vsub.s32 0, %v131
    %v133 = vrot.slane %v128, %v132
    %vm135 = vcmask 220160
    %v137 = vsel %vm135, %v70, 0
    %v140 = vsel %vm135, %v71, 0
    %v143 = vsel %vm135, %v72, 0
    %v146 = vsel %vm135, %v73, 0
    %v149 = vsel %vm135, %v74, 0
    %v152 = vsel %vm135, %v75, 0
    %v155 = vsel %vm135, %v76, 0
    %v158 = vsel %vm135, %v77, 0
    %v161 = vsel %vm135, %v78, 0
    %v164 = vsel %vm135, %v79, 0
    %v167 = vsel %vm135, %v80, 0
    %v170 = vsel %vm135, %v81, 0
    %v173 = vsel %vm135, %v82, 0
    %v176 = vsel %vm135, %v83, 0
    %v179 = vsel %vm135, %v84, 0
    %v182 = vsel %vm135, %v85, 0
    %v185 = vsel %vm135, %v86, 0
    %v188 = vsel %vm135, %v87, 0
    %v191 = vsel %vm135, %v88, 0
    %v194 = vsel %vm135, %v89, 0
    %v197 = vsel %vm135, %v90, 0
    %v200 = vsel %vm135, %v91, 0
    %v203 = vsel %vm135, %v92, 0
    %v206 = vsel %vm135, %v93, 0
    %v209 = vsel %vm135, %v94, 0
    %v212 = vsel %vm135, %v95, 0
    %v215 = vsel %vm135, %v96, 0
    %v218 = vsel %vm135, %v97, 0
    %v221 = vsel %vm135, %v98, 0
    %v224 = vsel %vm135, %v99, 0
    %v227 = vsel %vm135, %v100, 0
    %v230 = vsel %vm135, %v101, 0
    %v233 = vsel %vm135, %v102, 0
    %v236 = vsel %vm135, %v103, 0
    %v239 = vsel %vm135, %v104, 0
    %v242 = vsel %vm135, %v105, 0
    %v245 = vsel %vm135, %v106, 0
    %v248 = vsel %vm135, %v107, 0
    %v251 = vsel %vm135, %v108, 0
    %v254 = vsel %vm135, %v109, 0
    %v257 = vsel %vm135, %v110, 0
    %v260 = vsel %vm135, %v111, 0
    %v263 = vsel %vm135, %v112, 0
    %v266 = vsel %vm135, %v113, 0
    %v269 = vsel %vm135, %v114, 0
    %v272 = vsel %vm135, %v115, 0
    %v275 = vsel %vm135, %v116, 0
    %v278 = vsel %vm135, %v117, 0
    %v281 = vsel %vm135, %v118, 0
    %v284 = vsel %vm135, %v119, 0
    %v287 = vsel %vm135, %v120, 0
    %v290 = vsel %vm135, %v121, 0
    %v293 = vsel %vm135, %v122, 0
    %v296 = vsel %vm135, %v123, 0
    %vm298 = vcmask 1042432
    %v300 = vsel %vm298, %v127, 0
    %302 = vmatprep.subr.mxu0 0.0
    %303 = vmatpush1.msra.mxu0 0.0
    %304 = vmatprep.subr.mxu0 0.0
    %305 = vmatpush1.msra.mxu0 0.0
    %306 = vmatprep.subr.mxu0 0.0
    %307 = vmatpush1.msra.mxu0 0.0
    %308 = vmatprep.subr.mxu0 0.0
    %309 = vmatpush1.msra.mxu0 0.0
    %310 = vmatprep.subr.mxu0 0.0
    %311 = vmatpush1.msra.mxu0 0.0
    %312 = vmatprep.subr.mxu0 0.0
    %313 = vmatpush1.msra.mxu0 0.0
    %314 = vmatprep.subr.mxu0 0.0
    %315 = vmatpush1.msra.mxu0 0.0
    %316 = vmatprep.subr.mxu0 0.0
    %317 = vmatpush1.msra.mxu0 0.0
    %318 = vmatprep.subr.mxu0 0.0
    %319 = vmatpush1.msra.mxu0 0.0
    %320 = vmatprep.subr.mxu0 0.0
    %321 = vmatpush1.msra.mxu0 0.0
    %322 = vmatprep.subr.mxu0 0.0
    %323 = vmatpush1.msra.mxu0 0.0
    %324 = vmatprep.subr.mxu0 0.0
    %325 = vmatpush1.msra.mxu0 0.0
    %326 = vmatprep.subr.mxu0 0.0
    %327 = vmatpush1.msra.mxu0 %v300
    %328 = vmatprep.subr.mxu0 0.0
    %329 = vmatpush1.msra.mxu0 %v126
    %330 = vmatprep.subr.mxu0 0.0
    %331 = vmatpush1.msra.mxu0 %v125
    %332 = vmatprep.subr.mxu0 0.0
    %333 = vmatpush1.msra.mxu0 %v124
    %334 = vmatprep.subr.mxu0 0.0
    %335 = vmatpush2.msra.mxu0 0.0
    %336 = vmatprep.subr.mxu0 0.0
    %337 = vmatpush2.msra.mxu0 0.0
    %338 = vmatprep.subr.mxu0 0.0
    %339 = vmatpush2.msra.mxu0 0.0
    %340 = vmatprep.subr.mxu0 0.0
    %341 = vmatpush2.msra.mxu0 0.0
    %342 = vmatprep.subr.mxu0 0.0
    %343 = vmatpush2.msra.mxu0 0.0
    %344 = vmatprep.subr.mxu0 0.0
    %345 = vmatpush2.msra.mxu0 0.0
    %346 = vmatprep.subr.mxu0 0.0
    %347 = vmatpush2.msra.mxu0 0.0
    %348 = vmatprep.subr.mxu0 0.0
    %349 = vmatpush2.msra.mxu0 0.0
    %350 = vmatprep.subr.mxu0 0.0
    %351 = vmatpush2.msra.mxu0 0.0
    %352 = vmatprep.subr.mxu0 0.0
    %353 = vmatpush2.msra.mxu0 0.0
    %354 = vmatprep.subr.mxu0 0.0
    %355 = vmatpush2.msra.mxu0 0.0
    %356 = vmatprep.subr.mxu0 0.0
    %357 = vmatpush2.msra.mxu0 0.0
    %358 = vmatprep.subr.mxu0 0.0
    %359 = vmatpush2.msra.mxu0 0.0
    %360 = vmatprep.subr.mxu0 0.0
    %361 = vmatpush2.msra.mxu0 0.0
    %362 = vmatprep.subr.mxu0 0.0
    %363 = vmatpush2.msra.mxu0 0.0
    %364 = vmatprep.subr.mxu0 0.0
    %365 = vmatpush2.msra.mxu0 0.0
    %366 = vmatprep.mubr.f32.mxu0 0.0
    %367 = vmatmul.mubr.f32.gmra.mxu0 %v137
    %v368 = vpop.f32.mrf.mxu0
    %v369 = vadd.f32 %v133, %v368
    %v370 = vpop.f32.mrf.mxu0
    %371 = vmatprep.mubr.f32.mxu0 0.0
    %372 = vmatmul.mubr.f32.gmra.mxu0 %v140
    %v373 = vpop.f32.mrf.mxu0
    %v374 = vadd.f32 %v133, %v373
    %v375 = vpop.f32.mrf.mxu0
    %376 = vmatprep.mubr.f32.mxu0 0.0
    %377 = vmatmul.mubr.f32.gmra.mxu0 %v143
    %v378 = vpop.f32.mrf.mxu0
    %v379 = vadd.f32 %v133, %v378
    %v380 = vpop.f32.mrf.mxu0
    %381 = vmatprep.mubr.f32.mxu0 0.0
    %382 = vmatmul.mubr.f32.gmra.mxu0 %v146
    %v383 = vpop.f32.mrf.mxu0
    %v384 = vadd.f32 %v133, %v383
    %v385 = vpop.f32.mrf.mxu0
    %386 = vmatprep.mubr.f32.mxu0 0.0
    %387 = vmatmul.mubr.f32.gmra.mxu0 %v149
    %v388 = vpop.f32.mrf.mxu0
    %v389 = vadd.f32 %v133, %v388
    %v390 = vpop.f32.mrf.mxu0
    %391 = vmatprep.mubr.f32.mxu0 0.0
    %392 = vmatmul.mubr.f32.gmra.mxu0 %v152
    %v393 = vpop.f32.mrf.mxu0
    %v394 = vadd.f32 %v133, %v393
    %v395 = vpop.f32.mrf.mxu0
    %396 = vmatprep.mubr.f32.mxu0 0.0
    %397 = vmatmul.mubr.f32.gmra.mxu0 %v155
    %v398 = vpop.f32.mrf.mxu0
    %v399 = vadd.f32 %v133, %v398
    %v400 = vpop.f32.mrf.mxu0
    %401 = vmatprep.mubr.f32.mxu0 0.0
    %402 = vmatmul.mubr.f32.gmra.mxu0 %v158
    %v403 = vpop.f32.mrf.mxu0
    %v404 = vadd.f32 %v133, %v403
    %v405 = vpop.f32.mrf.mxu0
    %406 = vmatprep.mubr.f32.mxu0 0.0
    %407 = vmatmul.mubr.f32.gmra.mxu0 %v161
    %v408 = vpop.f32.mrf.mxu0
    %v409 = vadd.f32 %v133, %v408
    %v410 = vpop.f32.mrf.mxu0
    %411 = vmatprep.mubr.f32.mxu0 0.0
    %412 = vmatmul.mubr.f32.gmra.mxu0 %v164
    %v413 = vpop.f32.mrf.mxu0
    %v414 = vadd.f32 %v133, %v413
    %v415 = vpop.f32.mrf.mxu0
    %416 = vmatprep.mubr.f32.mxu0 0.0
    %417 = vmatmul.mubr.f32.gmra.mxu0 %v167
    %v418 = vpop.f32.mrf.mxu0
    %v419 = vadd.f32 %v133, %v418
    %v420 = vpop.f32.mrf.mxu0
    %421 = vmatprep.mubr.f32.mxu0 0.0
    %422 = vmatmul.mubr.f32.gmra.mxu0 %v170
    %v423 = vpop.f32.mrf.mxu0
    %v424 = vadd.f32 %v133, %v423
    %v425 = vpop.f32.mrf.mxu0
    %426 = vmatprep.mubr.f32.mxu0 0.0
    %427 = vmatmul.mubr.f32.gmra.mxu0 %v173
    %v428 = vpop.f32.mrf.mxu0
    %v429 = vadd.f32 %v133, %v428
    %v430 = vpop.f32.mrf.mxu0
    %431 = vmatprep.mubr.f32.mxu0 0.0
    %432 = vmatmul.mubr.f32.gmra.mxu0 %v176
    %v433 = vpop.f32.mrf.mxu0
    %v434 = vadd.f32 %v133, %v433
    %v435 = vpop.f32.mrf.mxu0
    %436 = vmatprep.mubr.f32.mxu0 0.0
    %437 = vmatmul.mubr.f32.gmra.mxu0 %v179
    %v438 = vpop.f32.mrf.mxu0
    %v439 = vadd.f32 %v133, %v438
    %v440 = vpop.f32.mrf.mxu0
    %441 = vmatprep.mubr.f32.mxu0 0.0
    %442 = vmatmul.mubr.f32.gmra.mxu0 %v182
    %v443 = vpop.f32.mrf.mxu0
    %v444 = vadd.f32 %v133, %v443
    %v445 = vpop.f32.mrf.mxu0
    %446 = vmatprep.mubr.f32.mxu0 0.0
    %447 = vmatmul.mubr.f32.gmra.mxu0 %v185
    %v448 = vpop.f32.mrf.mxu0
    %v449 = vadd.f32 %v133, %v448
    %v450 = vpop.f32.mrf.mxu0
    %451 = vmatprep.mubr.f32.mxu0 0.0
    %452 = vmatmul.mubr.f32.gmra.mxu0 %v188
    %v453 = vpop.f32.mrf.mxu0
    %v454 = vadd.f32 %v133, %v453
    %v455 = vpop.f32.mrf.mxu0
    %456 = vmatprep.mubr.f32.mxu0 0.0
    %457 = vmatmul.mubr.f32.gmra.mxu0 %v191
    %v458 = vpop.f32.mrf.mxu0
    %v459 = vadd.f32 %v133, %v458
    %v460 = vpop.f32.mrf.mxu0
    %461 = vmatprep.mubr.f32.mxu0 0.0
    %462 = vmatmul.mubr.f32.gmra.mxu0 %v194
    %v463 = vpop.f32.mrf.mxu0
    %v464 = vadd.f32 %v133, %v463
    %v465 = vpop.f32.mrf.mxu0
    %466 = vmatprep.mubr.f32.mxu0 0.0
    %467 = vmatmul.mubr.f32.gmra.mxu0 %v197
    %v468 = vpop.f32.mrf.mxu0
    %v469 = vadd.f32 %v133, %v468
    %v470 = vpop.f32.mrf.mxu0
    %471 = vmatprep.mubr.f32.mxu0 0.0
    %472 = vmatmul.mubr.f32.gmra.mxu0 %v200
    %v473 = vpop.f32.mrf.mxu0
    %v474 = vadd.f32 %v133, %v473
    %v475 = vpop.f32.mrf.mxu0
    %476 = vmatprep.mubr.f32.mxu0 0.0
    %477 = vmatmul.mubr.f32.gmra.mxu0 %v203
    %v478 = vpop.f32.mrf.mxu0
    %v479 = vadd.f32 %v133, %v478
    %v480 = vpop.f32.mrf.mxu0
    %481 = vmatprep.mubr.f32.mxu0 0.0
    %482 = vmatmul.mubr.f32.gmra.mxu0 %v206
    %v483 = vpop.f32.mrf.mxu0
    %v484 = vadd.f32 %v133, %v483
    %v485 = vpop.f32.mrf.mxu0
    %486 = vmatprep.mubr.f32.mxu0 0.0
    %487 = vmatmul.mubr.f32.gmra.mxu0 %v209
    %v488 = vpop.f32.mrf.mxu0
    %v489 = vadd.f32 %v133, %v488
    %v490 = vpop.f32.mrf.mxu0
    %491 = vmatprep.mubr.f32.mxu0 0.0
    %492 = vmatmul.mubr.f32.gmra.mxu0 %v212
    %v493 = vpop.f32.mrf.mxu0
    %v494 = vadd.f32 %v133, %v493
    %v495 = vpop.f32.mrf.mxu0
    %496 = vmatprep.mubr.f32.mxu0 0.0
    %497 = vmatmul.mubr.f32.gmra.mxu0 %v215
    %v498 = vpop.f32.mrf.mxu0
    %v499 = vadd.f32 %v133, %v498
    %v500 = vpop.f32.mrf.mxu0
    %501 = vmatprep.mubr.f32.mxu0 0.0
    %502 = vmatmul.mubr.f32.gmra.mxu0 %v218
    %v503 = vpop.f32.mrf.mxu0
    %v504 = vadd.f32 %v133, %v503
    %v505 = vpop.f32.mrf.mxu0
    %506 = vmatprep.mubr.f32.mxu0 0.0
    %507 = vmatmul.mubr.f32.gmra.mxu0 %v221
    %v508 = vpop.f32.mrf.mxu0
    %v509 = vadd.f32 %v133, %v508
    %v510 = vpop.f32.mrf.mxu0
    %511 = vmatprep.mubr.f32.mxu0 0.0
    %512 = vmatmul.mubr.f32.gmra.mxu0 %v224
    %v513 = vpop.f32.mrf.mxu0
    %v514 = vadd.f32 %v133, %v513
    %v515 = vpop.f32.mrf.mxu0
    %516 = vmatprep.mubr.f32.mxu0 0.0
    %517 = vmatmul.mubr.f32.gmra.mxu0 %v227
    %v518 = vpop.f32.mrf.mxu0
    %v519 = vadd.f32 %v133, %v518
    %v520 = vpop.f32.mrf.mxu0
    %521 = vmatprep.mubr.f32.mxu0 0.0
    %522 = vmatmul.mubr.f32.gmra.mxu0 %v230
    %v523 = vpop.f32.mrf.mxu0
    %v524 = vadd.f32 %v133, %v523
    %v525 = vpop.f32.mrf.mxu0
    %526 = vmatprep.mubr.f32.mxu0 0.0
    %527 = vmatmul.mubr.f32.gmra.mxu0 %v233
    %v528 = vpop.f32.mrf.mxu0
    %v529 = vadd.f32 %v133, %v528
    %v530 = vpop.f32.mrf.mxu0
    %531 = vmatprep.mubr.f32.mxu0 0.0
    %532 = vmatmul.mubr.f32.gmra.mxu0 %v236
    %v533 = vpop.f32.mrf.mxu0
    %v534 = vadd.f32 %v133, %v533
    %v535 = vpop.f32.mrf.mxu0
    %536 = vmatprep.mubr.f32.mxu0 0.0
    %537 = vmatmul.mubr.f32.gmra.mxu0 %v239
    %v538 = vpop.f32.mrf.mxu0
    %v539 = vadd.f32 %v133, %v538
    %v540 = vpop.f32.mrf.mxu0
    %541 = vmatprep.mubr.f32.mxu0 0.0
    %542 = vmatmul.mubr.f32.gmra.mxu0 %v242
    %v543 = vpop.f32.mrf.mxu0
    %v544 = vadd.f32 %v133, %v543
    %v545 = vpop.f32.mrf.mxu0
    %546 = vmatprep.mubr.f32.mxu0 0.0
    %547 = vmatmul.mubr.f32.gmra.mxu0 %v245
    %v548 = vpop.f32.mrf.mxu0
    %v549 = vadd.f32 %v133, %v548
    %v550 = vpop.f32.mrf.mxu0
    %551 = vmatprep.mubr.f32.mxu0 0.0
    %552 = vmatmul.mubr.f32.gmra.mxu0 %v248
    %v553 = vpop.f32.mrf.mxu0
    %v554 = vadd.f32 %v133, %v553
    %v555 = vpop.f32.mrf.mxu0
    %556 = vmatprep.mubr.f32.mxu0 0.0
    %557 = vmatmul.mubr.f32.gmra.mxu0 %v251
    %v558 = vpop.f32.mrf.mxu0
    %v559 = vadd.f32 %v133, %v558
    %v560 = vpop.f32.mrf.mxu0
    %561 = vmatprep.mubr.f32.mxu0 0.0
    %562 = vmatmul.mubr.f32.gmra.mxu0 %v254
    %v563 = vpop.f32.mrf.mxu0
    %v564 = vadd.f32 %v133, %v563
    %v565 = vpop.f32.mrf.mxu0
    %566 = vmatprep.mubr.f32.mxu0 0.0
    %567 = vmatmul.mubr.f32.gmra.mxu0 %v257
    %v568 = vpop.f32.mrf.mxu0
    %v569 = vadd.f32 %v133, %v568
    %v570 = vpop.f32.mrf.mxu0
    %571 = vmatprep.mubr.f32.mxu0 0.0
    %572 = vmatmul.mubr.f32.gmra.mxu0 %v260
    %v573 = vpop.f32.mrf.mxu0
    %v574 = vadd.f32 %v133, %v573
    %v575 = vpop.f32.mrf.mxu0
    %576 = vmatprep.mubr.f32.mxu0 0.0
    %577 = vmatmul.mubr.f32.gmra.mxu0 %v263
    %v578 = vpop.f32.mrf.mxu0
    %v579 = vadd.f32 %v133, %v578
    %v580 = vpop.f32.mrf.mxu0
    %581 = vmatprep.mubr.f32.mxu0 0.0
    %582 = vmatmul.mubr.f32.gmra.mxu0 %v266
    %v583 = vpop.f32.mrf.mxu0
    %v584 = vadd.f32 %v133, %v583
    %v585 = vpop.f32.mrf.mxu0
    %586 = vmatprep.mubr.f32.mxu0 0.0
    %587 = vmatmul.mubr.f32.gmra.mxu0 %v269
    %v588 = vpop.f32.mrf.mxu0
    %v589 = vadd.f32 %v133, %v588
    %v590 = vpop.f32.mrf.mxu0
    %591 = vmatprep.mubr.f32.mxu0 0.0
    %592 = vmatmul.mubr.f32.gmra.mxu0 %v272
    %v593 = vpop.f32.mrf.mxu0
    %v594 = vadd.f32 %v133, %v593
    %v595 = vpop.f32.mrf.mxu0
    %596 = vmatprep.mubr.f32.mxu0 0.0
    %597 = vmatmul.mubr.f32.gmra.mxu0 %v275
    %v598 = vpop.f32.mrf.mxu0
    %v599 = vadd.f32 %v133, %v598
    %v600 = vpop.f32.mrf.mxu0
    %601 = vmatprep.mubr.f32.mxu0 0.0
    %602 = vmatmul.mubr.f32.gmra.mxu0 %v278
    %v603 = vpop.f32.mrf.mxu0
    %v604 = vadd.f32 %v133, %v603
    %v605 = vpop.f32.mrf.mxu0
    %606 = vmatprep.mubr.f32.mxu0 0.0
    %607 = vmatmul.mubr.f32.gmra.mxu0 %v281
    %v608 = vpop.f32.mrf.mxu0
    %v609 = vadd.f32 %v133, %v608
    %v610 = vpop.f32.mrf.mxu0
    %611 = vmatprep.mubr.f32.mxu0 0.0
    %612 = vmatmul.mubr.f32.gmra.mxu0 %v284
    %v613 = vpop.f32.mrf.mxu0
    %v614 = vadd.f32 %v133, %v613
    %v615 = vpop.f32.mrf.mxu0
    %616 = vmatprep.mubr.f32.mxu0 0.0
    %617 = vmatmul.mubr.f32.gmra.mxu0 %v287
    %v618 = vpop.f32.mrf.mxu0
    %v619 = vadd.f32 %v133, %v618
    %v620 = vpop.f32.mrf.mxu0
    %621 = vmatprep.mubr.f32.mxu0 0.0
    %622 = vmatmul.mubr.f32.gmra.mxu0 %v290
    %v623 = vpop.f32.mrf.mxu0
    %v624 = vadd.f32 %v133, %v623
    %v625 = vpop.f32.mrf.mxu0
    %626 = vmatprep.mubr.f32.mxu0 0.0
    %627 = vmatmul.mubr.f32.gmra.mxu0 %v293
    %v628 = vpop.f32.mrf.mxu0
    %v629 = vadd.f32 %v133, %v628
    %v630 = vpop.f32.mrf.mxu0
    %631 = vmatprep.mubr.f32.mxu0 0.0
    %632 = vmatmul.mubr.f32.gmra.mxu0 %v296
    %v633 = vpop.f32.mrf.mxu0
    %v634 = vadd.f32 %v133, %v633
    %v635 = vpop.f32.mrf.mxu0
    %636 = vdwg.mxu0
    %v637 = vld [vmem:[%s3] sm:$0x1]
    %v638 = vld [vmem:[%s4] sm:$0x1]
    %vm639 = vcmask 130048
    %v640 = vsel %vm639, %v369, 0.0
    %v641 = vsel %vm639, %v374, 0.0
    %v642 = vadd.f32 %v640, %v641
    %v643 = vsel %vm639, %v379, 0.0
    %v644 = vadd.f32 %v642, %v643
    %v645 = vsel %vm639, %v384, 0.0
    %v646 = vadd.f32 %v644, %v645
    %v647 = vsel %vm639, %v389, 0.0
    %v648 = vadd.f32 %v646, %v647
    %v649 = vsel %vm639, %v394, 0.0
    %v650 = vadd.f32 %v648, %v649
    %v651 = vsel %vm639, %v399, 0.0
    %v652 = vadd.f32 %v650, %v651
    %v653 = vsel %vm639, %v404, 0.0
    %v654 = vadd.f32 %v652, %v653
    %v655 = vsel %vm639, %v409, 0.0
    %v656 = vadd.f32 %v654, %v655
    %v657 = vsel %vm639, %v414, 0.0
    %v658 = vadd.f32 %v656, %v657
    %v659 = vsel %vm639, %v419, 0.0
    %v660 = vadd.f32 %v658, %v659
    %v661 = vsel %vm639, %v424, 0.0
    %v662 = vadd.f32 %v660, %v661
    %v663 = vsel %vm639, %v429, 0.0
    %v664 = vadd.f32 %v662, %v663
    %v665 = vsel %vm639, %v434, 0.0
    %v666 = vadd.f32 %v664, %v665
    %v667 = vsel %vm639, %v439, 0.0
    %v668 = vadd.f32 %v666, %v667
    %v669 = vsel %vm639, %v444, 0.0
    %v670 = vadd.f32 %v668, %v669
    %v671 = vsel %vm639, %v449, 0.0
    %v672 = vadd.f32 %v670, %v671
    %v673 = vsel %vm639, %v454, 0.0
    %v674 = vadd.f32 %v672, %v673
    %v675 = vsel %vm639, %v459, 0.0
    %v676 = vadd.f32 %v674, %v675
    %v677 = vsel %vm639, %v464, 0.0
    %v678 = vadd.f32 %v676, %v677
    %v679 = vsel %vm639, %v469, 0.0
    %v680 = vadd.f32 %v678, %v679
    %v681 = vsel %vm639, %v474, 0.0
    %v682 = vadd.f32 %v680, %v681
    %v683 = vsel %vm639, %v479, 0.0
    %v684 = vadd.f32 %v682, %v683
    %v685 = vsel %vm639, %v484, 0.0
    %v686 = vadd.f32 %v684, %v685
    %v687 = vsel %vm639, %v489, 0.0
    %v688 = vadd.f32 %v686, %v687
    %v689 = vsel %vm639, %v494, 0.0
    %v690 = vadd.f32 %v688, %v689
    %v691 = vsel %vm639, %v499, 0.0
    %v692 = vadd.f32 %v690, %v691
    %v693 = vsel %vm639, %v504, 0.0
    %v694 = vadd.f32 %v692, %v693
    %v695 = vsel %vm639, %v509, 0.0
    %v696 = vadd.f32 %v694, %v695
    %v697 = vsel %vm639, %v514, 0.0
    %v698 = vadd.f32 %v696, %v697
    %v699 = vsel %vm639, %v519, 0.0
    %v700 = vadd.f32 %v698, %v699
    %v701 = vsel %vm639, %v524, 0.0
    %v702 = vadd.f32 %v700, %v701
    %v703 = vsel %vm639, %v529, 0.0
    %v704 = vadd.f32 %v702, %v703
    %v705 = vsel %vm639, %v534, 0.0
    %v706 = vadd.f32 %v704, %v705
    %v707 = vsel %vm639, %v539, 0.0
    %v708 = vadd.f32 %v706, %v707
    %v709 = vsel %vm639, %v544, 0.0
    %v710 = vadd.f32 %v708, %v709
    %v711 = vsel %vm639, %v549, 0.0
    %v712 = vadd.f32 %v710, %v711
    %v713 = vsel %vm639, %v554, 0.0
    %v714 = vadd.f32 %v712, %v713
    %v715 = vsel %vm639, %v559, 0.0
    %v716 = vadd.f32 %v714, %v715
    %v717 = vsel %vm639, %v564, 0.0
    %v718 = vadd.f32 %v716, %v717
    %v719 = vsel %vm639, %v569, 0.0
    %v720 = vadd.f32 %v718, %v719
    %v721 = vsel %vm639, %v574, 0.0
    %v722 = vadd.f32 %v720, %v721
    %v723 = vsel %vm639, %v579, 0.0
    %v724 = vadd.f32 %v722, %v723
    %v725 = vsel %vm639, %v584, 0.0
    %v726 = vadd.f32 %v724, %v725
    %v727 = vsel %vm639, %v589, 0.0
    %v728 = vadd.f32 %v726, %v727
    %v729 = vsel %vm639, %v594, 0.0
    %v730 = vadd.f32 %v728, %v729
    %v731 = vsel %vm639, %v599, 0.0
    %v732 = vadd.f32 %v730, %v731
    %v733 = vsel %vm639, %v604, 0.0
    %v734 = vadd.f32 %v732, %v733
    %v735 = vsel %vm639, %v609, 0.0
    %v736 = vadd.f32 %v734, %v735
    %v737 = vsel %vm639, %v614, 0.0
    %v738 = vadd.f32 %v736, %v737
    %v739 = vsel %vm639, %v619, 0.0
    %v740 = vadd.f32 %v738, %v739
    %v741 = vsel %vm639, %v624, 0.0
    %v742 = vadd.f32 %v740, %v741
    %v743 = vsel %vm639, %v629, 0.0
    %v744 = vadd.f32 %v742, %v743
    %v745 = vsel %vm639, %v634, 0.0
    %v746 = vadd.f32 %v744, %v745
    %v747 = vrot.slane %v746, 4
    %v748 = vadd.f32 %v746, %v747
    %v749 = vrot.slane %v748, 2
    %v750 = vadd.f32 %v748, %v749
    %v751 = vrot.slane %v750, 1
    %v752 = vadd.f32 %v750, %v751
    %v753 = vrcp.pop 432.0
    %v754 = vmul.f32 %v752, %v753
    %v755 = vsub.f32 %v369, %v754
    %v756 = vsub.f32 %v374, %v754
    %v757 = vsub.f32 %v379, %v754
    %v758 = vsub.f32 %v384, %v754
    %v759 = vsub.f32 %v389, %v754
    %v760 = vsub.f32 %v394, %v754
    %v761 = vsub.f32 %v399, %v754
    %v762 = vsub.f32 %v404, %v754
    %v763 = vsub.f32 %v409, %v754
    %v764 = vsub.f32 %v414, %v754
    %v765 = vsub.f32 %v419, %v754
    %v766 = vsub.f32 %v424, %v754
    %v767 = vsub.f32 %v429, %v754
    %v768 = vsub.f32 %v434, %v754
    %v769 = vsub.f32 %v439, %v754
    %v770 = vsub.f32 %v444, %v754
    %v771 = vsub.f32 %v449, %v754
    %v772 = vsub.f32 %v454, %v754
    %v773 = vsub.f32 %v459, %v754
    %v774 = vsub.f32 %v464, %v754
    %v775 = vsub.f32 %v469, %v754
    %v776 = vsub.f32 %v474, %v754
    %v777 = vsub.f32 %v479, %v754
    %v778 = vsub.f32 %v484, %v754
    %v779 = vsub.f32 %v489, %v754
    %v780 = vsub.f32 %v494, %v754
    %v781 = vsub.f32 %v499, %v754
    %v782 = vsub.f32 %v504, %v754
    %v783 = vsub.f32 %v509, %v754
    %v784 = vsub.f32 %v514, %v754
    %v785 = vsub.f32 %v519, %v754
    %v786 = vsub.f32 %v524, %v754
    %v787 = vsub.f32 %v529, %v754
    %v788 = vsub.f32 %v534, %v754
    %v789 = vsub.f32 %v539, %v754
    %v790 = vsub.f32 %v544, %v754
    %v791 = vsub.f32 %v549, %v754
    %v792 = vsub.f32 %v554, %v754
    %v793 = vsub.f32 %v559, %v754
    %v794 = vsub.f32 %v564, %v754
    %v795 = vsub.f32 %v569, %v754
    %v796 = vsub.f32 %v574, %v754
    %v797 = vsub.f32 %v579, %v754
    %v798 = vsub.f32 %v584, %v754
    %v799 = vsub.f32 %v589, %v754
    %v800 = vsub.f32 %v594, %v754
    %v801 = vsub.f32 %v599, %v754
    %v802 = vsub.f32 %v604, %v754
    %v803 = vsub.f32 %v609, %v754
    %v804 = vsub.f32 %v614, %v754
    %v805 = vsub.f32 %v619, %v754
    %v806 = vsub.f32 %v624, %v754
    %v807 = vsub.f32 %v629, %v754
    %v808 = vsub.f32 %v634, %v754
    %v809 = vmul.f32 %v755, %v755
    %v810 = vmul.f32 %v756, %v756
    %v811 = vmul.f32 %v757, %v757
    %v812 = vmul.f32 %v758, %v758
    %v813 = vmul.f32 %v759, %v759
    %v814 = vmul.f32 %v760, %v760
    %v815 = vmul.f32 %v761, %v761
    %v816 = vmul.f32 %v762, %v762
    %v817 = vmul.f32 %v763, %v763
    %v818 = vmul.f32 %v764, %v764
    %v819 = vmul.f32 %v765, %v765
    %v820 = vmul.f32 %v766, %v766
    %v821 = vmul.f32 %v767, %v767
    %v822 = vmul.f32 %v768, %v768
    %v823 = vmul.f32 %v769, %v769
    %v824 = vmul.f32 %v770, %v770
    %v825 = vmul.f32 %v771, %v771
    %v826 = vmul.f32 %v772, %v772
    %v827 = vmul.f32 %v773, %v773
    %v828 = vmul.f32 %v774, %v774
    %v829 = vmul.f32 %v775, %v775
    %v830 = vmul.f32 %v776, %v776
    %v831 = vmul.f32 %v777, %v777
    %v832 = vmul.f32 %v778, %v778
    %v833 = vmul.f32 %v779, %v779
    %v834 = vmul.f32 %v780, %v780
    %v835 = vmul.f32 %v781, %v781
    %v836 = vmul.f32 %v782, %v782
    %v837 = vmul.f32 %v783, %v783
    %v838 = vmul.f32 %v784, %v784
    %v839 = vmul.f32 %v785, %v785
    %v840 = vmul.f32 %v786, %v786
    %v841 = vmul.f32 %v787, %v787
    %v842 = vmul.f32 %v788, %v788
    %v843 = vmul.f32 %v789, %v789
    %v844 = vmul.f32 %v790, %v790
    %v845 = vmul.f32 %v791, %v791
    %v846 = vmul.f32 %v792, %v792
    %v847 = vmul.f32 %v793, %v793
    %v848 = vmul.f32 %v794, %v794
    %v849 = vmul.f32 %v795, %v795
    %v850 = vmul.f32 %v796, %v796
    %v851 = vmul.f32 %v797, %v797
    %v852 = vmul.f32 %v798, %v798
    %v853 = vmul.f32 %v799, %v799
    %v854 = vmul.f32 %v800, %v800
    %v855 = vmul.f32 %v801, %v801
    %v856 = vmul.f32 %v802, %v802
    %v857 = vmul.f32 %v803, %v803
    %v858 = vmul.f32 %v804, %v804
    %v859 = vmul.f32 %v805, %v805
    %v860 = vmul.f32 %v806, %v806
    %v861 = vmul.f32 %v807, %v807
    %v862 = vmul.f32 %v808, %v808
    %v863 = vsel %vm639, %v809, 0.0
    %v864 = vsel %vm639, %v810, 0.0
    %v865 = vadd.f32 %v863, %v864
    %v866 = vsel %vm639, %v811, 0.0
    %v867 = vadd.f32 %v865, %v866
    %v868 = vsel %vm639, %v812, 0.0
    %v869 = vadd.f32 %v867, %v868
    %v870 = vsel %vm639, %v813, 0.0
    %v871 = vadd.f32 %v869, %v870
    %v872 = vsel %vm639, %v814, 0.0
    %v873 = vadd.f32 %v871, %v872
    %v874 = vsel %vm639, %v815, 0.0
    %v875 = vadd.f32 %v873, %v874
    %v876 = vsel %vm639, %v816, 0.0
    %v877 = vadd.f32 %v875, %v876
    %v878 = vsel %vm639, %v817, 0.0
    %v879 = vadd.f32 %v877, %v878
    %v880 = vsel %vm639, %v818, 0.0
    %v881 = vadd.f32 %v879, %v880
    %v882 = vsel %vm639, %v819, 0.0
    %v883 = vadd.f32 %v881, %v882
    %v884 = vsel %vm639, %v820, 0.0
    %v885 = vadd.f32 %v883, %v884
    %v886 = vsel %vm639, %v821, 0.0
    %v887 = vadd.f32 %v885, %v886
    %v888 = vsel %vm639, %v822, 0.0
    %v889 = vadd.f32 %v887, %v888
    %v890 = vsel %vm639, %v823, 0.0
    %v891 = vadd.f32 %v889, %v890
    %v892 = vsel %vm639, %v824, 0.0
    %v893 = vadd.f32 %v891, %v892
    %v894 = vsel %vm639, %v825, 0.0
    %v895 = vadd.f32 %v893, %v894
    %v896 = vsel %vm639, %v826, 0.0
    %v897 = vadd.f32 %v895, %v896
    %v898 = vsel %vm639, %v827, 0.0
    %v899 = vadd.f32 %v897, %v898
    %v900 = vsel %vm639, %v828, 0.0
    %v901 = vadd.f32 %v899, %v900
    %v902 = vsel %vm639, %v829, 0.0
    %v903 = vadd.f32 %v901, %v902
    %v904 = vsel %vm639, %v830, 0.0
    %v905 = vadd.f32 %v903, %v904
    %v906 = vsel %vm639, %v831, 0.0
    %v907 = vadd.f32 %v905, %v906
    %v908 = vsel %vm639, %v832, 0.0
    %v909 = vadd.f32 %v907, %v908
    %v910 = vsel %vm639, %v833, 0.0
    %v911 = vadd.f32 %v909, %v910
    %v912 = vsel %vm639, %v834, 0.0
    %v913 = vadd.f32 %v911, %v912
    %v914 = vsel %vm639, %v835, 0.0
    %v915 = vadd.f32 %v913, %v914
    %v916 = vsel %vm639, %v836, 0.0
    %v917 = vadd.f32 %v915, %v916
    %v918 = vsel %vm639, %v837, 0.0
    %v919 = vadd.f32 %v917, %v918
    %v920 = vsel %vm639, %v838, 0.0
    %v921 = vadd.f32 %v919, %v920
    %v922 = vsel %vm639, %v839, 0.0
    %v923 = vadd.f32 %v921, %v922
    %v924 = vsel %vm639, %v840, 0.0
    %v925 = vadd.f32 %v923, %v924
    %v926 = vsel %vm639, %v841, 0.0
    %v927 = vadd.f32 %v925, %v926
    %v928 = vsel %vm639, %v842, 0.0
    %v929 = vadd.f32 %v927, %v928
    %v930 = vsel %vm639, %v843, 0.0
    %v931 = vadd.f32 %v929, %v930
    %v932 = vsel %vm639, %v844, 0.0
    %v933 = vadd.f32 %v931, %v932
    %v934 = vsel %vm639, %v845, 0.0
    %v935 = vadd.f32 %v933, %v934
    %v936 = vsel %vm639, %v846, 0.0
    %v937 = vadd.f32 %v935, %v936
    %v938 = vsel %vm639, %v847, 0.0
    %v939 = vadd.f32 %v937, %v938
    %v940 = vsel %vm639, %v848, 0.0
    %v941 = vadd.f32 %v939, %v940
    %v942 = vsel %vm639, %v849, 0.0
    %v943 = vadd.f32 %v941, %v942
    %v944 = vsel %vm639, %v850, 0.0
    %v945 = vadd.f32 %v943, %v944
    %v946 = vsel %vm639, %v851, 0.0
    %v947 = vadd.f32 %v945, %v946
    %v948 = vsel %vm639, %v852, 0.0
    %v949 = vadd.f32 %v947, %v948
    %v950 = vsel %vm639, %v853, 0.0
    %v951 = vadd.f32 %v949, %v950
    %v952 = vsel %vm639, %v854, 0.0
    %v953 = vadd.f32 %v951, %v952
    %v954 = vsel %vm639, %v855, 0.0
    %v955 = vadd.f32 %v953, %v954
    %v956 = vsel %vm639, %v856, 0.0
    %v957 = vadd.f32 %v955, %v956
    %v958 = vsel %vm639, %v857, 0.0
    %v959 = vadd.f32 %v957, %v958
    %v960 = vsel %vm639, %v858, 0.0
    %v961 = vadd.f32 %v959, %v960
    %v962 = vsel %vm639, %v859, 0.0
    %v963 = vadd.f32 %v961, %v962
    %v964 = vsel %vm639, %v860, 0.0
    %v965 = vadd.f32 %v963, %v964
    %v966 = vsel %vm639, %v861, 0.0
    %v967 = vadd.f32 %v965, %v966
    %v968 = vsel %vm639, %v862, 0.0
    %v969 = vadd.f32 %v967, %v968
    %v970 = vrot.slane %v969, 4
    %v971 = vadd.f32 %v969, %v970
    %v972 = vrot.slane %v971, 2
    %v973 = vadd.f32 %v971, %v972
    %v974 = vrot.slane %v973, 1
    %v975 = vadd.f32 %v973, %v974
    %v976 = vmul.f32 %v975, %v753
    %v977 = vadd.f32 %v976, 1e-05
    %v978 = vrsqrt.pop %v977
    %v979 = vmul.f32 %v755, %v978
    %v980 = vmul.f32 %v756, %v978
    %v981 = vmul.f32 %v757, %v978
    %v982 = vmul.f32 %v758, %v978
    %v983 = vmul.f32 %v759, %v978
    %v984 = vmul.f32 %v760, %v978
    %v985 = vmul.f32 %v761, %v978
    %v986 = vmul.f32 %v762, %v978
    %v987 = vmul.f32 %v763, %v978
    %v988 = vmul.f32 %v764, %v978
    %v989 = vmul.f32 %v765, %v978
    %v990 = vmul.f32 %v766, %v978
    %v991 = vmul.f32 %v767, %v978
    %v992 = vmul.f32 %v768, %v978
    %v993 = vmul.f32 %v769, %v978
    %v994 = vmul.f32 %v770, %v978
    %v995 = vmul.f32 %v771, %v978
    %v996 = vmul.f32 %v772, %v978
    %v997 = vmul.f32 %v773, %v978
    %v998 = vmul.f32 %v774, %v978
    %v999 = vmul.f32 %v775, %v978
    %v1000 = vmul.f32 %v776, %v978
    %v1001 = vmul.f32 %v777, %v978
    %v1002 = vmul.f32 %v778, %v978
    %v1003 = vmul.f32 %v779, %v978
    %v1004 = vmul.f32 %v780, %v978
    %v1005 = vmul.f32 %v781, %v978
    %v1006 = vmul.f32 %v782, %v978
    %v1007 = vmul.f32 %v783, %v978
    %v1008 = vmul.f32 %v784, %v978
    %v1009 = vmul.f32 %v785, %v978
    %v1010 = vmul.f32 %v786, %v978
    %v1011 = vmul.f32 %v787, %v978
    %v1012 = vmul.f32 %v788, %v978
    %v1013 = vmul.f32 %v789, %v978
    %v1014 = vmul.f32 %v790, %v978
    %v1015 = vmul.f32 %v791, %v978
    %v1016 = vmul.f32 %v792, %v978
    %v1017 = vmul.f32 %v793, %v978
    %v1018 = vmul.f32 %v794, %v978
    %v1019 = vmul.f32 %v795, %v978
    %v1020 = vmul.f32 %v796, %v978
    %v1021 = vmul.f32 %v797, %v978
    %v1022 = vmul.f32 %v798, %v978
    %v1023 = vmul.f32 %v799, %v978
    %v1024 = vmul.f32 %v800, %v978
    %v1025 = vmul.f32 %v801, %v978
    %v1026 = vmul.f32 %v802, %v978
    %v1027 = vmul.f32 %v803, %v978
    %v1028 = vmul.f32 %v804, %v978
    %v1029 = vmul.f32 %v805, %v978
    %v1030 = vmul.f32 %v806, %v978
    %v1031 = vmul.f32 %v807, %v978
    %v1032 = vmul.f32 %v808, %v978
    %v1034 = vlaneseq
    %v1035 = vshrl.u32 %v1034, 7
    %v1036 = vsub.s32 0, %v1035
    %v1037 = vrot.slane %v637, %v1036
    %v1039 = vmul.f32 %v979, %v1037
    %v1040 = vmul.f32 %v980, %v1037
    %v1041 = vmul.f32 %v981, %v1037
    %v1042 = vmul.f32 %v982, %v1037
    %v1043 = vmul.f32 %v983, %v1037
    %v1044 = vmul.f32 %v984, %v1037
    %v1045 = vmul.f32 %v985, %v1037
    %v1046 = vmul.f32 %v986, %v1037
    %v1047 = vmul.f32 %v987, %v1037
    %v1048 = vmul.f32 %v988, %v1037
    %v1049 = vmul.f32 %v989, %v1037
    %v1050 = vmul.f32 %v990, %v1037
    %v1051 = vmul.f32 %v991, %v1037
    %v1052 = vmul.f32 %v992, %v1037
    %v1053 = vmul.f32 %v993, %v1037
    %v1054 = vmul.f32 %v994, %v1037
    %v1055 = vmul.f32 %v995, %v1037
    %v1056 = vmul.f32 %v996, %v1037
    %v1057 = vmul.f32 %v997, %v1037
    %v1058 = vmul.f32 %v998, %v1037
    %v1059 = vmul.f32 %v999, %v1037
    %v1060 = vmul.f32 %v1000, %v1037
    %v1061 = vmul.f32 %v1001, %v1037
    %v1062 = vmul.f32 %v1002, %v1037
    %v1063 = vmul.f32 %v1003, %v1037
    %v1064 = vmul.f32 %v1004, %v1037
    %v1065 = vmul.f32 %v1005, %v1037
    %v1066 = vmul.f32 %v1006, %v1037
    %v1067 = vmul.f32 %v1007, %v1037
    %v1068 = vmul.f32 %v1008, %v1037
    %v1069 = vmul.f32 %v1009, %v1037
    %v1070 = vmul.f32 %v1010, %v1037
    %v1071 = vmul.f32 %v1011, %v1037
    %v1072 = vmul.f32 %v1012, %v1037
    %v1073 = vmul.f32 %v1013, %v1037
    %v1074 = vmul.f32 %v1014, %v1037
    %v1075 = vmul.f32 %v1015, %v1037
    %v1076 = vmul.f32 %v1016, %v1037
    %v1077 = vmul.f32 %v1017, %v1037
    %v1078 = vmul.f32 %v1018, %v1037
    %v1079 = vmul.f32 %v1019, %v1037
    %v1080 = vmul.f32 %v1020, %v1037
    %v1081 = vmul.f32 %v1021, %v1037
    %v1082 = vmul.f32 %v1022, %v1037
    %v1083 = vmul.f32 %v1023, %v1037
    %v1084 = vmul.f32 %v1024, %v1037
    %v1085 = vmul.f32 %v1025, %v1037
    %v1086 = vmul.f32 %v1026, %v1037
    %v1087 = vmul.f32 %v1027, %v1037
    %v1088 = vmul.f32 %v1028, %v1037
    %v1089 = vmul.f32 %v1029, %v1037
    %v1090 = vmul.f32 %v1030, %v1037
    %v1091 = vmul.f32 %v1031, %v1037
    %v1092 = vmul.f32 %v1032, %v1037
    %v1094 = vlaneseq
    %v1095 = vshrl.u32 %v1094, 7
    %v1096 = vsub.s32 0, %v1095
    %v1097 = vrot.slane %v638, %v1096
    %v1099 = vadd.f32 %v1039, %v1097
    %v1100 = vadd.f32 %v1040, %v1097
    %v1101 = vadd.f32 %v1041, %v1097
    %v1102 = vadd.f32 %v1042, %v1097
    %v1103 = vadd.f32 %v1043, %v1097
    %v1104 = vadd.f32 %v1044, %v1097
    %v1105 = vadd.f32 %v1045, %v1097
    %v1106 = vadd.f32 %v1046, %v1097
    %v1107 = vadd.f32 %v1047, %v1097
    %v1108 = vadd.f32 %v1048, %v1097
    %v1109 = vadd.f32 %v1049, %v1097
    %v1110 = vadd.f32 %v1050, %v1097
    %v1111 = vadd.f32 %v1051, %v1097
    %v1112 = vadd.f32 %v1052, %v1097
    %v1113 = vadd.f32 %v1053, %v1097
    %v1114 = vadd.f32 %v1054, %v1097
    %v1115 = vadd.f32 %v1055, %v1097
    %v1116 = vadd.f32 %v1056, %v1097
    %v1117 = vadd.f32 %v1057, %v1097
    %v1118 = vadd.f32 %v1058, %v1097
    %v1119 = vadd.f32 %v1059, %v1097
    %v1120 = vadd.f32 %v1060, %v1097
    %v1121 = vadd.f32 %v1061, %v1097
    %v1122 = vadd.f32 %v1062, %v1097
    %v1123 = vadd.f32 %v1063, %v1097
    %v1124 = vadd.f32 %v1064, %v1097
    %v1125 = vadd.f32 %v1065, %v1097
    %v1126 = vadd.f32 %v1066, %v1097
    %v1127 = vadd.f32 %v1067, %v1097
    %v1128 = vadd.f32 %v1068, %v1097
    %v1129 = vadd.f32 %v1069, %v1097
    %v1130 = vadd.f32 %v1070, %v1097
    %v1131 = vadd.f32 %v1071, %v1097
    %v1132 = vadd.f32 %v1072, %v1097
    %v1133 = vadd.f32 %v1073, %v1097
    %v1134 = vadd.f32 %v1074, %v1097
    %v1135 = vadd.f32 %v1075, %v1097
    %v1136 = vadd.f32 %v1076, %v1097
    %v1137 = vadd.f32 %v1077, %v1097
    %v1138 = vadd.f32 %v1078, %v1097
    %v1139 = vadd.f32 %v1079, %v1097
    %v1140 = vadd.f32 %v1080, %v1097
    %v1141 = vadd.f32 %v1081, %v1097
    %v1142 = vadd.f32 %v1082, %v1097
    %v1143 = vadd.f32 %v1083, %v1097
    %v1144 = vadd.f32 %v1084, %v1097
    %v1145 = vadd.f32 %v1085, %v1097
    %v1146 = vadd.f32 %v1086, %v1097
    %v1147 = vadd.f32 %v1087, %v1097
    %v1148 = vadd.f32 %v1088, %v1097
    %v1149 = vadd.f32 %v1089, %v1097
    %v1150 = vadd.f32 %v1090, %v1097
    %v1151 = vadd.f32 %v1091, %v1097
    %v1152 = vadd.f32 %v1092, %v1097
    %v1153 = vmax.f32 %v1099, 0.0
    %v1154 = vmax.f32 %v1100, 0.0
    %v1155 = vmax.f32 %v1101, 0.0
    %v1156 = vmax.f32 %v1102, 0.0
    %v1157 = vmax.f32 %v1103, 0.0
    %v1158 = vmax.f32 %v1104, 0.0
    %v1159 = vmax.f32 %v1105, 0.0
    %v1160 = vmax.f32 %v1106, 0.0
    %v1161 = vmax.f32 %v1107, 0.0
    %v1162 = vmax.f32 %v1108, 0.0
    %v1163 = vmax.f32 %v1109, 0.0
    %v1164 = vmax.f32 %v1110, 0.0
    %v1165 = vmax.f32 %v1111, 0.0
    %v1166 = vmax.f32 %v1112, 0.0
    %v1167 = vmax.f32 %v1113, 0.0
    %v1168 = vmax.f32 %v1114, 0.0
    %v1169 = vmax.f32 %v1115, 0.0
    %v1170 = vmax.f32 %v1116, 0.0
    %v1171 = vmax.f32 %v1117, 0.0
    %v1172 = vmax.f32 %v1118, 0.0
    %v1173 = vmax.f32 %v1119, 0.0
    %v1174 = vmax.f32 %v1120, 0.0
    %v1175 = vmax.f32 %v1121, 0.0
    %v1176 = vmax.f32 %v1122, 0.0
    %v1177 = vmax.f32 %v1123, 0.0
    %v1178 = vmax.f32 %v1124, 0.0
    %v1179 = vmax.f32 %v1125, 0.0
    %v1180 = vmax.f32 %v1126, 0.0
    %v1181 = vmax.f32 %v1127, 0.0
    %v1182 = vmax.f32 %v1128, 0.0
    %v1183 = vmax.f32 %v1129, 0.0
    %v1184 = vmax.f32 %v1130, 0.0
    %v1185 = vmax.f32 %v1131, 0.0
    %v1186 = vmax.f32 %v1132, 0.0
    %v1187 = vmax.f32 %v1133, 0.0
    %v1188 = vmax.f32 %v1134, 0.0
    %v1189 = vmax.f32 %v1135, 0.0
    %v1190 = vmax.f32 %v1136, 0.0
    %v1191 = vmax.f32 %v1137, 0.0
    %v1192 = vmax.f32 %v1138, 0.0
    %v1193 = vmax.f32 %v1139, 0.0
    %v1194 = vmax.f32 %v1140, 0.0
    %v1195 = vmax.f32 %v1141, 0.0
    %v1196 = vmax.f32 %v1142, 0.0
    %v1197 = vmax.f32 %v1143, 0.0
    %v1198 = vmax.f32 %v1144, 0.0
    %v1199 = vmax.f32 %v1145, 0.0
    %v1200 = vmax.f32 %v1146, 0.0
    %v1201 = vmax.f32 %v1147, 0.0
    %v1202 = vmax.f32 %v1148, 0.0
    %v1203 = vmax.f32 %v1149, 0.0
    %v1204 = vmax.f32 %v1150, 0.0
    %v1205 = vmax.f32 %v1151, 0.0
    %v1206 = vmax.f32 %v1152, 0.0
    %v1207 = vld [vmem:[%s5] sm:$0xff]
    %v1208 = vld [vmem:[%s5 + $0x8] sm:$0xff]
    %v1209 = vld [vmem:[%s5 + $0x10] sm:$0xff]
    %v1210 = vld [vmem:[%s5 + $0x18] sm:$0xff]
    %v1211 = vld [vmem:[%s5 + $0x20] sm:$0xff]
    %v1212 = vld [vmem:[%s5 + $0x28] sm:$0xff]
    %v1213 = vld [vmem:[%s5 + $0x30] sm:$0xff]
    %v1214 = vld [vmem:[%s5 + $0x38] sm:$0xff]
    %v1215 = vld [vmem:[%s5 + $0x40] sm:$0xff]
    %v1216 = vld [vmem:[%s5 + $0x48] sm:$0xff]
    %v1217 = vld [vmem:[%s5 + $0x50] sm:$0xff]
    %v1218 = vld [vmem:[%s5 + $0x58] sm:$0xff]
    %v1219 = vld [vmem:[%s5 + $0x60] sm:$0xff]
    %v1220 = vld [vmem:[%s5 + $0x68] sm:$0xff]
    %v1221 = vld [vmem:[%s5 + $0x70] sm:$0xff]
    %v1222 = vld [vmem:[%s5 + $0x78] sm:$0xff]
    %v1223 = vld [vmem:[%s5 + $0x80] sm:$0xff]
    %v1224 = vld [vmem:[%s5 + $0x88] sm:$0xff]
    %v1225 = vld [vmem:[%s5 + $0x90] sm:$0xff]
    %v1226 = vld [vmem:[%s5 + $0x98] sm:$0xff]
    %v1227 = vld [vmem:[%s5 + $0xa0] sm:$0xff]
    %v1228 = vld [vmem:[%s5 + $0xa8] sm:$0xff]
    %v1229 = vld [vmem:[%s5 + $0xb0] sm:$0xff]
    %v1230 = vld [vmem:[%s5 + $0xb8] sm:$0xff]
    %v1231 = vld [vmem:[%s5 + $0xc0] sm:$0xff]
    %v1232 = vld [vmem:[%s5 + $0xc8] sm:$0xff]
    %v1233 = vld [vmem:[%s5 + $0xd0] sm:$0xff]
    %v1234 = vld [vmem:[%s5 + $0xd8] sm:$0xff]
    %v1235 = vld [vmem:[%s5 + $0xe0] sm:$0xff]
    %v1236 = vld [vmem:[%s5 + $0xe8] sm:$0xff]
    %v1237 = vld [vmem:[%s5 + $0xf0] sm:$0xff]
    %v1238 = vld [vmem:[%s5 + $0xf8] sm:$0xff]
    %v1239 = vld [vmem:[%s5 + $0x100] sm:$0xff]
    %v1240 = vld [vmem:[%s5 + $0x108] sm:$0xff]
    %v1241 = vld [vmem:[%s5 + $0x110] sm:$0xff]
    %v1242 = vld [vmem:[%s5 + $0x118] sm:$0xff]
    %v1243 = vld [vmem:[%s5 + $0x120] sm:$0xff]
    %v1244 = vld [vmem:[%s5 + $0x128] sm:$0xff]
    %v1245 = vld [vmem:[%s5 + $0x130] sm:$0xff]
    %v1246 = vld [vmem:[%s5 + $0x138] sm:$0xff]
    %v1247 = vld [vmem:[%s5 + $0x140] sm:$0xff]
    %v1248 = vld [vmem:[%s5 + $0x148] sm:$0xff]
    %v1249 = vld [vmem:[%s5 + $0x150] sm:$0xff]
    %v1250 = vld [vmem:[%s5 + $0x158] sm:$0xff]
    %v1251 = vld [vmem:[%s5 + $0x160] sm:$0xff]
    %v1252 = vld [vmem:[%s5 + $0x168] sm:$0xff]
    %v1253 = vld [vmem:[%s5 + $0x170] sm:$0xff]
    %v1254 = vld [vmem:[%s5 + $0x178] sm:$0xff]
    %v1255 = vld [vmem:[%s5 + $0x180] sm:$0xff]
    %v1256 = vld [vmem:[%s5 + $0x188] sm:$0xff]
    %v1257 = vld [vmem:[%s5 + $0x190] sm:$0xff]
    %v1258 = vld [vmem:[%s5 + $0x198] sm:$0xff]
    %v1259 = vld [vmem:[%s5 + $0x1a0] sm:$0xff]
    %v1260 = vld [vmem:[%s5 + $0x1a8] sm:$0xff]
    %v1261 = vld [vmem:[%s5 + $0x1b0] sm:$0xff]
    %v1262 = vld [vmem:[%s5 + $0x1b8] sm:$0xff]
    %v1263 = vld [vmem:[%s5 + $0x1c0] sm:$0xff]
    %v1264 = vld [vmem:[%s5 + $0x1c8] sm:$0xff]
    %v1265 = vld [vmem:[%s5 + $0x1d0] sm:$0xff]
    %v1266 = vld [vmem:[%s5 + $0x1d8] sm:$0xff]
    %v1267 = vld [vmem:[%s5 + $0x1e0] sm:$0xff]
    %v1268 = vld [vmem:[%s5 + $0x1e8] sm:$0xff]
    %v1269 = vld [vmem:[%s5 + $0x1f0] sm:$0xff]
    %v1270 = vld [vmem:[%s5 + $0x1f8] sm:$0xff]
    %v1271 = vld [vmem:[%s5 + $0x200] sm:$0xff]
    %v1272 = vld [vmem:[%s5 + $0x208] sm:$0xff]
    %v1273 = vld [vmem:[%s5 + $0x210] sm:$0xff]
    %v1274 = vld [vmem:[%s5 + $0x218] sm:$0xff]
    %v1275 = vld [vmem:[%s5 + $0x220] sm:$0xff]
    %v1276 = vld [vmem:[%s5 + $0x228] sm:$0xff]
    %v1277 = vld [vmem:[%s5 + $0x230] sm:$0xff]
    %v1278 = vld [vmem:[%s5 + $0x238] sm:$0xff]
    %v1279 = vld [vmem:[%s5 + $0x240] sm:$0xff]
    %v1280 = vld [vmem:[%s5 + $0x248] sm:$0xff]
    %v1281 = vld [vmem:[%s5 + $0x250] sm:$0xff]
    %v1282 = vld [vmem:[%s5 + $0x258] sm:$0xff]
    %v1283 = vld [vmem:[%s5 + $0x260] sm:$0xff]
    %v1284 = vld [vmem:[%s5 + $0x268] sm:$0xff]
    %v1285 = vld [vmem:[%s5 + $0x270] sm:$0xff]
    %v1286 = vld [vmem:[%s5 + $0x278] sm:$0xff]
    %v1287 = vld [vmem:[%s5 + $0x280] sm:$0xff]
    %v1288 = vld [vmem:[%s5 + $0x288] sm:$0xff]
    %v1289 = vld [vmem:[%s5 + $0x290] sm:$0xff]
    %v1290 = vld [vmem:[%s5 + $0x298] sm:$0xff]
    %v1291 = vld [vmem:[%s5 + $0x2a0] sm:$0xff]
    %v1292 = vld [vmem:[%s5 + $0x2a8] sm:$0xff]
    %v1293 = vld [vmem:[%s5 + $0x2b0] sm:$0xff]
    %v1294 = vld [vmem:[%s5 + $0x2b8] sm:$0xff]
    %v1295 = vld [vmem:[%s5 + $0x2c0] sm:$0xff]
    %v1296 = vld [vmem:[%s5 + $0x2c8] sm:$0xff]
    %v1297 = vld [vmem:[%s5 + $0x2d0] sm:$0xff]
    %v1298 = vld [vmem:[%s5 + $0x2d8] sm:$0xff]
    %v1299 = vld [vmem:[%s5 + $0x2e0] sm:$0xff]
    %v1300 = vld [vmem:[%s5 + $0x2e8] sm:$0xff]
    %v1301 = vld [vmem:[%s5 + $0x2f0] sm:$0xff]
    %v1302 = vld [vmem:[%s5 + $0x2f8] sm:$0xff]
    %v1303 = vld [vmem:[%s5 + $0x300] sm:$0xff]
    %v1304 = vld [vmem:[%s5 + $0x308] sm:$0xff]
    %v1305 = vld [vmem:[%s5 + $0x310] sm:$0xff]
    %v1306 = vld [vmem:[%s5 + $0x318] sm:$0xff]
    %v1307 = vld [vmem:[%s5 + $0x320] sm:$0xff]
    %v1308 = vld [vmem:[%s5 + $0x328] sm:$0xff]
    %v1309 = vld [vmem:[%s5 + $0x330] sm:$0xff]
    %v1310 = vld [vmem:[%s5 + $0x338] sm:$0xff]
    %v1311 = vld [vmem:[%s5 + $0x340] sm:$0xff]
    %v1312 = vld [vmem:[%s5 + $0x348] sm:$0xff]
    %v1313 = vld [vmem:[%s5 + $0x350] sm:$0xff]
    %v1314 = vld [vmem:[%s5 + $0x358] sm:$0xff]
    %v1315 = vld [vmem:[%s5 + $0x360] sm:$0xff]
    %v1316 = vld [vmem:[%s5 + $0x368] sm:$0xff]
    %v1317 = vld [vmem:[%s5 + $0x370] sm:$0xff]
    %v1318 = vld [vmem:[%s5 + $0x378] sm:$0xff]
    %v1319 = vld [vmem:[%s5 + $0x380] sm:$0xff]
    %v1320 = vld [vmem:[%s5 + $0x388] sm:$0xff]
    %v1321 = vld [vmem:[%s5 + $0x390] sm:$0xff]
    %v1322 = vld [vmem:[%s5 + $0x398] sm:$0xff]
    %v1323 = vld [vmem:[%s5 + $0x3a0] sm:$0xff]
    %v1324 = vld [vmem:[%s5 + $0x3a8] sm:$0xff]
    %v1325 = vld [vmem:[%s5 + $0x3b0] sm:$0xff]
    %v1326 = vld [vmem:[%s5 + $0x3b8] sm:$0xff]
    %v1327 = vld [vmem:[%s5 + $0x3c0] sm:$0xff]
    %v1328 = vld [vmem:[%s5 + $0x3c8] sm:$0xff]
    %v1329 = vld [vmem:[%s5 + $0x3d0] sm:$0xff]
    %v1330 = vld [vmem:[%s5 + $0x3d8] sm:$0xff]
    %v1331 = vld [vmem:[%s5 + $0x3e0] sm:$0xff]
    %v1332 = vld [vmem:[%s5 + $0x3e8] sm:$0xff]
    %v1333 = vld [vmem:[%s5 + $0x3f0] sm:$0xff]
    %v1334 = vld [vmem:[%s5 + $0x3f8] sm:$0xff]
    %v1335 = vld [vmem:[%s5 + $0x400] sm:$0xff]
    %v1336 = vld [vmem:[%s5 + $0x408] sm:$0xff]
    %v1337 = vld [vmem:[%s5 + $0x410] sm:$0xff]
    %v1338 = vld [vmem:[%s5 + $0x418] sm:$0xff]
    %v1339 = vld [vmem:[%s5 + $0x420] sm:$0xff]
    %v1340 = vld [vmem:[%s5 + $0x428] sm:$0xff]
    %v1341 = vld [vmem:[%s5 + $0x430] sm:$0xff]
    %v1342 = vld [vmem:[%s5 + $0x438] sm:$0xff]
    %v1343 = vld [vmem:[%s5 + $0x440] sm:$0xff]
    %v1344 = vld [vmem:[%s5 + $0x448] sm:$0xff]
    %v1345 = vld [vmem:[%s5 + $0x450] sm:$0xff]
    %v1346 = vld [vmem:[%s5 + $0x458] sm:$0xff]
    %v1347 = vld [vmem:[%s5 + $0x460] sm:$0xff]
    %v1348 = vld [vmem:[%s5 + $0x468] sm:$0xff]
    %v1349 = vld [vmem:[%s5 + $0x470] sm:$0xff]
    %v1350 = vld [vmem:[%s5 + $0x478] sm:$0xff]
    %v1351 = vld [vmem:[%s5 + $0x480] sm:$0xff]
    %v1352 = vld [vmem:[%s5 + $0x488] sm:$0xff]
    %v1353 = vld [vmem:[%s5 + $0x490] sm:$0xff]
    %v1354 = vld [vmem:[%s5 + $0x498] sm:$0xff]
    %v1355 = vld [vmem:[%s5 + $0x4a0] sm:$0xff]
    %v1356 = vld [vmem:[%s5 + $0x4a8] sm:$0xff]
    %v1357 = vld [vmem:[%s5 + $0x4b0] sm:$0xff]
    %v1358 = vld [vmem:[%s5 + $0x4b8] sm:$0xff]
    %v1359 = vld [vmem:[%s5 + $0x4c0] sm:$0xff]
    %v1360 = vld [vmem:[%s5 + $0x4c8] sm:$0xff]
    %v1361 = vld [vmem:[%s5 + $0x4d0] sm:$0xff]
    %v1362 = vld [vmem:[%s5 + $0x4d8] sm:$0xff]
    %v1363 = vld [vmem:[%s5 + $0x4e0] sm:$0xff]
    %v1364 = vld [vmem:[%s5 + $0x4e8] sm:$0xff]
    %v1365 = vld [vmem:[%s5 + $0x4f0] sm:$0xff]
    %v1366 = vld [vmem:[%s5 + $0x4f8] sm:$0xff]
    %v1367 = vld [vmem:[%s5 + $0x500] sm:$0xff]
    %v1368 = vld [vmem:[%s5 + $0x508] sm:$0xff]
    %v1369 = vld [vmem:[%s5 + $0x510] sm:$0xff]
    %v1370 = vld [vmem:[%s5 + $0x518] sm:$0xff]
    %v1371 = vld [vmem:[%s5 + $0x520] sm:$0xff]
    %v1372 = vld [vmem:[%s5 + $0x528] sm:$0xff]
    %v1373 = vld [vmem:[%s5 + $0x530] sm:$0xff]
    %v1374 = vld [vmem:[%s5 + $0x538] sm:$0xff]
    %v1375 = vld [vmem:[%s5 + $0x540] sm:$0xff]
    %v1376 = vld [vmem:[%s5 + $0x548] sm:$0xff]
    %v1377 = vld [vmem:[%s5 + $0x550] sm:$0xff]
    %v1378 = vld [vmem:[%s5 + $0x558] sm:$0xff]
    %v1379 = vld [vmem:[%s5 + $0x560] sm:$0xff]
    %v1380 = vld [vmem:[%s5 + $0x568] sm:$0xff]
    %v1381 = vld [vmem:[%s5 + $0x570] sm:$0xff]
    %v1382 = vld [vmem:[%s5 + $0x578] sm:$0xff]
    %v1383 = vld [vmem:[%s5 + $0x580] sm:$0xff]
    %v1384 = vld [vmem:[%s5 + $0x588] sm:$0xff]
    %v1385 = vld [vmem:[%s5 + $0x590] sm:$0xff]
    %v1386 = vld [vmem:[%s5 + $0x598] sm:$0xff]
    %v1387 = vld [vmem:[%s5 + $0x5a0] sm:$0xff]
    %v1388 = vld [vmem:[%s5 + $0x5a8] sm:$0xff]
    %v1389 = vld [vmem:[%s5 + $0x5b0] sm:$0xff]
    %v1390 = vld [vmem:[%s5 + $0x5b8] sm:$0xff]
    %v1391 = vld [vmem:[%s5 + $0x5c0] sm:$0xff]
    %v1392 = vld [vmem:[%s5 + $0x5c8] sm:$0xff]
    %v1393 = vld [vmem:[%s5 + $0x5d0] sm:$0xff]
    %v1394 = vld [vmem:[%s5 + $0x5d8] sm:$0xff]
    %v1395 = vld [vmem:[%s5 + $0x5e0] sm:$0xff]
    %v1396 = vld [vmem:[%s5 + $0x5e8] sm:$0xff]
    %v1397 = vld [vmem:[%s5 + $0x5f0] sm:$0xff]
    %v1398 = vld [vmem:[%s5 + $0x5f8] sm:$0xff]
    %v1399 = vld [vmem:[%s5 + $0x600] sm:$0xff]
    %v1400 = vld [vmem:[%s5 + $0x608] sm:$0xff]
    %v1401 = vld [vmem:[%s5 + $0x610] sm:$0xff]
    %v1402 = vld [vmem:[%s5 + $0x618] sm:$0xff]
    %v1403 = vld [vmem:[%s5 + $0x620] sm:$0xff]
    %v1404 = vld [vmem:[%s5 + $0x628] sm:$0xff]
    %v1405 = vld [vmem:[%s5 + $0x630] sm:$0xff]
    %v1406 = vld [vmem:[%s5 + $0x638] sm:$0xff]
    %v1407 = vld [vmem:[%s5 + $0x640] sm:$0xff]
    %v1408 = vld [vmem:[%s5 + $0x648] sm:$0xff]
    %v1409 = vld [vmem:[%s5 + $0x650] sm:$0xff]
    %v1410 = vld [vmem:[%s5 + $0x658] sm:$0xff]
    %v1411 = vld [vmem:[%s5 + $0x660] sm:$0xff]
    %v1412 = vld [vmem:[%s5 + $0x668] sm:$0xff]
    %v1413 = vld [vmem:[%s5 + $0x670] sm:$0xff]
    %v1414 = vld [vmem:[%s5 + $0x678] sm:$0xff]
    %v1415 = vld [vmem:[%s5 + $0x680] sm:$0xff]
    %v1416 = vld [vmem:[%s5 + $0x688] sm:$0xff]
    %v1417 = vld [vmem:[%s5 + $0x690] sm:$0xff]
    %v1418 = vld [vmem:[%s5 + $0x698] sm:$0xff]
    %v1419 = vld [vmem:[%s5 + $0x6a0] sm:$0xff]
    %v1420 = vld [vmem:[%s5 + $0x6a8] sm:$0xff]
    %v1421 = vld [vmem:[%s5 + $0x6b0] sm:$0xff]
    %v1422 = vld [vmem:[%s5 + $0x6b8] sm:$0xff]
    %v1423 = vld [vmem:[%s5 + $0x6c0] sm:$0xff]
    %v1424 = vld [vmem:[%s5 + $0x6c8] sm:$0xff]
    %v1425 = vld [vmem:[%s5 + $0x6d0] sm:$0xff]
    %v1426 = vld [vmem:[%s5 + $0x6d8] sm:$0xff]
    %v1427 = vld [vmem:[%s5 + $0x6e0] sm:$0xff]
    %v1428 = vld [vmem:[%s5 + $0x6e8] sm:$0xff]
    %v1429 = vld [vmem:[%s5 + $0x6f0] sm:$0xff]
    %v1430 = vld [vmem:[%s5 + $0x6f8] sm:$0xff]
    %v1431 = vld [vmem:[%s5 + $0x700] sm:$0xff]
    %v1432 = vld [vmem:[%s5 + $0x708] sm:$0xff]
    %v1433 = vld [vmem:[%s5 + $0x710] sm:$0xff]
    %v1434 = vld [vmem:[%s5 + $0x718] sm:$0xff]
    %v1435 = vld [vmem:[%s5 + $0x720] sm:$0xff]
    %v1436 = vld [vmem:[%s5 + $0x728] sm:$0xff]
    %v1437 = vld [vmem:[%s5 + $0x730] sm:$0xff]
    %v1438 = vld [vmem:[%s5 + $0x738] sm:$0xff]
    %v1439 = vld [vmem:[%s5 + $0x740] sm:$0xff]
    %v1440 = vld [vmem:[%s5 + $0x748] sm:$0xff]
    %v1441 = vld [vmem:[%s5 + $0x750] sm:$0xff]
    %v1442 = vld [vmem:[%s5 + $0x758] sm:$0xff]
    %v1443 = vld [vmem:[%s5 + $0x760] sm:$0xff]
    %v1444 = vld [vmem:[%s5 + $0x768] sm:$0xff]
    %v1445 = vld [vmem:[%s5 + $0x770] sm:$0xff]
    %v1446 = vld [vmem:[%s5 + $0x778] sm:$0xff]
    %v1447 = vld [vmem:[%s5 + $0x780] sm:$0xff]
    %v1448 = vld [vmem:[%s5 + $0x788] sm:$0xff]
    %v1449 = vld [vmem:[%s5 + $0x790] sm:$0xff]
    %v1450 = vld [vmem:[%s5 + $0x798] sm:$0xff]
    %v1451 = vld [vmem:[%s5 + $0x7a0] sm:$0xff]
    %v1452 = vld [vmem:[%s5 + $0x7a8] sm:$0xff]
    %v1453 = vld [vmem:[%s5 + $0x7b0] sm:$0xff]
    %v1454 = vld [vmem:[%s5 + $0x7b8] sm:$0xff]
    %v1455 = vld [vmem:[%s5 + $0x7c0] sm:$0xff]
    %v1456 = vld [vmem:[%s5 + $0x7c8] sm:$0xff]
    %v1457 = vld [vmem:[%s5 + $0x7d0] sm:$0xff]
    %v1458 = vld [vmem:[%s5 + $0x7d8] sm:$0xff]
    %v1459 = vld [vmem:[%s5 + $0x7e0] sm:$0xff]
    %v1460 = vld [vmem:[%s5 + $0x7e8] sm:$0xff]
    %v1461 = vld [vmem:[%s5 + $0x7f0] sm:$0xff]
    %v1462 = vld [vmem:[%s5 + $0x7f8] sm:$0xff]
    %v1463 = vld [vmem:[%s5 + $0x800] sm:$0xff]
    %v1464 = vld [vmem:[%s5 + $0x808] sm:$0xff]
    %v1465 = vld [vmem:[%s5 + $0x810] sm:$0xff]
    %v1466 = vld [vmem:[%s5 + $0x818] sm:$0xff]
    %v1467 = vld [vmem:[%s5 + $0x820] sm:$0xff]
    %v1468 = vld [vmem:[%s5 + $0x828] sm:$0xff]
    %v1469 = vld [vmem:[%s5 + $0x830] sm:$0xff]
    %v1470 = vld [vmem:[%s5 + $0x838] sm:$0xff]
    %v1471 = vld [vmem:[%s5 + $0x840] sm:$0xff]
    %v1472 = vld [vmem:[%s5 + $0x848] sm:$0xff]
    %v1473 = vld [vmem:[%s5 + $0x850] sm:$0xff]
    %v1474 = vld [vmem:[%s5 + $0x858] sm:$0xff]
    %v1475 = vld [vmem:[%s5 + $0x860] sm:$0xff]
    %v1476 = vld [vmem:[%s5 + $0x868] sm:$0xff]
    %v1477 = vld [vmem:[%s5 + $0x870] sm:$0xff]
    %v1478 = vld [vmem:[%s5 + $0x878] sm:$0xff]
    %v1479 = vld [vmem:[%s5 + $0x880] sm:$0xff]
    %v1480 = vld [vmem:[%s5 + $0x888] sm:$0xff]
    %v1481 = vld [vmem:[%s5 + $0x890] sm:$0xff]
    %v1482 = vld [vmem:[%s5 + $0x898] sm:$0xff]
    %v1483 = vld [vmem:[%s5 + $0x8a0] sm:$0xff]
    %v1484 = vld [vmem:[%s5 + $0x8a8] sm:$0xff]
    %v1485 = vld [vmem:[%s5 + $0x8b0] sm:$0xff]
    %v1486 = vld [vmem:[%s5 + $0x8b8] sm:$0xff]
    %v1487 = vld [vmem:[%s5 + $0x8c0] sm:$0xff]
    %v1488 = vld [vmem:[%s5 + $0x8c8] sm:$0xff]
    %v1489 = vld [vmem:[%s5 + $0x8d0] sm:$0xff]
    %v1490 = vld [vmem:[%s5 + $0x8d8] sm:$0xff]
    %v1491 = vld [vmem:[%s5 + $0x8e0] sm:$0xff]
    %v1492 = vld [vmem:[%s5 + $0x8e8] sm:$0xff]
    %v1493 = vld [vmem:[%s5 + $0x8f0] sm:$0xff]
    %v1494 = vld [vmem:[%s5 + $0x8f8] sm:$0xff]
    %v1495 = vld [vmem:[%s5 + $0x900] sm:$0xff]
    %v1496 = vld [vmem:[%s5 + $0x908] sm:$0xff]
    %v1497 = vld [vmem:[%s5 + $0x910] sm:$0xff]
    %v1498 = vld [vmem:[%s5 + $0x918] sm:$0xff]
    %v1499 = vld [vmem:[%s5 + $0x920] sm:$0xff]
    %v1500 = vld [vmem:[%s5 + $0x928] sm:$0xff]
    %v1501 = vld [vmem:[%s5 + $0x930] sm:$0xff]
    %v1502 = vld [vmem:[%s5 + $0x938] sm:$0xff]
    %v1503 = vld [vmem:[%s5 + $0x940] sm:$0xff]
    %v1504 = vld [vmem:[%s5 + $0x948] sm:$0xff]
    %v1505 = vld [vmem:[%s5 + $0x950] sm:$0xff]
    %v1506 = vld [vmem:[%s5 + $0x958] sm:$0xff]
    %v1507 = vld [vmem:[%s5 + $0x960] sm:$0xff]
    %v1508 = vld [vmem:[%s5 + $0x968] sm:$0xff]
    %v1509 = vld [vmem:[%s5 + $0x970] sm:$0xff]
    %v1510 = vld [vmem:[%s5 + $0x978] sm:$0xff]
    %v1511 = vld [vmem:[%s5 + $0x980] sm:$0xff]
    %v1512 = vld [vmem:[%s5 + $0x988] sm:$0xff]
    %v1513 = vld [vmem:[%s5 + $0x990] sm:$0xff]
    %v1514 = vld [vmem:[%s5 + $0x998] sm:$0xff]
    %v1515 = vld [vmem:[%s5 + $0x9a0] sm:$0xff]
    %v1516 = vld [vmem:[%s5 + $0x9a8] sm:$0xff]
    %v1517 = vld [vmem:[%s5 + $0x9b0] sm:$0xff]
    %v1518 = vld [vmem:[%s5 + $0x9b8] sm:$0xff]
    %v1519 = vld [vmem:[%s5 + $0x9c0] sm:$0xff]
    %v1520 = vld [vmem:[%s5 + $0x9c8] sm:$0xff]
    %v1521 = vld [vmem:[%s5 + $0x9d0] sm:$0xff]
    %v1522 = vld [vmem:[%s5 + $0x9d8] sm:$0xff]
    %v1523 = vld [vmem:[%s5 + $0x9e0] sm:$0xff]
    %v1524 = vld [vmem:[%s5 + $0x9e8] sm:$0xff]
    %v1525 = vld [vmem:[%s5 + $0x9f0] sm:$0xff]
    %v1526 = vld [vmem:[%s5 + $0x9f8] sm:$0xff]
    %v1527 = vld [vmem:[%s5 + $0xa00] sm:$0xff]
    %v1528 = vld [vmem:[%s5 + $0xa08] sm:$0xff]
    %v1529 = vld [vmem:[%s5 + $0xa10] sm:$0xff]
    %v1530 = vld [vmem:[%s5 + $0xa18] sm:$0xff]
    %vm1531 = vcmask 392192
    %v1533 = vsel %vm1531, %v1210, 0
    %v1536 = vsel %vm1531, %v1214, 0
    %v1539 = vsel %vm1531, %v1218, 0
    %v1542 = vsel %vm1531, %v1222, 0
    %v1545 = vsel %vm1531, %v1226, 0
    %v1548 = vsel %vm1531, %v1230, 0
    %v1551 = vsel %vm1531, %v1234, 0
    %v1554 = vsel %vm1531, %v1238, 0
    %v1557 = vsel %vm1531, %v1242, 0
    %v1560 = vsel %vm1531, %v1246, 0
    %v1563 = vsel %vm1531, %v1250, 0
    %v1566 = vsel %vm1531, %v1254, 0
    %v1569 = vsel %vm1531, %v1258, 0
    %v1572 = vsel %vm1531, %v1262, 0
    %v1575 = vsel %vm1531, %v1266, 0
    %v1578 = vsel %vm1531, %v1270, 0
    %v1581 = vsel %vm1531, %v1274, 0
    %v1584 = vsel %vm1531, %v1278, 0
    %v1587 = vsel %vm1531, %v1282, 0
    %v1590 = vsel %vm1531, %v1286, 0
    %v1593 = vsel %vm1531, %v1290, 0
    %v1596 = vsel %vm1531, %v1294, 0
    %v1599 = vsel %vm1531, %v1298, 0
    %v1602 = vsel %vm1531, %v1302, 0
    %v1605 = vsel %vm1531, %v1306, 0
    %v1608 = vsel %vm1531, %v1310, 0
    %v1611 = vsel %vm1531, %v1314, 0
    %v1614 = vsel %vm1531, %v1318, 0
    %v1617 = vsel %vm1531, %v1322, 0
    %v1620 = vsel %vm1531, %v1326, 0
    %v1623 = vsel %vm1531, %v1330, 0
    %v1626 = vsel %vm1531, %v1334, 0
    %v1629 = vsel %vm1531, %v1338, 0
    %v1632 = vsel %vm1531, %v1342, 0
    %v1635 = vsel %vm1531, %v1346, 0
    %v1638 = vsel %vm1531, %v1350, 0
    %v1641 = vsel %vm1531, %v1354, 0
    %v1644 = vsel %vm1531, %v1358, 0
    %v1647 = vsel %vm1531, %v1362, 0
    %v1650 = vsel %vm1531, %v1366, 0
    %v1653 = vsel %vm1531, %v1370, 0
    %v1656 = vsel %vm1531, %v1374, 0
    %v1659 = vsel %vm1531, %v1378, 0
    %v1662 = vsel %vm1531, %v1382, 0
    %v1665 = vsel %vm1531, %v1386, 0
    %v1668 = vsel %vm1531, %v1390, 0
    %v1671 = vsel %vm1531, %v1394, 0
    %v1674 = vsel %vm1531, %v1398, 0
    %v1677 = vsel %vm1531, %v1402, 0
    %v1680 = vsel %vm1531, %v1406, 0
    %v1683 = vsel %vm1531, %v1410, 0
    %v1686 = vsel %vm1531, %v1414, 0
    %v1689 = vsel %vm1531, %v1418, 0
    %v1692 = vsel %vm1531, %v1422, 0
    %v1695 = vsel %vm1531, %v1426, 0
    %v1698 = vsel %vm1531, %v1430, 0
    %v1701 = vsel %vm1531, %v1434, 0
    %v1704 = vsel %vm1531, %v1438, 0
    %v1707 = vsel %vm1531, %v1442, 0
    %v1710 = vsel %vm1531, %v1446, 0
    %v1713 = vsel %vm1531, %v1450, 0
    %v1716 = vsel %vm1531, %v1454, 0
    %v1719 = vsel %vm1531, %v1458, 0
    %v1722 = vsel %vm1531, %v1462, 0
    %v1725 = vsel %vm1531, %v1466, 0
    %v1728 = vsel %vm1531, %v1470, 0
    %v1731 = vsel %vm1531, %v1474, 0
    %v1734 = vsel %vm1531, %v1478, 0
    %v1737 = vsel %vm1531, %v1482, 0
    %v1740 = vsel %vm1531, %v1486, 0
    %v1743 = vsel %vm1531, %v1490, 0
    %v1746 = vsel %vm1531, %v1494, 0
    %v1749 = vsel %vm1531, %v1498, 0
    %v1752 = vsel %vm1531, %v1502, 0
    %v1755 = vsel %vm1531, %v1506, 0
    %v1758 = vsel %vm1531, %v1510, 0
    %v1761 = vsel %vm1531, %v1514, 0
    %v1764 = vsel %vm1531, %v1518, 0
    %v1767 = vsel %vm1531, %v1522, 0
    %v1770 = vsel %vm1531, %v1526, 0
    %v1773 = vsel %vm1531, %v1530, 0
    %1775 = vmatprep.subr.mxu0 0.0
    %1776 = vmatpush1.msra.mxu0 %v1168
    %1777 = vmatprep.subr.mxu0 0.0
    %1778 = vmatpush1.msra.mxu0 %v1167
    %1779 = vmatprep.subr.mxu0 0.0
    %1780 = vmatpush1.msra.mxu0 %v1166
    %1781 = vmatprep.subr.mxu0 0.0
    %1782 = vmatpush1.msra.mxu0 %v1165
    %1783 = vmatprep.subr.mxu0 0.0
    %1784 = vmatpush1.msra.mxu0 %v1164
    %1785 = vmatprep.subr.mxu0 0.0
    %1786 = vmatpush1.msra.mxu0 %v1163
    %1787 = vmatprep.subr.mxu0 0.0
    %1788 = vmatpush1.msra.mxu0 %v1162
    %1789 = vmatprep.subr.mxu0 0.0
    %1790 = vmatpush1.msra.mxu0 %v1161
    %1791 = vmatprep.subr.mxu0 0.0
    %1792 = vmatpush1.msra.mxu0 %v1160
    %1793 = vmatprep.subr.mxu0 0.0
    %1794 = vmatpush1.msra.mxu0 %v1159
    %1795 = vmatprep.subr.mxu0 0.0
    %1796 = vmatpush1.msra.mxu0 %v1158
    %1797 = vmatprep.subr.mxu0 0.0
    %1798 = vmatpush1.msra.mxu0 %v1157
    %1799 = vmatprep.subr.mxu0 0.0
    %1800 = vmatpush1.msra.mxu0 %v1156
    %1801 = vmatprep.subr.mxu0 0.0
    %1802 = vmatpush1.msra.mxu0 %v1155
    %1803 = vmatprep.subr.mxu0 0.0
    %1804 = vmatpush1.msra.mxu0 %v1154
    %1805 = vmatprep.subr.mxu0 0.0
    %1806 = vmatpush1.msra.mxu0 %v1153
    %1807 = vmatprep.subr.mxu0 0.0
    %1808 = vmatpush2.msra.mxu0 %v1184
    %1809 = vmatprep.subr.mxu0 0.0
    %1810 = vmatpush2.msra.mxu0 %v1183
    %1811 = vmatprep.subr.mxu0 0.0
    %1812 = vmatpush2.msra.mxu0 %v1182
    %1813 = vmatprep.subr.mxu0 0.0
    %1814 = vmatpush2.msra.mxu0 %v1181
    %1815 = vmatprep.subr.mxu0 0.0
    %1816 = vmatpush2.msra.mxu0 %v1180
    %1817 = vmatprep.subr.mxu0 0.0
    %1818 = vmatpush2.msra.mxu0 %v1179
    %1819 = vmatprep.subr.mxu0 0.0
    %1820 = vmatpush2.msra.mxu0 %v1178
    %1821 = vmatprep.subr.mxu0 0.0
    %1822 = vmatpush2.msra.mxu0 %v1177
    %1823 = vmatprep.subr.mxu0 0.0
    %1824 = vmatpush2.msra.mxu0 %v1176
    %1825 = vmatprep.subr.mxu0 0.0
    %1826 = vmatpush2.msra.mxu0 %v1175
    %1827 = vmatprep.subr.mxu0 0.0
    %1828 = vmatpush2.msra.mxu0 %v1174
    %1829 = vmatprep.subr.mxu0 0.0
    %1830 = vmatpush2.msra.mxu0 %v1173
    %1831 = vmatprep.subr.mxu0 0.0
    %1832 = vmatpush2.msra.mxu0 %v1172
    %1833 = vmatprep.subr.mxu0 0.0
    %1834 = vmatpush2.msra.mxu0 %v1171
    %1835 = vmatprep.subr.mxu0 0.0
    %1836 = vmatpush2.msra.mxu0 %v1170
    %1837 = vmatprep.subr.mxu0 0.0
    %1838 = vmatpush2.msra.mxu0 %v1169
    %1839 = vmatprep.mubr.f32.mxu0 %v1208
    %1840 = vmatmul.mubr.f32.gmra.mxu0 %v1207
    %v1841 = vpop.f32.mrf.mxu0
    %v1842 = vadd.f32 0.0, %v1841
    %v1843 = vpop.f32.mrf.mxu0
    %1844 = vmatprep.mubr.f32.mxu0 %v1212
    %1845 = vmatmul.mubr.f32.gmra.mxu0 %v1211
    %v1846 = vpop.f32.mrf.mxu0
    %v1847 = vadd.f32 0.0, %v1846
    %v1848 = vpop.f32.mrf.mxu0
    %1849 = vmatprep.mubr.f32.mxu0 %v1216
    %1850 = vmatmul.mubr.f32.gmra.mxu0 %v1215
    %v1851 = vpop.f32.mrf.mxu0
    %v1852 = vadd.f32 0.0, %v1851
    %v1853 = vpop.f32.mrf.mxu0
    %1854 = vmatprep.mubr.f32.mxu0 %v1220
    %1855 = vmatmul.mubr.f32.gmra.mxu0 %v1219
    %v1856 = vpop.f32.mrf.mxu0
    %v1857 = vadd.f32 0.0, %v1856
    %v1858 = vpop.f32.mrf.mxu0
    %1859 = vmatprep.mubr.f32.mxu0 %v1224
    %1860 = vmatmul.mubr.f32.gmra.mxu0 %v1223
    %v1861 = vpop.f32.mrf.mxu0
    %v1862 = vadd.f32 0.0, %v1861
    %v1863 = vpop.f32.mrf.mxu0
    %1864 = vmatprep.mubr.f32.mxu0 %v1228
    %1865 = vmatmul.mubr.f32.gmra.mxu0 %v1227
    %v1866 = vpop.f32.mrf.mxu0
    %v1867 = vadd.f32 0.0, %v1866
    %v1868 = vpop.f32.mrf.mxu0
    %1869 = vmatprep.mubr.f32.mxu0 %v1232
    %1870 = vmatmul.mubr.f32.gmra.mxu0 %v1231
    %v1871 = vpop.f32.mrf.mxu0
    %v1872 = vadd.f32 0.0, %v1871
    %v1873 = vpop.f32.mrf.mxu0
    %1874 = vmatprep.mubr.f32.mxu0 %v1236
    %1875 = vmatmul.mubr.f32.gmra.mxu0 %v1235
    %v1876 = vpop.f32.mrf.mxu0
    %v1877 = vadd.f32 0.0, %v1876
    %v1878 = vpop.f32.mrf.mxu0
    %1879 = vmatprep.mubr.f32.mxu0 %v1240
    %1880 = vmatmul.mubr.f32.gmra.mxu0 %v1239
    %v1881 = vpop.f32.mrf.mxu0
    %v1882 = vadd.f32 0.0, %v1881
    %v1883 = vpop.f32.mrf.mxu0
    %1884 = vmatprep.mubr.f32.mxu0 %v1244
    %1885 = vmatmul.mubr.f32.gmra.mxu0 %v1243
    %v1886 = vpop.f32.mrf.mxu0
    %v1887 = vadd.f32 0.0, %v1886
    %v1888 = vpop.f32.mrf.mxu0
    %1889 = vmatprep.mubr.f32.mxu0 %v1248
    %1890 = vmatmul.mubr.f32.gmra.mxu0 %v1247
    %v1891 = vpop.f32.mrf.mxu0
    %v1892 = vadd.f32 0.0, %v1891
    %v1893 = vpop.f32.mrf.mxu0
    %1894 = vmatprep.mubr.f32.mxu0 %v1252
    %1895 = vmatmul.mubr.f32.gmra.mxu0 %v1251
    %v1896 = vpop.f32.mrf.mxu0
    %v1897 = vadd.f32 0.0, %v1896
    %v1898 = vpop.f32.mrf.mxu0
    %1899 = vmatprep.mubr.f32.mxu0 %v1256
    %1900 = vmatmul.mubr.f32.gmra.mxu0 %v1255
    %v1901 = vpop.f32.mrf.mxu0
    %v1902 = vadd.f32 0.0, %v1901
    %v1903 = vpop.f32.mrf.mxu0
    %1904 = vmatprep.mubr.f32.mxu0 %v1260
    %1905 = vmatmul.mubr.f32.gmra.mxu0 %v1259
    %v1906 = vpop.f32.mrf.mxu0
    %v1907 = vadd.f32 0.0, %v1906
    %v1908 = vpop.f32.mrf.mxu0
    %1909 = vmatprep.mubr.f32.mxu0 %v1264
    %1910 = vmatmul.mubr.f32.gmra.mxu0 %v1263
    %v1911 = vpop.f32.mrf.mxu0
    %v1912 = vadd.f32 0.0, %v1911
    %v1913 = vpop.f32.mrf.mxu0
    %1914 = vmatprep.mubr.f32.mxu0 %v1268
    %1915 = vmatmul.mubr.f32.gmra.mxu0 %v1267
    %v1916 = vpop.f32.mrf.mxu0
    %v1917 = vadd.f32 0.0, %v1916
    %v1918 = vpop.f32.mrf.mxu0
    %1919 = vmatprep.mubr.f32.mxu0 %v1272
    %1920 = vmatmul.mubr.f32.gmra.mxu0 %v1271
    %v1921 = vpop.f32.mrf.mxu0
    %v1922 = vadd.f32 0.0, %v1921
    %v1923 = vpop.f32.mrf.mxu0
    %1924 = vmatprep.mubr.f32.mxu0 %v1276
    %1925 = vmatmul.mubr.f32.gmra.mxu0 %v1275
    %v1926 = vpop.f32.mrf.mxu0
    %v1927 = vadd.f32 0.0, %v1926
    %v1928 = vpop.f32.mrf.mxu0
    %1929 = vmatprep.mubr.f32.mxu0 %v1280
    %1930 = vmatmul.mubr.f32.gmra.mxu0 %v1279
    %v1931 = vpop.f32.mrf.mxu0
    %v1932 = vadd.f32 0.0, %v1931
    %v1933 = vpop.f32.mrf.mxu0
    %1934 = vmatprep.mubr.f32.mxu0 %v1284
    %1935 = vmatmul.mubr.f32.gmra.mxu0 %v1283
    %v1936 = vpop.f32.mrf.mxu0
    %v1937 = vadd.f32 0.0, %v1936
    %v1938 = vpop.f32.mrf.mxu0
    %1939 = vmatprep.mubr.f32.mxu0 %v1288
    %1940 = vmatmul.mubr.f32.gmra.mxu0 %v1287
    %v1941 = vpop.f32.mrf.mxu0
    %v1942 = vadd.f32 0.0, %v1941
    %v1943 = vpop.f32.mrf.mxu0
    %1944 = vmatprep.mubr.f32.mxu0 %v1292
    %1945 = vmatmul.mubr.f32.gmra.mxu0 %v1291
    %v1946 = vpop.f32.mrf.mxu0
    %v1947 = vadd.f32 0.0, %v1946
    %v1948 = vpop.f32.mrf.mxu0
    %1949 = vmatprep.mubr.f32.mxu0 %v1296
    %1950 = vmatmul.mubr.f32.gmra.mxu0 %v1295
    %v1951 = vpop.f32.mrf.mxu0
    %v1952 = vadd.f32 0.0, %v1951
    %v1953 = vpop.f32.mrf.mxu0
    %1954 = vmatprep.mubr.f32.mxu0 %v1300
    %1955 = vmatmul.mubr.f32.gmra.mxu0 %v1299
    %v1956 = vpop.f32.mrf.mxu0
    %v1957 = vadd.f32 0.0, %v1956
    %v1958 = vpop.f32.mrf.mxu0
    %1959 = vmatprep.mubr.f32.mxu0 %v1304
    %1960 = vmatmul.mubr.f32.gmra.mxu0 %v1303
    %v1961 = vpop.f32.mrf.mxu0
    %v1962 = vadd.f32 0.0, %v1961
    %v1963 = vpop.f32.mrf.mxu0
    %1964 = vmatprep.mubr.f32.mxu0 %v1308
    %1965 = vmatmul.mubr.f32.gmra.mxu0 %v1307
    %v1966 = vpop.f32.mrf.mxu0
    %v1967 = vadd.f32 0.0, %v1966
    %v1968 = vpop.f32.mrf.mxu0
    %1969 = vmatprep.mubr.f32.mxu0 %v1312
    %1970 = vmatmul.mubr.f32.gmra.mxu0 %v1311
    %v1971 = vpop.f32.mrf.mxu0
    %v1972 = vadd.f32 0.0, %v1971
    %v1973 = vpop.f32.mrf.mxu0
    %1974 = vmatprep.mubr.f32.mxu0 %v1316
    %1975 = vmatmul.mubr.f32.gmra.mxu0 %v1315
    %v1976 = vpop.f32.mrf.mxu0
    %v1977 = vadd.f32 0.0, %v1976
    %v1978 = vpop.f32.mrf.mxu0
    %1979 = vmatprep.mubr.f32.mxu0 %v1320
    %1980 = vmatmul.mubr.f32.gmra.mxu0 %v1319
    %v1981 = vpop.f32.mrf.mxu0
    %v1982 = vadd.f32 0.0, %v1981
    %v1983 = vpop.f32.mrf.mxu0
    %1984 = vmatprep.mubr.f32.mxu0 %v1324
    %1985 = vmatmul.mubr.f32.gmra.mxu0 %v1323
    %v1986 = vpop.f32.mrf.mxu0
    %v1987 = vadd.f32 0.0, %v1986
    %v1988 = vpop.f32.mrf.mxu0
    %1989 = vmatprep.mubr.f32.mxu0 %v1328
    %1990 = vmatmul.mubr.f32.gmra.mxu0 %v1327
    %v1991 = vpop.f32.mrf.mxu0
    %v1992 = vadd.f32 0.0, %v1991
    %v1993 = vpop.f32.mrf.mxu0
    %1994 = vmatprep.mubr.f32.mxu0 %v1332
    %1995 = vmatmul.mubr.f32.gmra.mxu0 %v1331
    %v1996 = vpop.f32.mrf.mxu0
    %v1997 = vadd.f32 0.0, %v1996
    %v1998 = vpop.f32.mrf.mxu0
    %1999 = vmatprep.mubr.f32.mxu0 %v1336
    %2000 = vmatmul.mubr.f32.gmra.mxu0 %v1335
    %v2001 = vpop.f32.mrf.mxu0
    %v2002 = vadd.f32 0.0, %v2001
    %v2003 = vpop.f32.mrf.mxu0
    %2004 = vmatprep.mubr.f32.mxu0 %v1340
    %2005 = vmatmul.mubr.f32.gmra.mxu0 %v1339
    %v2006 = vpop.f32.mrf.mxu0
    %v2007 = vadd.f32 0.0, %v2006
    %v2008 = vpop.f32.mrf.mxu0
    %2009 = vmatprep.mubr.f32.mxu0 %v1344
    %2010 = vmatmul.mubr.f32.gmra.mxu0 %v1343
    %v2011 = vpop.f32.mrf.mxu0
    %v2012 = vadd.f32 0.0, %v2011
    %v2013 = vpop.f32.mrf.mxu0
    %2014 = vmatprep.mubr.f32.mxu0 %v1348
    %2015 = vmatmul.mubr.f32.gmra.mxu0 %v1347
    %v2016 = vpop.f32.mrf.mxu0
    %v2017 = vadd.f32 0.0, %v2016
    %v2018 = vpop.f32.mrf.mxu0
    %2019 = vmatprep.mubr.f32.mxu0 %v1352
    %2020 = vmatmul.mubr.f32.gmra.mxu0 %v1351
    %v2021 = vpop.f32.mrf.mxu0
    %v2022 = vadd.f32 0.0, %v2021
    %v2023 = vpop.f32.mrf.mxu0
    %2024 = vmatprep.mubr.f32.mxu0 %v1356
    %2025 = vmatmul.mubr.f32.gmra.mxu0 %v1355
    %v2026 = vpop.f32.mrf.mxu0
    %v2027 = vadd.f32 0.0, %v2026
    %v2028 = vpop.f32.mrf.mxu0
    %2029 = vmatprep.mubr.f32.mxu0 %v1360
    %2030 = vmatmul.mubr.f32.gmra.mxu0 %v1359
    %v2031 = vpop.f32.mrf.mxu0
    %v2032 = vadd.f32 0.0, %v2031
    %v2033 = vpop.f32.mrf.mxu0
    %2034 = vmatprep.mubr.f32.mxu0 %v1364
    %2035 = vmatmul.mubr.f32.gmra.mxu0 %v1363
    %v2036 = vpop.f32.mrf.mxu0
    %v2037 = vadd.f32 0.0, %v2036
    %v2038 = vpop.f32.mrf.mxu0
    %2039 = vmatprep.mubr.f32.mxu0 %v1368
    %2040 = vmatmul.mubr.f32.gmra.mxu0 %v1367
    %v2041 = vpop.f32.mrf.mxu0
    %v2042 = vadd.f32 0.0, %v2041
    %v2043 = vpop.f32.mrf.mxu0
    %2044 = vmatprep.mubr.f32.mxu0 %v1372
    %2045 = vmatmul.mubr.f32.gmra.mxu0 %v1371
    %v2046 = vpop.f32.mrf.mxu0
    %v2047 = vadd.f32 0.0, %v2046
    %v2048 = vpop.f32.mrf.mxu0
    %2049 = vmatprep.mubr.f32.mxu0 %v1376
    %2050 = vmatmul.mubr.f32.gmra.mxu0 %v1375
    %v2051 = vpop.f32.mrf.mxu0
    %v2052 = vadd.f32 0.0, %v2051
    %v2053 = vpop.f32.mrf.mxu0
    %2054 = vmatprep.mubr.f32.mxu0 %v1380
    %2055 = vmatmul.mubr.f32.gmra.mxu0 %v1379
    %v2056 = vpop.f32.mrf.mxu0
    %v2057 = vadd.f32 0.0, %v2056
    %v2058 = vpop.f32.mrf.mxu0
    %2059 = vmatprep.mubr.f32.mxu0 %v1384
    %2060 = vmatmul.mubr.f32.gmra.mxu0 %v1383
    %v2061 = vpop.f32.mrf.mxu0
    %v2062 = vadd.f32 0.0, %v2061
    %v2063 = vpop.f32.mrf.mxu0
    %2064 = vmatprep.mubr.f32.mxu0 %v1388
    %2065 = vmatmul.mubr.f32.gmra.mxu0 %v1387
    %v2066 = vpop.f32.mrf.mxu0
    %v2067 = vadd.f32 0.0, %v2066
    %v2068 = vpop.f32.mrf.mxu0
    %2069 = vmatprep.mubr.f32.mxu0 %v1392
    %2070 = vmatmul.mubr.f32.gmra.mxu0 %v1391
    %v2071 = vpop.f32.mrf.mxu0
    %v2072 = vadd.f32 0.0, %v2071
    %v2073 = vpop.f32.mrf.mxu0
    %2074 = vmatprep.mubr.f32.mxu0 %v1396
    %2075 = vmatmul.mubr.f32.gmra.mxu0 %v1395
    %v2076 = vpop.f32.mrf.mxu0
    %v2077 = vadd.f32 0.0, %v2076
    %v2078 = vpop.f32.mrf.mxu0
    %2079 = vmatprep.mubr.f32.mxu0 %v1400
    %2080 = vmatmul.mubr.f32.gmra.mxu0 %v1399
    %v2081 = vpop.f32.mrf.mxu0
    %v2082 = vadd.f32 0.0, %v2081
    %v2083 = vpop.f32.mrf.mxu0
    %2084 = vmatprep.mubr.f32.mxu0 %v1404
    %2085 = vmatmul.mubr.f32.gmra.mxu0 %v1403
    %v2086 = vpop.f32.mrf.mxu0
    %v2087 = vadd.f32 0.0, %v2086
    %v2088 = vpop.f32.mrf.mxu0
    %2089 = vmatprep.mubr.f32.mxu0 %v1408
    %2090 = vmatmul.mubr.f32.gmra.mxu0 %v1407
    %v2091 = vpop.f32.mrf.mxu0
    %v2092 = vadd.f32 0.0, %v2091
    %v2093 = vpop.f32.mrf.mxu0
    %2094 = vmatprep.mubr.f32.mxu0 %v1412
    %2095 = vmatmul.mubr.f32.gmra.mxu0 %v1411
    %v2096 = vpop.f32.mrf.mxu0
    %v2097 = vadd.f32 0.0, %v2096
    %v2098 = vpop.f32.mrf.mxu0
    %2099 = vmatprep.mubr.f32.mxu0 %v1416
    %2100 = vmatmul.mubr.f32.gmra.mxu0 %v1415
    %v2101 = vpop.f32.mrf.mxu0
    %v2102 = vadd.f32 0.0, %v2101
    %v2103 = vpop.f32.mrf.mxu0
    %2104 = vmatprep.mubr.f32.mxu0 %v1420
    %2105 = vmatmul.mubr.f32.gmra.mxu0 %v1419
    %v2106 = vpop.f32.mrf.mxu0
    %v2107 = vadd.f32 0.0, %v2106
    %v2108 = vpop.f32.mrf.mxu0
    %2109 = vmatprep.mubr.f32.mxu0 %v1424
    %2110 = vmatmul.mubr.f32.gmra.mxu0 %v1423
    %v2111 = vpop.f32.mrf.mxu0
    %v2112 = vadd.f32 0.0, %v2111
    %v2113 = vpop.f32.mrf.mxu0
    %2114 = vmatprep.mubr.f32.mxu0 %v1428
    %2115 = vmatmul.mubr.f32.gmra.mxu0 %v1427
    %v2116 = vpop.f32.mrf.mxu0
    %v2117 = vadd.f32 0.0, %v2116
    %v2118 = vpop.f32.mrf.mxu0
    %2119 = vmatprep.mubr.f32.mxu0 %v1432
    %2120 = vmatmul.mubr.f32.gmra.mxu0 %v1431
    %v2121 = vpop.f32.mrf.mxu0
    %v2122 = vadd.f32 0.0, %v2121
    %v2123 = vpop.f32.mrf.mxu0
    %2124 = vmatprep.mubr.f32.mxu0 %v1436
    %2125 = vmatmul.mubr.f32.gmra.mxu0 %v1435
    %v2126 = vpop.f32.mrf.mxu0
    %v2127 = vadd.f32 0.0, %v2126
    %v2128 = vpop.f32.mrf.mxu0
    %2129 = vmatprep.mubr.f32.mxu0 %v1440
    %2130 = vmatmul.mubr.f32.gmra.mxu0 %v1439
    %v2131 = vpop.f32.mrf.mxu0
    %v2132 = vadd.f32 0.0, %v2131
    %v2133 = vpop.f32.mrf.mxu0
    %2134 = vmatprep.mubr.f32.mxu0 %v1444
    %2135 = vmatmul.mubr.f32.gmra.mxu0 %v1443
    %v2136 = vpop.f32.mrf.mxu0
    %v2137 = vadd.f32 0.0, %v2136
    %v2138 = vpop.f32.mrf.mxu0
    %2139 = vmatprep.mubr.f32.mxu0 %v1448
    %2140 = vmatmul.mubr.f32.gmra.mxu0 %v1447
    %v2141 = vpop.f32.mrf.mxu0
    %v2142 = vadd.f32 0.0, %v2141
    %v2143 = vpop.f32.mrf.mxu0
    %2144 = vmatprep.mubr.f32.mxu0 %v1452
    %2145 = vmatmul.mubr.f32.gmra.mxu0 %v1451
    %v2146 = vpop.f32.mrf.mxu0
    %v2147 = vadd.f32 0.0, %v2146
    %v2148 = vpop.f32.mrf.mxu0
    %2149 = vmatprep.mubr.f32.mxu0 %v1456
    %2150 = vmatmul.mubr.f32.gmra.mxu0 %v1455
    %v2151 = vpop.f32.mrf.mxu0
    %v2152 = vadd.f32 0.0, %v2151
    %v2153 = vpop.f32.mrf.mxu0
    %2154 = vmatprep.mubr.f32.mxu0 %v1460
    %2155 = vmatmul.mubr.f32.gmra.mxu0 %v1459
    %v2156 = vpop.f32.mrf.mxu0
    %v2157 = vadd.f32 0.0, %v2156
    %v2158 = vpop.f32.mrf.mxu0
    %2159 = vmatprep.mubr.f32.mxu0 %v1464
    %2160 = vmatmul.mubr.f32.gmra.mxu0 %v1463
    %v2161 = vpop.f32.mrf.mxu0
    %v2162 = vadd.f32 0.0, %v2161
    %v2163 = vpop.f32.mrf.mxu0
    %2164 = vmatprep.mubr.f32.mxu0 %v1468
    %2165 = vmatmul.mubr.f32.gmra.mxu0 %v1467
    %v2166 = vpop.f32.mrf.mxu0
    %v2167 = vadd.f32 0.0, %v2166
    %v2168 = vpop.f32.mrf.mxu0
    %2169 = vmatprep.mubr.f32.mxu0 %v1472
    %2170 = vmatmul.mubr.f32.gmra.mxu0 %v1471
    %v2171 = vpop.f32.mrf.mxu0
    %v2172 = vadd.f32 0.0, %v2171
    %v2173 = vpop.f32.mrf.mxu0
    %2174 = vmatprep.mubr.f32.mxu0 %v1476
    %2175 = vmatmul.mubr.f32.gmra.mxu0 %v1475
    %v2176 = vpop.f32.mrf.mxu0
    %v2177 = vadd.f32 0.0, %v2176
    %v2178 = vpop.f32.mrf.mxu0
    %2179 = vmatprep.mubr.f32.mxu0 %v1480
    %2180 = vmatmul.mubr.f32.gmra.mxu0 %v1479
    %v2181 = vpop.f32.mrf.mxu0
    %v2182 = vadd.f32 0.0, %v2181
    %v2183 = vpop.f32.mrf.mxu0
    %2184 = vmatprep.mubr.f32.mxu0 %v1484
    %2185 = vmatmul.mubr.f32.gmra.mxu0 %v1483
    %v2186 = vpop.f32.mrf.mxu0
    %v2187 = vadd.f32 0.0, %v2186
    %v2188 = vpop.f32.mrf.mxu0
    %2189 = vmatprep.mubr.f32.mxu0 %v1488
    %2190 = vmatmul.mubr.f32.gmra.mxu0 %v1487
    %v2191 = vpop.f32.mrf.mxu0
    %v2192 = vadd.f32 0.0, %v2191
    %v2193 = vpop.f32.mrf.mxu0
    %2194 = vmatprep.mubr.f32.mxu0 %v1492
    %2195 = vmatmul.mubr.f32.gmra.mxu0 %v1491
    %v2196 = vpop.f32.mrf.mxu0
    %v2197 = vadd.f32 0.0, %v2196
    %v2198 = vpop.f32.mrf.mxu0
    %2199 = vmatprep.mubr.f32.mxu0 %v1496
    %2200 = vmatmul.mubr.f32.gmra.mxu0 %v1495
    %v2201 = vpop.f32.mrf.mxu0
    %v2202 = vadd.f32 0.0, %v2201
    %v2203 = vpop.f32.mrf.mxu0
    %2204 = vmatprep.mubr.f32.mxu0 %v1500
    %2205 = vmatmul.mubr.f32.gmra.mxu0 %v1499
    %v2206 = vpop.f32.mrf.mxu0
    %v2207 = vadd.f32 0.0, %v2206
    %v2208 = vpop.f32.mrf.mxu0
    %2209 = vmatprep.mubr.f32.mxu0 %v1504
    %2210 = vmatmul.mubr.f32.gmra.mxu0 %v1503
    %v2211 = vpop.f32.mrf.mxu0
    %v2212 = vadd.f32 0.0, %v2211
    %v2213 = vpop.f32.mrf.mxu0
    %2214 = vmatprep.mubr.f32.mxu0 %v1508
    %2215 = vmatmul.mubr.f32.gmra.mxu0 %v1507
    %v2216 = vpop.f32.mrf.mxu0
    %v2217 = vadd.f32 0.0, %v2216
    %v2218 = vpop.f32.mrf.mxu0
    %2219 = vmatprep.mubr.f32.mxu0 %v1512
    %2220 = vmatmul.mubr.f32.gmra.mxu0 %v1511
    %v2221 = vpop.f32.mrf.mxu0
    %v2222 = vadd.f32 0.0, %v2221
    %v2223 = vpop.f32.mrf.mxu0
    %2224 = vmatprep.mubr.f32.mxu0 %v1516
    %2225 = vmatmul.mubr.f32.gmra.mxu0 %v1515
    %v2226 = vpop.f32.mrf.mxu0
    %v2227 = vadd.f32 0.0, %v2226
    %v2228 = vpop.f32.mrf.mxu0
    %2229 = vmatprep.mubr.f32.mxu0 %v1520
    %2230 = vmatmul.mubr.f32.gmra.mxu0 %v1519
    %v2231 = vpop.f32.mrf.mxu0
    %v2232 = vadd.f32 0.0, %v2231
    %v2233 = vpop.f32.mrf.mxu0
    %2234 = vmatprep.mubr.f32.mxu0 %v1524
    %2235 = vmatmul.mubr.f32.gmra.mxu0 %v1523
    %v2236 = vpop.f32.mrf.mxu0
    %v2237 = vadd.f32 0.0, %v2236
    %v2238 = vpop.f32.mrf.mxu0
    %2239 = vmatprep.mubr.f32.mxu0 %v1528
    %2240 = vmatmul.mubr.f32.gmra.mxu0 %v1527
    %v2241 = vpop.f32.mrf.mxu0
    %v2242 = vadd.f32 0.0, %v2241
    %v2243 = vpop.f32.mrf.mxu0
    %2244 = vdwg.mxu0
    %2245 = vmatprep.subr.mxu0 0.0
    %2246 = vmatpush1.msra.mxu0 %v1200
    %2247 = vmatprep.subr.mxu0 0.0
    %2248 = vmatpush1.msra.mxu0 %v1199
    %2249 = vmatprep.subr.mxu0 0.0
    %2250 = vmatpush1.msra.mxu0 %v1198
    %2251 = vmatprep.subr.mxu0 0.0
    %2252 = vmatpush1.msra.mxu0 %v1197
    %2253 = vmatprep.subr.mxu0 0.0
    %2254 = vmatpush1.msra.mxu0 %v1196
    %2255 = vmatprep.subr.mxu0 0.0
    %2256 = vmatpush1.msra.mxu0 %v1195
    %2257 = vmatprep.subr.mxu0 0.0
    %2258 = vmatpush1.msra.mxu0 %v1194
    %2259 = vmatprep.subr.mxu0 0.0
    %2260 = vmatpush1.msra.mxu0 %v1193
    %2261 = vmatprep.subr.mxu0 0.0
    %2262 = vmatpush1.msra.mxu0 %v1192
    %2263 = vmatprep.subr.mxu0 0.0
    %2264 = vmatpush1.msra.mxu0 %v1191
    %2265 = vmatprep.subr.mxu0 0.0
    %2266 = vmatpush1.msra.mxu0 %v1190
    %2267 = vmatprep.subr.mxu0 0.0
    %2268 = vmatpush1.msra.mxu0 %v1189
    %2269 = vmatprep.subr.mxu0 0.0
    %2270 = vmatpush1.msra.mxu0 %v1188
    %2271 = vmatprep.subr.mxu0 0.0
    %2272 = vmatpush1.msra.mxu0 %v1187
    %2273 = vmatprep.subr.mxu0 0.0
    %2274 = vmatpush1.msra.mxu0 %v1186
    %2275 = vmatprep.subr.mxu0 0.0
    %2276 = vmatpush1.msra.mxu0 %v1185
    %2277 = vmatprep.subr.mxu0 0.0
    %2278 = vmatpush2.msra.mxu0 0.0
    %2279 = vmatprep.subr.mxu0 0.0
    %2280 = vmatpush2.msra.mxu0 0.0
    %2281 = vmatprep.subr.mxu0 0.0
    %2282 = vmatpush2.msra.mxu0 0.0
    %2283 = vmatprep.subr.mxu0 0.0
    %2284 = vmatpush2.msra.mxu0 0.0
    %2285 = vmatprep.subr.mxu0 0.0
    %2286 = vmatpush2.msra.mxu0 0.0
    %2287 = vmatprep.subr.mxu0 0.0
    %2288 = vmatpush2.msra.mxu0 0.0
    %2289 = vmatprep.subr.mxu0 0.0
    %2290 = vmatpush2.msra.mxu0 0.0
    %2291 = vmatprep.subr.mxu0 0.0
    %2292 = vmatpush2.msra.mxu0 0.0
    %2293 = vmatprep.subr.mxu0 0.0
    %2294 = vmatpush2.msra.mxu0 0.0
    %2295 = vmatprep.subr.mxu0 0.0
    %2296 = vmatpush2.msra.mxu0 0.0
    %2297 = vmatprep.subr.mxu0 0.0
    %2298 = vmatpush2.msra.mxu0 %v1206
    %2299 = vmatprep.subr.mxu0 0.0
    %2300 = vmatpush2.msra.mxu0 %v1205
    %2301 = vmatprep.subr.mxu0 0.0
    %2302 = vmatpush2.msra.mxu0 %v1204
    %2303 = vmatprep.subr.mxu0 0.0
    %2304 = vmatpush2.msra.mxu0 %v1203
    %2305 = vmatprep.subr.mxu0 0.0
    %2306 = vmatpush2.msra.mxu0 %v1202
    %2307 = vmatprep.subr.mxu0 0.0
    %2308 = vmatpush2.msra.mxu0 %v1201
    %2309 = vmatprep.mubr.f32.mxu0 %v1533
    %2310 = vmatmul.mubr.f32.gmra.mxu0 %v1209
    %v2311 = vpop.f32.mrf.mxu0
    %v2312 = vadd.f32 %v1842, %v2311
    %v2313 = vpop.f32.mrf.mxu0
    %2314 = vmatprep.mubr.f32.mxu0 %v1536
    %2315 = vmatmul.mubr.f32.gmra.mxu0 %v1213
    %v2316 = vpop.f32.mrf.mxu0
    %v2317 = vadd.f32 %v1847, %v2316
    %v2318 = vpop.f32.mrf.mxu0
    %2319 = vmatprep.mubr.f32.mxu0 %v1539
    %2320 = vmatmul.mubr.f32.gmra.mxu0 %v1217
    %v2321 = vpop.f32.mrf.mxu0
    %v2322 = vadd.f32 %v1852, %v2321
    %v2323 = vpop.f32.mrf.mxu0
    %2324 = vmatprep.mubr.f32.mxu0 %v1542
    %2325 = vmatmul.mubr.f32.gmra.mxu0 %v1221
    %v2326 = vpop.f32.mrf.mxu0
    %v2327 = vadd.f32 %v1857, %v2326
    %v2328 = vpop.f32.mrf.mxu0
    %2329 = vmatprep.mubr.f32.mxu0 %v1545
    %2330 = vmatmul.mubr.f32.gmra.mxu0 %v1225
    %v2331 = vpop.f32.mrf.mxu0
    %v2332 = vadd.f32 %v1862, %v2331
    %v2333 = vpop.f32.mrf.mxu0
    %2334 = vmatprep.mubr.f32.mxu0 %v1548
    %2335 = vmatmul.mubr.f32.gmra.mxu0 %v1229
    %v2336 = vpop.f32.mrf.mxu0
    %v2337 = vadd.f32 %v1867, %v2336
    %v2338 = vpop.f32.mrf.mxu0
    %2339 = vmatprep.mubr.f32.mxu0 %v1551
    %2340 = vmatmul.mubr.f32.gmra.mxu0 %v1233
    %v2341 = vpop.f32.mrf.mxu0
    %v2342 = vadd.f32 %v1872, %v2341
    %v2343 = vpop.f32.mrf.mxu0
    %2344 = vmatprep.mubr.f32.mxu0 %v1554
    %2345 = vmatmul.mubr.f32.gmra.mxu0 %v1237
    %v2346 = vpop.f32.mrf.mxu0
    %v2347 = vadd.f32 %v1877, %v2346
    %v2348 = vpop.f32.mrf.mxu0
    %2349 = vmatprep.mubr.f32.mxu0 %v1557
    %2350 = vmatmul.mubr.f32.gmra.mxu0 %v1241
    %v2351 = vpop.f32.mrf.mxu0
    %v2352 = vadd.f32 %v1882, %v2351
    %v2353 = vpop.f32.mrf.mxu0
    %2354 = vmatprep.mubr.f32.mxu0 %v1560
    %2355 = vmatmul.mubr.f32.gmra.mxu0 %v1245
    %v2356 = vpop.f32.mrf.mxu0
    %v2357 = vadd.f32 %v1887, %v2356
    %v2358 = vpop.f32.mrf.mxu0
    %2359 = vmatprep.mubr.f32.mxu0 %v1563
    %2360 = vmatmul.mubr.f32.gmra.mxu0 %v1249
    %v2361 = vpop.f32.mrf.mxu0
    %v2362 = vadd.f32 %v1892, %v2361
    %v2363 = vpop.f32.mrf.mxu0
    %2364 = vmatprep.mubr.f32.mxu0 %v1566
    %2365 = vmatmul.mubr.f32.gmra.mxu0 %v1253
    %v2366 = vpop.f32.mrf.mxu0
    %v2367 = vadd.f32 %v1897, %v2366
    %v2368 = vpop.f32.mrf.mxu0
    %2369 = vmatprep.mubr.f32.mxu0 %v1569
    %2370 = vmatmul.mubr.f32.gmra.mxu0 %v1257
    %v2371 = vpop.f32.mrf.mxu0
    %v2372 = vadd.f32 %v1902, %v2371
    %v2373 = vpop.f32.mrf.mxu0
    %2374 = vmatprep.mubr.f32.mxu0 %v1572
    %2375 = vmatmul.mubr.f32.gmra.mxu0 %v1261
    %v2376 = vpop.f32.mrf.mxu0
    %v2377 = vadd.f32 %v1907, %v2376
    %v2378 = vpop.f32.mrf.mxu0
    %2379 = vmatprep.mubr.f32.mxu0 %v1575
    %2380 = vmatmul.mubr.f32.gmra.mxu0 %v1265
    %v2381 = vpop.f32.mrf.mxu0
    %v2382 = vadd.f32 %v1912, %v2381
    %v2383 = vpop.f32.mrf.mxu0
    %2384 = vmatprep.mubr.f32.mxu0 %v1578
    %2385 = vmatmul.mubr.f32.gmra.mxu0 %v1269
    %v2386 = vpop.f32.mrf.mxu0
    %v2387 = vadd.f32 %v1917, %v2386
    %v2388 = vpop.f32.mrf.mxu0
    %2389 = vmatprep.mubr.f32.mxu0 %v1581
    %2390 = vmatmul.mubr.f32.gmra.mxu0 %v1273
    %v2391 = vpop.f32.mrf.mxu0
    %v2392 = vadd.f32 %v1922, %v2391
    %v2393 = vpop.f32.mrf.mxu0
    %2394 = vmatprep.mubr.f32.mxu0 %v1584
    %2395 = vmatmul.mubr.f32.gmra.mxu0 %v1277
    %v2396 = vpop.f32.mrf.mxu0
    %v2397 = vadd.f32 %v1927, %v2396
    %v2398 = vpop.f32.mrf.mxu0
    %2399 = vmatprep.mubr.f32.mxu0 %v1587
    %2400 = vmatmul.mubr.f32.gmra.mxu0 %v1281
    %v2401 = vpop.f32.mrf.mxu0
    %v2402 = vadd.f32 %v1932, %v2401
    %v2403 = vpop.f32.mrf.mxu0
    %2404 = vmatprep.mubr.f32.mxu0 %v1590
    %2405 = vmatmul.mubr.f32.gmra.mxu0 %v1285
    %v2406 = vpop.f32.mrf.mxu0
    %v2407 = vadd.f32 %v1937, %v2406
    %v2408 = vpop.f32.mrf.mxu0
    %2409 = vmatprep.mubr.f32.mxu0 %v1593
    %2410 = vmatmul.mubr.f32.gmra.mxu0 %v1289
    %v2411 = vpop.f32.mrf.mxu0
    %v2412 = vadd.f32 %v1942, %v2411
    %v2413 = vpop.f32.mrf.mxu0
    %2414 = vmatprep.mubr.f32.mxu0 %v1596
    %2415 = vmatmul.mubr.f32.gmra.mxu0 %v1293
    %v2416 = vpop.f32.mrf.mxu0
    %v2417 = vadd.f32 %v1947, %v2416
    %v2418 = vpop.f32.mrf.mxu0
    %2419 = vmatprep.mubr.f32.mxu0 %v1599
    %2420 = vmatmul.mubr.f32.gmra.mxu0 %v1297
    %v2421 = vpop.f32.mrf.mxu0
    %v2422 = vadd.f32 %v1952, %v2421
    %v2423 = vpop.f32.mrf.mxu0
    %2424 = vmatprep.mubr.f32.mxu0 %v1602
    %2425 = vmatmul.mubr.f32.gmra.mxu0 %v1301
    %v2426 = vpop.f32.mrf.mxu0
    %v2427 = vadd.f32 %v1957, %v2426
    %v2428 = vpop.f32.mrf.mxu0
    %2429 = vmatprep.mubr.f32.mxu0 %v1605
    %2430 = vmatmul.mubr.f32.gmra.mxu0 %v1305
    %v2431 = vpop.f32.mrf.mxu0
    %v2432 = vadd.f32 %v1962, %v2431
    %v2433 = vpop.f32.mrf.mxu0
    %2434 = vmatprep.mubr.f32.mxu0 %v1608
    %2435 = vmatmul.mubr.f32.gmra.mxu0 %v1309
    %v2436 = vpop.f32.mrf.mxu0
    %v2437 = vadd.f32 %v1967, %v2436
    %v2438 = vpop.f32.mrf.mxu0
    %2439 = vmatprep.mubr.f32.mxu0 %v1611
    %2440 = vmatmul.mubr.f32.gmra.mxu0 %v1313
    %v2441 = vpop.f32.mrf.mxu0
    %v2442 = vadd.f32 %v1972, %v2441
    %v2443 = vpop.f32.mrf.mxu0
    %2444 = vmatprep.mubr.f32.mxu0 %v1614
    %2445 = vmatmul.mubr.f32.gmra.mxu0 %v1317
    %v2446 = vpop.f32.mrf.mxu0
    %v2447 = vadd.f32 %v1977, %v2446
    %v2448 = vpop.f32.mrf.mxu0
    %2449 = vmatprep.mubr.f32.mxu0 %v1617
    %2450 = vmatmul.mubr.f32.gmra.mxu0 %v1321
    %v2451 = vpop.f32.mrf.mxu0
    %v2452 = vadd.f32 %v1982, %v2451
    %v2453 = vpop.f32.mrf.mxu0
    %2454 = vmatprep.mubr.f32.mxu0 %v1620
    %2455 = vmatmul.mubr.f32.gmra.mxu0 %v1325
    %v2456 = vpop.f32.mrf.mxu0
    %v2457 = vadd.f32 %v1987, %v2456
    %v2458 = vpop.f32.mrf.mxu0
    %2459 = vmatprep.mubr.f32.mxu0 %v1623
    %2460 = vmatmul.mubr.f32.gmra.mxu0 %v1329
    %v2461 = vpop.f32.mrf.mxu0
    %v2462 = vadd.f32 %v1992, %v2461
    %v2463 = vpop.f32.mrf.mxu0
    %2464 = vmatprep.mubr.f32.mxu0 %v1626
    %2465 = vmatmul.mubr.f32.gmra.mxu0 %v1333
    %v2466 = vpop.f32.mrf.mxu0
    %v2467 = vadd.f32 %v1997, %v2466
    %v2468 = vpop.f32.mrf.mxu0
    %2469 = vmatprep.mubr.f32.mxu0 %v1629
    %2470 = vmatmul.mubr.f32.gmra.mxu0 %v1337
    %v2471 = vpop.f32.mrf.mxu0
    %v2472 = vadd.f32 %v2002, %v2471
    %v2473 = vpop.f32.mrf.mxu0
    %2474 = vmatprep.mubr.f32.mxu0 %v1632
    %2475 = vmatmul.mubr.f32.gmra.mxu0 %v1341
    %v2476 = vpop.f32.mrf.mxu0
    %v2477 = vadd.f32 %v2007, %v2476
    %v2478 = vpop.f32.mrf.mxu0
    %2479 = vmatprep.mubr.f32.mxu0 %v1635
    %2480 = vmatmul.mubr.f32.gmra.mxu0 %v1345
    %v2481 = vpop.f32.mrf.mxu0
    %v2482 = vadd.f32 %v2012, %v2481
    %v2483 = vpop.f32.mrf.mxu0
    %2484 = vmatprep.mubr.f32.mxu0 %v1638
    %2485 = vmatmul.mubr.f32.gmra.mxu0 %v1349
    %v2486 = vpop.f32.mrf.mxu0
    %v2487 = vadd.f32 %v2017, %v2486
    %v2488 = vpop.f32.mrf.mxu0
    %2489 = vmatprep.mubr.f32.mxu0 %v1641
    %2490 = vmatmul.mubr.f32.gmra.mxu0 %v1353
    %v2491 = vpop.f32.mrf.mxu0
    %v2492 = vadd.f32 %v2022, %v2491
    %v2493 = vpop.f32.mrf.mxu0
    %2494 = vmatprep.mubr.f32.mxu0 %v1644
    %2495 = vmatmul.mubr.f32.gmra.mxu0 %v1357
    %v2496 = vpop.f32.mrf.mxu0
    %v2497 = vadd.f32 %v2027, %v2496
    %v2498 = vpop.f32.mrf.mxu0
    %2499 = vmatprep.mubr.f32.mxu0 %v1647
    %2500 = vmatmul.mubr.f32.gmra.mxu0 %v1361
    %v2501 = vpop.f32.mrf.mxu0
    %v2502 = vadd.f32 %v2032, %v2501
    %v2503 = vpop.f32.mrf.mxu0
    %2504 = vmatprep.mubr.f32.mxu0 %v1650
    %2505 = vmatmul.mubr.f32.gmra.mxu0 %v1365
    %v2506 = vpop.f32.mrf.mxu0
    %v2507 = vadd.f32 %v2037, %v2506
    %v2508 = vpop.f32.mrf.mxu0
    %2509 = vmatprep.mubr.f32.mxu0 %v1653
    %2510 = vmatmul.mubr.f32.gmra.mxu0 %v1369
    %v2511 = vpop.f32.mrf.mxu0
    %v2512 = vadd.f32 %v2042, %v2511
    %v2513 = vpop.f32.mrf.mxu0
    %2514 = vmatprep.mubr.f32.mxu0 %v1656
    %2515 = vmatmul.mubr.f32.gmra.mxu0 %v1373
    %v2516 = vpop.f32.mrf.mxu0
    %v2517 = vadd.f32 %v2047, %v2516
    %v2518 = vpop.f32.mrf.mxu0
    %2519 = vmatprep.mubr.f32.mxu0 %v1659
    %2520 = vmatmul.mubr.f32.gmra.mxu0 %v1377
    %v2521 = vpop.f32.mrf.mxu0
    %v2522 = vadd.f32 %v2052, %v2521
    %v2523 = vpop.f32.mrf.mxu0
    %2524 = vmatprep.mubr.f32.mxu0 %v1662
    %2525 = vmatmul.mubr.f32.gmra.mxu0 %v1381
    %v2526 = vpop.f32.mrf.mxu0
    %v2527 = vadd.f32 %v2057, %v2526
    %v2528 = vpop.f32.mrf.mxu0
    %2529 = vmatprep.mubr.f32.mxu0 %v1665
    %2530 = vmatmul.mubr.f32.gmra.mxu0 %v1385
    %v2531 = vpop.f32.mrf.mxu0
    %v2532 = vadd.f32 %v2062, %v2531
    %v2533 = vpop.f32.mrf.mxu0
    %2534 = vmatprep.mubr.f32.mxu0 %v1668
    %2535 = vmatmul.mubr.f32.gmra.mxu0 %v1389
    %v2536 = vpop.f32.mrf.mxu0
    %v2537 = vadd.f32 %v2067, %v2536
    %v2538 = vpop.f32.mrf.mxu0
    %2539 = vmatprep.mubr.f32.mxu0 %v1671
    %2540 = vmatmul.mubr.f32.gmra.mxu0 %v1393
    %v2541 = vpop.f32.mrf.mxu0
    %v2542 = vadd.f32 %v2072, %v2541
    %v2543 = vpop.f32.mrf.mxu0
    %2544 = vmatprep.mubr.f32.mxu0 %v1674
    %2545 = vmatmul.mubr.f32.gmra.mxu0 %v1397
    %v2546 = vpop.f32.mrf.mxu0
    %v2547 = vadd.f32 %v2077, %v2546
    %v2548 = vpop.f32.mrf.mxu0
    %2549 = vmatprep.mubr.f32.mxu0 %v1677
    %2550 = vmatmul.mubr.f32.gmra.mxu0 %v1401
    %v2551 = vpop.f32.mrf.mxu0
    %v2552 = vadd.f32 %v2082, %v2551
    %v2553 = vpop.f32.mrf.mxu0
    %2554 = vmatprep.mubr.f32.mxu0 %v1680
    %2555 = vmatmul.mubr.f32.gmra.mxu0 %v1405
    %v2556 = vpop.f32.mrf.mxu0
    %v2557 = vadd.f32 %v2087, %v2556
    %v2558 = vpop.f32.mrf.mxu0
    %2559 = vmatprep.mubr.f32.mxu0 %v1683
    %2560 = vmatmul.mubr.f32.gmra.mxu0 %v1409
    %v2561 = vpop.f32.mrf.mxu0
    %v2562 = vadd.f32 %v2092, %v2561
    %v2563 = vpop.f32.mrf.mxu0
    %2564 = vmatprep.mubr.f32.mxu0 %v1686
    %2565 = vmatmul.mubr.f32.gmra.mxu0 %v1413
    %v2566 = vpop.f32.mrf.mxu0
    %v2567 = vadd.f32 %v2097, %v2566
    %v2568 = vpop.f32.mrf.mxu0
    %2569 = vmatprep.mubr.f32.mxu0 %v1689
    %2570 = vmatmul.mubr.f32.gmra.mxu0 %v1417
    %v2571 = vpop.f32.mrf.mxu0
    %v2572 = vadd.f32 %v2102, %v2571
    %v2573 = vpop.f32.mrf.mxu0
    %2574 = vmatprep.mubr.f32.mxu0 %v1692
    %2575 = vmatmul.mubr.f32.gmra.mxu0 %v1421
    %v2576 = vpop.f32.mrf.mxu0
    %v2577 = vadd.f32 %v2107, %v2576
    %v2578 = vpop.f32.mrf.mxu0
    %2579 = vmatprep.mubr.f32.mxu0 %v1695
    %2580 = vmatmul.mubr.f32.gmra.mxu0 %v1425
    %v2581 = vpop.f32.mrf.mxu0
    %v2582 = vadd.f32 %v2112, %v2581
    %v2583 = vpop.f32.mrf.mxu0
    %2584 = vmatprep.mubr.f32.mxu0 %v1698
    %2585 = vmatmul.mubr.f32.gmra.mxu0 %v1429
    %v2586 = vpop.f32.mrf.mxu0
    %v2587 = vadd.f32 %v2117, %v2586
    %v2588 = vpop.f32.mrf.mxu0
    %2589 = vmatprep.mubr.f32.mxu0 %v1701
    %2590 = vmatmul.mubr.f32.gmra.mxu0 %v1433
    %v2591 = vpop.f32.mrf.mxu0
    %v2592 = vadd.f32 %v2122, %v2591
    %v2593 = vpop.f32.mrf.mxu0
    %2594 = vmatprep.mubr.f32.mxu0 %v1704
    %2595 = vmatmul.mubr.f32.gmra.mxu0 %v1437
    %v2596 = vpop.f32.mrf.mxu0
    %v2597 = vadd.f32 %v2127, %v2596
    %v2598 = vpop.f32.mrf.mxu0
    %2599 = vmatprep.mubr.f32.mxu0 %v1707
    %2600 = vmatmul.mubr.f32.gmra.mxu0 %v1441
    %v2601 = vpop.f32.mrf.mxu0
    %v2602 = vadd.f32 %v2132, %v2601
    %v2603 = vpop.f32.mrf.mxu0
    %2604 = vmatprep.mubr.f32.mxu0 %v1710
    %2605 = vmatmul.mubr.f32.gmra.mxu0 %v1445
    %v2606 = vpop.f32.mrf.mxu0
    %v2607 = vadd.f32 %v2137, %v2606
    %v2608 = vpop.f32.mrf.mxu0
    %2609 = vmatprep.mubr.f32.mxu0 %v1713
    %2610 = vmatmul.mubr.f32.gmra.mxu0 %v1449
    %v2611 = vpop.f32.mrf.mxu0
    %v2612 = vadd.f32 %v2142, %v2611
    %v2613 = vpop.f32.mrf.mxu0
    %2614 = vmatprep.mubr.f32.mxu0 %v1716
    %2615 = vmatmul.mubr.f32.gmra.mxu0 %v1453
    %v2616 = vpop.f32.mrf.mxu0
    %v2617 = vadd.f32 %v2147, %v2616
    %v2618 = vpop.f32.mrf.mxu0
    %2619 = vmatprep.mubr.f32.mxu0 %v1719
    %2620 = vmatmul.mubr.f32.gmra.mxu0 %v1457
    %v2621 = vpop.f32.mrf.mxu0
    %v2622 = vadd.f32 %v2152, %v2621
    %v2623 = vpop.f32.mrf.mxu0
    %2624 = vmatprep.mubr.f32.mxu0 %v1722
    %2625 = vmatmul.mubr.f32.gmra.mxu0 %v1461
    %v2626 = vpop.f32.mrf.mxu0
    %v2627 = vadd.f32 %v2157, %v2626
    %v2628 = vpop.f32.mrf.mxu0
    %2629 = vmatprep.mubr.f32.mxu0 %v1725
    %2630 = vmatmul.mubr.f32.gmra.mxu0 %v1465
    %v2631 = vpop.f32.mrf.mxu0
    %v2632 = vadd.f32 %v2162, %v2631
    %v2633 = vpop.f32.mrf.mxu0
    %2634 = vmatprep.mubr.f32.mxu0 %v1728
    %2635 = vmatmul.mubr.f32.gmra.mxu0 %v1469
    %v2636 = vpop.f32.mrf.mxu0
    %v2637 = vadd.f32 %v2167, %v2636
    %v2638 = vpop.f32.mrf.mxu0
    %2639 = vmatprep.mubr.f32.mxu0 %v1731
    %2640 = vmatmul.mubr.f32.gmra.mxu0 %v1473
    %v2641 = vpop.f32.mrf.mxu0
    %v2642 = vadd.f32 %v2172, %v2641
    %v2643 = vpop.f32.mrf.mxu0
    %2644 = vmatprep.mubr.f32.mxu0 %v1734
    %2645 = vmatmul.mubr.f32.gmra.mxu0 %v1477
    %v2646 = vpop.f32.mrf.mxu0
    %v2647 = vadd.f32 %v2177, %v2646
    %v2648 = vpop.f32.mrf.mxu0
    %2649 = vmatprep.mubr.f32.mxu0 %v1737
    %2650 = vmatmul.mubr.f32.gmra.mxu0 %v1481
    %v2651 = vpop.f32.mrf.mxu0
    %v2652 = vadd.f32 %v2182, %v2651
    %v2653 = vpop.f32.mrf.mxu0
    %2654 = vmatprep.mubr.f32.mxu0 %v1740
    %2655 = vmatmul.mubr.f32.gmra.mxu0 %v1485
    %v2656 = vpop.f32.mrf.mxu0
    %v2657 = vadd.f32 %v2187, %v2656
    %v2658 = vpop.f32.mrf.mxu0
    %2659 = vmatprep.mubr.f32.mxu0 %v1743
    %2660 = vmatmul.mubr.f32.gmra.mxu0 %v1489
    %v2661 = vpop.f32.mrf.mxu0
    %v2662 = vadd.f32 %v2192, %v2661
    %v2663 = vpop.f32.mrf.mxu0
    %2664 = vmatprep.mubr.f32.mxu0 %v1746
    %2665 = vmatmul.mubr.f32.gmra.mxu0 %v1493
    %v2666 = vpop.f32.mrf.mxu0
    %v2667 = vadd.f32 %v2197, %v2666
    %v2668 = vpop.f32.mrf.mxu0
    %2669 = vmatprep.mubr.f32.mxu0 %v1749
    %2670 = vmatmul.mubr.f32.gmra.mxu0 %v1497
    %v2671 = vpop.f32.mrf.mxu0
    %v2672 = vadd.f32 %v2202, %v2671
    %v2673 = vpop.f32.mrf.mxu0
    %2674 = vmatprep.mubr.f32.mxu0 %v1752
    %2675 = vmatmul.mubr.f32.gmra.mxu0 %v1501
    %v2676 = vpop.f32.mrf.mxu0
    %v2677 = vadd.f32 %v2207, %v2676
    %v2678 = vpop.f32.mrf.mxu0
    %2679 = vmatprep.mubr.f32.mxu0 %v1755
    %2680 = vmatmul.mubr.f32.gmra.mxu0 %v1505
    %v2681 = vpop.f32.mrf.mxu0
    %v2682 = vadd.f32 %v2212, %v2681
    %v2683 = vpop.f32.mrf.mxu0
    %2684 = vmatprep.mubr.f32.mxu0 %v1758
    %2685 = vmatmul.mubr.f32.gmra.mxu0 %v1509
    %v2686 = vpop.f32.mrf.mxu0
    %v2687 = vadd.f32 %v2217, %v2686
    %v2688 = vpop.f32.mrf.mxu0
    %2689 = vmatprep.mubr.f32.mxu0 %v1761
    %2690 = vmatmul.mubr.f32.gmra.mxu0 %v1513
    %v2691 = vpop.f32.mrf.mxu0
    %v2692 = vadd.f32 %v2222, %v2691
    %v2693 = vpop.f32.mrf.mxu0
    %2694 = vmatprep.mubr.f32.mxu0 %v1764
    %2695 = vmatmul.mubr.f32.gmra.mxu0 %v1517
    %v2696 = vpop.f32.mrf.mxu0
    %v2697 = vadd.f32 %v2227, %v2696
    %v2698 = vpop.f32.mrf.mxu0
    %2699 = vmatprep.mubr.f32.mxu0 %v1767
    %2700 = vmatmul.mubr.f32.gmra.mxu0 %v1521
    %v2701 = vpop.f32.mrf.mxu0
    %v2702 = vadd.f32 %v2232, %v2701
    %v2703 = vpop.f32.mrf.mxu0
    %2704 = vmatprep.mubr.f32.mxu0 %v1770
    %2705 = vmatmul.mubr.f32.gmra.mxu0 %v1525
    %v2706 = vpop.f32.mrf.mxu0
    %v2707 = vadd.f32 %v2237, %v2706
    %v2708 = vpop.f32.mrf.mxu0
    %2709 = vmatprep.mubr.f32.mxu0 %v1773
    %2710 = vmatmul.mubr.f32.gmra.mxu0 %v1529
    %v2711 = vpop.f32.mrf.mxu0
    %v2712 = vadd.f32 %v2242, %v2711
    %v2713 = vpop.f32.mrf.mxu0
    %2714 = vdwg.mxu0
    %v2715 = vmax.f32 %v2312, %v2447
    %v2716 = vmax.f32 %v2317, %v2452
    %v2717 = vmax.f32 %v2322, %v2457
    %v2718 = vmax.f32 %v2327, %v2462
    %v2719 = vmax.f32 %v2332, %v2467
    %v2720 = vmax.f32 %v2337, %v2472
    %v2721 = vmax.f32 %v2342, %v2477
    %v2722 = vmax.f32 %v2347, %v2482
    %v2723 = vmax.f32 %v2352, %v2487
    %v2724 = vmax.f32 %v2357, %v2492
    %v2725 = vmax.f32 %v2362, %v2497
    %v2726 = vmax.f32 %v2367, %v2502
    %v2727 = vmax.f32 %v2372, %v2507
    %v2728 = vmax.f32 %v2377, %v2512
    %v2729 = vmax.f32 %v2382, %v2517
    %v2730 = vmax.f32 %v2387, %v2522
    %v2731 = vmax.f32 %v2392, %v2527
    %v2732 = vmax.f32 %v2397, %v2532
    %v2733 = vmax.f32 %v2402, %v2537
    %v2734 = vmax.f32 %v2407, %v2542
    %v2735 = vmax.f32 %v2412, %v2547
    %v2736 = vmax.f32 %v2417, %v2552
    %v2737 = vmax.f32 %v2422, %v2557
    %v2738 = vmax.f32 %v2427, %v2562
    %v2739 = vmax.f32 %v2432, %v2567
    %v2740 = vmax.f32 %v2437, %v2572
    %v2741 = vmax.f32 %v2442, %v2577
    %v2742 = vmax.f32 %v2715, %v2582
    %v2743 = vmax.f32 %v2716, %v2587
    %v2744 = vmax.f32 %v2717, %v2592
    %v2745 = vmax.f32 %v2718, %v2597
    %v2746 = vmax.f32 %v2719, %v2602
    %v2747 = vmax.f32 %v2720, %v2607
    %v2748 = vmax.f32 %v2721, %v2612
    %v2749 = vmax.f32 %v2722, %v2617
    %v2750 = vmax.f32 %v2723, %v2622
    %v2751 = vmax.f32 %v2724, %v2627
    %v2752 = vmax.f32 %v2725, %v2632
    %v2753 = vmax.f32 %v2726, %v2637
    %v2754 = vmax.f32 %v2727, %v2642
    %v2755 = vmax.f32 %v2728, %v2647
    %v2756 = vmax.f32 %v2729, %v2652
    %v2757 = vmax.f32 %v2730, %v2657
    %v2758 = vmax.f32 %v2731, %v2662
    %v2759 = vmax.f32 %v2732, %v2667
    %v2760 = vmax.f32 %v2733, %v2672
    %v2761 = vmax.f32 %v2734, %v2677
    %v2762 = vmax.f32 %v2735, %v2682
    %v2763 = vmax.f32 %v2736, %v2687
    %v2764 = vmax.f32 %v2737, %v2692
    %v2765 = vmax.f32 %v2738, %v2697
    %v2766 = vmax.f32 %v2739, %v2702
    %v2767 = vmax.f32 %v2740, %v2707
    %v2768 = vmax.f32 %v2741, %v2712
    %v2769 = vld [vmem:[%s6] sm:$0xff]
    %v2770 = vld [vmem:[%s6 + $0x8] sm:$0xff]
    %v2771 = vld [vmem:[%s6 + $0x10] sm:$0xff]
    %v2772 = vld [vmem:[%s6 + $0x18] sm:$0xff]
    %v2773 = vld [vmem:[%s6 + $0x20] sm:$0xff]
    %v2774 = vld [vmem:[%s6 + $0x28] sm:$0xff]
    %v2775 = vld [vmem:[%s6 + $0x30] sm:$0xff]
    %v2776 = vld [vmem:[%s6 + $0x38] sm:$0xff]
    %v2777 = vld [vmem:[%s6 + $0x40] sm:$0xff]
    %v2778 = vld [vmem:[%s6 + $0x48] sm:$0xff]
    %v2779 = vld [vmem:[%s6 + $0x50] sm:$0xff]
    %v2780 = vld [vmem:[%s6 + $0x58] sm:$0xff]
    %v2781 = vld [vmem:[%s6 + $0x60] sm:$0xff]
    %v2782 = vld [vmem:[%s6 + $0x68] sm:$0xff]
    %v2783 = vld [vmem:[%s6 + $0x70] sm:$0xff]
    %v2784 = vld [vmem:[%s6 + $0x78] sm:$0xff]
    %v2785 = vld [vmem:[%s6 + $0x80] sm:$0xff]
    %v2786 = vld [vmem:[%s6 + $0x88] sm:$0xff]
    %v2787 = vld [vmem:[%s6 + $0x90] sm:$0xff]
    %v2788 = vld [vmem:[%s6 + $0x98] sm:$0xff]
    %v2789 = vld [vmem:[%s6 + $0xa0] sm:$0xff]
    %v2790 = vld [vmem:[%s6 + $0xa8] sm:$0xff]
    %v2791 = vld [vmem:[%s6 + $0xb0] sm:$0xff]
    %v2792 = vld [vmem:[%s6 + $0xb8] sm:$0xff]
    %v2793 = vld [vmem:[%s6 + $0xc0] sm:$0xff]
    %v2794 = vld [vmem:[%s6 + $0xc8] sm:$0xff]
    %v2795 = vld [vmem:[%s6 + $0xd0] sm:$0xff]
    %v2796 = vld [vmem:[%s6 + $0xd8] sm:$0xff]
    %v2797 = vld [vmem:[%s6 + $0xe0] sm:$0xff]
    %v2798 = vld [vmem:[%s6 + $0xe8] sm:$0xff]
    %v2799 = vld [vmem:[%s6 + $0xf0] sm:$0xff]
    %v2800 = vld [vmem:[%s6 + $0xf8] sm:$0xff]
    %v2801 = vld [vmem:[%s6 + $0x100] sm:$0xff]
    %v2802 = vld [vmem:[%s6 + $0x108] sm:$0xff]
    %v2803 = vld [vmem:[%s6 + $0x110] sm:$0xff]
    %v2804 = vld [vmem:[%s6 + $0x118] sm:$0xff]
    %v2805 = vld [vmem:[%s6 + $0x120] sm:$0xff]
    %v2806 = vld [vmem:[%s6 + $0x128] sm:$0xff]
    %v2807 = vld [vmem:[%s6 + $0x130] sm:$0xff]
    %v2808 = vld [vmem:[%s6 + $0x138] sm:$0xff]
    %v2809 = vld [vmem:[%s6 + $0x140] sm:$0xff]
    %v2810 = vld [vmem:[%s6 + $0x148] sm:$0xff]
    %v2811 = vld [vmem:[%s6 + $0x150] sm:$0xff]
    %v2812 = vld [vmem:[%s6 + $0x158] sm:$0xff]
    %v2813 = vld [vmem:[%s6 + $0x160] sm:$0xff]
    %v2814 = vld [vmem:[%s6 + $0x168] sm:$0xff]
    %v2815 = vld [vmem:[%s6 + $0x170] sm:$0xff]
    %v2816 = vld [vmem:[%s6 + $0x178] sm:$0xff]
    %v2817 = vld [vmem:[%s6 + $0x180] sm:$0xff]
    %v2818 = vld [vmem:[%s6 + $0x188] sm:$0xff]
    %v2819 = vld [vmem:[%s6 + $0x190] sm:$0xff]
    %v2820 = vld [vmem:[%s6 + $0x198] sm:$0xff]
    %v2821 = vld [vmem:[%s6 + $0x1a0] sm:$0xff]
    %v2822 = vld [vmem:[%s6 + $0x1a8] sm:$0xff]
    %v2823 = vld [vmem:[%s6 + $0x1b0] sm:$0xff]
    %v2824 = vld [vmem:[%s6 + $0x1b8] sm:$0xff]
    %v2825 = vld [vmem:[%s6 + $0x1c0] sm:$0xff]
    %v2826 = vld [vmem:[%s6 + $0x1c8] sm:$0xff]
    %v2827 = vld [vmem:[%s6 + $0x1d0] sm:$0xff]
    %v2828 = vld [vmem:[%s6 + $0x1d8] sm:$0xff]
    %v2829 = vld [vmem:[%s6 + $0x1e0] sm:$0xff]
    %v2830 = vld [vmem:[%s6 + $0x1e8] sm:$0xff]
    %v2831 = vld [vmem:[%s6 + $0x1f0] sm:$0xff]
    %v2832 = vld [vmem:[%s6 + $0x1f8] sm:$0xff]
    %v2833 = vld [vmem:[%s6 + $0x200] sm:$0xff]
    %v2834 = vld [vmem:[%s6 + $0x208] sm:$0xff]
    %v2835 = vld [vmem:[%s6 + $0x210] sm:$0xff]
    %v2836 = vld [vmem:[%s6 + $0x218] sm:$0xff]
    %v2837 = vld [vmem:[%s6 + $0x220] sm:$0xff]
    %v2838 = vld [vmem:[%s6 + $0x228] sm:$0xff]
    %v2839 = vld [vmem:[%s6 + $0x230] sm:$0xff]
    %v2840 = vld [vmem:[%s6 + $0x238] sm:$0xff]
    %v2841 = vld [vmem:[%s6 + $0x240] sm:$0xff]
    %v2842 = vld [vmem:[%s6 + $0x248] sm:$0xff]
    %v2843 = vld [vmem:[%s6 + $0x250] sm:$0xff]
    %v2844 = vld [vmem:[%s6 + $0x258] sm:$0xff]
    %v2845 = vld [vmem:[%s6 + $0x260] sm:$0xff]
    %v2846 = vld [vmem:[%s6 + $0x268] sm:$0xff]
    %v2847 = vld [vmem:[%s6 + $0x270] sm:$0xff]
    %v2848 = vld [vmem:[%s6 + $0x278] sm:$0xff]
    %v2849 = vld [vmem:[%s6 + $0x280] sm:$0xf]
    %v2850 = vld [vmem:[%s6 + $0x288] sm:$0xf]
    %vm2851 = vcmask 719872
    %v2853 = vsel %vm2851, %v2770, 0
    %v2856 = vsel %vm2851, %v2772, 0
    %v2859 = vsel %vm2851, %v2774, 0
    %v2862 = vsel %vm2851, %v2776, 0
    %v2865 = vsel %vm2851, %v2778, 0
    %v2868 = vsel %vm2851, %v2780, 0
    %v2871 = vsel %vm2851, %v2782, 0
    %v2874 = vsel %vm2851, %v2784, 0
    %v2877 = vsel %vm2851, %v2786, 0
    %v2880 = vsel %vm2851, %v2788, 0
    %v2883 = vsel %vm2851, %v2790, 0
    %v2886 = vsel %vm2851, %v2792, 0
    %v2889 = vsel %vm2851, %v2794, 0
    %v2892 = vsel %vm2851, %v2796, 0
    %v2895 = vsel %vm2851, %v2798, 0
    %v2898 = vsel %vm2851, %v2800, 0
    %v2901 = vsel %vm2851, %v2802, 0
    %v2904 = vsel %vm2851, %v2804, 0
    %v2907 = vsel %vm2851, %v2806, 0
    %v2910 = vsel %vm2851, %v2808, 0
    %v2913 = vsel %vm2851, %v2810, 0
    %v2916 = vsel %vm2851, %v2812, 0
    %v2919 = vsel %vm2851, %v2814, 0
    %v2922 = vsel %vm2851, %v2816, 0
    %v2925 = vsel %vm2851, %v2818, 0
    %v2928 = vsel %vm2851, %v2820, 0
    %v2931 = vsel %vm2851, %v2822, 0
    %v2934 = vsel %vm2851, %v2824, 0
    %v2937 = vsel %vm2851, %v2826, 0
    %v2940 = vsel %vm2851, %v2828, 0
    %v2943 = vsel %vm2851, %v2830, 0
    %v2946 = vsel %vm2851, %v2832, 0
    %v2949 = vsel %vm2851, %v2834, 0
    %v2952 = vsel %vm2851, %v2836, 0
    %v2955 = vsel %vm2851, %v2838, 0
    %v2958 = vsel %vm2851, %v2840, 0
    %v2961 = vsel %vm2851, %v2842, 0
    %v2964 = vsel %vm2851, %v2844, 0
    %v2967 = vsel %vm2851, %v2846, 0
    %v2970 = vsel %vm2851, %v2848, 0
    %v2973 = vsel %vm2851, %v2850, 0
    %2975 = vmatprep.subr.mxu0 0.0
    %2976 = vmatpush1.msra.mxu0 %v2757
    %2977 = vmatprep.subr.mxu0 0.0
    %2978 = vmatpush1.msra.mxu0 %v2756
    %2979 = vmatprep.subr.mxu0 0.0
    %2980 = vmatpush1.msra.mxu0 %v2755
    %2981 = vmatprep.subr.mxu0 0.0
    %2982 = vmatpush1.msra.mxu0 %v2754
    %2983 = vmatprep.subr.mxu0 0.0
    %2984 = vmatpush1.msra.mxu0 %v2753
    %2985 = vmatprep.subr.mxu0 0.0
    %2986 = vmatpush1.msra.mxu0 %v2752
    %2987 = vmatprep.subr.mxu0 0.0
    %2988 = vmatpush1.msra.mxu0 %v2751
    %2989 = vmatprep.subr.mxu0 0.0
    %2990 = vmatpush1.msra.mxu0 %v2750
    %2991 = vmatprep.subr.mxu0 0.0
    %2992 = vmatpush1.msra.mxu0 %v2749
    %2993 = vmatprep.subr.mxu0 0.0
    %2994 = vmatpush1.msra.mxu0 %v2748
    %2995 = vmatprep.subr.mxu0 0.0
    %2996 = vmatpush1.msra.mxu0 %v2747
    %2997 = vmatprep.subr.mxu0 0.0
    %2998 = vmatpush1.msra.mxu0 %v2746
    %2999 = vmatprep.subr.mxu0 0.0
    %3000 = vmatpush1.msra.mxu0 %v2745
    %3001 = vmatprep.subr.mxu0 0.0
    %3002 = vmatpush1.msra.mxu0 %v2744
    %3003 = vmatprep.subr.mxu0 0.0
    %3004 = vmatpush1.msra.mxu0 %v2743
    %3005 = vmatprep.subr.mxu0 0.0
    %3006 = vmatpush1.msra.mxu0 %v2742
    %3007 = vmatprep.subr.mxu0 0.0
    %3008 = vmatpush2.msra.mxu0 0.0
    %3009 = vmatprep.subr.mxu0 0.0
    %3010 = vmatpush2.msra.mxu0 0.0
    %3011 = vmatprep.subr.mxu0 0.0
    %3012 = vmatpush2.msra.mxu0 0.0
    %3013 = vmatprep.subr.mxu0 0.0
    %3014 = vmatpush2.msra.mxu0 0.0
    %3015 = vmatprep.subr.mxu0 0.0
    %3016 = vmatpush2.msra.mxu0 0.0
    %3017 = vmatprep.subr.mxu0 0.0
    %3018 = vmatpush2.msra.mxu0 %v2768
    %3019 = vmatprep.subr.mxu0 0.0
    %3020 = vmatpush2.msra.mxu0 %v2767
    %3021 = vmatprep.subr.mxu0 0.0
    %3022 = vmatpush2.msra.mxu0 %v2766
    %3023 = vmatprep.subr.mxu0 0.0
    %3024 = vmatpush2.msra.mxu0 %v2765
    %3025 = vmatprep.subr.mxu0 0.0
    %3026 = vmatpush2.msra.mxu0 %v2764
    %3027 = vmatprep.subr.mxu0 0.0
    %3028 = vmatpush2.msra.mxu0 %v2763
    %3029 = vmatprep.subr.mxu0 0.0
    %3030 = vmatpush2.msra.mxu0 %v2762
    %3031 = vmatprep.subr.mxu0 0.0
    %3032 = vmatpush2.msra.mxu0 %v2761
    %3033 = vmatprep.subr.mxu0 0.0
    %3034 = vmatpush2.msra.mxu0 %v2760
    %3035 = vmatprep.subr.mxu0 0.0
    %3036 = vmatpush2.msra.mxu0 %v2759
    %3037 = vmatprep.subr.mxu0 0.0
    %3038 = vmatpush2.msra.mxu0 %v2758
    %3039 = vmatprep.mubr.f32.mxu0 %v2853
    %3040 = vmatmul.mubr.f32.gmra.mxu0 %v2769
    %v3041 = vpop.f32.mrf.mxu0
    %v3042 = vadd.f32 0.0, %v3041
    %v3043 = vpop.f32.mrf.mxu0
    %3044 = vmatprep.mubr.f32.mxu0 %v2856
    %3045 = vmatmul.mubr.f32.gmra.mxu0 %v2771
    %v3046 = vpop.f32.mrf.mxu0
    %v3047 = vadd.f32 0.0, %v3046
    %v3048 = vpop.f32.mrf.mxu0
    %3049 = vmatprep.mubr.f32.mxu0 %v2859
    %3050 = vmatmul.mubr.f32.gmra.mxu0 %v2773
    %v3051 = vpop.f32.mrf.mxu0
    %v3052 = vadd.f32 0.0, %v3051
    %v3053 = vpop.f32.mrf.mxu0
    %3054 = vmatprep.mubr.f32.mxu0 %v2862
    %3055 = vmatmul.mubr.f32.gmra.mxu0 %v2775
    %v3056 = vpop.f32.mrf.mxu0
    %v3057 = vadd.f32 0.0, %v3056
    %v3058 = vpop.f32.mrf.mxu0
    %3059 = vmatprep.mubr.f32.mxu0 %v2865
    %3060 = vmatmul.mubr.f32.gmra.mxu0 %v2777
    %v3061 = vpop.f32.mrf.mxu0
    %v3062 = vadd.f32 0.0, %v3061
    %v3063 = vpop.f32.mrf.mxu0
    %3064 = vmatprep.mubr.f32.mxu0 %v2868
    %3065 = vmatmul.mubr.f32.gmra.mxu0 %v2779
    %v3066 = vpop.f32.mrf.mxu0
    %v3067 = vadd.f32 0.0, %v3066
    %v3068 = vpop.f32.mrf.mxu0
    %3069 = vmatprep.mubr.f32.mxu0 %v2871
    %3070 = vmatmul.mubr.f32.gmra.mxu0 %v2781
    %v3071 = vpop.f32.mrf.mxu0
    %v3072 = vadd.f32 0.0, %v3071
    %v3073 = vpop.f32.mrf.mxu0
    %3074 = vmatprep.mubr.f32.mxu0 %v2874
    %3075 = vmatmul.mubr.f32.gmra.mxu0 %v2783
    %v3076 = vpop.f32.mrf.mxu0
    %v3077 = vadd.f32 0.0, %v3076
    %v3078 = vpop.f32.mrf.mxu0
    %3079 = vmatprep.mubr.f32.mxu0 %v2877
    %3080 = vmatmul.mubr.f32.gmra.mxu0 %v2785
    %v3081 = vpop.f32.mrf.mxu0
    %v3082 = vadd.f32 0.0, %v3081
    %v3083 = vpop.f32.mrf.mxu0
    %3084 = vmatprep.mubr.f32.mxu0 %v2880
    %3085 = vmatmul.mubr.f32.gmra.mxu0 %v2787
    %v3086 = vpop.f32.mrf.mxu0
    %v3087 = vadd.f32 0.0, %v3086
    %v3088 = vpop.f32.mrf.mxu0
    %3089 = vmatprep.mubr.f32.mxu0 %v2883
    %3090 = vmatmul.mubr.f32.gmra.mxu0 %v2789
    %v3091 = vpop.f32.mrf.mxu0
    %v3092 = vadd.f32 0.0, %v3091
    %v3093 = vpop.f32.mrf.mxu0
    %3094 = vmatprep.mubr.f32.mxu0 %v2886
    %3095 = vmatmul.mubr.f32.gmra.mxu0 %v2791
    %v3096 = vpop.f32.mrf.mxu0
    %v3097 = vadd.f32 0.0, %v3096
    %v3098 = vpop.f32.mrf.mxu0
    %3099 = vmatprep.mubr.f32.mxu0 %v2889
    %3100 = vmatmul.mubr.f32.gmra.mxu0 %v2793
    %v3101 = vpop.f32.mrf.mxu0
    %v3102 = vadd.f32 0.0, %v3101
    %v3103 = vpop.f32.mrf.mxu0
    %3104 = vmatprep.mubr.f32.mxu0 %v2892
    %3105 = vmatmul.mubr.f32.gmra.mxu0 %v2795
    %v3106 = vpop.f32.mrf.mxu0
    %v3107 = vadd.f32 0.0, %v3106
    %v3108 = vpop.f32.mrf.mxu0
    %3109 = vmatprep.mubr.f32.mxu0 %v2895
    %3110 = vmatmul.mubr.f32.gmra.mxu0 %v2797
    %v3111 = vpop.f32.mrf.mxu0
    %v3112 = vadd.f32 0.0, %v3111
    %v3113 = vpop.f32.mrf.mxu0
    %3114 = vmatprep.mubr.f32.mxu0 %v2898
    %3115 = vmatmul.mubr.f32.gmra.mxu0 %v2799
    %v3116 = vpop.f32.mrf.mxu0
    %v3117 = vadd.f32 0.0, %v3116
    %v3118 = vpop.f32.mrf.mxu0
    %3119 = vmatprep.mubr.f32.mxu0 %v2901
    %3120 = vmatmul.mubr.f32.gmra.mxu0 %v2801
    %v3121 = vpop.f32.mrf.mxu0
    %v3122 = vadd.f32 0.0, %v3121
    %v3123 = vpop.f32.mrf.mxu0
    %3124 = vmatprep.mubr.f32.mxu0 %v2904
    %3125 = vmatmul.mubr.f32.gmra.mxu0 %v2803
    %v3126 = vpop.f32.mrf.mxu0
    %v3127 = vadd.f32 0.0, %v3126
    %v3128 = vpop.f32.mrf.mxu0
    %3129 = vmatprep.mubr.f32.mxu0 %v2907
    %3130 = vmatmul.mubr.f32.gmra.mxu0 %v2805
    %v3131 = vpop.f32.mrf.mxu0
    %v3132 = vadd.f32 0.0, %v3131
    %v3133 = vpop.f32.mrf.mxu0
    %3134 = vmatprep.mubr.f32.mxu0 %v2910
    %3135 = vmatmul.mubr.f32.gmra.mxu0 %v2807
    %v3136 = vpop.f32.mrf.mxu0
    %v3137 = vadd.f32 0.0, %v3136
    %v3138 = vpop.f32.mrf.mxu0
    %3139 = vmatprep.mubr.f32.mxu0 %v2913
    %3140 = vmatmul.mubr.f32.gmra.mxu0 %v2809
    %v3141 = vpop.f32.mrf.mxu0
    %v3142 = vadd.f32 0.0, %v3141
    %v3143 = vpop.f32.mrf.mxu0
    %3144 = vmatprep.mubr.f32.mxu0 %v2916
    %3145 = vmatmul.mubr.f32.gmra.mxu0 %v2811
    %v3146 = vpop.f32.mrf.mxu0
    %v3147 = vadd.f32 0.0, %v3146
    %v3148 = vpop.f32.mrf.mxu0
    %3149 = vmatprep.mubr.f32.mxu0 %v2919
    %3150 = vmatmul.mubr.f32.gmra.mxu0 %v2813
    %v3151 = vpop.f32.mrf.mxu0
    %v3152 = vadd.f32 0.0, %v3151
    %v3153 = vpop.f32.mrf.mxu0
    %3154 = vmatprep.mubr.f32.mxu0 %v2922
    %3155 = vmatmul.mubr.f32.gmra.mxu0 %v2815
    %v3156 = vpop.f32.mrf.mxu0
    %v3157 = vadd.f32 0.0, %v3156
    %v3158 = vpop.f32.mrf.mxu0
    %3159 = vmatprep.mubr.f32.mxu0 %v2925
    %3160 = vmatmul.mubr.f32.gmra.mxu0 %v2817
    %v3161 = vpop.f32.mrf.mxu0
    %v3162 = vadd.f32 0.0, %v3161
    %v3163 = vpop.f32.mrf.mxu0
    %3164 = vmatprep.mubr.f32.mxu0 %v2928
    %3165 = vmatmul.mubr.f32.gmra.mxu0 %v2819
    %v3166 = vpop.f32.mrf.mxu0
    %v3167 = vadd.f32 0.0, %v3166
    %v3168 = vpop.f32.mrf.mxu0
    %3169 = vmatprep.mubr.f32.mxu0 %v2931
    %3170 = vmatmul.mubr.f32.gmra.mxu0 %v2821
    %v3171 = vpop.f32.mrf.mxu0
    %v3172 = vadd.f32 0.0, %v3171
    %v3173 = vpop.f32.mrf.mxu0
    %3174 = vmatprep.mubr.f32.mxu0 %v2934
    %3175 = vmatmul.mubr.f32.gmra.mxu0 %v2823
    %v3176 = vpop.f32.mrf.mxu0
    %v3177 = vadd.f32 0.0, %v3176
    %v3178 = vpop.f32.mrf.mxu0
    %3179 = vmatprep.mubr.f32.mxu0 %v2937
    %3180 = vmatmul.mubr.f32.gmra.mxu0 %v2825
    %v3181 = vpop.f32.mrf.mxu0
    %v3182 = vadd.f32 0.0, %v3181
    %v3183 = vpop.f32.mrf.mxu0
    %3184 = vmatprep.mubr.f32.mxu0 %v2940
    %3185 = vmatmul.mubr.f32.gmra.mxu0 %v2827
    %v3186 = vpop.f32.mrf.mxu0
    %v3187 = vadd.f32 0.0, %v3186
    %v3188 = vpop.f32.mrf.mxu0
    %3189 = vmatprep.mubr.f32.mxu0 %v2943
    %3190 = vmatmul.mubr.f32.gmra.mxu0 %v2829
    %v3191 = vpop.f32.mrf.mxu0
    %v3192 = vadd.f32 0.0, %v3191
    %v3193 = vpop.f32.mrf.mxu0
    %3194 = vmatprep.mubr.f32.mxu0 %v2946
    %3195 = vmatmul.mubr.f32.gmra.mxu0 %v2831
    %v3196 = vpop.f32.mrf.mxu0
    %v3197 = vadd.f32 0.0, %v3196
    %v3198 = vpop.f32.mrf.mxu0
    %3199 = vmatprep.mubr.f32.mxu0 %v2949
    %3200 = vmatmul.mubr.f32.gmra.mxu0 %v2833
    %v3201 = vpop.f32.mrf.mxu0
    %v3202 = vadd.f32 0.0, %v3201
    %v3203 = vpop.f32.mrf.mxu0
    %3204 = vmatprep.mubr.f32.mxu0 %v2952
    %3205 = vmatmul.mubr.f32.gmra.mxu0 %v2835
    %v3206 = vpop.f32.mrf.mxu0
    %v3207 = vadd.f32 0.0, %v3206
    %v3208 = vpop.f32.mrf.mxu0
    %3209 = vmatprep.mubr.f32.mxu0 %v2955
    %3210 = vmatmul.mubr.f32.gmra.mxu0 %v2837
    %v3211 = vpop.f32.mrf.mxu0
    %v3212 = vadd.f32 0.0, %v3211
    %v3213 = vpop.f32.mrf.mxu0
    %3214 = vmatprep.mubr.f32.mxu0 %v2958
    %3215 = vmatmul.mubr.f32.gmra.mxu0 %v2839
    %v3216 = vpop.f32.mrf.mxu0
    %v3217 = vadd.f32 0.0, %v3216
    %v3218 = vpop.f32.mrf.mxu0
    %3219 = vmatprep.mubr.f32.mxu0 %v2961
    %3220 = vmatmul.mubr.f32.gmra.mxu0 %v2841
    %v3221 = vpop.f32.mrf.mxu0
    %v3222 = vadd.f32 0.0, %v3221
    %v3223 = vpop.f32.mrf.mxu0
    %3224 = vmatprep.mubr.f32.mxu0 %v2964
    %3225 = vmatmul.mubr.f32.gmra.mxu0 %v2843
    %v3226 = vpop.f32.mrf.mxu0
    %v3227 = vadd.f32 0.0, %v3226
    %v3228 = vpop.f32.mrf.mxu0
    %3229 = vmatprep.mubr.f32.mxu0 %v2967
    %3230 = vmatmul.mubr.f32.gmra.mxu0 %v2845
    %v3231 = vpop.f32.mrf.mxu0
    %v3232 = vadd.f32 0.0, %v3231
    %v3233 = vpop.f32.mrf.mxu0
    %3234 = vmatprep.mubr.f32.mxu0 %v2970
    %3235 = vmatmul.mubr.f32.gmra.mxu0 %v2847
    %v3236 = vpop.f32.mrf.mxu0
    %v3237 = vadd.f32 0.0, %v3236
    %v3238 = vpop.f32.mrf.mxu0
    %3239 = vmatprep.mubr.f32.mxu0 %v2973
    %3240 = vmatmul.mubr.f32.gmra.mxu0 %v2849
    %v3241 = vpop.f32.mrf.mxu0
    %v3242 = vadd.f32 0.0, %v3241
    %v3243 = vpop.f32.mrf.mxu0
    %3244 = vdwg.mxu0
    %vm3259 = vcmask 1043456
    %v3260 = vrot.slane %v3107, 4
    %v3261 = vrot.slane %v3112, 4
    %v3262 = vsel %vm3259, %v3260, %v3261
    %v3263 = vrot.slane %v3117, 4
    %v3264 = vsel %vm3259, %v3261, %v3263
    %v3265 = vrot.slane %v3122, 4
    %v3266 = vsel %vm3259, %v3263, %v3265
    %v3267 = vrot.slane %v3127, 4
    %v3268 = vsel %vm3259, %v3265, %v3267
    %v3269 = vrot.slane %v3132, 4
    %v3270 = vsel %vm3259, %v3267, %v3269
    %v3271 = vrot.slane %v3137, 4
    %v3272 = vsel %vm3259, %v3269, %v3271
    %v3273 = vrot.slane %v3142, 4
    %v3274 = vsel %vm3259, %v3271, %v3273
    %v3275 = vrot.slane %v3147, 4
    %v3276 = vsel %vm3259, %v3273, %v3275
    %v3277 = vrot.slane %v3152, 4
    %v3278 = vsel %vm3259, %v3275, %v3277
    %v3279 = vrot.slane %v3157, 4
    %v3280 = vsel %vm3259, %v3277, %v3279
    %v3281 = vrot.slane %v3162, 4
    %v3282 = vsel %vm3259, %v3279, %v3281
    %v3283 = vrot.slane %v3167, 4
    %v3284 = vsel %vm3259, %v3281, %v3283
    %v3285 = vrot.slane %v3172, 4
    %v3286 = vsel %vm3259, %v3283, %v3285
    %v3301 = vmax.f32 %v3042, %v3262
    %v3302 = vmax.f32 %v3047, %v3264
    %v3303 = vmax.f32 %v3052, %v3266
    %v3304 = vmax.f32 %v3057, %v3268
    %v3305 = vmax.f32 %v3062, %v3270
    %v3306 = vmax.f32 %v3067, %v3272
    %v3307 = vmax.f32 %v3072, %v3274
    %v3308 = vmax.f32 %v3077, %v3276
    %v3309 = vmax.f32 %v3082, %v3278
    %v3310 = vmax.f32 %v3087, %v3280
    %v3311 = vmax.f32 %v3092, %v3282
    %v3312 = vmax.f32 %v3097, %v3284
    %v3313 = vmax.f32 %v3102, %v3286
    %v3314 = vmax.f32 %v3107, %v3285
    %v3315 = vmax.f32 %v3301, %v3177
    %v3316 = vmax.f32 %v3302, %v3182
    %v3317 = vmax.f32 %v3303, %v3187
    %v3318 = vmax.f32 %v3304, %v3192
    %v3319 = vmax.f32 %v3305, %v3197
    %v3320 = vmax.f32 %v3306, %v3202
    %v3321 = vmax.f32 %v3307, %v3207
    %v3322 = vmax.f32 %v3308, %v3212
    %v3323 = vmax.f32 %v3309, %v3217
    %v3324 = vmax.f32 %v3310, %v3222
    %v3325 = vmax.f32 %v3311, %v3227
    %v3326 = vmax.f32 %v3312, %v3232
    %v3327 = vmax.f32 %v3313, %v3237
    %v3328 = vmax.f32 %v3314, %v3242
    %v3329 = vld [vmem:[%s7] sm:$0xff]
    %v3330 = vld [vmem:[%s7 + $0x8] sm:$0xff]
    %v3331 = vld [vmem:[%s7 + $0x10] sm:$0xff]
    %v3332 = vld [vmem:[%s7 + $0x18] sm:$0xff]
    %v3333 = vld [vmem:[%s7 + $0x20] sm:$0xff]
    %v3334 = vld [vmem:[%s7 + $0x28] sm:$0xff]
    %v3335 = vld [vmem:[%s7 + $0x30] sm:$0xff]
    %v3336 = vld [vmem:[%s7 + $0x38] sm:$0xff]
    %v3337 = vld [vmem:[%s7 + $0x40] sm:$0xff]
    %v3338 = vld [vmem:[%s7 + $0x48] sm:$0xff]
    %v3339 = vld [vmem:[%s7 + $0x50] sm:$0xff]
    %v3340 = vld [vmem:[%s7 + $0x58] sm:$0xff]
    %v3341 = vld [vmem:[%s7 + $0x60] sm:$0xff]
    %v3342 = vld [vmem:[%s7 + $0x68] sm:$0xff]
    %v3343 = vld [vmem:[%s7 + $0x70] sm:$0xff]
    %v3344 = vld [vmem:[%s7 + $0x78] sm:$0xff]
    %v3345 = vld [vmem:[%s7 + $0x80] sm:$0xff]
    %v3346 = vld [vmem:[%s7 + $0x88] sm:$0xff]
    %v3347 = vld [vmem:[%s7 + $0x90] sm:$0xff]
    %v3348 = vld [vmem:[%s7 + $0x98] sm:$0xff]
    %v3349 = vld [vmem:[%s7 + $0xa0] sm:$0x3]
    %vm3350 = vcmask 883712
    %v3352 = vsel %vm3350, %v3329, 0
    %v3355 = vsel %vm3350, %v3330, 0
    %v3358 = vsel %vm3350, %v3331, 0
    %v3361 = vsel %vm3350, %v3332, 0
    %v3364 = vsel %vm3350, %v3333, 0
    %v3367 = vsel %vm3350, %v3334, 0
    %v3370 = vsel %vm3350, %v3335, 0
    %v3373 = vsel %vm3350, %v3336, 0
    %v3376 = vsel %vm3350, %v3337, 0
    %v3379 = vsel %vm3350, %v3338, 0
    %v3382 = vsel %vm3350, %v3339, 0
    %v3385 = vsel %vm3350, %v3340, 0
    %v3388 = vsel %vm3350, %v3341, 0
    %v3391 = vsel %vm3350, %v3342, 0
    %v3394 = vsel %vm3350, %v3343, 0
    %v3397 = vsel %vm3350, %v3344, 0
    %v3400 = vsel %vm3350, %v3345, 0
    %v3403 = vsel %vm3350, %v3346, 0
    %v3406 = vsel %vm3350, %v3347, 0
    %v3409 = vsel %vm3350, %v3348, 0
    %v3412 = vsel %vm3350, %v3349, 0
    %v3415 = vsel %vm3259, %v3328, 0
    %3417 = vmatprep.subr.mxu0 0.0
    %3418 = vmatpush1.msra.mxu0 0.0
    %3419 = vmatprep.subr.mxu0 0.0
    %3420 = vmatpush1.msra.mxu0 0.0
    %3421 = vmatprep.subr.mxu0 0.0
    %3422 = vmatpush1.msra.mxu0 %v3415
    %3423 = vmatprep.subr.mxu0 0.0
    %3424 = vmatpush1.msra.mxu0 %v3327
    %3425 = vmatprep.subr.mxu0 0.0
    %3426 = vmatpush1.msra.mxu0 %v3326
    %3427 = vmatprep.subr.mxu0 0.0
    %3428 = vmatpush1.msra.mxu0 %v3325
    %3429 = vmatprep.subr.mxu0 0.0
    %3430 = vmatpush1.msra.mxu0 %v3324
    %3431 = vmatprep.subr.mxu0 0.0
    %3432 = vmatpush1.msra.mxu0 %v3323
    %3433 = vmatprep.subr.mxu0 0.0
    %3434 = vmatpush1.msra.mxu0 %v3322
    %3435 = vmatprep.subr.mxu0 0.0
    %3436 = vmatpush1.msra.mxu0 %v3321
    %3437 = vmatprep.subr.mxu0 0.0
    %3438 = vmatpush1.msra.mxu0 %v3320
    %3439 = vmatprep.subr.mxu0 0.0
    %3440 = vmatpush1.msra.mxu0 %v3319
    %3441 = vmatprep.subr.mxu0 0.0
    %3442 = vmatpush1.msra.mxu0 %v3318
    %3443 = vmatprep.subr.mxu0 0.0
    %3444 = vmatpush1.msra.mxu0 %v3317
    %3445 = vmatprep.subr.mxu0 0.0
    %3446 = vmatpush1.msra.mxu0 %v3316
    %3447 = vmatprep.subr.mxu0 0.0
    %3448 = vmatpush1.msra.mxu0 %v3315
    %3449 = vmatprep.subr.mxu0 0.0
    %3450 = vmatpush2.msra.mxu0 0.0
    %3451 = vmatprep.subr.mxu0 0.0
    %3452 = vmatpush2.msra.mxu0 0.0
    %3453 = vmatprep.subr.mxu0 0.0
    %3454 = vmatpush2.msra.mxu0 0.0
    %3455 = vmatprep.subr.mxu0 0.0
    %3456 = vmatpush2.msra.mxu0 0.0
    %3457 = vmatprep.subr.mxu0 0.0
    %3458 = vmatpush2.msra.mxu0 0.0
    %3459 = vmatprep.subr.mxu0 0.0
    %3460 = vmatpush2.msra.mxu0 0.0
    %3461 = vmatprep.subr.mxu0 0.0
    %3462 = vmatpush2.msra.mxu0 0.0
    %3463 = vmatprep.subr.mxu0 0.0
    %3464 = vmatpush2.msra.mxu0 0.0
    %3465 = vmatprep.subr.mxu0 0.0
    %3466 = vmatpush2.msra.mxu0 0.0
    %3467 = vmatprep.subr.mxu0 0.0
    %3468 = vmatpush2.msra.mxu0 0.0
    %3469 = vmatprep.subr.mxu0 0.0
    %3470 = vmatpush2.msra.mxu0 0.0
    %3471 = vmatprep.subr.mxu0 0.0
    %3472 = vmatpush2.msra.mxu0 0.0
    %3473 = vmatprep.subr.mxu0 0.0
    %3474 = vmatpush2.msra.mxu0 0.0
    %3475 = vmatprep.subr.mxu0 0.0
    %3476 = vmatpush2.msra.mxu0 0.0
    %3477 = vmatprep.subr.mxu0 0.0
    %3478 = vmatpush2.msra.mxu0 0.0
    %3479 = vmatprep.subr.mxu0 0.0
    %3480 = vmatpush2.msra.mxu0 0.0
    %3481 = vmatprep.mubr.f32.mxu0 0.0
    %3482 = vmatmul.mubr.f32.gmra.mxu0 %v3352
    %v3483 = vpop.f32.mrf.mxu0
    %v3484 = vadd.f32 0.0, %v3483
    %v3485 = vpop.f32.mrf.mxu0
    %3486 = vmatprep.mubr.f32.mxu0 0.0
    %3487 = vmatmul.mubr.f32.gmra.mxu0 %v3355
    %v3488 = vpop.f32.mrf.mxu0
    %v3489 = vadd.f32 0.0, %v3488
    %v3490 = vpop.f32.mrf.mxu0
    %3491 = vmatprep.mubr.f32.mxu0 0.0
    %3492 = vmatmul.mubr.f32.gmra.mxu0 %v3358
    %v3493 = vpop.f32.mrf.mxu0
    %v3494 = vadd.f32 0.0, %v3493
    %v3495 = vpop.f32.mrf.mxu0
    %3496 = vmatprep.mubr.f32.mxu0 0.0
    %3497 = vmatmul.mubr.f32.gmra.mxu0 %v3361
    %v3498 = vpop.f32.mrf.mxu0
    %v3499 = vadd.f32 0.0, %v3498
    %v3500 = vpop.f32.mrf.mxu0
    %3501 = vmatprep.mubr.f32.mxu0 0.0
    %3502 = vmatmul.mubr.f32.gmra.mxu0 %v3364
    %v3503 = vpop.f32.mrf.mxu0
    %v3504 = vadd.f32 0.0, %v3503
    %v3505 = vpop.f32.mrf.mxu0
    %3506 = vmatprep.mubr.f32.mxu0 0.0
    %3507 = vmatmul.mubr.f32.gmra.mxu0 %v3367
    %v3508 = vpop.f32.mrf.mxu0
    %v3509 = vadd.f32 0.0, %v3508
    %v3510 = vpop.f32.mrf.mxu0
    %3511 = vmatprep.mubr.f32.mxu0 0.0
    %3512 = vmatmul.mubr.f32.gmra.mxu0 %v3370
    %v3513 = vpop.f32.mrf.mxu0
    %v3514 = vadd.f32 0.0, %v3513
    %v3515 = vpop.f32.mrf.mxu0
    %3516 = vmatprep.mubr.f32.mxu0 0.0
    %3517 = vmatmul.mubr.f32.gmra.mxu0 %v3373
    %v3518 = vpop.f32.mrf.mxu0
    %v3519 = vadd.f32 0.0, %v3518
    %v3520 = vpop.f32.mrf.mxu0
    %3521 = vmatprep.mubr.f32.mxu0 0.0
    %3522 = vmatmul.mubr.f32.gmra.mxu0 %v3376
    %v3523 = vpop.f32.mrf.mxu0
    %v3524 = vadd.f32 0.0, %v3523
    %v3525 = vpop.f32.mrf.mxu0
    %3526 = vmatprep.mubr.f32.mxu0 0.0
    %3527 = vmatmul.mubr.f32.gmra.mxu0 %v3379
    %v3528 = vpop.f32.mrf.mxu0
    %v3529 = vadd.f32 0.0, %v3528
    %v3530 = vpop.f32.mrf.mxu0
    %3531 = vmatprep.mubr.f32.mxu0 0.0
    %3532 = vmatmul.mubr.f32.gmra.mxu0 %v3382
    %v3533 = vpop.f32.mrf.mxu0
    %v3534 = vadd.f32 0.0, %v3533
    %v3535 = vpop.f32.mrf.mxu0
    %3536 = vmatprep.mubr.f32.mxu0 0.0
    %3537 = vmatmul.mubr.f32.gmra.mxu0 %v3385
    %v3538 = vpop.f32.mrf.mxu0
    %v3539 = vadd.f32 0.0, %v3538
    %v3540 = vpop.f32.mrf.mxu0
    %3541 = vmatprep.mubr.f32.mxu0 0.0
    %3542 = vmatmul.mubr.f32.gmra.mxu0 %v3388
    %v3543 = vpop.f32.mrf.mxu0
    %v3544 = vadd.f32 0.0, %v3543
    %v3545 = vpop.f32.mrf.mxu0
    %3546 = vmatprep.mubr.f32.mxu0 0.0
    %3547 = vmatmul.mubr.f32.gmra.mxu0 %v3391
    %v3548 = vpop.f32.mrf.mxu0
    %v3549 = vadd.f32 0.0, %v3548
    %v3550 = vpop.f32.mrf.mxu0
    %3551 = vmatprep.mubr.f32.mxu0 0.0
    %3552 = vmatmul.mubr.f32.gmra.mxu0 %v3394
    %v3553 = vpop.f32.mrf.mxu0
    %v3554 = vadd.f32 0.0, %v3553
    %v3555 = vpop.f32.mrf.mxu0
    %3556 = vmatprep.mubr.f32.mxu0 0.0
    %3557 = vmatmul.mubr.f32.gmra.mxu0 %v3397
    %v3558 = vpop.f32.mrf.mxu0
    %v3559 = vadd.f32 0.0, %v3558
    %v3560 = vpop.f32.mrf.mxu0
    %3561 = vmatprep.mubr.f32.mxu0 0.0
    %3562 = vmatmul.mubr.f32.gmra.mxu0 %v3400
    %v3563 = vpop.f32.mrf.mxu0
    %v3564 = vadd.f32 0.0, %v3563
    %v3565 = vpop.f32.mrf.mxu0
    %3566 = vmatprep.mubr.f32.mxu0 0.0
    %3567 = vmatmul.mubr.f32.gmra.mxu0 %v3403
    %v3568 = vpop.f32.mrf.mxu0
    %v3569 = vadd.f32 0.0, %v3568
    %v3570 = vpop.f32.mrf.mxu0
    %3571 = vmatprep.mubr.f32.mxu0 0.0
    %3572 = vmatmul.mubr.f32.gmra.mxu0 %v3406
    %v3573 = vpop.f32.mrf.mxu0
    %v3574 = vadd.f32 0.0, %v3573
    %v3575 = vpop.f32.mrf.mxu0
    %3576 = vmatprep.mubr.f32.mxu0 0.0
    %3577 = vmatmul.mubr.f32.gmra.mxu0 %v3409
    %v3578 = vpop.f32.mrf.mxu0
    %v3579 = vadd.f32 0.0, %v3578
    %v3580 = vpop.f32.mrf.mxu0
    %3581 = vmatprep.mubr.f32.mxu0 0.0
    %3582 = vmatmul.mubr.f32.gmra.mxu0 %v3412
    %v3583 = vpop.f32.mrf.mxu0
    %v3584 = vadd.f32 0.0, %v3583
    %v3585 = vpop.f32.mrf.mxu0
    %3586 = vdwg.mxu0
    %vm3595 = vcmask 1041408
    %v3596 = vrot.slane %v3514, 6
    %v3597 = vrot.slane %v3519, 6
    %v3598 = vsel %vm3595, %v3596, %v3597
    %v3599 = vrot.slane %v3524, 6
    %v3600 = vsel %vm3595, %v3597, %v3599
    %v3601 = vrot.slane %v3529, 6
    %v3602 = vsel %vm3595, %v3599, %v3601
    %v3603 = vrot.slane %v3534, 6
    %v3604 = vsel %vm3595, %v3601, %v3603
    %v3605 = vrot.slane %v3539, 6
    %v3606 = vsel %vm3595, %v3603, %v3605
    %v3607 = vrot.slane %v3544, 6
    %v3608 = vsel %vm3595, %v3605, %v3607
    %v3609 = vrot.slane %v3549, 6
    %v3610 = vsel %vm3595, %v3607, %v3609
    %v3618 = vmax.f32 %v3484, %v3598
    %v3619 = vmax.f32 %v3489, %v3600
    %v3620 = vmax.f32 %v3494, %v3602
    %v3621 = vmax.f32 %v3499, %v3604
    %v3622 = vmax.f32 %v3504, %v3606
    %v3623 = vmax.f32 %v3509, %v3608
    %v3624 = vmax.f32 %v3514, %v3610
    %v3632 = vrot.slane %v3549, 4
    %v3633 = vrot.slane %v3554, 4
    %v3634 = vsel %vm3259, %v3632, %v3633
    %v3635 = vrot.slane %v3559, 4
    %v3636 = vsel %vm3259, %v3633, %v3635
    %v3637 = vrot.slane %v3564, 4
    %v3638 = vsel %vm3259, %v3635, %v3637
    %v3639 = vrot.slane %v3569, 4
    %v3640 = vsel %vm3259, %v3637, %v3639
    %v3641 = vrot.slane %v3574, 4
    %v3642 = vsel %vm3259, %v3639, %v3641
    %v3643 = vrot.slane %v3579, 4
    %v3644 = vsel %vm3259, %v3641, %v3643
    %v3645 = vrot.slane %v3584, 4
    %v3646 = vsel %vm3259, %v3643, %v3645
    %v3654 = vmax.f32 %v3618, %v3634
    %v3655 = vmax.f32 %v3619, %v3636
    %v3656 = vmax.f32 %v3620, %v3638
    %v3657 = vmax.f32 %v3621, %v3640
    %v3658 = vmax.f32 %v3622, %v3642
    %v3659 = vmax.f32 %v3623, %v3644
    %v3660 = vmax.f32 %v3624, %v3646
    %v3661 = vld [vmem:[%s8] sm:$0xff]
    %v3662 = vld [vmem:[%s8 + $0x8] sm:$0xff]
    %v3663 = vld [vmem:[%s8 + $0x10] sm:$0xff]
    %v3664 = vld [vmem:[%s8 + $0x18] sm:$0xff]
    %v3665 = vld [vmem:[%s8 + $0x20] sm:$0xff]
    %v3666 = vld [vmem:[%s8 + $0x28] sm:$0xff]
    %v3667 = vld [vmem:[%s8 + $0x30] sm:$0xff]
    %v3668 = vld [vmem:[%s8 + $0x38] sm:$0xff]
    %v3669 = vld [vmem:[%s8 + $0x40] sm:$0xff]
    %v3670 = vld [vmem:[%s8 + $0x48] sm:$0xff]
    %v3671 = vld [vmem:[%s8 + $0x50] sm:$0xff]
    %v3672 = vld [vmem:[%s8 + $0x58] sm:$0xff]
    %v3673 = vld [vmem:[%s8 + $0x60] sm:$0xff]
    %v3674 = vld [vmem:[%s8 + $0x68] sm:$0xff]
    %v3675 = vld [vmem:[%s8 + $0x70] sm:$0xff]
    %v3676 = vld [vmem:[%s8 + $0x78] sm:$0xff]
    %v3677 = vld [vmem:[%s8 + $0x80] sm:$0xff]
    %v3678 = vld [vmem:[%s8 + $0x88] sm:$0xff]
    %v3679 = vld [vmem:[%s8 + $0x90] sm:$0xff]
    %v3680 = vld [vmem:[%s8 + $0x98] sm:$0xff]
    %v3681 = vld [vmem:[%s8 + $0xa0] sm:$0xff]
    %v3682 = vld [vmem:[%s8 + $0xa8] sm:$0xff]
    %v3683 = vld [vmem:[%s8 + $0xb0] sm:$0xff]
    %v3684 = vld [vmem:[%s8 + $0xb8] sm:$0xff]
    %v3685 = vld [vmem:[%s8 + $0xc0] sm:$0xff]
    %v3686 = vld [vmem:[%s8 + $0xc8] sm:$0xff]
    %v3687 = vld [vmem:[%s8 + $0xd0] sm:$0xff]
    %v3688 = vld [vmem:[%s8 + $0xd8] sm:$0xff]
    %v3689 = vld [vmem:[%s8 + $0xe0] sm:$0xff]
    %v3690 = vld [vmem:[%s8 + $0xe8] sm:$0xff]
    %v3691 = vld [vmem:[%s8 + $0xf0] sm:$0xff]
    %v3692 = vld [vmem:[%s8 + $0xf8] sm:$0xff]
    %v3693 = vld [vmem:[%s8 + $0x100] sm:$0xff]
    %v3694 = vld [vmem:[%s8 + $0x108] sm:$0xff]
    %v3695 = vld [vmem:[%s8 + $0x110] sm:$0xff]
    %v3696 = vld [vmem:[%s8 + $0x118] sm:$0xff]
    %v3697 = vld [vmem:[%s8 + $0x120] sm:$0xff]
    %v3698 = vld [vmem:[%s8 + $0x128] sm:$0xff]
    %v3699 = vld [vmem:[%s8 + $0x130] sm:$0xff]
    %v3700 = vld [vmem:[%s8 + $0x138] sm:$0xff]
    %v3701 = vld [vmem:[%s8 + $0x140] sm:$0xff]
    %v3702 = vld [vmem:[%s8 + $0x148] sm:$0xff]
    %v3703 = vld [vmem:[%s8 + $0x150] sm:$0xff]
    %v3704 = vld [vmem:[%s8 + $0x158] sm:$0xff]
    %v3705 = vld [vmem:[%s8 + $0x160] sm:$0xff]
    %v3706 = vld [vmem:[%s8 + $0x168] sm:$0xff]
    %v3707 = vld [vmem:[%s8 + $0x170] sm:$0xff]
    %v3708 = vld [vmem:[%s8 + $0x178] sm:$0xff]
    %v3709 = vld [vmem:[%s8 + $0x180] sm:$0xff]
    %v3710 = vld [vmem:[%s8 + $0x188] sm:$0xff]
    %v3711 = vld [vmem:[%s8 + $0x190] sm:$0xff]
    %v3712 = vld [vmem:[%s8 + $0x198] sm:$0xff]
    %v3713 = vld [vmem:[%s8 + $0x1a0] sm:$0xff]
    %v3714 = vld [vmem:[%s8 + $0x1a8] sm:$0xff]
    %v3715 = vld [vmem:[%s8 + $0x1b0] sm:$0xff]
    %v3716 = vld [vmem:[%s8 + $0x1b8] sm:$0xff]
    %v3717 = vld [vmem:[%s8 + $0x1c0] sm:$0xff]
    %v3718 = vld [vmem:[%s8 + $0x1c8] sm:$0xff]
    %v3719 = vld [vmem:[%s8 + $0x1d0] sm:$0xff]
    %v3720 = vld [vmem:[%s8 + $0x1d8] sm:$0xff]
    %v3721 = vld [vmem:[%s8 + $0x1e0] sm:$0xff]
    %v3722 = vld [vmem:[%s8 + $0x1e8] sm:$0xff]
    %v3723 = vld [vmem:[%s8 + $0x1f0] sm:$0xff]
    %v3724 = vld [vmem:[%s8 + $0x1f8] sm:$0xff]
    %v3725 = vld [vmem:[%s8 + $0x200] sm:$0xff]
    %v3726 = vld [vmem:[%s8 + $0x208] sm:$0xff]
    %v3727 = vld [vmem:[%s8 + $0x210] sm:$0xff]
    %v3728 = vld [vmem:[%s8 + $0x218] sm:$0xff]
    %v3729 = vld [vmem:[%s8 + $0x220] sm:$0xff]
    %v3730 = vld [vmem:[%s8 + $0x228] sm:$0xff]
    %v3731 = vld [vmem:[%s8 + $0x230] sm:$0xff]
    %v3732 = vld [vmem:[%s8 + $0x238] sm:$0xff]
    %v3733 = vld [vmem:[%s8 + $0x240] sm:$0xff]
    %v3734 = vld [vmem:[%s8 + $0x248] sm:$0xff]
    %v3735 = vld [vmem:[%s8 + $0x250] sm:$0xff]
    %v3736 = vld [vmem:[%s8 + $0x258] sm:$0xff]
    %v3737 = vld [vmem:[%s8 + $0x260] sm:$0xff]
    %v3738 = vld [vmem:[%s8 + $0x268] sm:$0xff]
    %v3739 = vld [vmem:[%s8 + $0x270] sm:$0xff]
    %v3740 = vld [vmem:[%s8 + $0x278] sm:$0xff]
    %v3741 = vld [vmem:[%s8 + $0x280] sm:$0xff]
    %v3742 = vld [vmem:[%s8 + $0x288] sm:$0xff]
    %v3743 = vld [vmem:[%s8 + $0x290] sm:$0xff]
    %v3744 = vld [vmem:[%s8 + $0x298] sm:$0xff]
    %v3745 = vld [vmem:[%s8 + $0x2a0] sm:$0xff]
    %v3746 = vld [vmem:[%s8 + $0x2a8] sm:$0xff]
    %v3747 = vld [vmem:[%s8 + $0x2b0] sm:$0xff]
    %v3748 = vld [vmem:[%s8 + $0x2b8] sm:$0xff]
    %v3749 = vld [vmem:[%s8 + $0x2c0] sm:$0xff]
    %v3750 = vld [vmem:[%s8 + $0x2c8] sm:$0xff]
    %v3751 = vld [vmem:[%s8 + $0x2d0] sm:$0xff]
    %v3752 = vld [vmem:[%s8 + $0x2d8] sm:$0xff]
    %v3753 = vld [vmem:[%s8 + $0x2e0] sm:$0xff]
    %v3754 = vld [vmem:[%s8 + $0x2e8] sm:$0xff]
    %v3755 = vld [vmem:[%s8 + $0x2f0] sm:$0xff]
    %v3756 = vld [vmem:[%s8 + $0x2f8] sm:$0xff]
    %v3757 = vld [vmem:[%s8 + $0x300] sm:$0xff]
    %v3758 = vld [vmem:[%s8 + $0x308] sm:$0xff]
    %v3759 = vld [vmem:[%s8 + $0x310] sm:$0xff]
    %v3760 = vld [vmem:[%s8 + $0x318] sm:$0xff]
    %v3761 = vld [vmem:[%s8 + $0x320] sm:$0xff]
    %v3762 = vld [vmem:[%s8 + $0x328] sm:$0xff]
    %v3763 = vld [vmem:[%s8 + $0x330] sm:$0xff]
    %v3764 = vld [vmem:[%s8 + $0x338] sm:$0xff]
    %v3765 = vld [vmem:[%s8 + $0x340] sm:$0xff]
    %v3766 = vld [vmem:[%s8 + $0x348] sm:$0xff]
    %v3767 = vld [vmem:[%s8 + $0x350] sm:$0xff]
    %v3768 = vld [vmem:[%s8 + $0x358] sm:$0xff]
    %v3769 = vld [vmem:[%s8 + $0x360] sm:$0xff]
    %v3770 = vld [vmem:[%s8 + $0x368] sm:$0xff]
    %v3771 = vld [vmem:[%s8 + $0x370] sm:$0xff]
    %v3772 = vld [vmem:[%s8 + $0x378] sm:$0xff]
    %v3773 = vld [vmem:[%s8 + $0x380] sm:$0xff]
    %v3774 = vld [vmem:[%s8 + $0x388] sm:$0xff]
    %v3775 = vld [vmem:[%s8 + $0x390] sm:$0xff]
    %v3776 = vld [vmem:[%s8 + $0x398] sm:$0xff]
    %v3777 = vld [vmem:[%s8 + $0x3a0] sm:$0xff]
    %v3778 = vld [vmem:[%s8 + $0x3a8] sm:$0xff]
    %v3779 = vld [vmem:[%s8 + $0x3b0] sm:$0xff]
    %v3780 = vld [vmem:[%s8 + $0x3b8] sm:$0xff]
    %v3781 = vld [vmem:[%s8 + $0x3c0] sm:$0xff]
    %v3782 = vld [vmem:[%s8 + $0x3c8] sm:$0xff]
    %v3783 = vld [vmem:[%s8 + $0x3d0] sm:$0xff]
    %v3784 = vld [vmem:[%s8 + $0x3d8] sm:$0xff]
    %v3785 = vld [vmem:[%s8 + $0x3e0] sm:$0xff]
    %v3786 = vld [vmem:[%s8 + $0x3e8] sm:$0xff]
    %v3787 = vld [vmem:[%s8 + $0x3f0] sm:$0xff]
    %v3788 = vld [vmem:[%s8 + $0x3f8] sm:$0xff]
    %v3789 = vld [vmem:[%s8 + $0x400] sm:$0xff]
    %v3790 = vld [vmem:[%s8 + $0x408] sm:$0xff]
    %v3791 = vld [vmem:[%s8 + $0x410] sm:$0xff]
    %v3792 = vld [vmem:[%s8 + $0x418] sm:$0xff]
    %v3793 = vld [vmem:[%s8 + $0x420] sm:$0xff]
    %v3794 = vld [vmem:[%s8 + $0x428] sm:$0xff]
    %v3795 = vld [vmem:[%s8 + $0x430] sm:$0xff]
    %v3796 = vld [vmem:[%s8 + $0x438] sm:$0xff]
    %v3797 = vld [vmem:[%s8 + $0x440] sm:$0xff]
    %v3798 = vld [vmem:[%s8 + $0x448] sm:$0xff]
    %v3799 = vld [vmem:[%s8 + $0x450] sm:$0xff]
    %v3800 = vld [vmem:[%s8 + $0x458] sm:$0xff]
    %v3801 = vld [vmem:[%s8 + $0x460] sm:$0xff]
    %v3802 = vld [vmem:[%s8 + $0x468] sm:$0xff]
    %v3803 = vld [vmem:[%s8 + $0x470] sm:$0xff]
    %v3804 = vld [vmem:[%s8 + $0x478] sm:$0xff]
    %v3805 = vld [vmem:[%s8 + $0x480] sm:$0xff]
    %v3806 = vld [vmem:[%s8 + $0x488] sm:$0xff]
    %v3807 = vld [vmem:[%s8 + $0x490] sm:$0xff]
    %v3808 = vld [vmem:[%s8 + $0x498] sm:$0xff]
    %v3809 = vld [vmem:[%s8 + $0x4a0] sm:$0xff]
    %v3810 = vld [vmem:[%s8 + $0x4a8] sm:$0xff]
    %v3811 = vld [vmem:[%s8 + $0x4b0] sm:$0xff]
    %v3812 = vld [vmem:[%s8 + $0x4b8] sm:$0xff]
    %v3813 = vld [vmem:[%s8 + $0x4c0] sm:$0xff]
    %v3814 = vld [vmem:[%s8 + $0x4c8] sm:$0xff]
    %v3815 = vld [vmem:[%s8 + $0x4d0] sm:$0xff]
    %v3816 = vld [vmem:[%s8 + $0x4d8] sm:$0xff]
    %v3817 = vld [vmem:[%s8 + $0x4e0] sm:$0xff]
    %v3818 = vld [vmem:[%s8 + $0x4e8] sm:$0xff]
    %v3819 = vld [vmem:[%s8 + $0x4f0] sm:$0xff]
    %v3820 = vld [vmem:[%s8 + $0x4f8] sm:$0xff]
    %v3821 = vld [vmem:[%s8 + $0x500] sm:$0xff]
    %v3822 = vld [vmem:[%s8 + $0x508] sm:$0xff]
    %v3823 = vld [vmem:[%s8 + $0x510] sm:$0xff]
    %v3824 = vld [vmem:[%s8 + $0x518] sm:$0xff]
    %v3825 = vld [vmem:[%s8 + $0x520] sm:$0xff]
    %v3826 = vld [vmem:[%s8 + $0x528] sm:$0xff]
    %v3827 = vld [vmem:[%s8 + $0x530] sm:$0xff]
    %v3828 = vld [vmem:[%s8 + $0x538] sm:$0xff]
    %v3829 = vld [vmem:[%s8 + $0x540] sm:$0xff]
    %v3830 = vld [vmem:[%s8 + $0x548] sm:$0xff]
    %v3831 = vld [vmem:[%s8 + $0x550] sm:$0xff]
    %v3832 = vld [vmem:[%s8 + $0x558] sm:$0xff]
    %v3833 = vld [vmem:[%s8 + $0x560] sm:$0xff]
    %v3834 = vld [vmem:[%s8 + $0x568] sm:$0xff]
    %v3835 = vld [vmem:[%s8 + $0x570] sm:$0xff]
    %v3836 = vld [vmem:[%s8 + $0x578] sm:$0xff]
    %v3837 = vld [vmem:[%s8 + $0x580] sm:$0xff]
    %v3838 = vld [vmem:[%s8 + $0x588] sm:$0xff]
    %v3839 = vld [vmem:[%s8 + $0x590] sm:$0xff]
    %v3840 = vld [vmem:[%s8 + $0x598] sm:$0xff]
    %v3841 = vld [vmem:[%s8 + $0x5a0] sm:$0xff]
    %v3842 = vld [vmem:[%s8 + $0x5a8] sm:$0xff]
    %v3843 = vld [vmem:[%s8 + $0x5b0] sm:$0x3]
    %vm3844 = vcmask 441344
    %v3846 = vsel %vm3844, %v3661, 0
    %v3849 = vsel %vm3844, %v3662, 0
    %v3852 = vsel %vm3844, %v3663, 0
    %v3855 = vsel %vm3844, %v3664, 0
    %v3858 = vsel %vm3844, %v3665, 0
    %v3861 = vsel %vm3844, %v3666, 0
    %v3864 = vsel %vm3844, %v3667, 0
    %v3867 = vsel %vm3844, %v3668, 0
    %v3870 = vsel %vm3844, %v3669, 0
    %v3873 = vsel %vm3844, %v3670, 0
    %v3876 = vsel %vm3844, %v3671, 0
    %v3879 = vsel %vm3844, %v3672, 0
    %v3882 = vsel %vm3844, %v3673, 0
    %v3885 = vsel %vm3844, %v3674, 0
    %v3888 = vsel %vm3844, %v3675, 0
    %v3891 = vsel %vm3844, %v3676, 0
    %v3894 = vsel %vm3844, %v3677, 0
    %v3897 = vsel %vm3844, %v3678, 0
    %v3900 = vsel %vm3844, %v3679, 0
    %v3903 = vsel %vm3844, %v3680, 0
    %v3906 = vsel %vm3844, %v3681, 0
    %v3909 = vsel %vm3844, %v3682, 0
    %v3912 = vsel %vm3844, %v3683, 0
    %v3915 = vsel %vm3844, %v3684, 0
    %v3918 = vsel %vm3844, %v3685, 0
    %v3921 = vsel %vm3844, %v3686, 0
    %v3924 = vsel %vm3844, %v3687, 0
    %v3927 = vsel %vm3844, %v3688, 0
    %v3930 = vsel %vm3844, %v3689, 0
    %v3933 = vsel %vm3844, %v3690, 0
    %v3936 = vsel %vm3844, %v3691, 0
    %v3939 = vsel %vm3844, %v3692, 0
    %v3942 = vsel %vm3844, %v3693, 0
    %v3945 = vsel %vm3844, %v3694, 0
    %v3948 = vsel %vm3844, %v3695, 0
    %v3951 = vsel %vm3844, %v3696, 0
    %v3954 = vsel %vm3844, %v3697, 0
    %v3957 = vsel %vm3844, %v3698, 0
    %v3960 = vsel %vm3844, %v3699, 0
    %v3963 = vsel %vm3844, %v3700, 0
    %v3966 = vsel %vm3844, %v3701, 0
    %v3969 = vsel %vm3844, %v3702, 0
    %v3972 = vsel %vm3844, %v3703, 0
    %v3975 = vsel %vm3844, %v3704, 0
    %v3978 = vsel %vm3844, %v3705, 0
    %v3981 = vsel %vm3844, %v3706, 0
    %v3984 = vsel %vm3844, %v3707, 0
    %v3987 = vsel %vm3844, %v3708, 0
    %v3990 = vsel %vm3844, %v3709, 0
    %v3993 = vsel %vm3844, %v3710, 0
    %v3996 = vsel %vm3844, %v3711, 0
    %v3999 = vsel %vm3844, %v3712, 0
    %v4002 = vsel %vm3844, %v3713, 0
    %v4005 = vsel %vm3844, %v3714, 0
    %v4008 = vsel %vm3844, %v3715, 0
    %v4011 = vsel %vm3844, %v3716, 0
    %v4014 = vsel %vm3844, %v3717, 0
    %v4017 = vsel %vm3844, %v3718, 0
    %v4020 = vsel %vm3844, %v3719, 0
    %v4023 = vsel %vm3844, %v3720, 0
    %v4026 = vsel %vm3844, %v3721, 0
    %v4029 = vsel %vm3844, %v3722, 0
    %v4032 = vsel %vm3844, %v3723, 0
    %v4035 = vsel %vm3844, %v3724, 0
    %v4038 = vsel %vm3844, %v3725, 0
    %v4041 = vsel %vm3844, %v3726, 0
    %v4044 = vsel %vm3844, %v3727, 0
    %v4047 = vsel %vm3844, %v3728, 0
    %v4050 = vsel %vm3844, %v3729, 0
    %v4053 = vsel %vm3844, %v3730, 0
    %v4056 = vsel %vm3844, %v3731, 0
    %v4059 = vsel %vm3844, %v3732, 0
    %v4062 = vsel %vm3844, %v3733, 0
    %v4065 = vsel %vm3844, %v3734, 0
    %v4068 = vsel %vm3844, %v3735, 0
    %v4071 = vsel %vm3844, %v3736, 0
    %v4074 = vsel %vm3844, %v3737, 0
    %v4077 = vsel %vm3844, %v3738, 0
    %v4080 = vsel %vm3844, %v3739, 0
    %v4083 = vsel %vm3844, %v3740, 0
    %v4086 = vsel %vm3844, %v3741, 0
    %v4089 = vsel %vm3844, %v3742, 0
    %v4092 = vsel %vm3844, %v3743, 0
    %v4095 = vsel %vm3844, %v3744, 0
    %v4098 = vsel %vm3844, %v3745, 0
    %v4101 = vsel %vm3844, %v3746, 0
    %v4104 = vsel %vm3844, %v3747, 0
    %v4107 = vsel %vm3844, %v3748, 0
    %v4110 = vsel %vm3844, %v3749, 0
    %v4113 = vsel %vm3844, %v3750, 0
    %v4116 = vsel %vm3844, %v3751, 0
    %v4119 = vsel %vm3844, %v3752, 0
    %v4122 = vsel %vm3844, %v3753, 0
    %v4125 = vsel %vm3844, %v3754, 0
    %v4128 = vsel %vm3844, %v3755, 0
    %v4131 = vsel %vm3844, %v3756, 0
    %v4134 = vsel %vm3844, %v3757, 0
    %v4137 = vsel %vm3844, %v3758, 0
    %v4140 = vsel %vm3844, %v3759, 0
    %v4143 = vsel %vm3844, %v3760, 0
    %v4146 = vsel %vm3844, %v3761, 0
    %v4149 = vsel %vm3844, %v3762, 0
    %v4152 = vsel %vm3844, %v3763, 0
    %v4155 = vsel %vm3844, %v3764, 0
    %v4158 = vsel %vm3844, %v3765, 0
    %v4161 = vsel %vm3844, %v3766, 0
    %v4164 = vsel %vm3844, %v3767, 0
    %v4167 = vsel %vm3844, %v3768, 0
    %v4170 = vsel %vm3844, %v3769, 0
    %v4173 = vsel %vm3844, %v3770, 0
    %v4176 = vsel %vm3844, %v3771, 0
    %v4179 = vsel %vm3844, %v3772, 0
    %v4182 = vsel %vm3844, %v3773, 0
    %v4185 = vsel %vm3844, %v3774, 0
    %v4188 = vsel %vm3844, %v3775, 0
    %v4191 = vsel %vm3844, %v3776, 0
    %v4194 = vsel %vm3844, %v3777, 0
    %v4197 = vsel %vm3844, %v3778, 0
    %v4200 = vsel %vm3844, %v3779, 0
    %v4203 = vsel %vm3844, %v3780, 0
    %v4206 = vsel %vm3844, %v3781, 0
    %v4209 = vsel %vm3844, %v3782, 0
    %v4212 = vsel %vm3844, %v3783, 0
    %v4215 = vsel %vm3844, %v3784, 0
    %v4218 = vsel %vm3844, %v3785, 0
    %v4221 = vsel %vm3844, %v3786, 0
    %v4224 = vsel %vm3844, %v3787, 0
    %v4227 = vsel %vm3844, %v3788, 0
    %v4230 = vsel %vm3844, %v3789, 0
    %v4233 = vsel %vm3844, %v3790, 0
    %v4236 = vsel %vm3844, %v3791, 0
    %v4239 = vsel %vm3844, %v3792, 0
    %v4242 = vsel %vm3844, %v3793, 0
    %v4245 = vsel %vm3844, %v3794, 0
    %v4248 = vsel %vm3844, %v3795, 0
    %v4251 = vsel %vm3844, %v3796, 0
    %v4254 = vsel %vm3844, %v3797, 0
    %v4257 = vsel %vm3844, %v3798, 0
    %v4260 = vsel %vm3844, %v3799, 0
    %v4263 = vsel %vm3844, %v3800, 0
    %v4266 = vsel %vm3844, %v3801, 0
    %v4269 = vsel %vm3844, %v3802, 0
    %v4272 = vsel %vm3844, %v3803, 0
    %v4275 = vsel %vm3844, %v3804, 0
    %v4278 = vsel %vm3844, %v3805, 0
    %v4281 = vsel %vm3844, %v3806, 0
    %v4284 = vsel %vm3844, %v3807, 0
    %v4287 = vsel %vm3844, %v3808, 0
    %v4290 = vsel %vm3844, %v3809, 0
    %v4293 = vsel %vm3844, %v3810, 0
    %v4296 = vsel %vm3844, %v3811, 0
    %v4299 = vsel %vm3844, %v3812, 0
    %v4302 = vsel %vm3844, %v3813, 0
    %v4305 = vsel %vm3844, %v3814, 0
    %v4308 = vsel %vm3844, %v3815, 0
    %v4311 = vsel %vm3844, %v3816, 0
    %v4314 = vsel %vm3844, %v3817, 0
    %v4317 = vsel %vm3844, %v3818, 0
    %v4320 = vsel %vm3844, %v3819, 0
    %v4323 = vsel %vm3844, %v3820, 0
    %v4326 = vsel %vm3844, %v3821, 0
    %v4329 = vsel %vm3844, %v3822, 0
    %v4332 = vsel %vm3844, %v3823, 0
    %v4335 = vsel %vm3844, %v3824, 0
    %v4338 = vsel %vm3844, %v3825, 0
    %v4341 = vsel %vm3844, %v3826, 0
    %v4344 = vsel %vm3844, %v3827, 0
    %v4347 = vsel %vm3844, %v3828, 0
    %v4350 = vsel %vm3844, %v3829, 0
    %v4353 = vsel %vm3844, %v3830, 0
    %v4356 = vsel %vm3844, %v3831, 0
    %v4359 = vsel %vm3844, %v3832, 0
    %v4362 = vsel %vm3844, %v3833, 0
    %v4365 = vsel %vm3844, %v3834, 0
    %v4368 = vsel %vm3844, %v3835, 0
    %v4371 = vsel %vm3844, %v3836, 0
    %v4374 = vsel %vm3844, %v3837, 0
    %v4377 = vsel %vm3844, %v3838, 0
    %v4380 = vsel %vm3844, %v3839, 0
    %v4383 = vsel %vm3844, %v3840, 0
    %v4386 = vsel %vm3844, %v3841, 0
    %v4389 = vsel %vm3844, %v3842, 0
    %v4392 = vsel %vm3844, %v3843, 0
    %vm4394 = vcmask 1045504
    %v4396 = vsel %vm4394, %v3660, 0
    %4398 = vmatprep.subr.mxu0 0.0
    %4399 = vmatpush1.msra.mxu0 0.0
    %4400 = vmatprep.subr.mxu0 0.0
    %4401 = vmatpush1.msra.mxu0 0.0
    %4402 = vmatprep.subr.mxu0 0.0
    %4403 = vmatpush1.msra.mxu0 0.0
    %4404 = vmatprep.subr.mxu0 0.0
    %4405 = vmatpush1.msra.mxu0 0.0
    %4406 = vmatprep.subr.mxu0 0.0
    %4407 = vmatpush1.msra.mxu0 0.0
    %4408 = vmatprep.subr.mxu0 0.0
    %4409 = vmatpush1.msra.mxu0 0.0
    %4410 = vmatprep.subr.mxu0 0.0
    %4411 = vmatpush1.msra.mxu0 0.0
    %4412 = vmatprep.subr.mxu0 0.0
    %4413 = vmatpush1.msra.mxu0 0.0
    %4414 = vmatprep.subr.mxu0 0.0
    %4415 = vmatpush1.msra.mxu0 0.0
    %4416 = vmatprep.subr.mxu0 0.0
    %4417 = vmatpush1.msra.mxu0 %v4396
    %4418 = vmatprep.subr.mxu0 0.0
    %4419 = vmatpush1.msra.mxu0 %v3659
    %4420 = vmatprep.subr.mxu0 0.0
    %4421 = vmatpush1.msra.mxu0 %v3658
    %4422 = vmatprep.subr.mxu0 0.0
    %4423 = vmatpush1.msra.mxu0 %v3657
    %4424 = vmatprep.subr.mxu0 0.0
    %4425 = vmatpush1.msra.mxu0 %v3656
    %4426 = vmatprep.subr.mxu0 0.0
    %4427 = vmatpush1.msra.mxu0 %v3655
    %4428 = vmatprep.subr.mxu0 0.0
    %4429 = vmatpush1.msra.mxu0 %v3654
    %4430 = vmatprep.subr.mxu0 0.0
    %4431 = vmatpush2.msra.mxu0 0.0
    %4432 = vmatprep.subr.mxu0 0.0
    %4433 = vmatpush2.msra.mxu0 0.0
    %4434 = vmatprep.subr.mxu0 0.0
    %4435 = vmatpush2.msra.mxu0 0.0
    %4436 = vmatprep.subr.mxu0 0.0
    %4437 = vmatpush2.msra.mxu0 0.0
    %4438 = vmatprep.subr.mxu0 0.0
    %4439 = vmatpush2.msra.mxu0 0.0
    %4440 = vmatprep.subr.mxu0 0.0
    %4441 = vmatpush2.msra.mxu0 0.0
    %4442 = vmatprep.subr.mxu0 0.0
    %4443 = vmatpush2.msra.mxu0 0.0
    %4444 = vmatprep.subr.mxu0 0.0
    %4445 = vmatpush2.msra.mxu0 0.0
    %4446 = vmatprep.subr.mxu0 0.0
    %4447 = vmatpush2.msra.mxu0 0.0
    %4448 = vmatprep.subr.mxu0 0.0
    %4449 = vmatpush2.msra.mxu0 0.0
    %4450 = vmatprep.subr.mxu0 0.0
    %4451 = vmatpush2.msra.mxu0 0.0
    %4452 = vmatprep.subr.mxu0 0.0
    %4453 = vmatpush2.msra.mxu0 0.0
    %4454 = vmatprep.subr.mxu0 0.0
    %4455 = vmatpush2.msra.mxu0 0.0
    %4456 = vmatprep.subr.mxu0 0.0
    %4457 = vmatpush2.msra.mxu0 0.0
    %4458 = vmatprep.subr.mxu0 0.0
    %4459 = vmatpush2.msra.mxu0 0.0
    %4460 = vmatprep.subr.mxu0 0.0
    %4461 = vmatpush2.msra.mxu0 0.0
    %4462 = vmatprep.mubr.f32.mxu0 0.0
    %4463 = vmatmul.mubr.f32.gmra.mxu0 %v3846
    %v4464 = vpop.f32.mrf.mxu0
    %v4465 = vadd.f32 0.0, %v4464
    %v4466 = vpop.f32.mrf.mxu0
    %4467 = vmatprep.mubr.f32.mxu0 0.0
    %4468 = vmatmul.mubr.f32.gmra.mxu0 %v3849
    %v4469 = vpop.f32.mrf.mxu0
    %v4470 = vadd.f32 0.0, %v4469
    %v4471 = vpop.f32.mrf.mxu0
    %4472 = vmatprep.mubr.f32.mxu0 0.0
    %4473 = vmatmul.mubr.f32.gmra.mxu0 %v3852
    %v4474 = vpop.f32.mrf.mxu0
    %v4475 = vadd.f32 0.0, %v4474
    %v4476 = vpop.f32.mrf.mxu0
    %4477 = vmatprep.mubr.f32.mxu0 0.0
    %4478 = vmatmul.mubr.f32.gmra.mxu0 %v3855
    %v4479 = vpop.f32.mrf.mxu0
    %v4480 = vadd.f32 0.0, %v4479
    %v4481 = vpop.f32.mrf.mxu0
    %4482 = vmatprep.mubr.f32.mxu0 0.0
    %4483 = vmatmul.mubr.f32.gmra.mxu0 %v3858
    %v4484 = vpop.f32.mrf.mxu0
    %v4485 = vadd.f32 0.0, %v4484
    %v4486 = vpop.f32.mrf.mxu0
    %4487 = vmatprep.mubr.f32.mxu0 0.0
    %4488 = vmatmul.mubr.f32.gmra.mxu0 %v3861
    %v4489 = vpop.f32.mrf.mxu0
    %v4490 = vadd.f32 0.0, %v4489
    %v4491 = vpop.f32.mrf.mxu0
    %4492 = vmatprep.mubr.f32.mxu0 0.0
    %4493 = vmatmul.mubr.f32.gmra.mxu0 %v3864
    %v4494 = vpop.f32.mrf.mxu0
    %v4495 = vadd.f32 0.0, %v4494
    %v4496 = vpop.f32.mrf.mxu0
    %4497 = vmatprep.mubr.f32.mxu0 0.0
    %4498 = vmatmul.mubr.f32.gmra.mxu0 %v3867
    %v4499 = vpop.f32.mrf.mxu0
    %v4500 = vadd.f32 0.0, %v4499
    %v4501 = vpop.f32.mrf.mxu0
    %4502 = vmatprep.mubr.f32.mxu0 0.0
    %4503 = vmatmul.mubr.f32.gmra.mxu0 %v3870
    %v4504 = vpop.f32.mrf.mxu0
    %v4505 = vadd.f32 0.0, %v4504
    %v4506 = vpop.f32.mrf.mxu0
    %4507 = vmatprep.mubr.f32.mxu0 0.0
    %4508 = vmatmul.mubr.f32.gmra.mxu0 %v3873
    %v4509 = vpop.f32.mrf.mxu0
    %v4510 = vadd.f32 0.0, %v4509
    %v4511 = vpop.f32.mrf.mxu0
    %4512 = vmatprep.mubr.f32.mxu0 0.0
    %4513 = vmatmul.mubr.f32.gmra.mxu0 %v3876
    %v4514 = vpop.f32.mrf.mxu0
    %v4515 = vadd.f32 0.0, %v4514
    %v4516 = vpop.f32.mrf.mxu0
    %4517 = vmatprep.mubr.f32.mxu0 0.0
    %4518 = vmatmul.mubr.f32.gmra.mxu0 %v3879
    %v4519 = vpop.f32.mrf.mxu0
    %v4520 = vadd.f32 0.0, %v4519
    %v4521 = vpop.f32.mrf.mxu0
    %4522 = vmatprep.mubr.f32.mxu0 0.0
    %4523 = vmatmul.mubr.f32.gmra.mxu0 %v3882
    %v4524 = vpop.f32.mrf.mxu0
    %v4525 = vadd.f32 0.0, %v4524
    %v4526 = vpop.f32.mrf.mxu0
    %4527 = vmatprep.mubr.f32.mxu0 0.0
    %4528 = vmatmul.mubr.f32.gmra.mxu0 %v3885
    %v4529 = vpop.f32.mrf.mxu0
    %v4530 = vadd.f32 0.0, %v4529
    %v4531 = vpop.f32.mrf.mxu0
    %4532 = vmatprep.mubr.f32.mxu0 0.0
    %4533 = vmatmul.mubr.f32.gmra.mxu0 %v3888
    %v4534 = vpop.f32.mrf.mxu0
    %v4535 = vadd.f32 0.0, %v4534
    %v4536 = vpop.f32.mrf.mxu0
    %4537 = vmatprep.mubr.f32.mxu0 0.0
    %4538 = vmatmul.mubr.f32.gmra.mxu0 %v3891
    %v4539 = vpop.f32.mrf.mxu0
    %v4540 = vadd.f32 0.0, %v4539
    %v4541 = vpop.f32.mrf.mxu0
    %4542 = vmatprep.mubr.f32.mxu0 0.0
    %4543 = vmatmul.mubr.f32.gmra.mxu0 %v3894
    %v4544 = vpop.f32.mrf.mxu0
    %v4545 = vadd.f32 0.0, %v4544
    %v4546 = vpop.f32.mrf.mxu0
    %4547 = vmatprep.mubr.f32.mxu0 0.0
    %4548 = vmatmul.mubr.f32.gmra.mxu0 %v3897
    %v4549 = vpop.f32.mrf.mxu0
    %v4550 = vadd.f32 0.0, %v4549
    %v4551 = vpop.f32.mrf.mxu0
    %4552 = vmatprep.mubr.f32.mxu0 0.0
    %4553 = vmatmul.mubr.f32.gmra.mxu0 %v3900
    %v4554 = vpop.f32.mrf.mxu0
    %v4555 = vadd.f32 0.0, %v4554
    %v4556 = vpop.f32.mrf.mxu0
    %4557 = vmatprep.mubr.f32.mxu0 0.0
    %4558 = vmatmul.mubr.f32.gmra.mxu0 %v3903
    %v4559 = vpop.f32.mrf.mxu0
    %v4560 = vadd.f32 0.0, %v4559
    %v4561 = vpop.f32.mrf.mxu0
    %4562 = vmatprep.mubr.f32.mxu0 0.0
    %4563 = vmatmul.mubr.f32.gmra.mxu0 %v3906
    %v4564 = vpop.f32.mrf.mxu0
    %v4565 = vadd.f32 0.0, %v4564
    %v4566 = vpop.f32.mrf.mxu0
    %4567 = vmatprep.mubr.f32.mxu0 0.0
    %4568 = vmatmul.mubr.f32.gmra.mxu0 %v3909
    %v4569 = vpop.f32.mrf.mxu0
    %v4570 = vadd.f32 0.0, %v4569
    %v4571 = vpop.f32.mrf.mxu0
    %4572 = vmatprep.mubr.f32.mxu0 0.0
    %4573 = vmatmul.mubr.f32.gmra.mxu0 %v3912
    %v4574 = vpop.f32.mrf.mxu0
    %v4575 = vadd.f32 0.0, %v4574
    %v4576 = vpop.f32.mrf.mxu0
    %4577 = vmatprep.mubr.f32.mxu0 0.0
    %4578 = vmatmul.mubr.f32.gmra.mxu0 %v3915
    %v4579 = vpop.f32.mrf.mxu0
    %v4580 = vadd.f32 0.0, %v4579
    %v4581 = vpop.f32.mrf.mxu0
    %4582 = vmatprep.mubr.f32.mxu0 0.0
    %4583 = vmatmul.mubr.f32.gmra.mxu0 %v3918
    %v4584 = vpop.f32.mrf.mxu0
    %v4585 = vadd.f32 0.0, %v4584
    %v4586 = vpop.f32.mrf.mxu0
    %4587 = vmatprep.mubr.f32.mxu0 0.0
    %4588 = vmatmul.mubr.f32.gmra.mxu0 %v3921
    %v4589 = vpop.f32.mrf.mxu0
    %v4590 = vadd.f32 0.0, %v4589
    %v4591 = vpop.f32.mrf.mxu0
    %4592 = vmatprep.mubr.f32.mxu0 0.0
    %4593 = vmatmul.mubr.f32.gmra.mxu0 %v3924
    %v4594 = vpop.f32.mrf.mxu0
    %v4595 = vadd.f32 0.0, %v4594
    %v4596 = vpop.f32.mrf.mxu0
    %4597 = vmatprep.mubr.f32.mxu0 0.0
    %4598 = vmatmul.mubr.f32.gmra.mxu0 %v3927
    %v4599 = vpop.f32.mrf.mxu0
    %v4600 = vadd.f32 0.0, %v4599
    %v4601 = vpop.f32.mrf.mxu0
    %4602 = vmatprep.mubr.f32.mxu0 0.0
    %4603 = vmatmul.mubr.f32.gmra.mxu0 %v3930
    %v4604 = vpop.f32.mrf.mxu0
    %v4605 = vadd.f32 0.0, %v4604
    %v4606 = vpop.f32.mrf.mxu0
    %4607 = vmatprep.mubr.f32.mxu0 0.0
    %4608 = vmatmul.mubr.f32.gmra.mxu0 %v3933
    %v4609 = vpop.f32.mrf.mxu0
    %v4610 = vadd.f32 0.0, %v4609
    %v4611 = vpop.f32.mrf.mxu0
    %4612 = vmatprep.mubr.f32.mxu0 0.0
    %4613 = vmatmul.mubr.f32.gmra.mxu0 %v3936
    %v4614 = vpop.f32.mrf.mxu0
    %v4615 = vadd.f32 0.0, %v4614
    %v4616 = vpop.f32.mrf.mxu0
    %4617 = vmatprep.mubr.f32.mxu0 0.0
    %4618 = vmatmul.mubr.f32.gmra.mxu0 %v3939
    %v4619 = vpop.f32.mrf.mxu0
    %v4620 = vadd.f32 0.0, %v4619
    %v4621 = vpop.f32.mrf.mxu0
    %4622 = vmatprep.mubr.f32.mxu0 0.0
    %4623 = vmatmul.mubr.f32.gmra.mxu0 %v3942
    %v4624 = vpop.f32.mrf.mxu0
    %v4625 = vadd.f32 0.0, %v4624
    %v4626 = vpop.f32.mrf.mxu0
    %4627 = vmatprep.mubr.f32.mxu0 0.0
    %4628 = vmatmul.mubr.f32.gmra.mxu0 %v3945
    %v4629 = vpop.f32.mrf.mxu0
    %v4630 = vadd.f32 0.0, %v4629
    %v4631 = vpop.f32.mrf.mxu0
    %4632 = vmatprep.mubr.f32.mxu0 0.0
    %4633 = vmatmul.mubr.f32.gmra.mxu0 %v3948
    %v4634 = vpop.f32.mrf.mxu0
    %v4635 = vadd.f32 0.0, %v4634
    %v4636 = vpop.f32.mrf.mxu0
    %4637 = vmatprep.mubr.f32.mxu0 0.0
    %4638 = vmatmul.mubr.f32.gmra.mxu0 %v3951
    %v4639 = vpop.f32.mrf.mxu0
    %v4640 = vadd.f32 0.0, %v4639
    %v4641 = vpop.f32.mrf.mxu0
    %4642 = vmatprep.mubr.f32.mxu0 0.0
    %4643 = vmatmul.mubr.f32.gmra.mxu0 %v3954
    %v4644 = vpop.f32.mrf.mxu0
    %v4645 = vadd.f32 0.0, %v4644
    %v4646 = vpop.f32.mrf.mxu0
    %4647 = vmatprep.mubr.f32.mxu0 0.0
    %4648 = vmatmul.mubr.f32.gmra.mxu0 %v3957
    %v4649 = vpop.f32.mrf.mxu0
    %v4650 = vadd.f32 0.0, %v4649
    %v4651 = vpop.f32.mrf.mxu0
    %4652 = vmatprep.mubr.f32.mxu0 0.0
    %4653 = vmatmul.mubr.f32.gmra.mxu0 %v3960
    %v4654 = vpop.f32.mrf.mxu0
    %v4655 = vadd.f32 0.0, %v4654
    %v4656 = vpop.f32.mrf.mxu0
    %4657 = vmatprep.mubr.f32.mxu0 0.0
    %4658 = vmatmul.mubr.f32.gmra.mxu0 %v3963
    %v4659 = vpop.f32.mrf.mxu0
    %v4660 = vadd.f32 0.0, %v4659
    %v4661 = vpop.f32.mrf.mxu0
    %4662 = vmatprep.mubr.f32.mxu0 0.0
    %4663 = vmatmul.mubr.f32.gmra.mxu0 %v3966
    %v4664 = vpop.f32.mrf.mxu0
    %v4665 = vadd.f32 0.0, %v4664
    %v4666 = vpop.f32.mrf.mxu0
    %4667 = vmatprep.mubr.f32.mxu0 0.0
    %4668 = vmatmul.mubr.f32.gmra.mxu0 %v3969
    %v4669 = vpop.f32.mrf.mxu0
    %v4670 = vadd.f32 0.0, %v4669
    %v4671 = vpop.f32.mrf.mxu0
    %4672 = vmatprep.mubr.f32.mxu0 0.0
    %4673 = vmatmul.mubr.f32.gmra.mxu0 %v3972
    %v4674 = vpop.f32.mrf.mxu0
    %v4675 = vadd.f32 0.0, %v4674
    %v4676 = vpop.f32.mrf.mxu0
    %4677 = vmatprep.mubr.f32.mxu0 0.0
    %4678 = vmatmul.mubr.f32.gmra.mxu0 %v3975
    %v4679 = vpop.f32.mrf.mxu0
    %v4680 = vadd.f32 0.0, %v4679
    %v4681 = vpop.f32.mrf.mxu0
    %4682 = vmatprep.mubr.f32.mxu0 0.0
    %4683 = vmatmul.mubr.f32.gmra.mxu0 %v3978
    %v4684 = vpop.f32.mrf.mxu0
    %v4685 = vadd.f32 0.0, %v4684
    %v4686 = vpop.f32.mrf.mxu0
    %4687 = vmatprep.mubr.f32.mxu0 0.0
    %4688 = vmatmul.mubr.f32.gmra.mxu0 %v3981
    %v4689 = vpop.f32.mrf.mxu0
    %v4690 = vadd.f32 0.0, %v4689
    %v4691 = vpop.f32.mrf.mxu0
    %4692 = vmatprep.mubr.f32.mxu0 0.0
    %4693 = vmatmul.mubr.f32.gmra.mxu0 %v3984
    %v4694 = vpop.f32.mrf.mxu0
    %v4695 = vadd.f32 0.0, %v4694
    %v4696 = vpop.f32.mrf.mxu0
    %4697 = vmatprep.mubr.f32.mxu0 0.0
    %4698 = vmatmul.mubr.f32.gmra.mxu0 %v3987
    %v4699 = vpop.f32.mrf.mxu0
    %v4700 = vadd.f32 0.0, %v4699
    %v4701 = vpop.f32.mrf.mxu0
    %4702 = vmatprep.mubr.f32.mxu0 0.0
    %4703 = vmatmul.mubr.f32.gmra.mxu0 %v3990
    %v4704 = vpop.f32.mrf.mxu0
    %v4705 = vadd.f32 0.0, %v4704
    %v4706 = vpop.f32.mrf.mxu0
    %4707 = vmatprep.mubr.f32.mxu0 0.0
    %4708 = vmatmul.mubr.f32.gmra.mxu0 %v3993
    %v4709 = vpop.f32.mrf.mxu0
    %v4710 = vadd.f32 0.0, %v4709
    %v4711 = vpop.f32.mrf.mxu0
    %4712 = vmatprep.mubr.f32.mxu0 0.0
    %4713 = vmatmul.mubr.f32.gmra.mxu0 %v3996
    %v4714 = vpop.f32.mrf.mxu0
    %v4715 = vadd.f32 0.0, %v4714
    %v4716 = vpop.f32.mrf.mxu0
    %4717 = vmatprep.mubr.f32.mxu0 0.0
    %4718 = vmatmul.mubr.f32.gmra.mxu0 %v3999
    %v4719 = vpop.f32.mrf.mxu0
    %v4720 = vadd.f32 0.0, %v4719
    %v4721 = vpop.f32.mrf.mxu0
    %4722 = vmatprep.mubr.f32.mxu0 0.0
    %4723 = vmatmul.mubr.f32.gmra.mxu0 %v4002
    %v4724 = vpop.f32.mrf.mxu0
    %v4725 = vadd.f32 0.0, %v4724
    %v4726 = vpop.f32.mrf.mxu0
    %4727 = vmatprep.mubr.f32.mxu0 0.0
    %4728 = vmatmul.mubr.f32.gmra.mxu0 %v4005
    %v4729 = vpop.f32.mrf.mxu0
    %v4730 = vadd.f32 0.0, %v4729
    %v4731 = vpop.f32.mrf.mxu0
    %4732 = vmatprep.mubr.f32.mxu0 0.0
    %4733 = vmatmul.mubr.f32.gmra.mxu0 %v4008
    %v4734 = vpop.f32.mrf.mxu0
    %v4735 = vadd.f32 0.0, %v4734
    %v4736 = vpop.f32.mrf.mxu0
    %4737 = vmatprep.mubr.f32.mxu0 0.0
    %4738 = vmatmul.mubr.f32.gmra.mxu0 %v4011
    %v4739 = vpop.f32.mrf.mxu0
    %v4740 = vadd.f32 0.0, %v4739
    %v4741 = vpop.f32.mrf.mxu0
    %4742 = vmatprep.mubr.f32.mxu0 0.0
    %4743 = vmatmul.mubr.f32.gmra.mxu0 %v4014
    %v4744 = vpop.f32.mrf.mxu0
    %v4745 = vadd.f32 0.0, %v4744
    %v4746 = vpop.f32.mrf.mxu0
    %4747 = vmatprep.mubr.f32.mxu0 0.0
    %4748 = vmatmul.mubr.f32.gmra.mxu0 %v4017
    %v4749 = vpop.f32.mrf.mxu0
    %v4750 = vadd.f32 0.0, %v4749
    %v4751 = vpop.f32.mrf.mxu0
    %4752 = vmatprep.mubr.f32.mxu0 0.0
    %4753 = vmatmul.mubr.f32.gmra.mxu0 %v4020
    %v4754 = vpop.f32.mrf.mxu0
    %v4755 = vadd.f32 0.0, %v4754
    %v4756 = vpop.f32.mrf.mxu0
    %4757 = vmatprep.mubr.f32.mxu0 0.0
    %4758 = vmatmul.mubr.f32.gmra.mxu0 %v4023
    %v4759 = vpop.f32.mrf.mxu0
    %v4760 = vadd.f32 0.0, %v4759
    %v4761 = vpop.f32.mrf.mxu0
    %4762 = vmatprep.mubr.f32.mxu0 0.0
    %4763 = vmatmul.mubr.f32.gmra.mxu0 %v4026
    %v4764 = vpop.f32.mrf.mxu0
    %v4765 = vadd.f32 0.0, %v4764
    %v4766 = vpop.f32.mrf.mxu0
    %4767 = vmatprep.mubr.f32.mxu0 0.0
    %4768 = vmatmul.mubr.f32.gmra.mxu0 %v4029
    %v4769 = vpop.f32.mrf.mxu0
    %v4770 = vadd.f32 0.0, %v4769
    %v4771 = vpop.f32.mrf.mxu0
    %4772 = vmatprep.mubr.f32.mxu0 0.0
    %4773 = vmatmul.mubr.f32.gmra.mxu0 %v4032
    %v4774 = vpop.f32.mrf.mxu0
    %v4775 = vadd.f32 0.0, %v4774
    %v4776 = vpop.f32.mrf.mxu0
    %4777 = vmatprep.mubr.f32.mxu0 0.0
    %4778 = vmatmul.mubr.f32.gmra.mxu0 %v4035
    %v4779 = vpop.f32.mrf.mxu0
    %v4780 = vadd.f32 0.0, %v4779
    %v4781 = vpop.f32.mrf.mxu0
    %4782 = vmatprep.mubr.f32.mxu0 0.0
    %4783 = vmatmul.mubr.f32.gmra.mxu0 %v4038
    %v4784 = vpop.f32.mrf.mxu0
    %v4785 = vadd.f32 0.0, %v4784
    %v4786 = vpop.f32.mrf.mxu0
    %4787 = vmatprep.mubr.f32.mxu0 0.0
    %4788 = vmatmul.mubr.f32.gmra.mxu0 %v4041
    %v4789 = vpop.f32.mrf.mxu0
    %v4790 = vadd.f32 0.0, %v4789
    %v4791 = vpop.f32.mrf.mxu0
    %4792 = vmatprep.mubr.f32.mxu0 0.0
    %4793 = vmatmul.mubr.f32.gmra.mxu0 %v4044
    %v4794 = vpop.f32.mrf.mxu0
    %v4795 = vadd.f32 0.0, %v4794
    %v4796 = vpop.f32.mrf.mxu0
    %4797 = vmatprep.mubr.f32.mxu0 0.0
    %4798 = vmatmul.mubr.f32.gmra.mxu0 %v4047
    %v4799 = vpop.f32.mrf.mxu0
    %v4800 = vadd.f32 0.0, %v4799
    %v4801 = vpop.f32.mrf.mxu0
    %4802 = vmatprep.mubr.f32.mxu0 0.0
    %4803 = vmatmul.mubr.f32.gmra.mxu0 %v4050
    %v4804 = vpop.f32.mrf.mxu0
    %v4805 = vadd.f32 0.0, %v4804
    %v4806 = vpop.f32.mrf.mxu0
    %4807 = vmatprep.mubr.f32.mxu0 0.0
    %4808 = vmatmul.mubr.f32.gmra.mxu0 %v4053
    %v4809 = vpop.f32.mrf.mxu0
    %v4810 = vadd.f32 0.0, %v4809
    %v4811 = vpop.f32.mrf.mxu0
    %4812 = vmatprep.mubr.f32.mxu0 0.0
    %4813 = vmatmul.mubr.f32.gmra.mxu0 %v4056
    %v4814 = vpop.f32.mrf.mxu0
    %v4815 = vadd.f32 0.0, %v4814
    %v4816 = vpop.f32.mrf.mxu0
    %4817 = vmatprep.mubr.f32.mxu0 0.0
    %4818 = vmatmul.mubr.f32.gmra.mxu0 %v4059
    %v4819 = vpop.f32.mrf.mxu0
    %v4820 = vadd.f32 0.0, %v4819
    %v4821 = vpop.f32.mrf.mxu0
    %4822 = vmatprep.mubr.f32.mxu0 0.0
    %4823 = vmatmul.mubr.f32.gmra.mxu0 %v4062
    %v4824 = vpop.f32.mrf.mxu0
    %v4825 = vadd.f32 0.0, %v4824
    %v4826 = vpop.f32.mrf.mxu0
    %4827 = vmatprep.mubr.f32.mxu0 0.0
    %4828 = vmatmul.mubr.f32.gmra.mxu0 %v4065
    %v4829 = vpop.f32.mrf.mxu0
    %v4830 = vadd.f32 0.0, %v4829
    %v4831 = vpop.f32.mrf.mxu0
    %4832 = vmatprep.mubr.f32.mxu0 0.0
    %4833 = vmatmul.mubr.f32.gmra.mxu0 %v4068
    %v4834 = vpop.f32.mrf.mxu0
    %v4835 = vadd.f32 0.0, %v4834
    %v4836 = vpop.f32.mrf.mxu0
    %4837 = vmatprep.mubr.f32.mxu0 0.0
    %4838 = vmatmul.mubr.f32.gmra.mxu0 %v4071
    %v4839 = vpop.f32.mrf.mxu0
    %v4840 = vadd.f32 0.0, %v4839
    %v4841 = vpop.f32.mrf.mxu0
    %4842 = vmatprep.mubr.f32.mxu0 0.0
    %4843 = vmatmul.mubr.f32.gmra.mxu0 %v4074
    %v4844 = vpop.f32.mrf.mxu0
    %v4845 = vadd.f32 0.0, %v4844
    %v4846 = vpop.f32.mrf.mxu0
    %4847 = vmatprep.mubr.f32.mxu0 0.0
    %4848 = vmatmul.mubr.f32.gmra.mxu0 %v4077
    %v4849 = vpop.f32.mrf.mxu0
    %v4850 = vadd.f32 0.0, %v4849
    %v4851 = vpop.f32.mrf.mxu0
    %4852 = vmatprep.mubr.f32.mxu0 0.0
    %4853 = vmatmul.mubr.f32.gmra.mxu0 %v4080
    %v4854 = vpop.f32.mrf.mxu0
    %v4855 = vadd.f32 0.0, %v4854
    %v4856 = vpop.f32.mrf.mxu0
    %4857 = vmatprep.mubr.f32.mxu0 0.0
    %4858 = vmatmul.mubr.f32.gmra.mxu0 %v4083
    %v4859 = vpop.f32.mrf.mxu0
    %v4860 = vadd.f32 0.0, %v4859
    %v4861 = vpop.f32.mrf.mxu0
    %4862 = vmatprep.mubr.f32.mxu0 0.0
    %4863 = vmatmul.mubr.f32.gmra.mxu0 %v4086
    %v4864 = vpop.f32.mrf.mxu0
    %v4865 = vadd.f32 0.0, %v4864
    %v4866 = vpop.f32.mrf.mxu0
    %4867 = vmatprep.mubr.f32.mxu0 0.0
    %4868 = vmatmul.mubr.f32.gmra.mxu0 %v4089
    %v4869 = vpop.f32.mrf.mxu0
    %v4870 = vadd.f32 0.0, %v4869
    %v4871 = vpop.f32.mrf.mxu0
    %4872 = vmatprep.mubr.f32.mxu0 0.0
    %4873 = vmatmul.mubr.f32.gmra.mxu0 %v4092
    %v4874 = vpop.f32.mrf.mxu0
    %v4875 = vadd.f32 0.0, %v4874
    %v4876 = vpop.f32.mrf.mxu0
    %4877 = vmatprep.mubr.f32.mxu0 0.0
    %4878 = vmatmul.mubr.f32.gmra.mxu0 %v4095
    %v4879 = vpop.f32.mrf.mxu0
    %v4880 = vadd.f32 0.0, %v4879
    %v4881 = vpop.f32.mrf.mxu0
    %4882 = vmatprep.mubr.f32.mxu0 0.0
    %4883 = vmatmul.mubr.f32.gmra.mxu0 %v4098
    %v4884 = vpop.f32.mrf.mxu0
    %v4885 = vadd.f32 0.0, %v4884
    %v4886 = vpop.f32.mrf.mxu0
    %4887 = vmatprep.mubr.f32.mxu0 0.0
    %4888 = vmatmul.mubr.f32.gmra.mxu0 %v4101
    %v4889 = vpop.f32.mrf.mxu0
    %v4890 = vadd.f32 0.0, %v4889
    %v4891 = vpop.f32.mrf.mxu0
    %4892 = vmatprep.mubr.f32.mxu0 0.0
    %4893 = vmatmul.mubr.f32.gmra.mxu0 %v4104
    %v4894 = vpop.f32.mrf.mxu0
    %v4895 = vadd.f32 0.0, %v4894
    %v4896 = vpop.f32.mrf.mxu0
    %4897 = vmatprep.mubr.f32.mxu0 0.0
    %4898 = vmatmul.mubr.f32.gmra.mxu0 %v4107
    %v4899 = vpop.f32.mrf.mxu0
    %v4900 = vadd.f32 0.0, %v4899
    %v4901 = vpop.f32.mrf.mxu0
    %4902 = vmatprep.mubr.f32.mxu0 0.0
    %4903 = vmatmul.mubr.f32.gmra.mxu0 %v4110
    %v4904 = vpop.f32.mrf.mxu0
    %v4905 = vadd.f32 0.0, %v4904
    %v4906 = vpop.f32.mrf.mxu0
    %4907 = vmatprep.mubr.f32.mxu0 0.0
    %4908 = vmatmul.mubr.f32.gmra.mxu0 %v4113
    %v4909 = vpop.f32.mrf.mxu0
    %v4910 = vadd.f32 0.0, %v4909
    %v4911 = vpop.f32.mrf.mxu0
    %4912 = vmatprep.mubr.f32.mxu0 0.0
    %4913 = vmatmul.mubr.f32.gmra.mxu0 %v4116
    %v4914 = vpop.f32.mrf.mxu0
    %v4915 = vadd.f32 0.0, %v4914
    %v4916 = vpop.f32.mrf.mxu0
    %4917 = vmatprep.mubr.f32.mxu0 0.0
    %4918 = vmatmul.mubr.f32.gmra.mxu0 %v4119
    %v4919 = vpop.f32.mrf.mxu0
    %v4920 = vadd.f32 0.0, %v4919
    %v4921 = vpop.f32.mrf.mxu0
    %4922 = vmatprep.mubr.f32.mxu0 0.0
    %4923 = vmatmul.mubr.f32.gmra.mxu0 %v4122
    %v4924 = vpop.f32.mrf.mxu0
    %v4925 = vadd.f32 0.0, %v4924
    %v4926 = vpop.f32.mrf.mxu0
    %4927 = vmatprep.mubr.f32.mxu0 0.0
    %4928 = vmatmul.mubr.f32.gmra.mxu0 %v4125
    %v4929 = vpop.f32.mrf.mxu0
    %v4930 = vadd.f32 0.0, %v4929
    %v4931 = vpop.f32.mrf.mxu0
    %4932 = vmatprep.mubr.f32.mxu0 0.0
    %4933 = vmatmul.mubr.f32.gmra.mxu0 %v4128
    %v4934 = vpop.f32.mrf.mxu0
    %v4935 = vadd.f32 0.0, %v4934
    %v4936 = vpop.f32.mrf.mxu0
    %4937 = vmatprep.mubr.f32.mxu0 0.0
    %4938 = vmatmul.mubr.f32.gmra.mxu0 %v4131
    %v4939 = vpop.f32.mrf.mxu0
    %v4940 = vadd.f32 0.0, %v4939
    %v4941 = vpop.f32.mrf.mxu0
    %4942 = vmatprep.mubr.f32.mxu0 0.0
    %4943 = vmatmul.mubr.f32.gmra.mxu0 %v4134
    %v4944 = vpop.f32.mrf.mxu0
    %v4945 = vadd.f32 0.0, %v4944
    %v4946 = vpop.f32.mrf.mxu0
    %4947 = vmatprep.mubr.f32.mxu0 0.0
    %4948 = vmatmul.mubr.f32.gmra.mxu0 %v4137
    %v4949 = vpop.f32.mrf.mxu0
    %v4950 = vadd.f32 0.0, %v4949
    %v4951 = vpop.f32.mrf.mxu0
    %4952 = vmatprep.mubr.f32.mxu0 0.0
    %4953 = vmatmul.mubr.f32.gmra.mxu0 %v4140
    %v4954 = vpop.f32.mrf.mxu0
    %v4955 = vadd.f32 0.0, %v4954
    %v4956 = vpop.f32.mrf.mxu0
    %4957 = vmatprep.mubr.f32.mxu0 0.0
    %4958 = vmatmul.mubr.f32.gmra.mxu0 %v4143
    %v4959 = vpop.f32.mrf.mxu0
    %v4960 = vadd.f32 0.0, %v4959
    %v4961 = vpop.f32.mrf.mxu0
    %4962 = vmatprep.mubr.f32.mxu0 0.0
    %4963 = vmatmul.mubr.f32.gmra.mxu0 %v4146
    %v4964 = vpop.f32.mrf.mxu0
    %v4965 = vadd.f32 0.0, %v4964
    %v4966 = vpop.f32.mrf.mxu0
    %4967 = vmatprep.mubr.f32.mxu0 0.0
    %4968 = vmatmul.mubr.f32.gmra.mxu0 %v4149
    %v4969 = vpop.f32.mrf.mxu0
    %v4970 = vadd.f32 0.0, %v4969
    %v4971 = vpop.f32.mrf.mxu0
    %4972 = vmatprep.mubr.f32.mxu0 0.0
    %4973 = vmatmul.mubr.f32.gmra.mxu0 %v4152
    %v4974 = vpop.f32.mrf.mxu0
    %v4975 = vadd.f32 0.0, %v4974
    %v4976 = vpop.f32.mrf.mxu0
    %4977 = vmatprep.mubr.f32.mxu0 0.0
    %4978 = vmatmul.mubr.f32.gmra.mxu0 %v4155
    %v4979 = vpop.f32.mrf.mxu0
    %v4980 = vadd.f32 0.0, %v4979
    %v4981 = vpop.f32.mrf.mxu0
    %4982 = vmatprep.mubr.f32.mxu0 0.0
    %4983 = vmatmul.mubr.f32.gmra.mxu0 %v4158
    %v4984 = vpop.f32.mrf.mxu0
    %v4985 = vadd.f32 0.0, %v4984
    %v4986 = vpop.f32.mrf.mxu0
    %4987 = vmatprep.mubr.f32.mxu0 0.0
    %4988 = vmatmul.mubr.f32.gmra.mxu0 %v4161
    %v4989 = vpop.f32.mrf.mxu0
    %v4990 = vadd.f32 0.0, %v4989
    %v4991 = vpop.f32.mrf.mxu0
    %4992 = vmatprep.mubr.f32.mxu0 0.0
    %4993 = vmatmul.mubr.f32.gmra.mxu0 %v4164
    %v4994 = vpop.f32.mrf.mxu0
    %v4995 = vadd.f32 0.0, %v4994
    %v4996 = vpop.f32.mrf.mxu0
    %4997 = vmatprep.mubr.f32.mxu0 0.0
    %4998 = vmatmul.mubr.f32.gmra.mxu0 %v4167
    %v4999 = vpop.f32.mrf.mxu0
    %v5000 = vadd.f32 0.0, %v4999
    %v5001 = vpop.f32.mrf.mxu0
    %5002 = vmatprep.mubr.f32.mxu0 0.0
    %5003 = vmatmul.mubr.f32.gmra.mxu0 %v4170
    %v5004 = vpop.f32.mrf.mxu0
    %v5005 = vadd.f32 0.0, %v5004
    %v5006 = vpop.f32.mrf.mxu0
    %5007 = vmatprep.mubr.f32.mxu0 0.0
    %5008 = vmatmul.mubr.f32.gmra.mxu0 %v4173
    %v5009 = vpop.f32.mrf.mxu0
    %v5010 = vadd.f32 0.0, %v5009
    %v5011 = vpop.f32.mrf.mxu0
    %5012 = vmatprep.mubr.f32.mxu0 0.0
    %5013 = vmatmul.mubr.f32.gmra.mxu0 %v4176
    %v5014 = vpop.f32.mrf.mxu0
    %v5015 = vadd.f32 0.0, %v5014
    %v5016 = vpop.f32.mrf.mxu0
    %5017 = vmatprep.mubr.f32.mxu0 0.0
    %5018 = vmatmul.mubr.f32.gmra.mxu0 %v4179
    %v5019 = vpop.f32.mrf.mxu0
    %v5020 = vadd.f32 0.0, %v5019
    %v5021 = vpop.f32.mrf.mxu0
    %5022 = vmatprep.mubr.f32.mxu0 0.0
    %5023 = vmatmul.mubr.f32.gmra.mxu0 %v4182
    %v5024 = vpop.f32.mrf.mxu0
    %v5025 = vadd.f32 0.0, %v5024
    %v5026 = vpop.f32.mrf.mxu0
    %5027 = vmatprep.mubr.f32.mxu0 0.0
    %5028 = vmatmul.mubr.f32.gmra.mxu0 %v4185
    %v5029 = vpop.f32.mrf.mxu0
    %v5030 = vadd.f32 0.0, %v5029
    %v5031 = vpop.f32.mrf.mxu0
    %5032 = vmatprep.mubr.f32.mxu0 0.0
    %5033 = vmatmul.mubr.f32.gmra.mxu0 %v4188
    %v5034 = vpop.f32.mrf.mxu0
    %v5035 = vadd.f32 0.0, %v5034
    %v5036 = vpop.f32.mrf.mxu0
    %5037 = vmatprep.mubr.f32.mxu0 0.0
    %5038 = vmatmul.mubr.f32.gmra.mxu0 %v4191
    %v5039 = vpop.f32.mrf.mxu0
    %v5040 = vadd.f32 0.0, %v5039
    %v5041 = vpop.f32.mrf.mxu0
    %5042 = vmatprep.mubr.f32.mxu0 0.0
    %5043 = vmatmul.mubr.f32.gmra.mxu0 %v4194
    %v5044 = vpop.f32.mrf.mxu0
    %v5045 = vadd.f32 0.0, %v5044
    %v5046 = vpop.f32.mrf.mxu0
    %5047 = vmatprep.mubr.f32.mxu0 0.0
    %5048 = vmatmul.mubr.f32.gmra.mxu0 %v4197
    %v5049 = vpop.f32.mrf.mxu0
    %v5050 = vadd.f32 0.0, %v5049
    %v5051 = vpop.f32.mrf.mxu0
    %5052 = vmatprep.mubr.f32.mxu0 0.0
    %5053 = vmatmul.mubr.f32.gmra.mxu0 %v4200
    %v5054 = vpop.f32.mrf.mxu0
    %v5055 = vadd.f32 0.0, %v5054
    %v5056 = vpop.f32.mrf.mxu0
    %5057 = vmatprep.mubr.f32.mxu0 0.0
    %5058 = vmatmul.mubr.f32.gmra.mxu0 %v4203
    %v5059 = vpop.f32.mrf.mxu0
    %v5060 = vadd.f32 0.0, %v5059
    %v5061 = vpop.f32.mrf.mxu0
    %5062 = vmatprep.mubr.f32.mxu0 0.0
    %5063 = vmatmul.mubr.f32.gmra.mxu0 %v4206
    %v5064 = vpop.f32.mrf.mxu0
    %v5065 = vadd.f32 0.0, %v5064
    %v5066 = vpop.f32.mrf.mxu0
    %5067 = vmatprep.mubr.f32.mxu0 0.0
    %5068 = vmatmul.mubr.f32.gmra.mxu0 %v4209
    %v5069 = vpop.f32.mrf.mxu0
    %v5070 = vadd.f32 0.0, %v5069
    %v5071 = vpop.f32.mrf.mxu0
    %5072 = vmatprep.mubr.f32.mxu0 0.0
    %5073 = vmatmul.mubr.f32.gmra.mxu0 %v4212
    %v5074 = vpop.f32.mrf.mxu0
    %v5075 = vadd.f32 0.0, %v5074
    %v5076 = vpop.f32.mrf.mxu0
    %5077 = vmatprep.mubr.f32.mxu0 0.0
    %5078 = vmatmul.mubr.f32.gmra.mxu0 %v4215
    %v5079 = vpop.f32.mrf.mxu0
    %v5080 = vadd.f32 0.0, %v5079
    %v5081 = vpop.f32.mrf.mxu0
    %5082 = vmatprep.mubr.f32.mxu0 0.0
    %5083 = vmatmul.mubr.f32.gmra.mxu0 %v4218
    %v5084 = vpop.f32.mrf.mxu0
    %v5085 = vadd.f32 0.0, %v5084
    %v5086 = vpop.f32.mrf.mxu0
    %5087 = vmatprep.mubr.f32.mxu0 0.0
    %5088 = vmatmul.mubr.f32.gmra.mxu0 %v4221
    %v5089 = vpop.f32.mrf.mxu0
    %v5090 = vadd.f32 0.0, %v5089
    %v5091 = vpop.f32.mrf.mxu0
    %5092 = vmatprep.mubr.f32.mxu0 0.0
    %5093 = vmatmul.mubr.f32.gmra.mxu0 %v4224
    %v5094 = vpop.f32.mrf.mxu0
    %v5095 = vadd.f32 0.0, %v5094
    %v5096 = vpop.f32.mrf.mxu0
    %5097 = vmatprep.mubr.f32.mxu0 0.0
    %5098 = vmatmul.mubr.f32.gmra.mxu0 %v4227
    %v5099 = vpop.f32.mrf.mxu0
    %v5100 = vadd.f32 0.0, %v5099
    %v5101 = vpop.f32.mrf.mxu0
    %5102 = vmatprep.mubr.f32.mxu0 0.0
    %5103 = vmatmul.mubr.f32.gmra.mxu0 %v4230
    %v5104 = vpop.f32.mrf.mxu0
    %v5105 = vadd.f32 0.0, %v5104
    %v5106 = vpop.f32.mrf.mxu0
    %5107 = vmatprep.mubr.f32.mxu0 0.0
    %5108 = vmatmul.mubr.f32.gmra.mxu0 %v4233
    %v5109 = vpop.f32.mrf.mxu0
    %v5110 = vadd.f32 0.0, %v5109
    %v5111 = vpop.f32.mrf.mxu0
    %5112 = vmatprep.mubr.f32.mxu0 0.0
    %5113 = vmatmul.mubr.f32.gmra.mxu0 %v4236
    %v5114 = vpop.f32.mrf.mxu0
    %v5115 = vadd.f32 0.0, %v5114
    %v5116 = vpop.f32.mrf.mxu0
    %5117 = vmatprep.mubr.f32.mxu0 0.0
    %5118 = vmatmul.mubr.f32.gmra.mxu0 %v4239
    %v5119 = vpop.f32.mrf.mxu0
    %v5120 = vadd.f32 0.0, %v5119
    %v5121 = vpop.f32.mrf.mxu0
    %5122 = vmatprep.mubr.f32.mxu0 0.0
    %5123 = vmatmul.mubr.f32.gmra.mxu0 %v4242
    %v5124 = vpop.f32.mrf.mxu0
    %v5125 = vadd.f32 0.0, %v5124
    %v5126 = vpop.f32.mrf.mxu0
    %5127 = vmatprep.mubr.f32.mxu0 0.0
    %5128 = vmatmul.mubr.f32.gmra.mxu0 %v4245
    %v5129 = vpop.f32.mrf.mxu0
    %v5130 = vadd.f32 0.0, %v5129
    %v5131 = vpop.f32.mrf.mxu0
    %5132 = vmatprep.mubr.f32.mxu0 0.0
    %5133 = vmatmul.mubr.f32.gmra.mxu0 %v4248
    %v5134 = vpop.f32.mrf.mxu0
    %v5135 = vadd.f32 0.0, %v5134
    %v5136 = vpop.f32.mrf.mxu0
    %5137 = vmatprep.mubr.f32.mxu0 0.0
    %5138 = vmatmul.mubr.f32.gmra.mxu0 %v4251
    %v5139 = vpop.f32.mrf.mxu0
    %v5140 = vadd.f32 0.0, %v5139
    %v5141 = vpop.f32.mrf.mxu0
    %5142 = vmatprep.mubr.f32.mxu0 0.0
    %5143 = vmatmul.mubr.f32.gmra.mxu0 %v4254
    %v5144 = vpop.f32.mrf.mxu0
    %v5145 = vadd.f32 0.0, %v5144
    %v5146 = vpop.f32.mrf.mxu0
    %5147 = vmatprep.mubr.f32.mxu0 0.0
    %5148 = vmatmul.mubr.f32.gmra.mxu0 %v4257
    %v5149 = vpop.f32.mrf.mxu0
    %v5150 = vadd.f32 0.0, %v5149
    %v5151 = vpop.f32.mrf.mxu0
    %5152 = vmatprep.mubr.f32.mxu0 0.0
    %5153 = vmatmul.mubr.f32.gmra.mxu0 %v4260
    %v5154 = vpop.f32.mrf.mxu0
    %v5155 = vadd.f32 0.0, %v5154
    %v5156 = vpop.f32.mrf.mxu0
    %5157 = vmatprep.mubr.f32.mxu0 0.0
    %5158 = vmatmul.mubr.f32.gmra.mxu0 %v4263
    %v5159 = vpop.f32.mrf.mxu0
    %v5160 = vadd.f32 0.0, %v5159
    %v5161 = vpop.f32.mrf.mxu0
    %5162 = vmatprep.mubr.f32.mxu0 0.0
    %5163 = vmatmul.mubr.f32.gmra.mxu0 %v4266
    %v5164 = vpop.f32.mrf.mxu0
    %v5165 = vadd.f32 0.0, %v5164
    %v5166 = vpop.f32.mrf.mxu0
    %5167 = vmatprep.mubr.f32.mxu0 0.0
    %5168 = vmatmul.mubr.f32.gmra.mxu0 %v4269
    %v5169 = vpop.f32.mrf.mxu0
    %v5170 = vadd.f32 0.0, %v5169
    %v5171 = vpop.f32.mrf.mxu0
    %5172 = vmatprep.mubr.f32.mxu0 0.0
    %5173 = vmatmul.mubr.f32.gmra.mxu0 %v4272
    %v5174 = vpop.f32.mrf.mxu0
    %v5175 = vadd.f32 0.0, %v5174
    %v5176 = vpop.f32.mrf.mxu0
    %5177 = vmatprep.mubr.f32.mxu0 0.0
    %5178 = vmatmul.mubr.f32.gmra.mxu0 %v4275
    %v5179 = vpop.f32.mrf.mxu0
    %v5180 = vadd.f32 0.0, %v5179
    %v5181 = vpop.f32.mrf.mxu0
    %5182 = vmatprep.mubr.f32.mxu0 0.0
    %5183 = vmatmul.mubr.f32.gmra.mxu0 %v4278
    %v5184 = vpop.f32.mrf.mxu0
    %v5185 = vadd.f32 0.0, %v5184
    %v5186 = vpop.f32.mrf.mxu0
    %5187 = vmatprep.mubr.f32.mxu0 0.0
    %5188 = vmatmul.mubr.f32.gmra.mxu0 %v4281
    %v5189 = vpop.f32.mrf.mxu0
    %v5190 = vadd.f32 0.0, %v5189
    %v5191 = vpop.f32.mrf.mxu0
    %5192 = vmatprep.mubr.f32.mxu0 0.0
    %5193 = vmatmul.mubr.f32.gmra.mxu0 %v4284
    %v5194 = vpop.f32.mrf.mxu0
    %v5195 = vadd.f32 0.0, %v5194
    %v5196 = vpop.f32.mrf.mxu0
    %5197 = vmatprep.mubr.f32.mxu0 0.0
    %5198 = vmatmul.mubr.f32.gmra.mxu0 %v4287
    %v5199 = vpop.f32.mrf.mxu0
    %v5200 = vadd.f32 0.0, %v5199
    %v5201 = vpop.f32.mrf.mxu0
    %5202 = vmatprep.mubr.f32.mxu0 0.0
    %5203 = vmatmul.mubr.f32.gmra.mxu0 %v4290
    %v5204 = vpop.f32.mrf.mxu0
    %v5205 = vadd.f32 0.0, %v5204
    %v5206 = vpop.f32.mrf.mxu0
    %5207 = vmatprep.mubr.f32.mxu0 0.0
    %5208 = vmatmul.mubr.f32.gmra.mxu0 %v4293
    %v5209 = vpop.f32.mrf.mxu0
    %v5210 = vadd.f32 0.0, %v5209
    %v5211 = vpop.f32.mrf.mxu0
    %5212 = vmatprep.mubr.f32.mxu0 0.0
    %5213 = vmatmul.mubr.f32.gmra.mxu0 %v4296
    %v5214 = vpop.f32.mrf.mxu0
    %v5215 = vadd.f32 0.0, %v5214
    %v5216 = vpop.f32.mrf.mxu0
    %5217 = vmatprep.mubr.f32.mxu0 0.0
    %5218 = vmatmul.mubr.f32.gmra.mxu0 %v4299
    %v5219 = vpop.f32.mrf.mxu0
    %v5220 = vadd.f32 0.0, %v5219
    %v5221 = vpop.f32.mrf.mxu0
    %5222 = vmatprep.mubr.f32.mxu0 0.0
    %5223 = vmatmul.mubr.f32.gmra.mxu0 %v4302
    %v5224 = vpop.f32.mrf.mxu0
    %v5225 = vadd.f32 0.0, %v5224
    %v5226 = vpop.f32.mrf.mxu0
    %5227 = vmatprep.mubr.f32.mxu0 0.0
    %5228 = vmatmul.mubr.f32.gmra.mxu0 %v4305
    %v5229 = vpop.f32.mrf.mxu0
    %v5230 = vadd.f32 0.0, %v5229
    %v5231 = vpop.f32.mrf.mxu0
    %5232 = vmatprep.mubr.f32.mxu0 0.0
    %5233 = vmatmul.mubr.f32.gmra.mxu0 %v4308
    %v5234 = vpop.f32.mrf.mxu0
    %v5235 = vadd.f32 0.0, %v5234
    %v5236 = vpop.f32.mrf.mxu0
    %5237 = vmatprep.mubr.f32.mxu0 0.0
    %5238 = vmatmul.mubr.f32.gmra.mxu0 %v4311
    %v5239 = vpop.f32.mrf.mxu0
    %v5240 = vadd.f32 0.0, %v5239
    %v5241 = vpop.f32.mrf.mxu0
    %5242 = vmatprep.mubr.f32.mxu0 0.0
    %5243 = vmatmul.mubr.f32.gmra.mxu0 %v4314
    %v5244 = vpop.f32.mrf.mxu0
    %v5245 = vadd.f32 0.0, %v5244
    %v5246 = vpop.f32.mrf.mxu0
    %5247 = vmatprep.mubr.f32.mxu0 0.0
    %5248 = vmatmul.mubr.f32.gmra.mxu0 %v4317
    %v5249 = vpop.f32.mrf.mxu0
    %v5250 = vadd.f32 0.0, %v5249
    %v5251 = vpop.f32.mrf.mxu0
    %5252 = vmatprep.mubr.f32.mxu0 0.0
    %5253 = vmatmul.mubr.f32.gmra.mxu0 %v4320
    %v5254 = vpop.f32.mrf.mxu0
    %v5255 = vadd.f32 0.0, %v5254
    %v5256 = vpop.f32.mrf.mxu0
    %5257 = vmatprep.mubr.f32.mxu0 0.0
    %5258 = vmatmul.mubr.f32.gmra.mxu0 %v4323
    %v5259 = vpop.f32.mrf.mxu0
    %v5260 = vadd.f32 0.0, %v5259
    %v5261 = vpop.f32.mrf.mxu0
    %5262 = vmatprep.mubr.f32.mxu0 0.0
    %5263 = vmatmul.mubr.f32.gmra.mxu0 %v4326
    %v5264 = vpop.f32.mrf.mxu0
    %v5265 = vadd.f32 0.0, %v5264
    %v5266 = vpop.f32.mrf.mxu0
    %5267 = vmatprep.mubr.f32.mxu0 0.0
    %5268 = vmatmul.mubr.f32.gmra.mxu0 %v4329
    %v5269 = vpop.f32.mrf.mxu0
    %v5270 = vadd.f32 0.0, %v5269
    %v5271 = vpop.f32.mrf.mxu0
    %5272 = vmatprep.mubr.f32.mxu0 0.0
    %5273 = vmatmul.mubr.f32.gmra.mxu0 %v4332
    %v5274 = vpop.f32.mrf.mxu0
    %v5275 = vadd.f32 0.0, %v5274
    %v5276 = vpop.f32.mrf.mxu0
    %5277 = vmatprep.mubr.f32.mxu0 0.0
    %5278 = vmatmul.mubr.f32.gmra.mxu0 %v4335
    %v5279 = vpop.f32.mrf.mxu0
    %v5280 = vadd.f32 0.0, %v5279
    %v5281 = vpop.f32.mrf.mxu0
    %5282 = vmatprep.mubr.f32.mxu0 0.0
    %5283 = vmatmul.mubr.f32.gmra.mxu0 %v4338
    %v5284 = vpop.f32.mrf.mxu0
    %v5285 = vadd.f32 0.0, %v5284
    %v5286 = vpop.f32.mrf.mxu0
    %5287 = vmatprep.mubr.f32.mxu0 0.0
    %5288 = vmatmul.mubr.f32.gmra.mxu0 %v4341
    %v5289 = vpop.f32.mrf.mxu0
    %v5290 = vadd.f32 0.0, %v5289
    %v5291 = vpop.f32.mrf.mxu0
    %5292 = vmatprep.mubr.f32.mxu0 0.0
    %5293 = vmatmul.mubr.f32.gmra.mxu0 %v4344
    %v5294 = vpop.f32.mrf.mxu0
    %v5295 = vadd.f32 0.0, %v5294
    %v5296 = vpop.f32.mrf.mxu0
    %5297 = vmatprep.mubr.f32.mxu0 0.0
    %5298 = vmatmul.mubr.f32.gmra.mxu0 %v4347
    %v5299 = vpop.f32.mrf.mxu0
    %v5300 = vadd.f32 0.0, %v5299
    %v5301 = vpop.f32.mrf.mxu0
    %5302 = vmatprep.mubr.f32.mxu0 0.0
    %5303 = vmatmul.mubr.f32.gmra.mxu0 %v4350
    %v5304 = vpop.f32.mrf.mxu0
    %v5305 = vadd.f32 0.0, %v5304
    %v5306 = vpop.f32.mrf.mxu0
    %5307 = vmatprep.mubr.f32.mxu0 0.0
    %5308 = vmatmul.mubr.f32.gmra.mxu0 %v4353
    %v5309 = vpop.f32.mrf.mxu0
    %v5310 = vadd.f32 0.0, %v5309
    %v5311 = vpop.f32.mrf.mxu0
    %5312 = vmatprep.mubr.f32.mxu0 0.0
    %5313 = vmatmul.mubr.f32.gmra.mxu0 %v4356
    %v5314 = vpop.f32.mrf.mxu0
    %v5315 = vadd.f32 0.0, %v5314
    %v5316 = vpop.f32.mrf.mxu0
    %5317 = vmatprep.mubr.f32.mxu0 0.0
    %5318 = vmatmul.mubr.f32.gmra.mxu0 %v4359
    %v5319 = vpop.f32.mrf.mxu0
    %v5320 = vadd.f32 0.0, %v5319
    %v5321 = vpop.f32.mrf.mxu0
    %5322 = vmatprep.mubr.f32.mxu0 0.0
    %5323 = vmatmul.mubr.f32.gmra.mxu0 %v4362
    %v5324 = vpop.f32.mrf.mxu0
    %v5325 = vadd.f32 0.0, %v5324
    %v5326 = vpop.f32.mrf.mxu0
    %5327 = vmatprep.mubr.f32.mxu0 0.0
    %5328 = vmatmul.mubr.f32.gmra.mxu0 %v4365
    %v5329 = vpop.f32.mrf.mxu0
    %v5330 = vadd.f32 0.0, %v5329
    %v5331 = vpop.f32.mrf.mxu0
    %5332 = vmatprep.mubr.f32.mxu0 0.0
    %5333 = vmatmul.mubr.f32.gmra.mxu0 %v4368
    %v5334 = vpop.f32.mrf.mxu0
    %v5335 = vadd.f32 0.0, %v5334
    %v5336 = vpop.f32.mrf.mxu0
    %5337 = vmatprep.mubr.f32.mxu0 0.0
    %5338 = vmatmul.mubr.f32.gmra.mxu0 %v4371
    %v5339 = vpop.f32.mrf.mxu0
    %v5340 = vadd.f32 0.0, %v5339
    %v5341 = vpop.f32.mrf.mxu0
    %5342 = vmatprep.mubr.f32.mxu0 0.0
    %5343 = vmatmul.mubr.f32.gmra.mxu0 %v4374
    %v5344 = vpop.f32.mrf.mxu0
    %v5345 = vadd.f32 0.0, %v5344
    %v5346 = vpop.f32.mrf.mxu0
    %5347 = vmatprep.mubr.f32.mxu0 0.0
    %5348 = vmatmul.mubr.f32.gmra.mxu0 %v4377
    %v5349 = vpop.f32.mrf.mxu0
    %v5350 = vadd.f32 0.0, %v5349
    %v5351 = vpop.f32.mrf.mxu0
    %5352 = vmatprep.mubr.f32.mxu0 0.0
    %5353 = vmatmul.mubr.f32.gmra.mxu0 %v4380
    %v5354 = vpop.f32.mrf.mxu0
    %v5355 = vadd.f32 0.0, %v5354
    %v5356 = vpop.f32.mrf.mxu0
    %5357 = vmatprep.mubr.f32.mxu0 0.0
    %5358 = vmatmul.mubr.f32.gmra.mxu0 %v4383
    %v5359 = vpop.f32.mrf.mxu0
    %v5360 = vadd.f32 0.0, %v5359
    %v5361 = vpop.f32.mrf.mxu0
    %5362 = vmatprep.mubr.f32.mxu0 0.0
    %5363 = vmatmul.mubr.f32.gmra.mxu0 %v4386
    %v5364 = vpop.f32.mrf.mxu0
    %v5365 = vadd.f32 0.0, %v5364
    %v5366 = vpop.f32.mrf.mxu0
    %5367 = vmatprep.mubr.f32.mxu0 0.0
    %5368 = vmatmul.mubr.f32.gmra.mxu0 %v4389
    %v5369 = vpop.f32.mrf.mxu0
    %v5370 = vadd.f32 0.0, %v5369
    %v5371 = vpop.f32.mrf.mxu0
    %5372 = vmatprep.mubr.f32.mxu0 0.0
    %5373 = vmatmul.mubr.f32.gmra.mxu0 %v4392
    %v5374 = vpop.f32.mrf.mxu0
    %v5375 = vadd.f32 0.0, %v5374
    %v5376 = vpop.f32.mrf.mxu0
    %5377 = vdwg.mxu0
    %v5378 = vld [vmem:[%s10] sm:$0x1]
    %v5380 = vlaneseq
    %v5381 = vshrl.u32 %v5380, 7
    %v5382 = vsub.s32 0, %v5381
    %v5383 = vrot.slane %v5378, %v5382
    %v5385 = vadd.f32 %v5383, 0.0
    %v5386 = vld [vmem:[%s9] sm:$0xff]
    %v5387 = vld [vmem:[%s9 + $0x8] sm:$0xff]
    %v5389 = vsel %vm639, %v4465, 0
    %v5392 = vsel %vm639, %v4470, 0
    %v5395 = vsel %vm639, %v4475, 0
    %v5398 = vsel %vm639, %v4480, 0
    %v5401 = vsel %vm639, %v4485, 0
    %v5404 = vsel %vm639, %v4490, 0
    %v5407 = vsel %vm639, %v4495, 0
    %5409 = vmatprep.subr.mxu0 0.0
    %5410 = vmatpush1.msra.mxu0 0.0
    %5411 = vmatprep.subr.mxu0 0.0
    %5412 = vmatpush1.msra.mxu0 0.0
    %5413 = vmatprep.subr.mxu0 0.0
    %5414 = vmatpush1.msra.mxu0 0.0
    %5415 = vmatprep.subr.mxu0 0.0
    %5416 = vmatpush1.msra.mxu0 0.0
    %5417 = vmatprep.subr.mxu0 0.0
    %5418 = vmatpush1.msra.mxu0 0.0
    %5419 = vmatprep.subr.mxu0 0.0
    %5420 = vmatpush1.msra.mxu0 0.0
    %5421 = vmatprep.subr.mxu0 0.0
    %5422 = vmatpush1.msra.mxu0 0.0
    %5423 = vmatprep.subr.mxu0 0.0
    %5424 = vmatpush1.msra.mxu0 0.0
    %5425 = vmatprep.subr.mxu0 0.0
    %5426 = vmatpush1.msra.mxu0 0.0
    %5427 = vmatprep.subr.mxu0 0.0
    %5428 = vmatpush1.msra.mxu0 0.0
    %5429 = vmatprep.subr.mxu0 0.0
    %5430 = vmatpush1.msra.mxu0 0.0
    %5431 = vmatprep.subr.mxu0 0.0
    %5432 = vmatpush1.msra.mxu0 0.0
    %5433 = vmatprep.subr.mxu0 0.0
    %5434 = vmatpush1.msra.mxu0 0.0
    %5435 = vmatprep.subr.mxu0 0.0
    %5436 = vmatpush1.msra.mxu0 0.0
    %5437 = vmatprep.subr.mxu0 0.0
    %5438 = vmatpush1.msra.mxu0 %v5387
    %5439 = vmatprep.subr.mxu0 0.0
    %5440 = vmatpush1.msra.mxu0 %v5386
    %5441 = vmatprep.subr.mxu0 0.0
    %5442 = vmatpush2.msra.mxu0 0.0
    %5443 = vmatprep.subr.mxu0 0.0
    %5444 = vmatpush2.msra.mxu0 0.0
    %5445 = vmatprep.subr.mxu0 0.0
    %5446 = vmatpush2.msra.mxu0 0.0
    %5447 = vmatprep.subr.mxu0 0.0
    %5448 = vmatpush2.msra.mxu0 0.0
    %5449 = vmatprep.subr.mxu0 0.0
    %5450 = vmatpush2.msra.mxu0 0.0
    %5451 = vmatprep.subr.mxu0 0.0
    %5452 = vmatpush2.msra.mxu0 0.0
    %5453 = vmatprep.subr.mxu0 0.0
    %5454 = vmatpush2.msra.mxu0 0.0
    %5455 = vmatprep.subr.mxu0 0.0
    %5456 = vmatpush2.msra.mxu0 0.0
    %5457 = vmatprep.subr.mxu0 0.0
    %5458 = vmatpush2.msra.mxu0 0.0
    %5459 = vmatprep.subr.mxu0 0.0
    %5460 = vmatpush2.msra.mxu0 0.0
    %5461 = vmatprep.subr.mxu0 0.0
    %5462 = vmatpush2.msra.mxu0 0.0
    %5463 = vmatprep.subr.mxu0 0.0
    %5464 = vmatpush2.msra.mxu0 0.0
    %5465 = vmatprep.subr.mxu0 0.0
    %5466 = vmatpush2.msra.mxu0 0.0
    %5467 = vmatprep.subr.mxu0 0.0
    %5468 = vmatpush2.msra.mxu0 0.0
    %5469 = vmatprep.subr.mxu0 0.0
    %5470 = vmatpush2.msra.mxu0 0.0
    %5471 = vmatprep.subr.mxu0 0.0
    %5472 = vmatpush2.msra.mxu0 0.0
    %5473 = vmatprep.mubr.f32.mxu0 0.0
    %5474 = vmatmul.mubr.f32.gmra.mxu0 %v5389
    %v5475 = vpop.f32.mrf.mxu0
    %v5476 = vadd.f32 0.0, %v5475
    %v5477 = vpop.f32.mrf.mxu0
    %5478 = vmatprep.mubr.f32.mxu0 0.0
    %5479 = vmatmul.mubr.f32.gmra.mxu0 %v5392
    %v5480 = vpop.f32.mrf.mxu0
    %v5481 = vadd.f32 0.0, %v5480
    %v5482 = vpop.f32.mrf.mxu0
    %5483 = vmatprep.mubr.f32.mxu0 0.0
    %5484 = vmatmul.mubr.f32.gmra.mxu0 %v5395
    %v5485 = vpop.f32.mrf.mxu0
    %v5486 = vadd.f32 0.0, %v5485
    %v5487 = vpop.f32.mrf.mxu0
    %5488 = vmatprep.mubr.f32.mxu0 0.0
    %5489 = vmatmul.mubr.f32.gmra.mxu0 %v5398
    %v5490 = vpop.f32.mrf.mxu0
    %v5491 = vadd.f32 0.0, %v5490
    %v5492 = vpop.f32.mrf.mxu0
    %5493 = vmatprep.mubr.f32.mxu0 0.0
    %5494 = vmatmul.mubr.f32.gmra.mxu0 %v5401
    %v5495 = vpop.f32.mrf.mxu0
    %v5496 = vadd.f32 0.0, %v5495
    %v5497 = vpop.f32.mrf.mxu0
    %5498 = vmatprep.mubr.f32.mxu0 0.0
    %5499 = vmatmul.mubr.f32.gmra.mxu0 %v5404
    %v5500 = vpop.f32.mrf.mxu0
    %v5501 = vadd.f32 0.0, %v5500
    %v5502 = vpop.f32.mrf.mxu0
    %5503 = vmatprep.mubr.f32.mxu0 0.0
    %5504 = vmatmul.mubr.f32.gmra.mxu0 %v5407
    %v5505 = vpop.f32.mrf.mxu0
    %v5506 = vadd.f32 0.0, %v5505
    %v5507 = vpop.f32.mrf.mxu0
    %5508 = vdwg.mxu0
    %v5509 = vadd.f32 %v5385, %v5476
    %v5510 = vadd.f32 %v5385, %v5481
    %v5511 = vadd.f32 %v5385, %v5486
    %v5512 = vadd.f32 %v5385, %v5491
    %v5513 = vadd.f32 %v5385, %v5496
    %v5514 = vadd.f32 %v5385, %v5501
    %v5515 = vadd.f32 %v5385, %v5506
    %s5516 = scalar_lea.vmem %s9, 16
    %v5517 = vld [vmem:[%s5516] sm:$0xff]
    %v5518 = vld [vmem:[%s5516 + $0x8] sm:$0xff]
    %v5526 = vrot.slane %v4495, 6
    %v5527 = vrot.slane %v4500, 6
    %v5528 = vsel %vm3595, %v5526, %v5527
    %v5529 = vrot.slane %v4505, 6
    %v5530 = vsel %vm3595, %v5527, %v5529
    %v5531 = vrot.slane %v4510, 6
    %v5532 = vsel %vm3595, %v5529, %v5531
    %v5533 = vrot.slane %v4515, 6
    %v5534 = vsel %vm3595, %v5531, %v5533
    %v5535 = vrot.slane %v4520, 6
    %v5536 = vsel %vm3595, %v5533, %v5535
    %v5537 = vrot.slane %v4525, 6
    %v5538 = vsel %vm3595, %v5535, %v5537
    %v5539 = vrot.slane %v4530, 6
    %v5540 = vsel %vm3595, %v5537, %v5539
    %v5541 = vsel %vm639, %v5528, 0
    %v5543 = vsel %vm639, %v5530, 0
    %v5545 = vsel %vm639, %v5532, 0
    %v5547 = vsel %vm639, %v5534, 0
    %v5549 = vsel %vm639, %v5536, 0
    %v5551 = vsel %vm639, %v5538, 0
    %v5553 = vsel %vm639, %v5540, 0
    %5555 = vmatprep.subr.mxu0 0.0
    %5556 = vmatpush1.msra.mxu0 0.0
    %5557 = vmatprep.subr.mxu0 0.0
    %5558 = vmatpush1.msra.mxu0 0.0
    %5559 = vmatprep.subr.mxu0 0.0
    %5560 = vmatpush1.msra.mxu0 0.0
    %5561 = vmatprep.subr.mxu0 0.0
    %5562 = vmatpush1.msra.mxu0 0.0
    %5563 = vmatprep.subr.mxu0 0.0
    %5564 = vmatpush1.msra.mxu0 0.0
    %5565 = vmatprep.subr.mxu0 0.0
    %5566 = vmatpush1.msra.mxu0 0.0
    %5567 = vmatprep.subr.mxu0 0.0
    %5568 = vmatpush1.msra.mxu0 0.0
    %5569 = vmatprep.subr.mxu0 0.0
    %5570 = vmatpush1.msra.mxu0 0.0
    %5571 = vmatprep.subr.mxu0 0.0
    %5572 = vmatpush1.msra.mxu0 0.0
    %5573 = vmatprep.subr.mxu0 0.0
    %5574 = vmatpush1.msra.mxu0 0.0
    %5575 = vmatprep.subr.mxu0 0.0
    %5576 = vmatpush1.msra.mxu0 0.0
    %5577 = vmatprep.subr.mxu0 0.0
    %5578 = vmatpush1.msra.mxu0 0.0
    %5579 = vmatprep.subr.mxu0 0.0
    %5580 = vmatpush1.msra.mxu0 0.0
    %5581 = vmatprep.subr.mxu0 0.0
    %5582 = vmatpush1.msra.mxu0 0.0
    %5583 = vmatprep.subr.mxu0 0.0
    %5584 = vmatpush1.msra.mxu0 %v5518
    %5585 = vmatprep.subr.mxu0 0.0
    %5586 = vmatpush1.msra.mxu0 %v5517
    %5587 = vmatprep.subr.mxu0 0.0
    %5588 = vmatpush2.msra.mxu0 0.0
    %5589 = vmatprep.subr.mxu0 0.0
    %5590 = vmatpush2.msra.mxu0 0.0
    %5591 = vmatprep.subr.mxu0 0.0
    %5592 = vmatpush2.msra.mxu0 0.0
    %5593 = vmatprep.subr.mxu0 0.0
    %5594 = vmatpush2.msra.mxu0 0.0
    %5595 = vmatprep.subr.mxu0 0.0
    %5596 = vmatpush2.msra.mxu0 0.0
    %5597 = vmatprep.subr.mxu0 0.0
    %5598 = vmatpush2.msra.mxu0 0.0
    %5599 = vmatprep.subr.mxu0 0.0
    %5600 = vmatpush2.msra.mxu0 0.0
    %5601 = vmatprep.subr.mxu0 0.0
    %5602 = vmatpush2.msra.mxu0 0.0
    %5603 = vmatprep.subr.mxu0 0.0
    %5604 = vmatpush2.msra.mxu0 0.0
    %5605 = vmatprep.subr.mxu0 0.0
    %5606 = vmatpush2.msra.mxu0 0.0
    %5607 = vmatprep.subr.mxu0 0.0
    %5608 = vmatpush2.msra.mxu0 0.0
    %5609 = vmatprep.subr.mxu0 0.0
    %5610 = vmatpush2.msra.mxu0 0.0
    %5611 = vmatprep.subr.mxu0 0.0
    %5612 = vmatpush2.msra.mxu0 0.0
    %5613 = vmatprep.subr.mxu0 0.0
    %5614 = vmatpush2.msra.mxu0 0.0
    %5615 = vmatprep.subr.mxu0 0.0
    %5616 = vmatpush2.msra.mxu0 0.0
    %5617 = vmatprep.subr.mxu0 0.0
    %5618 = vmatpush2.msra.mxu0 0.0
    %5619 = vmatprep.mubr.f32.mxu0 0.0
    %5620 = vmatmul.mubr.f32.gmra.mxu0 %v5541
    %v5621 = vpop.f32.mrf.mxu0
    %v5622 = vadd.f32 0.0, %v5621
    %v5623 = vpop.f32.mrf.mxu0
    %5624 = vmatprep.mubr.f32.mxu0 0.0
    %5625 = vmatmul.mubr.f32.gmra.mxu0 %v5543
    %v5626 = vpop.f32.mrf.mxu0
    %v5627 = vadd.f32 0.0, %v5626
    %v5628 = vpop.f32.mrf.mxu0
    %5629 = vmatprep.mubr.f32.mxu0 0.0
    %5630 = vmatmul.mubr.f32.gmra.mxu0 %v5545
    %v5631 = vpop.f32.mrf.mxu0
    %v5632 = vadd.f32 0.0, %v5631
    %v5633 = vpop.f32.mrf.mxu0
    %5634 = vmatprep.mubr.f32.mxu0 0.0
    %5635 = vmatmul.mubr.f32.gmra.mxu0 %v5547
    %v5636 = vpop.f32.mrf.mxu0
    %v5637 = vadd.f32 0.0, %v5636
    %v5638 = vpop.f32.mrf.mxu0
    %5639 = vmatprep.mubr.f32.mxu0 0.0
    %5640 = vmatmul.mubr.f32.gmra.mxu0 %v5549
    %v5641 = vpop.f32.mrf.mxu0
    %v5642 = vadd.f32 0.0, %v5641
    %v5643 = vpop.f32.mrf.mxu0
    %5644 = vmatprep.mubr.f32.mxu0 0.0
    %5645 = vmatmul.mubr.f32.gmra.mxu0 %v5551
    %v5646 = vpop.f32.mrf.mxu0
    %v5647 = vadd.f32 0.0, %v5646
    %v5648 = vpop.f32.mrf.mxu0
    %5649 = vmatprep.mubr.f32.mxu0 0.0
    %5650 = vmatmul.mubr.f32.gmra.mxu0 %v5553
    %v5651 = vpop.f32.mrf.mxu0
    %v5652 = vadd.f32 0.0, %v5651
    %v5653 = vpop.f32.mrf.mxu0
    %5654 = vdwg.mxu0
    %v5655 = vadd.f32 %v5509, %v5622
    %v5656 = vadd.f32 %v5510, %v5627
    %v5657 = vadd.f32 %v5511, %v5632
    %v5658 = vadd.f32 %v5512, %v5637
    %v5659 = vadd.f32 %v5513, %v5642
    %v5660 = vadd.f32 %v5514, %v5647
    %v5661 = vadd.f32 %v5515, %v5652
    %s5662 = scalar_lea.vmem %s9, 32
    %v5663 = vld [vmem:[%s5662] sm:$0xff]
    %v5664 = vld [vmem:[%s5662 + $0x8] sm:$0xff]
    %v5672 = vrot.slane %v4530, 4
    %v5673 = vrot.slane %v4535, 4
    %v5674 = vsel %vm3259, %v5672, %v5673
    %v5675 = vrot.slane %v4540, 4
    %v5676 = vsel %vm3259, %v5673, %v5675
    %v5677 = vrot.slane %v4545, 4
    %v5678 = vsel %vm3259, %v5675, %v5677
    %v5679 = vrot.slane %v4550, 4
    %v5680 = vsel %vm3259, %v5677, %v5679
    %v5681 = vrot.slane %v4555, 4
    %v5682 = vsel %vm3259, %v5679, %v5681
    %v5683 = vrot.slane %v4560, 4
    %v5684 = vsel %vm3259, %v5681, %v5683
    %v5685 = vrot.slane %v4565, 4
    %v5686 = vsel %vm3259, %v5683, %v5685
    %v5687 = vsel %vm639, %v5674, 0
    %v5689 = vsel %vm639, %v5676, 0
    %v5691 = vsel %vm639, %v5678, 0
    %v5693 = vsel %vm639, %v5680, 0
    %v5695 = vsel %vm639, %v5682, 0
    %v5697 = vsel %vm639, %v5684, 0
    %v5699 = vsel %vm639, %v5686, 0
    %5701 = vmatprep.subr.mxu0 0.0
    %5702 = vmatpush1.msra.mxu0 0.0
    %5703 = vmatprep.subr.mxu0 0.0
    %5704 = vmatpush1.msra.mxu0 0.0
    %5705 = vmatprep.subr.mxu0 0.0
    %5706 = vmatpush1.msra.mxu0 0.0
    %5707 = vmatprep.subr.mxu0 0.0
    %5708 = vmatpush1.msra.mxu0 0.0
    %5709 = vmatprep.subr.mxu0 0.0
    %5710 = vmatpush1.msra.mxu0 0.0
    %5711 = vmatprep.subr.mxu0 0.0
    %5712 = vmatpush1.msra.mxu0 0.0
    %5713 = vmatprep.subr.mxu0 0.0
    %5714 = vmatpush1.msra.mxu0 0.0
    %5715 = vmatprep.subr.mxu0 0.0
    %5716 = vmatpush1.msra.mxu0 0.0
    %5717 = vmatprep.subr.mxu0 0.0
    %5718 = vmatpush1.msra.mxu0 0.0
    %5719 = vmatprep.subr.mxu0 0.0
    %5720 = vmatpush1.msra.mxu0 0.0
    %5721 = vmatprep.subr.mxu0 0.0
    %5722 = vmatpush1.msra.mxu0 0.0
    %5723 = vmatprep.subr.mxu0 0.0
    %5724 = vmatpush1.msra.mxu0 0.0
    %5725 = vmatprep.subr.mxu0 0.0
    %5726 = vmatpush1.msra.mxu0 0.0
    %5727 = vmatprep.subr.mxu0 0.0
    %5728 = vmatpush1.msra.mxu0 0.0
    %5729 = vmatprep.subr.mxu0 0.0
    %5730 = vmatpush1.msra.mxu0 %v5664
    %5731 = vmatprep.subr.mxu0 0.0
    %5732 = vmatpush1.msra.mxu0 %v5663
    %5733 = vmatprep.subr.mxu0 0.0
    %5734 = vmatpush2.msra.mxu0 0.0
    %5735 = vmatprep.subr.mxu0 0.0
    %5736 = vmatpush2.msra.mxu0 0.0
    %5737 = vmatprep.subr.mxu0 0.0
    %5738 = vmatpush2.msra.mxu0 0.0
    %5739 = vmatprep.subr.mxu0 0.0
    %5740 = vmatpush2.msra.mxu0 0.0
    %5741 = vmatprep.subr.mxu0 0.0
    %5742 = vmatpush2.msra.mxu0 0.0
    %5743 = vmatprep.subr.mxu0 0.0
    %5744 = vmatpush2.msra.mxu0 0.0
    %5745 = vmatprep.subr.mxu0 0.0
    %5746 = vmatpush2.msra.mxu0 0.0
    %5747 = vmatprep.subr.mxu0 0.0
    %5748 = vmatpush2.msra.mxu0 0.0
    %5749 = vmatprep.subr.mxu0 0.0
    %5750 = vmatpush2.msra.mxu0 0.0
    %5751 = vmatprep.subr.mxu0 0.0
    %5752 = vmatpush2.msra.mxu0 0.0
    %5753 = vmatprep.subr.mxu0 0.0
    %5754 = vmatpush2.msra.mxu0 0.0
    %5755 = vmatprep.subr.mxu0 0.0
    %5756 = vmatpush2.msra.mxu0 0.0
    %5757 = vmatprep.subr.mxu0 0.0
    %5758 = vmatpush2.msra.mxu0 0.0
    %5759 = vmatprep.subr.mxu0 0.0
    %5760 = vmatpush2.msra.mxu0 0.0
    %5761 = vmatprep.subr.mxu0 0.0
    %5762 = vmatpush2.msra.mxu0 0.0
    %5763 = vmatprep.subr.mxu0 0.0
    %5764 = vmatpush2.msra.mxu0 0.0
    %5765 = vmatprep.mubr.f32.mxu0 0.0
    %5766 = vmatmul.mubr.f32.gmra.mxu0 %v5687
    %v5767 = vpop.f32.mrf.mxu0
    %v5768 = vadd.f32 0.0, %v5767
    %v5769 = vpop.f32.mrf.mxu0
    %5770 = vmatprep.mubr.f32.mxu0 0.0
    %5771 = vmatmul.mubr.f32.gmra.mxu0 %v5689
    %v5772 = vpop.f32.mrf.mxu0
    %v5773 = vadd.f32 0.0, %v5772
    %v5774 = vpop.f32.mrf.mxu0
    %5775 = vmatprep.mubr.f32.mxu0 0.0
    %5776 = vmatmul.mubr.f32.gmra.mxu0 %v5691
    %v5777 = vpop.f32.mrf.mxu0
    %v5778 = vadd.f32 0.0, %v5777
    %v5779 = vpop.f32.mrf.mxu0
    %5780 = vmatprep.mubr.f32.mxu0 0.0
    %5781 = vmatmul.mubr.f32.gmra.mxu0 %v5693
    %v5782 = vpop.f32.mrf.mxu0
    %v5783 = vadd.f32 0.0, %v5782
    %v5784 = vpop.f32.mrf.mxu0
    %5785 = vmatprep.mubr.f32.mxu0 0.0
    %5786 = vmatmul.mubr.f32.gmra.mxu0 %v5695
    %v5787 = vpop.f32.mrf.mxu0
    %v5788 = vadd.f32 0.0, %v5787
    %v5789 = vpop.f32.mrf.mxu0
    %5790 = vmatprep.mubr.f32.mxu0 0.0
    %5791 = vmatmul.mubr.f32.gmra.mxu0 %v5697
    %v5792 = vpop.f32.mrf.mxu0
    %v5793 = vadd.f32 0.0, %v5792
    %v5794 = vpop.f32.mrf.mxu0
    %5795 = vmatprep.mubr.f32.mxu0 0.0
    %5796 = vmatmul.mubr.f32.gmra.mxu0 %v5699
    %v5797 = vpop.f32.mrf.mxu0
    %v5798 = vadd.f32 0.0, %v5797
    %v5799 = vpop.f32.mrf.mxu0
    %5800 = vdwg.mxu0
    %v5801 = vadd.f32 %v5655, %v5768
    %v5802 = vadd.f32 %v5656, %v5773
    %v5803 = vadd.f32 %v5657, %v5778
    %v5804 = vadd.f32 %v5658, %v5783
    %v5805 = vadd.f32 %v5659, %v5788
    %v5806 = vadd.f32 %v5660, %v5793
    %v5807 = vadd.f32 %v5661, %v5798
    %s5808 = scalar_lea.vmem %s9, 48
    %v5809 = vld [vmem:[%s5808] sm:$0xff]
    %v5810 = vld [vmem:[%s5808 + $0x8] sm:$0xff]
    %v5817 = vrot.slane %v4565, 2
    %v5818 = vrot.slane %v4570, 2
    %v5819 = vsel %vm4394, %v5817, %v5818
    %v5820 = vrot.slane %v4575, 2
    %v5821 = vsel %vm4394, %v5818, %v5820
    %v5822 = vrot.slane %v4580, 2
    %v5823 = vsel %vm4394, %v5820, %v5822
    %v5824 = vrot.slane %v4585, 2
    %v5825 = vsel %vm4394, %v5822, %v5824
    %v5826 = vrot.slane %v4590, 2
    %v5827 = vsel %vm4394, %v5824, %v5826
    %v5828 = vrot.slane %v4595, 2
    %v5829 = vsel %vm4394, %v5826, %v5828
    %v5830 = vsel %vm639, %v5819, 0
    %v5832 = vsel %vm639, %v5821, 0
    %v5834 = vsel %vm639, %v5823, 0
    %v5836 = vsel %vm639, %v5825, 0
    %v5838 = vsel %vm639, %v5827, 0
    %v5840 = vsel %vm639, %v5829, 0
    %v5842 = vsel %vm639, %v5828, 0
    %5844 = vmatprep.subr.mxu0 0.0
    %5845 = vmatpush1.msra.mxu0 0.0
    %5846 = vmatprep.subr.mxu0 0.0
    %5847 = vmatpush1.msra.mxu0 0.0
    %5848 = vmatprep.subr.mxu0 0.0
    %5849 = vmatpush1.msra.mxu0 0.0
    %5850 = vmatprep.subr.mxu0 0.0
    %5851 = vmatpush1.msra.mxu0 0.0
    %5852 = vmatprep.subr.mxu0 0.0
    %5853 = vmatpush1.msra.mxu0 0.0
    %5854 = vmatprep.subr.mxu0 0.0
    %5855 = vmatpush1.msra.mxu0 0.0
    %5856 = vmatprep.subr.mxu0 0.0
    %5857 = vmatpush1.msra.mxu0 0.0
    %5858 = vmatprep.subr.mxu0 0.0
    %5859 = vmatpush1.msra.mxu0 0.0
    %5860 = vmatprep.subr.mxu0 0.0
    %5861 = vmatpush1.msra.mxu0 0.0
    %5862 = vmatprep.subr.mxu0 0.0
    %5863 = vmatpush1.msra.mxu0 0.0
    %5864 = vmatprep.subr.mxu0 0.0
    %5865 = vmatpush1.msra.mxu0 0.0
    %5866 = vmatprep.subr.mxu0 0.0
    %5867 = vmatpush1.msra.mxu0 0.0
    %5868 = vmatprep.subr.mxu0 0.0
    %5869 = vmatpush1.msra.mxu0 0.0
    %5870 = vmatprep.subr.mxu0 0.0
    %5871 = vmatpush1.msra.mxu0 0.0
    %5872 = vmatprep.subr.mxu0 0.0
    %5873 = vmatpush1.msra.mxu0 %v5810
    %5874 = vmatprep.subr.mxu0 0.0
    %5875 = vmatpush1.msra.mxu0 %v5809
    %5876 = vmatprep.subr.mxu0 0.0
    %5877 = vmatpush2.msra.mxu0 0.0
    %5878 = vmatprep.subr.mxu0 0.0
    %5879 = vmatpush2.msra.mxu0 0.0
    %5880 = vmatprep.subr.mxu0 0.0
    %5881 = vmatpush2.msra.mxu0 0.0
    %5882 = vmatprep.subr.mxu0 0.0
    %5883 = vmatpush2.msra.mxu0 0.0
    %5884 = vmatprep.subr.mxu0 0.0
    %5885 = vmatpush2.msra.mxu0 0.0
    %5886 = vmatprep.subr.mxu0 0.0
    %5887 = vmatpush2.msra.mxu0 0.0
    %5888 = vmatprep.subr.mxu0 0.0
    %5889 = vmatpush2.msra.mxu0 0.0
    %5890 = vmatprep.subr.mxu0 0.0
    %5891 = vmatpush2.msra.mxu0 0.0
    %5892 = vmatprep.subr.mxu0 0.0
    %5893 = vmatpush2.msra.mxu0 0.0
    %5894 = vmatprep.subr.mxu0 0.0
    %5895 = vmatpush2.msra.mxu0 0.0
    %5896 = vmatprep.subr.mxu0 0.0
    %5897 = vmatpush2.msra.mxu0 0.0
    %5898 = vmatprep.subr.mxu0 0.0
    %5899 = vmatpush2.msra.mxu0 0.0
    %5900 = vmatprep.subr.mxu0 0.0
    %5901 = vmatpush2.msra.mxu0 0.0
    %5902 = vmatprep.subr.mxu0 0.0
    %5903 = vmatpush2.msra.mxu0 0.0
    %5904 = vmatprep.subr.mxu0 0.0
    %5905 = vmatpush2.msra.mxu0 0.0
    %5906 = vmatprep.subr.mxu0 0.0
    %5907 = vmatpush2.msra.mxu0 0.0
    %5908 = vmatprep.mubr.f32.mxu0 0.0
    %5909 = vmatmul.mubr.f32.gmra.mxu0 %v5830
    %v5910 = vpop.f32.mrf.mxu0
    %v5911 = vadd.f32 0.0, %v5910
    %v5912 = vpop.f32.mrf.mxu0
    %5913 = vmatprep.mubr.f32.mxu0 0.0
    %5914 = vmatmul.mubr.f32.gmra.mxu0 %v5832
    %v5915 = vpop.f32.mrf.mxu0
    %v5916 = vadd.f32 0.0, %v5915
    %v5917 = vpop.f32.mrf.mxu0
    %5918 = vmatprep.mubr.f32.mxu0 0.0
    %5919 = vmatmul.mubr.f32.gmra.mxu0 %v5834
    %v5920 = vpop.f32.mrf.mxu0
    %v5921 = vadd.f32 0.0, %v5920
    %v5922 = vpop.f32.mrf.mxu0
    %5923 = vmatprep.mubr.f32.mxu0 0.0
    %5924 = vmatmul.mubr.f32.gmra.mxu0 %v5836
    %v5925 = vpop.f32.mrf.mxu0
    %v5926 = vadd.f32 0.0, %v5925
    %v5927 = vpop.f32.mrf.mxu0
    %5928 = vmatprep.mubr.f32.mxu0 0.0
    %5929 = vmatmul.mubr.f32.gmra.mxu0 %v5838
    %v5930 = vpop.f32.mrf.mxu0
    %v5931 = vadd.f32 0.0, %v5930
    %v5932 = vpop.f32.mrf.mxu0
    %5933 = vmatprep.mubr.f32.mxu0 0.0
    %5934 = vmatmul.mubr.f32.gmra.mxu0 %v5840
    %v5935 = vpop.f32.mrf.mxu0
    %v5936 = vadd.f32 0.0, %v5935
    %v5937 = vpop.f32.mrf.mxu0
    %5938 = vmatprep.mubr.f32.mxu0 0.0
    %5939 = vmatmul.mubr.f32.gmra.mxu0 %v5842
    %v5940 = vpop.f32.mrf.mxu0
    %v5941 = vadd.f32 0.0, %v5940
    %v5942 = vpop.f32.mrf.mxu0
    %5943 = vdwg.mxu0
    %v5944 = vadd.f32 %v5801, %v5911
    %v5945 = vadd.f32 %v5802, %v5916
    %v5946 = vadd.f32 %v5803, %v5921
    %v5947 = vadd.f32 %v5804, %v5926
    %v5948 = vadd.f32 %v5805, %v5931
    %v5949 = vadd.f32 %v5806, %v5936
    %v5950 = vadd.f32 %v5807, %v5941
    %s5951 = scalar_lea.vmem %s9, 64
    %v5952 = vld [vmem:[%s5951] sm:$0xff]
    %v5953 = vld [vmem:[%s5951 + $0x8] sm:$0xff]
    %v5955 = vsel %vm639, %v4600, 0
    %v5958 = vsel %vm639, %v4605, 0
    %v5961 = vsel %vm639, %v4610, 0
    %v5964 = vsel %vm639, %v4615, 0
    %v5967 = vsel %vm639, %v4620, 0
    %v5970 = vsel %vm639, %v4625, 0
    %v5973 = vsel %vm639, %v4630, 0
    %5975 = vmatprep.subr.mxu0 0.0
    %5976 = vmatpush1.msra.mxu0 0.0
    %5977 = vmatprep.subr.mxu0 0.0
    %5978 = vmatpush1.msra.mxu0 0.0
    %5979 = vmatprep.subr.mxu0 0.0
    %5980 = vmatpush1.msra.mxu0 0.0
    %5981 = vmatprep.subr.mxu0 0.0
    %5982 = vmatpush1.msra.mxu0 0.0
    %5983 = vmatprep.subr.mxu0 0.0
    %5984 = vmatpush1.msra.mxu0 0.0
    %5985 = vmatprep.subr.mxu0 0.0
    %5986 = vmatpush1.msra.mxu0 0.0
    %5987 = vmatprep.subr.mxu0 0.0
    %5988 = vmatpush1.msra.mxu0 0.0
    %5989 = vmatprep.subr.mxu0 0.0
    %5990 = vmatpush1.msra.mxu0 0.0
    %5991 = vmatprep.subr.mxu0 0.0
    %5992 = vmatpush1.msra.mxu0 0.0
    %5993 = vmatprep.subr.mxu0 0.0
    %5994 = vmatpush1.msra.mxu0 0.0
    %5995 = vmatprep.subr.mxu0 0.0
    %5996 = vmatpush1.msra.mxu0 0.0
    %5997 = vmatprep.subr.mxu0 0.0
    %5998 = vmatpush1.msra.mxu0 0.0
    %5999 = vmatprep.subr.mxu0 0.0
    %6000 = vmatpush1.msra.mxu0 0.0
    %6001 = vmatprep.subr.mxu0 0.0
    %6002 = vmatpush1.msra.mxu0 0.0
    %6003 = vmatprep.subr.mxu0 0.0
    %6004 = vmatpush1.msra.mxu0 %v5953
    %6005 = vmatprep.subr.mxu0 0.0
    %6006 = vmatpush1.msra.mxu0 %v5952
    %6007 = vmatprep.subr.mxu0 0.0
    %6008 = vmatpush2.msra.mxu0 0.0
    %6009 = vmatprep.subr.mxu0 0.0
    %6010 = vmatpush2.msra.mxu0 0.0
    %6011 = vmatprep.subr.mxu0 0.0
    %6012 = vmatpush2.msra.mxu0 0.0
    %6013 = vmatprep.subr.mxu0 0.0
    %6014 = vmatpush2.msra.mxu0 0.0
    %6015 = vmatprep.subr.mxu0 0.0
    %6016 = vmatpush2.msra.mxu0 0.0
    %6017 = vmatprep.subr.mxu0 0.0
    %6018 = vmatpush2.msra.mxu0 0.0
    %6019 = vmatprep.subr.mxu0 0.0
    %6020 = vmatpush2.msra.mxu0 0.0
    %6021 = vmatprep.subr.mxu0 0.0
    %6022 = vmatpush2.msra.mxu0 0.0
    %6023 = vmatprep.subr.mxu0 0.0
    %6024 = vmatpush2.msra.mxu0 0.0
    %6025 = vmatprep.subr.mxu0 0.0
    %6026 = vmatpush2.msra.mxu0 0.0
    %6027 = vmatprep.subr.mxu0 0.0
    %6028 = vmatpush2.msra.mxu0 0.0
    %6029 = vmatprep.subr.mxu0 0.0
    %6030 = vmatpush2.msra.mxu0 0.0
    %6031 = vmatprep.subr.mxu0 0.0
    %6032 = vmatpush2.msra.mxu0 0.0
    %6033 = vmatprep.subr.mxu0 0.0
    %6034 = vmatpush2.msra.mxu0 0.0
    %6035 = vmatprep.subr.mxu0 0.0
    %6036 = vmatpush2.msra.mxu0 0.0
    %6037 = vmatprep.subr.mxu0 0.0
    %6038 = vmatpush2.msra.mxu0 0.0
    %6039 = vmatprep.mubr.f32.mxu0 0.0
    %6040 = vmatmul.mubr.f32.gmra.mxu0 %v5955
    %v6041 = vpop.f32.mrf.mxu0
    %v6042 = vadd.f32 0.0, %v6041
    %v6043 = vpop.f32.mrf.mxu0
    %6044 = vmatprep.mubr.f32.mxu0 0.0
    %6045 = vmatmul.mubr.f32.gmra.mxu0 %v5958
    %v6046 = vpop.f32.mrf.mxu0
    %v6047 = vadd.f32 0.0, %v6046
    %v6048 = vpop.f32.mrf.mxu0
    %6049 = vmatprep.mubr.f32.mxu0 0.0
    %6050 = vmatmul.mubr.f32.gmra.mxu0 %v5961
    %v6051 = vpop.f32.mrf.mxu0
    %v6052 = vadd.f32 0.0, %v6051
    %v6053 = vpop.f32.mrf.mxu0
    %6054 = vmatprep.mubr.f32.mxu0 0.0
    %6055 = vmatmul.mubr.f32.gmra.mxu0 %v5964
    %v6056 = vpop.f32.mrf.mxu0
    %v6057 = vadd.f32 0.0, %v6056
    %v6058 = vpop.f32.mrf.mxu0
    %6059 = vmatprep.mubr.f32.mxu0 0.0
    %6060 = vmatmul.mubr.f32.gmra.mxu0 %v5967
    %v6061 = vpop.f32.mrf.mxu0
    %v6062 = vadd.f32 0.0, %v6061
    %v6063 = vpop.f32.mrf.mxu0
    %6064 = vmatprep.mubr.f32.mxu0 0.0
    %6065 = vmatmul.mubr.f32.gmra.mxu0 %v5970
    %v6066 = vpop.f32.mrf.mxu0
    %v6067 = vadd.f32 0.0, %v6066
    %v6068 = vpop.f32.mrf.mxu0
    %6069 = vmatprep.mubr.f32.mxu0 0.0
    %6070 = vmatmul.mubr.f32.gmra.mxu0 %v5973
    %v6071 = vpop.f32.mrf.mxu0
    %v6072 = vadd.f32 0.0, %v6071
    %v6073 = vpop.f32.mrf.mxu0
    %6074 = vdwg.mxu0
    %v6075 = vadd.f32 %v5944, %v6042
    %v6076 = vadd.f32 %v5945, %v6047
    %v6077 = vadd.f32 %v5946, %v6052
    %v6078 = vadd.f32 %v5947, %v6057
    %v6079 = vadd.f32 %v5948, %v6062
    %v6080 = vadd.f32 %v5949, %v6067
    %v6081 = vadd.f32 %v5950, %v6072
    %s6082 = scalar_lea.vmem %s9, 80
    %v6083 = vld [vmem:[%s6082] sm:$0xff]
    %v6084 = vld [vmem:[%s6082 + $0x8] sm:$0xff]
    %v6092 = vrot.slane %v4630, 6
    %v6093 = vrot.slane %v4635, 6
    %v6094 = vsel %vm3595, %v6092, %v6093
    %v6095 = vrot.slane %v4640, 6
    %v6096 = vsel %vm3595, %v6093, %v6095
    %v6097 = vrot.slane %v4645, 6
    %v6098 = vsel %vm3595, %v6095, %v6097
    %v6099 = vrot.slane %v4650, 6
    %v6100 = vsel %vm3595, %v6097, %v6099
    %v6101 = vrot.slane %v4655, 6
    %v6102 = vsel %vm3595, %v6099, %v6101
    %v6103 = vrot.slane %v4660, 6
    %v6104 = vsel %vm3595, %v6101, %v6103
    %v6105 = vrot.slane %v4665, 6
    %v6106 = vsel %vm3595, %v6103, %v6105
    %v6107 = vsel %vm639, %v6094, 0
    %v6109 = vsel %vm639, %v6096, 0
    %v6111 = vsel %vm639, %v6098, 0
    %v6113 = vsel %vm639, %v6100, 0
    %v6115 = vsel %vm639, %v6102, 0
    %v6117 = vsel %vm639, %v6104, 0
    %v6119 = vsel %vm639, %v6106, 0
    %6121 = vmatprep.subr.mxu0 0.0
    %6122 = vmatpush1.msra.mxu0 0.0
    %6123 = vmatprep.subr.mxu0 0.0
    %6124 = vmatpush1.msra.mxu0 0.0
    %6125 = vmatprep.subr.mxu0 0.0
    %6126 = vmatpush1.msra.mxu0 0.0
    %6127 = vmatprep.subr.mxu0 0.0
    %6128 = vmatpush1.msra.mxu0 0.0
    %6129 = vmatprep.subr.mxu0 0.0
    %6130 = vmatpush1.msra.mxu0 0.0
    %6131 = vmatprep.subr.mxu0 0.0
    %6132 = vmatpush1.msra.mxu0 0.0
    %6133 = vmatprep.subr.mxu0 0.0
    %6134 = vmatpush1.msra.mxu0 0.0
    %6135 = vmatprep.subr.mxu0 0.0
    %6136 = vmatpush1.msra.mxu0 0.0
    %6137 = vmatprep.subr.mxu0 0.0
    %6138 = vmatpush1.msra.mxu0 0.0
    %6139 = vmatprep.subr.mxu0 0.0
    %6140 = vmatpush1.msra.mxu0 0.0
    %6141 = vmatprep.subr.mxu0 0.0
    %6142 = vmatpush1.msra.mxu0 0.0
    %6143 = vmatprep.subr.mxu0 0.0
    %6144 = vmatpush1.msra.mxu0 0.0
    %6145 = vmatprep.subr.mxu0 0.0
    %6146 = vmatpush1.msra.mxu0 0.0
    %6147 = vmatprep.subr.mxu0 0.0
    %6148 = vmatpush1.msra.mxu0 0.0
    %6149 = vmatprep.subr.mxu0 0.0
    %6150 = vmatpush1.msra.mxu0 %v6084
    %6151 = vmatprep.subr.mxu0 0.0
    %6152 = vmatpush1.msra.mxu0 %v6083
    %6153 = vmatprep.subr.mxu0 0.0
    %6154 = vmatpush2.msra.mxu0 0.0
    %6155 = vmatprep.subr.mxu0 0.0
    %6156 = vmatpush2.msra.mxu0 0.0
    %6157 = vmatprep.subr.mxu0 0.0
    %6158 = vmatpush2.msra.mxu0 0.0
    %6159 = vmatprep.subr.mxu0 0.0
    %6160 = vmatpush2.msra.mxu0 0.0
    %6161 = vmatprep.subr.mxu0 0.0
    %6162 = vmatpush2.msra.mxu0 0.0
    %6163 = vmatprep.subr.mxu0 0.0
    %6164 = vmatpush2.msra.mxu0 0.0
    %6165 = vmatprep.subr.mxu0 0.0
    %6166 = vmatpush2.msra.mxu0 0.0
    %6167 = vmatprep.subr.mxu0 0.0
    %6168 = vmatpush2.msra.mxu0 0.0
    %6169 = vmatprep.subr.mxu0 0.0
    %6170 = vmatpush2.msra.mxu0 0.0
    %6171 = vmatprep.subr.mxu0 0.0
    %6172 = vmatpush2.msra.mxu0 0.0
    %6173 = vmatprep.subr.mxu0 0.0
    %6174 = vmatpush2.msra.mxu0 0.0
    %6175 = vmatprep.subr.mxu0 0.0
    %6176 = vmatpush2.msra.mxu0 0.0
    %6177 = vmatprep.subr.mxu0 0.0
    %6178 = vmatpush2.msra.mxu0 0.0
    %6179 = vmatprep.subr.mxu0 0.0
    %6180 = vmatpush2.msra.mxu0 0.0
    %6181 = vmatprep.subr.mxu0 0.0
    %6182 = vmatpush2.msra.mxu0 0.0
    %6183 = vmatprep.subr.mxu0 0.0
    %6184 = vmatpush2.msra.mxu0 0.0
    %6185 = vmatprep.mubr.f32.mxu0 0.0
    %6186 = vmatmul.mubr.f32.gmra.mxu0 %v6107
    %v6187 = vpop.f32.mrf.mxu0
    %v6188 = vadd.f32 0.0, %v6187
    %v6189 = vpop.f32.mrf.mxu0
    %6190 = vmatprep.mubr.f32.mxu0 0.0
    %6191 = vmatmul.mubr.f32.gmra.mxu0 %v6109
    %v6192 = vpop.f32.mrf.mxu0
    %v6193 = vadd.f32 0.0, %v6192
    %v6194 = vpop.f32.mrf.mxu0
    %6195 = vmatprep.mubr.f32.mxu0 0.0
    %6196 = vmatmul.mubr.f32.gmra.mxu0 %v6111
    %v6197 = vpop.f32.mrf.mxu0
    %v6198 = vadd.f32 0.0, %v6197
    %v6199 = vpop.f32.mrf.mxu0
    %6200 = vmatprep.mubr.f32.mxu0 0.0
    %6201 = vmatmul.mubr.f32.gmra.mxu0 %v6113
    %v6202 = vpop.f32.mrf.mxu0
    %v6203 = vadd.f32 0.0, %v6202
    %v6204 = vpop.f32.mrf.mxu0
    %6205 = vmatprep.mubr.f32.mxu0 0.0
    %6206 = vmatmul.mubr.f32.gmra.mxu0 %v6115
    %v6207 = vpop.f32.mrf.mxu0
    %v6208 = vadd.f32 0.0, %v6207
    %v6209 = vpop.f32.mrf.mxu0
    %6210 = vmatprep.mubr.f32.mxu0 0.0
    %6211 = vmatmul.mubr.f32.gmra.mxu0 %v6117
    %v6212 = vpop.f32.mrf.mxu0
    %v6213 = vadd.f32 0.0, %v6212
    %v6214 = vpop.f32.mrf.mxu0
    %6215 = vmatprep.mubr.f32.mxu0 0.0
    %6216 = vmatmul.mubr.f32.gmra.mxu0 %v6119
    %v6217 = vpop.f32.mrf.mxu0
    %v6218 = vadd.f32 0.0, %v6217
    %v6219 = vpop.f32.mrf.mxu0
    %6220 = vdwg.mxu0
    %v6221 = vadd.f32 %v6075, %v6188
    %v6222 = vadd.f32 %v6076, %v6193
    %v6223 = vadd.f32 %v6077, %v6198
    %v6224 = vadd.f32 %v6078, %v6203
    %v6225 = vadd.f32 %v6079, %v6208
    %v6226 = vadd.f32 %v6080, %v6213
    %v6227 = vadd.f32 %v6081, %v6218
    %s6228 = scalar_lea.vmem %s9, 96
    %v6229 = vld [vmem:[%s6228] sm:$0xff]
    %v6230 = vld [vmem:[%s6228 + $0x8] sm:$0xff]
    %v6238 = vrot.slane %v4665, 4
    %v6239 = vrot.slane %v4670, 4
    %v6240 = vsel %vm3259, %v6238, %v6239
    %v6241 = vrot.slane %v4675, 4
    %v6242 = vsel %vm3259, %v6239, %v6241
    %v6243 = vrot.slane %v4680, 4
    %v6244 = vsel %vm3259, %v6241, %v6243
    %v6245 = vrot.slane %v4685, 4
    %v6246 = vsel %vm3259, %v6243, %v6245
    %v6247 = vrot.slane %v4690, 4
    %v6248 = vsel %vm3259, %v6245, %v6247
    %v6249 = vrot.slane %v4695, 4
    %v6250 = vsel %vm3259, %v6247, %v6249
    %v6251 = vrot.slane %v4700, 4
    %v6252 = vsel %vm3259, %v6249, %v6251
    %v6253 = vsel %vm639, %v6240, 0
    %v6255 = vsel %vm639, %v6242, 0
    %v6257 = vsel %vm639, %v6244, 0
    %v6259 = vsel %vm639, %v6246, 0
    %v6261 = vsel %vm639, %v6248, 0
    %v6263 = vsel %vm639, %v6250, 0
    %v6265 = vsel %vm639, %v6252, 0
    %6267 = vmatprep.subr.mxu0 0.0
    %6268 = vmatpush1.msra.mxu0 0.0
    %6269 = vmatprep.subr.mxu0 0.0
    %6270 = vmatpush1.msra.mxu0 0.0
    %6271 = vmatprep.subr.mxu0 0.0
    %6272 = vmatpush1.msra.mxu0 0.0
    %6273 = vmatprep.subr.mxu0 0.0
    %6274 = vmatpush1.msra.mxu0 0.0
    %6275 = vmatprep.subr.mxu0 0.0
    %6276 = vmatpush1.msra.mxu0 0.0
    %6277 = vmatprep.subr.mxu0 0.0
    %6278 = vmatpush1.msra.mxu0 0.0
    %6279 = vmatprep.subr.mxu0 0.0
    %6280 = vmatpush1.msra.mxu0 0.0
    %6281 = vmatprep.subr.mxu0 0.0
    %6282 = vmatpush1.msra.mxu0 0.0
    %6283 = vmatprep.subr.mxu0 0.0
    %6284 = vmatpush1.msra.mxu0 0.0
    %6285 = vmatprep.subr.mxu0 0.0
    %6286 = vmatpush1.msra.mxu0 0.0
    %6287 = vmatprep.subr.mxu0 0.0
    %6288 = vmatpush1.msra.mxu0 0.0
    %6289 = vmatprep.subr.mxu0 0.0
    %6290 = vmatpush1.msra.mxu0 0.0
    %6291 = vmatprep.subr.mxu0 0.0
    %6292 = vmatpush1.msra.mxu0 0.0
    %6293 = vmatprep.subr.mxu0 0.0
    %6294 = vmatpush1.msra.mxu0 0.0
    %6295 = vmatprep.subr.mxu0 0.0
    %6296 = vmatpush1.msra.mxu0 %v6230
    %6297 = vmatprep.subr.mxu0 0.0
    %6298 = vmatpush1.msra.mxu0 %v6229
    %6299 = vmatprep.subr.mxu0 0.0
    %6300 = vmatpush2.msra.mxu0 0.0
    %6301 = vmatprep.subr.mxu0 0.0
    %6302 = vmatpush2.msra.mxu0 0.0
    %6303 = vmatprep.subr.mxu0 0.0
    %6304 = vmatpush2.msra.mxu0 0.0
    %6305 = vmatprep.subr.mxu0 0.0
    %6306 = vmatpush2.msra.mxu0 0.0
    %6307 = vmatprep.subr.mxu0 0.0
    %6308 = vmatpush2.msra.mxu0 0.0
    %6309 = vmatprep.subr.mxu0 0.0
    %6310 = vmatpush2.msra.mxu0 0.0
    %6311 = vmatprep.subr.mxu0 0.0
    %6312 = vmatpush2.msra.mxu0 0.0
    %6313 = vmatprep.subr.mxu0 0.0
    %6314 = vmatpush2.msra.mxu0 0.0
    %6315 = vmatprep.subr.mxu0 0.0
    %6316 = vmatpush2.msra.mxu0 0.0
    %6317 = vmatprep.subr.mxu0 0.0
    %6318 = vmatpush2.msra.mxu0 0.0
    %6319 = vmatprep.subr.mxu0 0.0
    %6320 = vmatpush2.msra.mxu0 0.0
    %6321 = vmatprep.subr.mxu0 0.0
    %6322 = vmatpush2.msra.mxu0 0.0
    %6323 = vmatprep.subr.mxu0 0.0
    %6324 = vmatpush2.msra.mxu0 0.0
    %6325 = vmatprep.subr.mxu0 0.0
    %6326 = vmatpush2.msra.mxu0 0.0
    %6327 = vmatprep.subr.mxu0 0.0
    %6328 = vmatpush2.msra.mxu0 0.0
    %6329 = vmatprep.subr.mxu0 0.0
    %6330 = vmatpush2.msra.mxu0 0.0
    %6331 = vmatprep.mubr.f32.mxu0 0.0
    %6332 = vmatmul.mubr.f32.gmra.mxu0 %v6253
    %v6333 = vpop.f32.mrf.mxu0
    %v6334 = vadd.f32 0.0, %v6333
    %v6335 = vpop.f32.mrf.mxu0
    %6336 = vmatprep.mubr.f32.mxu0 0.0
    %6337 = vmatmul.mubr.f32.gmra.mxu0 %v6255
    %v6338 = vpop.f32.mrf.mxu0
    %v6339 = vadd.f32 0.0, %v6338
    %v6340 = vpop.f32.mrf.mxu0
    %6341 = vmatprep.mubr.f32.mxu0 0.0
    %6342 = vmatmul.mubr.f32.gmra.mxu0 %v6257
    %v6343 = vpop.f32.mrf.mxu0
    %v6344 = vadd.f32 0.0, %v6343
    %v6345 = vpop.f32.mrf.mxu0
    %6346 = vmatprep.mubr.f32.mxu0 0.0
    %6347 = vmatmul.mubr.f32.gmra.mxu0 %v6259
    %v6348 = vpop.f32.mrf.mxu0
    %v6349 = vadd.f32 0.0, %v6348
    %v6350 = vpop.f32.mrf.mxu0
    %6351 = vmatprep.mubr.f32.mxu0 0.0
    %6352 = vmatmul.mubr.f32.gmra.mxu0 %v6261
    %v6353 = vpop.f32.mrf.mxu0
    %v6354 = vadd.f32 0.0, %v6353
    %v6355 = vpop.f32.mrf.mxu0
    %6356 = vmatprep.mubr.f32.mxu0 0.0
    %6357 = vmatmul.mubr.f32.gmra.mxu0 %v6263
    %v6358 = vpop.f32.mrf.mxu0
    %v6359 = vadd.f32 0.0, %v6358
    %v6360 = vpop.f32.mrf.mxu0
    %6361 = vmatprep.mubr.f32.mxu0 0.0
    %6362 = vmatmul.mubr.f32.gmra.mxu0 %v6265
    %v6363 = vpop.f32.mrf.mxu0
    %v6364 = vadd.f32 0.0, %v6363
    %v6365 = vpop.f32.mrf.mxu0
    %6366 = vdwg.mxu0
    %v6367 = vadd.f32 %v6221, %v6334
    %v6368 = vadd.f32 %v6222, %v6339
    %v6369 = vadd.f32 %v6223, %v6344
    %v6370 = vadd.f32 %v6224, %v6349
    %v6371 = vadd.f32 %v6225, %v6354
    %v6372 = vadd.f32 %v6226, %v6359
    %v6373 = vadd.f32 %v6227, %v6364
    %s6374 = scalar_lea.vmem %s9, 112
    %v6375 = vld [vmem:[%s6374] sm:$0xff]
    %v6376 = vld [vmem:[%s6374 + $0x8] sm:$0xff]
    %v6383 = vrot.slane %v4700, 2
    %v6384 = vrot.slane %v4705, 2
    %v6385 = vsel %vm4394, %v6383, %v6384
    %v6386 = vrot.slane %v4710, 2
    %v6387 = vsel %vm4394, %v6384, %v6386
    %v6388 = vrot.slane %v4715, 2
    %v6389 = vsel %vm4394, %v6386, %v6388
    %v6390 = vrot.slane %v4720, 2
    %v6391 = vsel %vm4394, %v6388, %v6390
    %v6392 = vrot.slane %v4725, 2
    %v6393 = vsel %vm4394, %v6390, %v6392
    %v6394 = vrot.slane %v4730, 2
    %v6395 = vsel %vm4394, %v6392, %v6394
    %v6396 = vsel %vm639, %v6385, 0
    %v6398 = vsel %vm639, %v6387, 0
    %v6400 = vsel %vm639, %v6389, 0
    %v6402 = vsel %vm639, %v6391, 0
    %v6404 = vsel %vm639, %v6393, 0
    %v6406 = vsel %vm639, %v6395, 0
    %v6408 = vsel %vm639, %v6394, 0
    %6410 = vmatprep.subr.mxu0 0.0
    %6411 = vmatpush1.msra.mxu0 0.0
    %6412 = vmatprep.subr.mxu0 0.0
    %6413 = vmatpush1.msra.mxu0 0.0
    %6414 = vmatprep.subr.mxu0 0.0
    %6415 = vmatpush1.msra.mxu0 0.0
    %6416 = vmatprep.subr.mxu0 0.0
    %6417 = vmatpush1.msra.mxu0 0.0
    %6418 = vmatprep.subr.mxu0 0.0
    %6419 = vmatpush1.msra.mxu0 0.0
    %6420 = vmatprep.subr.mxu0 0.0
    %6421 = vmatpush1.msra.mxu0 0.0
    %6422 = vmatprep.subr.mxu0 0.0
    %6423 = vmatpush1.msra.mxu0 0.0
    %6424 = vmatprep.subr.mxu0 0.0
    %6425 = vmatpush1.msra.mxu0 0.0
    %6426 = vmatprep.subr.mxu0 0.0
    %6427 = vmatpush1.msra.mxu0 0.0
    %6428 = vmatprep.subr.mxu0 0.0
    %6429 = vmatpush1.msra.mxu0 0.0
    %6430 = vmatprep.subr.mxu0 0.0
    %6431 = vmatpush1.msra.mxu0 0.0
    %6432 = vmatprep.subr.mxu0 0.0
    %6433 = vmatpush1.msra.mxu0 0.0
    %6434 = vmatprep.subr.mxu0 0.0
    %6435 = vmatpush1.msra.mxu0 0.0
    %6436 = vmatprep.subr.mxu0 0.0
    %6437 = vmatpush1.msra.mxu0 0.0
    %6438 = vmatprep.subr.mxu0 0.0
    %6439 = vmatpush1.msra.mxu0 %v6376
    %6440 = vmatprep.subr.mxu0 0.0
    %6441 = vmatpush1.msra.mxu0 %v6375
    %6442 = vmatprep.subr.mxu0 0.0
    %6443 = vmatpush2.msra.mxu0 0.0
    %6444 = vmatprep.subr.mxu0 0.0
    %6445 = vmatpush2.msra.mxu0 0.0
    %6446 = vmatprep.subr.mxu0 0.0
    %6447 = vmatpush2.msra.mxu0 0.0
    %6448 = vmatprep.subr.mxu0 0.0
    %6449 = vmatpush2.msra.mxu0 0.0
    %6450 = vmatprep.subr.mxu0 0.0
    %6451 = vmatpush2.msra.mxu0 0.0
    %6452 = vmatprep.subr.mxu0 0.0
    %6453 = vmatpush2.msra.mxu0 0.0
    %6454 = vmatprep.subr.mxu0 0.0
    %6455 = vmatpush2.msra.mxu0 0.0
    %6456 = vmatprep.subr.mxu0 0.0
    %6457 = vmatpush2.msra.mxu0 0.0
    %6458 = vmatprep.subr.mxu0 0.0
    %6459 = vmatpush2.msra.mxu0 0.0
    %6460 = vmatprep.subr.mxu0 0.0
    %6461 = vmatpush2.msra.mxu0 0.0
    %6462 = vmatprep.subr.mxu0 0.0
    %6463 = vmatpush2.msra.mxu0 0.0
    %6464 = vmatprep.subr.mxu0 0.0
    %6465 = vmatpush2.msra.mxu0 0.0
    %6466 = vmatprep.subr.mxu0 0.0
    %6467 = vmatpush2.msra.mxu0 0.0
    %6468 = vmatprep.subr.mxu0 0.0
    %6469 = vmatpush2.msra.mxu0 0.0
    %6470 = vmatprep.subr.mxu0 0.0
    %6471 = vmatpush2.msra.mxu0 0.0
    %6472 = vmatprep.subr.mxu0 0.0
    %6473 = vmatpush2.msra.mxu0 0.0
    %6474 = vmatprep.mubr.f32.mxu0 0.0
    %6475 = vmatmul.mubr.f32.gmra.mxu0 %v6396
    %v6476 = vpop.f32.mrf.mxu0
    %v6477 = vadd.f32 0.0, %v6476
    %v6478 = vpop.f32.mrf.mxu0
    %6479 = vmatprep.mubr.f32.mxu0 0.0
    %6480 = vmatmul.mubr.f32.gmra.mxu0 %v6398
    %v6481 = vpop.f32.mrf.mxu0
    %v6482 = vadd.f32 0.0, %v6481
    %v6483 = vpop.f32.mrf.mxu0
    %6484 = vmatprep.mubr.f32.mxu0 0.0
    %6485 = vmatmul.mubr.f32.gmra.mxu0 %v6400
    %v6486 = vpop.f32.mrf.mxu0
    %v6487 = vadd.f32 0.0, %v6486
    %v6488 = vpop.f32.mrf.mxu0
    %6489 = vmatprep.mubr.f32.mxu0 0.0
    %6490 = vmatmul.mubr.f32.gmra.mxu0 %v6402
    %v6491 = vpop.f32.mrf.mxu0
    %v6492 = vadd.f32 0.0, %v6491
    %v6493 = vpop.f32.mrf.mxu0
    %6494 = vmatprep.mubr.f32.mxu0 0.0
    %6495 = vmatmul.mubr.f32.gmra.mxu0 %v6404
    %v6496 = vpop.f32.mrf.mxu0
    %v6497 = vadd.f32 0.0, %v6496
    %v6498 = vpop.f32.mrf.mxu0
    %6499 = vmatprep.mubr.f32.mxu0 0.0
    %6500 = vmatmul.mubr.f32.gmra.mxu0 %v6406
    %v6501 = vpop.f32.mrf.mxu0
    %v6502 = vadd.f32 0.0, %v6501
    %v6503 = vpop.f32.mrf.mxu0
    %6504 = vmatprep.mubr.f32.mxu0 0.0
    %6505 = vmatmul.mubr.f32.gmra.mxu0 %v6408
    %v6506 = vpop.f32.mrf.mxu0
    %v6507 = vadd.f32 0.0, %v6506
    %v6508 = vpop.f32.mrf.mxu0
    %6509 = vdwg.mxu0
    %v6510 = vadd.f32 %v6367, %v6477
    %v6511 = vadd.f32 %v6368, %v6482
    %v6512 = vadd.f32 %v6369, %v6487
    %v6513 = vadd.f32 %v6370, %v6492
    %v6514 = vadd.f32 %v6371, %v6497
    %v6515 = vadd.f32 %v6372, %v6502
    %v6516 = vadd.f32 %v6373, %v6507
    %s6517 = scalar_lea.vmem %s9, 128
    %v6518 = vld [vmem:[%s6517] sm:$0xff]
    %v6519 = vld [vmem:[%s6517 + $0x8] sm:$0xff]
    %v6521 = vsel %vm639, %v4735, 0
    %v6524 = vsel %vm639, %v4740, 0
    %v6527 = vsel %vm639, %v4745, 0
    %v6530 = vsel %vm639, %v4750, 0
    %v6533 = vsel %vm639, %v4755, 0
    %v6536 = vsel %vm639, %v4760, 0
    %v6539 = vsel %vm639, %v4765, 0
    %6541 = vmatprep.subr.mxu0 0.0
    %6542 = vmatpush1.msra.mxu0 0.0
    %6543 = vmatprep.subr.mxu0 0.0
    %6544 = vmatpush1.msra.mxu0 0.0
    %6545 = vmatprep.subr.mxu0 0.0
    %6546 = vmatpush1.msra.mxu0 0.0
    %6547 = vmatprep.subr.mxu0 0.0
    %6548 = vmatpush1.msra.mxu0 0.0
    %6549 = vmatprep.subr.mxu0 0.0
    %6550 = vmatpush1.msra.mxu0 0.0
    %6551 = vmatprep.subr.mxu0 0.0
    %6552 = vmatpush1.msra.mxu0 0.0
    %6553 = vmatprep.subr.mxu0 0.0
    %6554 = vmatpush1.msra.mxu0 0.0
    %6555 = vmatprep.subr.mxu0 0.0
    %6556 = vmatpush1.msra.mxu0 0.0
    %6557 = vmatprep.subr.mxu0 0.0
    %6558 = vmatpush1.msra.mxu0 0.0
    %6559 = vmatprep.subr.mxu0 0.0
    %6560 = vmatpush1.msra.mxu0 0.0
    %6561 = vmatprep.subr.mxu0 0.0
    %6562 = vmatpush1.msra.mxu0 0.0
    %6563 = vmatprep.subr.mxu0 0.0
    %6564 = vmatpush1.msra.mxu0 0.0
    %6565 = vmatprep.subr.mxu0 0.0
    %6566 = vmatpush1.msra.mxu0 0.0
    %6567 = vmatprep.subr.mxu0 0.0
    %6568 = vmatpush1.msra.mxu0 0.0
    %6569 = vmatprep.subr.mxu0 0.0
    %6570 = vmatpush1.msra.mxu0 %v6519
    %6571 = vmatprep.subr.mxu0 0.0
    %6572 = vmatpush1.msra.mxu0 %v6518
    %6573 = vmatprep.subr.mxu0 0.0
    %6574 = vmatpush2.msra.mxu0 0.0
    %6575 = vmatprep.subr.mxu0 0.0
    %6576 = vmatpush2.msra.mxu0 0.0
    %6577 = vmatprep.subr.mxu0 0.0
    %6578 = vmatpush2.msra.mxu0 0.0
    %6579 = vmatprep.subr.mxu0 0.0
    %6580 = vmatpush2.msra.mxu0 0.0
    %6581 = vmatprep.subr.mxu0 0.0
    %6582 = vmatpush2.msra.mxu0 0.0
    %6583 = vmatprep.subr.mxu0 0.0
    %6584 = vmatpush2.msra.mxu0 0.0
    %6585 = vmatprep.subr.mxu0 0.0
    %6586 = vmatpush2.msra.mxu0 0.0
    %6587 = vmatprep.subr.mxu0 0.0
    %6588 = vmatpush2.msra.mxu0 0.0
    %6589 = vmatprep.subr.mxu0 0.0
    %6590 = vmatpush2.msra.mxu0 0.0
    %6591 = vmatprep.subr.mxu0 0.0
    %6592 = vmatpush2.msra.mxu0 0.0
    %6593 = vmatprep.subr.mxu0 0.0
    %6594 = vmatpush2.msra.mxu0 0.0
    %6595 = vmatprep.subr.mxu0 0.0
    %6596 = vmatpush2.msra.mxu0 0.0
    %6597 = vmatprep.subr.mxu0 0.0
    %6598 = vmatpush2.msra.mxu0 0.0
    %6599 = vmatprep.subr.mxu0 0.0
    %6600 = vmatpush2.msra.mxu0 0.0
    %6601 = vmatprep.subr.mxu0 0.0
    %6602 = vmatpush2.msra.mxu0 0.0
    %6603 = vmatprep.subr.mxu0 0.0
    %6604 = vmatpush2.msra.mxu0 0.0
    %6605 = vmatprep.mubr.f32.mxu0 0.0
    %6606 = vmatmul.mubr.f32.gmra.mxu0 %v6521
    %v6607 = vpop.f32.mrf.mxu0
    %v6608 = vadd.f32 0.0, %v6607
    %v6609 = vpop.f32.mrf.mxu0
    %6610 = vmatprep.mubr.f32.mxu0 0.0
    %6611 = vmatmul.mubr.f32.gmra.mxu0 %v6524
    %v6612 = vpop.f32.mrf.mxu0
    %v6613 = vadd.f32 0.0, %v6612
    %v6614 = vpop.f32.mrf.mxu0
    %6615 = vmatprep.mubr.f32.mxu0 0.0
    %6616 = vmatmul.mubr.f32.gmra.mxu0 %v6527
    %v6617 = vpop.f32.mrf.mxu0
    %v6618 = vadd.f32 0.0, %v6617
    %v6619 = vpop.f32.mrf.mxu0
    %6620 = vmatprep.mubr.f32.mxu0 0.0
    %6621 = vmatmul.mubr.f32.gmra.mxu0 %v6530
    %v6622 = vpop.f32.mrf.mxu0
    %v6623 = vadd.f32 0.0, %v6622
    %v6624 = vpop.f32.mrf.mxu0
    %6625 = vmatprep.mubr.f32.mxu0 0.0
    %6626 = vmatmul.mubr.f32.gmra.mxu0 %v6533
    %v6627 = vpop.f32.mrf.mxu0
    %v6628 = vadd.f32 0.0, %v6627
    %v6629 = vpop.f32.mrf.mxu0
    %6630 = vmatprep.mubr.f32.mxu0 0.0
    %6631 = vmatmul.mubr.f32.gmra.mxu0 %v6536
    %v6632 = vpop.f32.mrf.mxu0
    %v6633 = vadd.f32 0.0, %v6632
    %v6634 = vpop.f32.mrf.mxu0
    %6635 = vmatprep.mubr.f32.mxu0 0.0
    %6636 = vmatmul.mubr.f32.gmra.mxu0 %v6539
    %v6637 = vpop.f32.mrf.mxu0
    %v6638 = vadd.f32 0.0, %v6637
    %v6639 = vpop.f32.mrf.mxu0
    %6640 = vdwg.mxu0
    %v6641 = vadd.f32 %v6510, %v6608
    %v6642 = vadd.f32 %v6511, %v6613
    %v6643 = vadd.f32 %v6512, %v6618
    %v6644 = vadd.f32 %v6513, %v6623
    %v6645 = vadd.f32 %v6514, %v6628
    %v6646 = vadd.f32 %v6515, %v6633
    %v6647 = vadd.f32 %v6516, %v6638
    %s6648 = scalar_lea.vmem %s9, 144
    %v6649 = vld [vmem:[%s6648] sm:$0xff]
    %v6650 = vld [vmem:[%s6648 + $0x8] sm:$0xff]
    %v6658 = vrot.slane %v4765, 6
    %v6659 = vrot.slane %v4770, 6
    %v6660 = vsel %vm3595, %v6658, %v6659
    %v6661 = vrot.slane %v4775, 6
    %v6662 = vsel %vm3595, %v6659, %v6661
    %v6663 = vrot.slane %v4780, 6
    %v6664 = vsel %vm3595, %v6661, %v6663
    %v6665 = vrot.slane %v4785, 6
    %v6666 = vsel %vm3595, %v6663, %v6665
    %v6667 = vrot.slane %v4790, 6
    %v6668 = vsel %vm3595, %v6665, %v6667
    %v6669 = vrot.slane %v4795, 6
    %v6670 = vsel %vm3595, %v6667, %v6669
    %v6671 = vrot.slane %v4800, 6
    %v6672 = vsel %vm3595, %v6669, %v6671
    %v6673 = vsel %vm639, %v6660, 0
    %v6675 = vsel %vm639, %v6662, 0
    %v6677 = vsel %vm639, %v6664, 0
    %v6679 = vsel %vm639, %v6666, 0
    %v6681 = vsel %vm639, %v6668, 0
    %v6683 = vsel %vm639, %v6670, 0
    %v6685 = vsel %vm639, %v6672, 0
    %6687 = vmatprep.subr.mxu0 0.0
    %6688 = vmatpush1.msra.mxu0 0.0
    %6689 = vmatprep.subr.mxu0 0.0
    %6690 = vmatpush1.msra.mxu0 0.0
    %6691 = vmatprep.subr.mxu0 0.0
    %6692 = vmatpush1.msra.mxu0 0.0
    %6693 = vmatprep.subr.mxu0 0.0
    %6694 = vmatpush1.msra.mxu0 0.0
    %6695 = vmatprep.subr.mxu0 0.0
    %6696 = vmatpush1.msra.mxu0 0.0
    %6697 = vmatprep.subr.mxu0 0.0
    %6698 = vmatpush1.msra.mxu0 0.0
    %6699 = vmatprep.subr.mxu0 0.0
    %6700 = vmatpush1.msra.mxu0 0.0
    %6701 = vmatprep.subr.mxu0 0.0
    %6702 = vmatpush1.msra.mxu0 0.0
    %6703 = vmatprep.subr.mxu0 0.0
    %6704 = vmatpush1.msra.mxu0 0.0
    %6705 = vmatprep.subr.mxu0 0.0
    %6706 = vmatpush1.msra.mxu0 0.0
    %6707 = vmatprep.subr.mxu0 0.0
    %6708 = vmatpush1.msra.mxu0 0.0
    %6709 = vmatprep.subr.mxu0 0.0
    %6710 = vmatpush1.msra.mxu0 0.0
    %6711 = vmatprep.subr.mxu0 0.0
    %6712 = vmatpush1.msra.mxu0 0.0
    %6713 = vmatprep.subr.mxu0 0.0
    %6714 = vmatpush1.msra.mxu0 0.0
    %6715 = vmatprep.subr.mxu0 0.0
    %6716 = vmatpush1.msra.mxu0 %v6650
    %6717 = vmatprep.subr.mxu0 0.0
    %6718 = vmatpush1.msra.mxu0 %v6649
    %6719 = vmatprep.subr.mxu0 0.0
    %6720 = vmatpush2.msra.mxu0 0.0
    %6721 = vmatprep.subr.mxu0 0.0
    %6722 = vmatpush2.msra.mxu0 0.0
    %6723 = vmatprep.subr.mxu0 0.0
    %6724 = vmatpush2.msra.mxu0 0.0
    %6725 = vmatprep.subr.mxu0 0.0
    %6726 = vmatpush2.msra.mxu0 0.0
    %6727 = vmatprep.subr.mxu0 0.0
    %6728 = vmatpush2.msra.mxu0 0.0
    %6729 = vmatprep.subr.mxu0 0.0
    %6730 = vmatpush2.msra.mxu0 0.0
    %6731 = vmatprep.subr.mxu0 0.0
    %6732 = vmatpush2.msra.mxu0 0.0
    %6733 = vmatprep.subr.mxu0 0.0
    %6734 = vmatpush2.msra.mxu0 0.0
    %6735 = vmatprep.subr.mxu0 0.0
    %6736 = vmatpush2.msra.mxu0 0.0
    %6737 = vmatprep.subr.mxu0 0.0
    %6738 = vmatpush2.msra.mxu0 0.0
    %6739 = vmatprep.subr.mxu0 0.0
    %6740 = vmatpush2.msra.mxu0 0.0
    %6741 = vmatprep.subr.mxu0 0.0
    %6742 = vmatpush2.msra.mxu0 0.0
    %6743 = vmatprep.subr.mxu0 0.0
    %6744 = vmatpush2.msra.mxu0 0.0
    %6745 = vmatprep.subr.mxu0 0.0
    %6746 = vmatpush2.msra.mxu0 0.0
    %6747 = vmatprep.subr.mxu0 0.0
    %6748 = vmatpush2.msra.mxu0 0.0
    %6749 = vmatprep.subr.mxu0 0.0
    %6750 = vmatpush2.msra.mxu0 0.0
    %6751 = vmatprep.mubr.f32.mxu0 0.0
    %6752 = vmatmul.mubr.f32.gmra.mxu0 %v6673
    %v6753 = vpop.f32.mrf.mxu0
    %v6754 = vadd.f32 0.0, %v6753
    %v6755 = vpop.f32.mrf.mxu0
    %6756 = vmatprep.mubr.f32.mxu0 0.0
    %6757 = vmatmul.mubr.f32.gmra.mxu0 %v6675
    %v6758 = vpop.f32.mrf.mxu0
    %v6759 = vadd.f32 0.0, %v6758
    %v6760 = vpop.f32.mrf.mxu0
    %6761 = vmatprep.mubr.f32.mxu0 0.0
    %6762 = vmatmul.mubr.f32.gmra.mxu0 %v6677
    %v6763 = vpop.f32.mrf.mxu0
    %v6764 = vadd.f32 0.0, %v6763
    %v6765 = vpop.f32.mrf.mxu0
    %6766 = vmatprep.mubr.f32.mxu0 0.0
    %6767 = vmatmul.mubr.f32.gmra.mxu0 %v6679
    %v6768 = vpop.f32.mrf.mxu0
    %v6769 = vadd.f32 0.0, %v6768
    %v6770 = vpop.f32.mrf.mxu0
    %6771 = vmatprep.mubr.f32.mxu0 0.0
    %6772 = vmatmul.mubr.f32.gmra.mxu0 %v6681
    %v6773 = vpop.f32.mrf.mxu0
    %v6774 = vadd.f32 0.0, %v6773
    %v6775 = vpop.f32.mrf.mxu0
    %6776 = vmatprep.mubr.f32.mxu0 0.0
    %6777 = vmatmul.mubr.f32.gmra.mxu0 %v6683
    %v6778 = vpop.f32.mrf.mxu0
    %v6779 = vadd.f32 0.0, %v6778
    %v6780 = vpop.f32.mrf.mxu0
    %6781 = vmatprep.mubr.f32.mxu0 0.0
    %6782 = vmatmul.mubr.f32.gmra.mxu0 %v6685
    %v6783 = vpop.f32.mrf.mxu0
    %v6784 = vadd.f32 0.0, %v6783
    %v6785 = vpop.f32.mrf.mxu0
    %6786 = vdwg.mxu0
    %v6787 = vadd.f32 %v6641, %v6754
    %v6788 = vadd.f32 %v6642, %v6759
    %v6789 = vadd.f32 %v6643, %v6764
    %v6790 = vadd.f32 %v6644, %v6769
    %v6791 = vadd.f32 %v6645, %v6774
    %v6792 = vadd.f32 %v6646, %v6779
    %v6793 = vadd.f32 %v6647, %v6784
    %s6794 = scalar_lea.vmem %s9, 160
    %v6795 = vld [vmem:[%s6794] sm:$0xff]
    %v6796 = vld [vmem:[%s6794 + $0x8] sm:$0xff]
    %v6804 = vrot.slane %v4800, 4
    %v6805 = vrot.slane %v4805, 4
    %v6806 = vsel %vm3259, %v6804, %v6805
    %v6807 = vrot.slane %v4810, 4
    %v6808 = vsel %vm3259, %v6805, %v6807
    %v6809 = vrot.slane %v4815, 4
    %v6810 = vsel %vm3259, %v6807, %v6809
    %v6811 = vrot.slane %v4820, 4
    %v6812 = vsel %vm3259, %v6809, %v6811
    %v6813 = vrot.slane %v4825, 4
    %v6814 = vsel %vm3259, %v6811, %v6813
    %v6815 = vrot.slane %v4830, 4
    %v6816 = vsel %vm3259, %v6813, %v6815
    %v6817 = vrot.slane %v4835, 4
    %v6818 = vsel %vm3259, %v6815, %v6817
    %v6819 = vsel %vm639, %v6806, 0
    %v6821 = vsel %vm639, %v6808, 0
    %v6823 = vsel %vm639, %v6810, 0
    %v6825 = vsel %vm639, %v6812, 0
    %v6827 = vsel %vm639, %v6814, 0
    %v6829 = vsel %vm639, %v6816, 0
    %v6831 = vsel %vm639, %v6818, 0
    %6833 = vmatprep.subr.mxu0 0.0
    %6834 = vmatpush1.msra.mxu0 0.0
    %6835 = vmatprep.subr.mxu0 0.0
    %6836 = vmatpush1.msra.mxu0 0.0
    %6837 = vmatprep.subr.mxu0 0.0
    %6838 = vmatpush1.msra.mxu0 0.0
    %6839 = vmatprep.subr.mxu0 0.0
    %6840 = vmatpush1.msra.mxu0 0.0
    %6841 = vmatprep.subr.mxu0 0.0
    %6842 = vmatpush1.msra.mxu0 0.0
    %6843 = vmatprep.subr.mxu0 0.0
    %6844 = vmatpush1.msra.mxu0 0.0
    %6845 = vmatprep.subr.mxu0 0.0
    %6846 = vmatpush1.msra.mxu0 0.0
    %6847 = vmatprep.subr.mxu0 0.0
    %6848 = vmatpush1.msra.mxu0 0.0
    %6849 = vmatprep.subr.mxu0 0.0
    %6850 = vmatpush1.msra.mxu0 0.0
    %6851 = vmatprep.subr.mxu0 0.0
    %6852 = vmatpush1.msra.mxu0 0.0
    %6853 = vmatprep.subr.mxu0 0.0
    %6854 = vmatpush1.msra.mxu0 0.0
    %6855 = vmatprep.subr.mxu0 0.0
    %6856 = vmatpush1.msra.mxu0 0.0
    %6857 = vmatprep.subr.mxu0 0.0
    %6858 = vmatpush1.msra.mxu0 0.0
    %6859 = vmatprep.subr.mxu0 0.0
    %6860 = vmatpush1.msra.mxu0 0.0
    %6861 = vmatprep.subr.mxu0 0.0
    %6862 = vmatpush1.msra.mxu0 %v6796
    %6863 = vmatprep.subr.mxu0 0.0
    %6864 = vmatpush1.msra.mxu0 %v6795
    %6865 = vmatprep.subr.mxu0 0.0
    %6866 = vmatpush2.msra.mxu0 0.0
    %6867 = vmatprep.subr.mxu0 0.0
    %6868 = vmatpush2.msra.mxu0 0.0
    %6869 = vmatprep.subr.mxu0 0.0
    %6870 = vmatpush2.msra.mxu0 0.0
    %6871 = vmatprep.subr.mxu0 0.0
    %6872 = vmatpush2.msra.mxu0 0.0
    %6873 = vmatprep.subr.mxu0 0.0
    %6874 = vmatpush2.msra.mxu0 0.0
    %6875 = vmatprep.subr.mxu0 0.0
    %6876 = vmatpush2.msra.mxu0 0.0
    %6877 = vmatprep.subr.mxu0 0.0
    %6878 = vmatpush2.msra.mxu0 0.0
    %6879 = vmatprep.subr.mxu0 0.0
    %6880 = vmatpush2.msra.mxu0 0.0
    %6881 = vmatprep.subr.mxu0 0.0
    %6882 = vmatpush2.msra.mxu0 0.0
    %6883 = vmatprep.subr.mxu0 0.0
    %6884 = vmatpush2.msra.mxu0 0.0
    %6885 = vmatprep.subr.mxu0 0.0
    %6886 = vmatpush2.msra.mxu0 0.0
    %6887 = vmatprep.subr.mxu0 0.0
    %6888 = vmatpush2.msra.mxu0 0.0
    %6889 = vmatprep.subr.mxu0 0.0
    %6890 = vmatpush2.msra.mxu0 0.0
    %6891 = vmatprep.subr.mxu0 0.0
    %6892 = vmatpush2.msra.mxu0 0.0
    %6893 = vmatprep.subr.mxu0 0.0
    %6894 = vmatpush2.msra.mxu0 0.0
    %6895 = vmatprep.subr.mxu0 0.0
    %6896 = vmatpush2.msra.mxu0 0.0
    %6897 = vmatprep.mubr.f32.mxu0 0.0
    %6898 = vmatmul.mubr.f32.gmra.mxu0 %v6819
    %v6899 = vpop.f32.mrf.mxu0
    %v6900 = vadd.f32 0.0, %v6899
    %v6901 = vpop.f32.mrf.mxu0
    %6902 = vmatprep.mubr.f32.mxu0 0.0
    %6903 = vmatmul.mubr.f32.gmra.mxu0 %v6821
    %v6904 = vpop.f32.mrf.mxu0
    %v6905 = vadd.f32 0.0, %v6904
    %v6906 = vpop.f32.mrf.mxu0
    %6907 = vmatprep.mubr.f32.mxu0 0.0
    %6908 = vmatmul.mubr.f32.gmra.mxu0 %v6823
    %v6909 = vpop.f32.mrf.mxu0
    %v6910 = vadd.f32 0.0, %v6909
    %v6911 = vpop.f32.mrf.mxu0
    %6912 = vmatprep.mubr.f32.mxu0 0.0
    %6913 = vmatmul.mubr.f32.gmra.mxu0 %v6825
    %v6914 = vpop.f32.mrf.mxu0
    %v6915 = vadd.f32 0.0, %v6914
    %v6916 = vpop.f32.mrf.mxu0
    %6917 = vmatprep.mubr.f32.mxu0 0.0
    %6918 = vmatmul.mubr.f32.gmra.mxu0 %v6827
    %v6919 = vpop.f32.mrf.mxu0
    %v6920 = vadd.f32 0.0, %v6919
    %v6921 = vpop.f32.mrf.mxu0
    %6922 = vmatprep.mubr.f32.mxu0 0.0
    %6923 = vmatmul.mubr.f32.gmra.mxu0 %v6829
    %v6924 = vpop.f32.mrf.mxu0
    %v6925 = vadd.f32 0.0, %v6924
    %v6926 = vpop.f32.mrf.mxu0
    %6927 = vmatprep.mubr.f32.mxu0 0.0
    %6928 = vmatmul.mubr.f32.gmra.mxu0 %v6831
    %v6929 = vpop.f32.mrf.mxu0
    %v6930 = vadd.f32 0.0, %v6929
    %v6931 = vpop.f32.mrf.mxu0
    %6932 = vdwg.mxu0
    %v6933 = vadd.f32 %v6787, %v6900
    %v6934 = vadd.f32 %v6788, %v6905
    %v6935 = vadd.f32 %v6789, %v6910
    %v6936 = vadd.f32 %v6790, %v6915
    %v6937 = vadd.f32 %v6791, %v6920
    %v6938 = vadd.f32 %v6792, %v6925
    %v6939 = vadd.f32 %v6793, %v6930
    %s6940 = scalar_lea.vmem %s9, 176
    %v6941 = vld [vmem:[%s6940] sm:$0xff]
    %v6942 = vld [vmem:[%s6940 + $0x8] sm:$0xff]
    %v6949 = vrot.slane %v4835, 2
    %v6950 = vrot.slane %v4840, 2
    %v6951 = vsel %vm4394, %v6949, %v6950
    %v6952 = vrot.slane %v4845, 2
    %v6953 = vsel %vm4394, %v6950, %v6952
    %v6954 = vrot.slane %v4850, 2
    %v6955 = vsel %vm4394, %v6952, %v6954
    %v6956 = vrot.slane %v4855, 2
    %v6957 = vsel %vm4394, %v6954, %v6956
    %v6958 = vrot.slane %v4860, 2
    %v6959 = vsel %vm4394, %v6956, %v6958
    %v6960 = vrot.slane %v4865, 2
    %v6961 = vsel %vm4394, %v6958, %v6960
    %v6962 = vsel %vm639, %v6951, 0
    %v6964 = vsel %vm639, %v6953, 0
    %v6966 = vsel %vm639, %v6955, 0
    %v6968 = vsel %vm639, %v6957, 0
    %v6970 = vsel %vm639, %v6959, 0
    %v6972 = vsel %vm639, %v6961, 0
    %v6974 = vsel %vm639, %v6960, 0
    %6976 = vmatprep.subr.mxu0 0.0
    %6977 = vmatpush1.msra.mxu0 0.0
    %6978 = vmatprep.subr.mxu0 0.0
    %6979 = vmatpush1.msra.mxu0 0.0
    %6980 = vmatprep.subr.mxu0 0.0
    %6981 = vmatpush1.msra.mxu0 0.0
    %6982 = vmatprep.subr.mxu0 0.0
    %6983 = vmatpush1.msra.mxu0 0.0
    %6984 = vmatprep.subr.mxu0 0.0
    %6985 = vmatpush1.msra.mxu0 0.0
    %6986 = vmatprep.subr.mxu0 0.0
    %6987 = vmatpush1.msra.mxu0 0.0
    %6988 = vmatprep.subr.mxu0 0.0
    %6989 = vmatpush1.msra.mxu0 0.0
    %6990 = vmatprep.subr.mxu0 0.0
    %6991 = vmatpush1.msra.mxu0 0.0
    %6992 = vmatprep.subr.mxu0 0.0
    %6993 = vmatpush1.msra.mxu0 0.0
    %6994 = vmatprep.subr.mxu0 0.0
    %6995 = vmatpush1.msra.mxu0 0.0
    %6996 = vmatprep.subr.mxu0 0.0
    %6997 = vmatpush1.msra.mxu0 0.0
    %6998 = vmatprep.subr.mxu0 0.0
    %6999 = vmatpush1.msra.mxu0 0.0
    %7000 = vmatprep.subr.mxu0 0.0
    %7001 = vmatpush1.msra.mxu0 0.0
    %7002 = vmatprep.subr.mxu0 0.0
    %7003 = vmatpush1.msra.mxu0 0.0
    %7004 = vmatprep.subr.mxu0 0.0
    %7005 = vmatpush1.msra.mxu0 %v6942
    %7006 = vmatprep.subr.mxu0 0.0
    %7007 = vmatpush1.msra.mxu0 %v6941
    %7008 = vmatprep.subr.mxu0 0.0
    %7009 = vmatpush2.msra.mxu0 0.0
    %7010 = vmatprep.subr.mxu0 0.0
    %7011 = vmatpush2.msra.mxu0 0.0
    %7012 = vmatprep.subr.mxu0 0.0
    %7013 = vmatpush2.msra.mxu0 0.0
    %7014 = vmatprep.subr.mxu0 0.0
    %7015 = vmatpush2.msra.mxu0 0.0
    %7016 = vmatprep.subr.mxu0 0.0
    %7017 = vmatpush2.msra.mxu0 0.0
    %7018 = vmatprep.subr.mxu0 0.0
    %7019 = vmatpush2.msra.mxu0 0.0
    %7020 = vmatprep.subr.mxu0 0.0
    %7021 = vmatpush2.msra.mxu0 0.0
    %7022 = vmatprep.subr.mxu0 0.0
    %7023 = vmatpush2.msra.mxu0 0.0
    %7024 = vmatprep.subr.mxu0 0.0
    %7025 = vmatpush2.msra.mxu0 0.0
    %7026 = vmatprep.subr.mxu0 0.0
    %7027 = vmatpush2.msra.mxu0 0.0
    %7028 = vmatprep.subr.mxu0 0.0
    %7029 = vmatpush2.msra.mxu0 0.0
    %7030 = vmatprep.subr.mxu0 0.0
    %7031 = vmatpush2.msra.mxu0 0.0
    %7032 = vmatprep.subr.mxu0 0.0
    %7033 = vmatpush2.msra.mxu0 0.0
    %7034 = vmatprep.subr.mxu0 0.0
    %7035 = vmatpush2.msra.mxu0 0.0
    %7036 = vmatprep.subr.mxu0 0.0
    %7037 = vmatpush2.msra.mxu0 0.0
    %7038 = vmatprep.subr.mxu0 0.0
    %7039 = vmatpush2.msra.mxu0 0.0
    %7040 = vmatprep.mubr.f32.mxu0 0.0
    %7041 = vmatmul.mubr.f32.gmra.mxu0 %v6962
    %v7042 = vpop.f32.mrf.mxu0
    %v7043 = vadd.f32 0.0, %v7042
    %v7044 = vpop.f32.mrf.mxu0
    %7045 = vmatprep.mubr.f32.mxu0 0.0
    %7046 = vmatmul.mubr.f32.gmra.mxu0 %v6964
    %v7047 = vpop.f32.mrf.mxu0
    %v7048 = vadd.f32 0.0, %v7047
    %v7049 = vpop.f32.mrf.mxu0
    %7050 = vmatprep.mubr.f32.mxu0 0.0
    %7051 = vmatmul.mubr.f32.gmra.mxu0 %v6966
    %v7052 = vpop.f32.mrf.mxu0
    %v7053 = vadd.f32 0.0, %v7052
    %v7054 = vpop.f32.mrf.mxu0
    %7055 = vmatprep.mubr.f32.mxu0 0.0
    %7056 = vmatmul.mubr.f32.gmra.mxu0 %v6968
    %v7057 = vpop.f32.mrf.mxu0
    %v7058 = vadd.f32 0.0, %v7057
    %v7059 = vpop.f32.mrf.mxu0
    %7060 = vmatprep.mubr.f32.mxu0 0.0
    %7061 = vmatmul.mubr.f32.gmra.mxu0 %v6970
    %v7062 = vpop.f32.mrf.mxu0
    %v7063 = vadd.f32 0.0, %v7062
    %v7064 = vpop.f32.mrf.mxu0
    %7065 = vmatprep.mubr.f32.mxu0 0.0
    %7066 = vmatmul.mubr.f32.gmra.mxu0 %v6972
    %v7067 = vpop.f32.mrf.mxu0
    %v7068 = vadd.f32 0.0, %v7067
    %v7069 = vpop.f32.mrf.mxu0
    %7070 = vmatprep.mubr.f32.mxu0 0.0
    %7071 = vmatmul.mubr.f32.gmra.mxu0 %v6974
    %v7072 = vpop.f32.mrf.mxu0
    %v7073 = vadd.f32 0.0, %v7072
    %v7074 = vpop.f32.mrf.mxu0
    %7075 = vdwg.mxu0
    %v7076 = vadd.f32 %v6933, %v7043
    %v7077 = vadd.f32 %v6934, %v7048
    %v7078 = vadd.f32 %v6935, %v7053
    %v7079 = vadd.f32 %v6936, %v7058
    %v7080 = vadd.f32 %v6937, %v7063
    %v7081 = vadd.f32 %v6938, %v7068
    %v7082 = vadd.f32 %v6939, %v7073
    %s7083 = scalar_lea.vmem %s9, 192
    %v7084 = vld [vmem:[%s7083] sm:$0xff]
    %v7085 = vld [vmem:[%s7083 + $0x8] sm:$0xff]
    %v7087 = vsel %vm639, %v4870, 0
    %v7090 = vsel %vm639, %v4875, 0
    %v7093 = vsel %vm639, %v4880, 0
    %v7096 = vsel %vm639, %v4885, 0
    %v7099 = vsel %vm639, %v4890, 0
    %v7102 = vsel %vm639, %v4895, 0
    %v7105 = vsel %vm639, %v4900, 0
    %7107 = vmatprep.subr.mxu0 0.0
    %7108 = vmatpush1.msra.mxu0 0.0
    %7109 = vmatprep.subr.mxu0 0.0
    %7110 = vmatpush1.msra.mxu0 0.0
    %7111 = vmatprep.subr.mxu0 0.0
    %7112 = vmatpush1.msra.mxu0 0.0
    %7113 = vmatprep.subr.mxu0 0.0
    %7114 = vmatpush1.msra.mxu0 0.0
    %7115 = vmatprep.subr.mxu0 0.0
    %7116 = vmatpush1.msra.mxu0 0.0
    %7117 = vmatprep.subr.mxu0 0.0
    %7118 = vmatpush1.msra.mxu0 0.0
    %7119 = vmatprep.subr.mxu0 0.0
    %7120 = vmatpush1.msra.mxu0 0.0
    %7121 = vmatprep.subr.mxu0 0.0
    %7122 = vmatpush1.msra.mxu0 0.0
    %7123 = vmatprep.subr.mxu0 0.0
    %7124 = vmatpush1.msra.mxu0 0.0
    %7125 = vmatprep.subr.mxu0 0.0
    %7126 = vmatpush1.msra.mxu0 0.0
    %7127 = vmatprep.subr.mxu0 0.0
    %7128 = vmatpush1.msra.mxu0 0.0
    %7129 = vmatprep.subr.mxu0 0.0
    %7130 = vmatpush1.msra.mxu0 0.0
    %7131 = vmatprep.subr.mxu0 0.0
    %7132 = vmatpush1.msra.mxu0 0.0
    %7133 = vmatprep.subr.mxu0 0.0
    %7134 = vmatpush1.msra.mxu0 0.0
    %7135 = vmatprep.subr.mxu0 0.0
    %7136 = vmatpush1.msra.mxu0 %v7085
    %7137 = vmatprep.subr.mxu0 0.0
    %7138 = vmatpush1.msra.mxu0 %v7084
    %7139 = vmatprep.subr.mxu0 0.0
    %7140 = vmatpush2.msra.mxu0 0.0
    %7141 = vmatprep.subr.mxu0 0.0
    %7142 = vmatpush2.msra.mxu0 0.0
    %7143 = vmatprep.subr.mxu0 0.0
    %7144 = vmatpush2.msra.mxu0 0.0
    %7145 = vmatprep.subr.mxu0 0.0
    %7146 = vmatpush2.msra.mxu0 0.0
    %7147 = vmatprep.subr.mxu0 0.0
    %7148 = vmatpush2.msra.mxu0 0.0
    %7149 = vmatprep.subr.mxu0 0.0
    %7150 = vmatpush2.msra.mxu0 0.0
    %7151 = vmatprep.subr.mxu0 0.0
    %7152 = vmatpush2.msra.mxu0 0.0
    %7153 = vmatprep.subr.mxu0 0.0
    %7154 = vmatpush2.msra.mxu0 0.0
    %7155 = vmatprep.subr.mxu0 0.0
    %7156 = vmatpush2.msra.mxu0 0.0
    %7157 = vmatprep.subr.mxu0 0.0
    %7158 = vmatpush2.msra.mxu0 0.0
    %7159 = vmatprep.subr.mxu0 0.0
    %7160 = vmatpush2.msra.mxu0 0.0
    %7161 = vmatprep.subr.mxu0 0.0
    %7162 = vmatpush2.msra.mxu0 0.0
    %7163 = vmatprep.subr.mxu0 0.0
    %7164 = vmatpush2.msra.mxu0 0.0
    %7165 = vmatprep.subr.mxu0 0.0
    %7166 = vmatpush2.msra.mxu0 0.0
    %7167 = vmatprep.subr.mxu0 0.0
    %7168 = vmatpush2.msra.mxu0 0.0
    %7169 = vmatprep.subr.mxu0 0.0
    %7170 = vmatpush2.msra.mxu0 0.0
    %7171 = vmatprep.mubr.f32.mxu0 0.0
    %7172 = vmatmul.mubr.f32.gmra.mxu0 %v7087
    %v7173 = vpop.f32.mrf.mxu0
    %v7174 = vadd.f32 0.0, %v7173
    %v7175 = vpop.f32.mrf.mxu0
    %7176 = vmatprep.mubr.f32.mxu0 0.0
    %7177 = vmatmul.mubr.f32.gmra.mxu0 %v7090
    %v7178 = vpop.f32.mrf.mxu0
    %v7179 = vadd.f32 0.0, %v7178
    %v7180 = vpop.f32.mrf.mxu0
    %7181 = vmatprep.mubr.f32.mxu0 0.0
    %7182 = vmatmul.mubr.f32.gmra.mxu0 %v7093
    %v7183 = vpop.f32.mrf.mxu0
    %v7184 = vadd.f32 0.0, %v7183
    %v7185 = vpop.f32.mrf.mxu0
    %7186 = vmatprep.mubr.f32.mxu0 0.0
    %7187 = vmatmul.mubr.f32.gmra.mxu0 %v7096
    %v7188 = vpop.f32.mrf.mxu0
    %v7189 = vadd.f32 0.0, %v7188
    %v7190 = vpop.f32.mrf.mxu0
    %7191 = vmatprep.mubr.f32.mxu0 0.0
    %7192 = vmatmul.mubr.f32.gmra.mxu0 %v7099
    %v7193 = vpop.f32.mrf.mxu0
    %v7194 = vadd.f32 0.0, %v7193
    %v7195 = vpop.f32.mrf.mxu0
    %7196 = vmatprep.mubr.f32.mxu0 0.0
    %7197 = vmatmul.mubr.f32.gmra.mxu0 %v7102
    %v7198 = vpop.f32.mrf.mxu0
    %v7199 = vadd.f32 0.0, %v7198
    %v7200 = vpop.f32.mrf.mxu0
    %7201 = vmatprep.mubr.f32.mxu0 0.0
    %7202 = vmatmul.mubr.f32.gmra.mxu0 %v7105
    %v7203 = vpop.f32.mrf.mxu0
    %v7204 = vadd.f32 0.0, %v7203
    %v7205 = vpop.f32.mrf.mxu0
    %7206 = vdwg.mxu0
    %v7207 = vadd.f32 %v7076, %v7174
    %v7208 = vadd.f32 %v7077, %v7179
    %v7209 = vadd.f32 %v7078, %v7184
    %v7210 = vadd.f32 %v7079, %v7189
    %v7211 = vadd.f32 %v7080, %v7194
    %v7212 = vadd.f32 %v7081, %v7199
    %v7213 = vadd.f32 %v7082, %v7204
    %s7214 = scalar_lea.vmem %s9, 208
    %v7215 = vld [vmem:[%s7214] sm:$0xff]
    %v7216 = vld [vmem:[%s7214 + $0x8] sm:$0xff]
    %v7224 = vrot.slane %v4900, 6
    %v7225 = vrot.slane %v4905, 6
    %v7226 = vsel %vm3595, %v7224, %v7225
    %v7227 = vrot.slane %v4910, 6
    %v7228 = vsel %vm3595, %v7225, %v7227
    %v7229 = vrot.slane %v4915, 6
    %v7230 = vsel %vm3595, %v7227, %v7229
    %v7231 = vrot.slane %v4920, 6
    %v7232 = vsel %vm3595, %v7229, %v7231
    %v7233 = vrot.slane %v4925, 6
    %v7234 = vsel %vm3595, %v7231, %v7233
    %v7235 = vrot.slane %v4930, 6
    %v7236 = vsel %vm3595, %v7233, %v7235
    %v7237 = vrot.slane %v4935, 6
    %v7238 = vsel %vm3595, %v7235, %v7237
    %v7239 = vsel %vm639, %v7226, 0
    %v7241 = vsel %vm639, %v7228, 0
    %v7243 = vsel %vm639, %v7230, 0
    %v7245 = vsel %vm639, %v7232, 0
    %v7247 = vsel %vm639, %v7234, 0
    %v7249 = vsel %vm639, %v7236, 0
    %v7251 = vsel %vm639, %v7238, 0
    %7253 = vmatprep.subr.mxu0 0.0
    %7254 = vmatpush1.msra.mxu0 0.0
    %7255 = vmatprep.subr.mxu0 0.0
    %7256 = vmatpush1.msra.mxu0 0.0
    %7257 = vmatprep.subr.mxu0 0.0
    %7258 = vmatpush1.msra.mxu0 0.0
    %7259 = vmatprep.subr.mxu0 0.0
    %7260 = vmatpush1.msra.mxu0 0.0
    %7261 = vmatprep.subr.mxu0 0.0
    %7262 = vmatpush1.msra.mxu0 0.0
    %7263 = vmatprep.subr.mxu0 0.0
    %7264 = vmatpush1.msra.mxu0 0.0
    %7265 = vmatprep.subr.mxu0 0.0
    %7266 = vmatpush1.msra.mxu0 0.0
    %7267 = vmatprep.subr.mxu0 0.0
    %7268 = vmatpush1.msra.mxu0 0.0
    %7269 = vmatprep.subr.mxu0 0.0
    %7270 = vmatpush1.msra.mxu0 0.0
    %7271 = vmatprep.subr.mxu0 0.0
    %7272 = vmatpush1.msra.mxu0 0.0
    %7273 = vmatprep.subr.mxu0 0.0
    %7274 = vmatpush1.msra.mxu0 0.0
    %7275 = vmatprep.subr.mxu0 0.0
    %7276 = vmatpush1.msra.mxu0 0.0
    %7277 = vmatprep.subr.mxu0 0.0
    %7278 = vmatpush1.msra.mxu0 0.0
    %7279 = vmatprep.subr.mxu0 0.0
    %7280 = vmatpush1.msra.mxu0 0.0
    %7281 = vmatprep.subr.mxu0 0.0
    %7282 = vmatpush1.msra.mxu0 %v7216
    %7283 = vmatprep.subr.mxu0 0.0
    %7284 = vmatpush1.msra.mxu0 %v7215
    %7285 = vmatprep.subr.mxu0 0.0
    %7286 = vmatpush2.msra.mxu0 0.0
    %7287 = vmatprep.subr.mxu0 0.0
    %7288 = vmatpush2.msra.mxu0 0.0
    %7289 = vmatprep.subr.mxu0 0.0
    %7290 = vmatpush2.msra.mxu0 0.0
    %7291 = vmatprep.subr.mxu0 0.0
    %7292 = vmatpush2.msra.mxu0 0.0
    %7293 = vmatprep.subr.mxu0 0.0
    %7294 = vmatpush2.msra.mxu0 0.0
    %7295 = vmatprep.subr.mxu0 0.0
    %7296 = vmatpush2.msra.mxu0 0.0
    %7297 = vmatprep.subr.mxu0 0.0
    %7298 = vmatpush2.msra.mxu0 0.0
    %7299 = vmatprep.subr.mxu0 0.0
    %7300 = vmatpush2.msra.mxu0 0.0
    %7301 = vmatprep.subr.mxu0 0.0
    %7302 = vmatpush2.msra.mxu0 0.0
    %7303 = vmatprep.subr.mxu0 0.0
    %7304 = vmatpush2.msra.mxu0 0.0
    %7305 = vmatprep.subr.mxu0 0.0
    %7306 = vmatpush2.msra.mxu0 0.0
    %7307 = vmatprep.subr.mxu0 0.0
    %7308 = vmatpush2.msra.mxu0 0.0
    %7309 = vmatprep.subr.mxu0 0.0
    %7310 = vmatpush2.msra.mxu0 0.0
    %7311 = vmatprep.subr.mxu0 0.0
    %7312 = vmatpush2.msra.mxu0 0.0
    %7313 = vmatprep.subr.mxu0 0.0
    %7314 = vmatpush2.msra.mxu0 0.0
    %7315 = vmatprep.subr.mxu0 0.0
    %7316 = vmatpush2.msra.mxu0 0.0
    %7317 = vmatprep.mubr.f32.mxu0 0.0
    %7318 = vmatmul.mubr.f32.gmra.mxu0 %v7239
    %v7319 = vpop.f32.mrf.mxu0
    %v7320 = vadd.f32 0.0, %v7319
    %v7321 = vpop.f32.mrf.mxu0
    %7322 = vmatprep.mubr.f32.mxu0 0.0
    %7323 = vmatmul.mubr.f32.gmra.mxu0 %v7241
    %v7324 = vpop.f32.mrf.mxu0
    %v7325 = vadd.f32 0.0, %v7324
    %v7326 = vpop.f32.mrf.mxu0
    %7327 = vmatprep.mubr.f32.mxu0 0.0
    %7328 = vmatmul.mubr.f32.gmra.mxu0 %v7243
    %v7329 = vpop.f32.mrf.mxu0
    %v7330 = vadd.f32 0.0, %v7329
    %v7331 = vpop.f32.mrf.mxu0
    %7332 = vmatprep.mubr.f32.mxu0 0.0
    %7333 = vmatmul.mubr.f32.gmra.mxu0 %v7245
    %v7334 = vpop.f32.mrf.mxu0
    %v7335 = vadd.f32 0.0, %v7334
    %v7336 = vpop.f32.mrf.mxu0
    %7337 = vmatprep.mubr.f32.mxu0 0.0
    %7338 = vmatmul.mubr.f32.gmra.mxu0 %v7247
    %v7339 = vpop.f32.mrf.mxu0
    %v7340 = vadd.f32 0.0, %v7339
    %v7341 = vpop.f32.mrf.mxu0
    %7342 = vmatprep.mubr.f32.mxu0 0.0
    %7343 = vmatmul.mubr.f32.gmra.mxu0 %v7249
    %v7344 = vpop.f32.mrf.mxu0
    %v7345 = vadd.f32 0.0, %v7344
    %v7346 = vpop.f32.mrf.mxu0
    %7347 = vmatprep.mubr.f32.mxu0 0.0
    %7348 = vmatmul.mubr.f32.gmra.mxu0 %v7251
    %v7349 = vpop.f32.mrf.mxu0
    %v7350 = vadd.f32 0.0, %v7349
    %v7351 = vpop.f32.mrf.mxu0
    %7352 = vdwg.mxu0
    %v7353 = vadd.f32 %v7207, %v7320
    %v7354 = vadd.f32 %v7208, %v7325
    %v7355 = vadd.f32 %v7209, %v7330
    %v7356 = vadd.f32 %v7210, %v7335
    %v7357 = vadd.f32 %v7211, %v7340
    %v7358 = vadd.f32 %v7212, %v7345
    %v7359 = vadd.f32 %v7213, %v7350
    %s7360 = scalar_lea.vmem %s9, 224
    %v7361 = vld [vmem:[%s7360] sm:$0xff]
    %v7362 = vld [vmem:[%s7360 + $0x8] sm:$0xff]
    %v7370 = vrot.slane %v4935, 4
    %v7371 = vrot.slane %v4940, 4
    %v7372 = vsel %vm3259, %v7370, %v7371
    %v7373 = vrot.slane %v4945, 4
    %v7374 = vsel %vm3259, %v7371, %v7373
    %v7375 = vrot.slane %v4950, 4
    %v7376 = vsel %vm3259, %v7373, %v7375
    %v7377 = vrot.slane %v4955, 4
    %v7378 = vsel %vm3259, %v7375, %v7377
    %v7379 = vrot.slane %v4960, 4
    %v7380 = vsel %vm3259, %v7377, %v7379
    %v7381 = vrot.slane %v4965, 4
    %v7382 = vsel %vm3259, %v7379, %v7381
    %v7383 = vrot.slane %v4970, 4
    %v7384 = vsel %vm3259, %v7381, %v7383
    %v7385 = vsel %vm639, %v7372, 0
    %v7387 = vsel %vm639, %v7374, 0
    %v7389 = vsel %vm639, %v7376, 0
    %v7391 = vsel %vm639, %v7378, 0
    %v7393 = vsel %vm639, %v7380, 0
    %v7395 = vsel %vm639, %v7382, 0
    %v7397 = vsel %vm639, %v7384, 0
    %7399 = vmatprep.subr.mxu0 0.0
    %7400 = vmatpush1.msra.mxu0 0.0
    %7401 = vmatprep.subr.mxu0 0.0
    %7402 = vmatpush1.msra.mxu0 0.0
    %7403 = vmatprep.subr.mxu0 0.0
    %7404 = vmatpush1.msra.mxu0 0.0
    %7405 = vmatprep.subr.mxu0 0.0
    %7406 = vmatpush1.msra.mxu0 0.0
    %7407 = vmatprep.subr.mxu0 0.0
    %7408 = vmatpush1.msra.mxu0 0.0
    %7409 = vmatprep.subr.mxu0 0.0
    %7410 = vmatpush1.msra.mxu0 0.0
    %7411 = vmatprep.subr.mxu0 0.0
    %7412 = vmatpush1.msra.mxu0 0.0
    %7413 = vmatprep.subr.mxu0 0.0
    %7414 = vmatpush1.msra.mxu0 0.0
    %7415 = vmatprep.subr.mxu0 0.0
    %7416 = vmatpush1.msra.mxu0 0.0
    %7417 = vmatprep.subr.mxu0 0.0
    %7418 = vmatpush1.msra.mxu0 0.0
    %7419 = vmatprep.subr.mxu0 0.0
    %7420 = vmatpush1.msra.mxu0 0.0
    %7421 = vmatprep.subr.mxu0 0.0
    %7422 = vmatpush1.msra.mxu0 0.0
    %7423 = vmatprep.subr.mxu0 0.0
    %7424 = vmatpush1.msra.mxu0 0.0
    %7425 = vmatprep.subr.mxu0 0.0
    %7426 = vmatpush1.msra.mxu0 0.0
    %7427 = vmatprep.subr.mxu0 0.0
    %7428 = vmatpush1.msra.mxu0 %v7362
    %7429 = vmatprep.subr.mxu0 0.0
    %7430 = vmatpush1.msra.mxu0 %v7361
    %7431 = vmatprep.subr.mxu0 0.0
    %7432 = vmatpush2.msra.mxu0 0.0
    %7433 = vmatprep.subr.mxu0 0.0
    %7434 = vmatpush2.msra.mxu0 0.0
    %7435 = vmatprep.subr.mxu0 0.0
    %7436 = vmatpush2.msra.mxu0 0.0
    %7437 = vmatprep.subr.mxu0 0.0
    %7438 = vmatpush2.msra.mxu0 0.0
    %7439 = vmatprep.subr.mxu0 0.0
    %7440 = vmatpush2.msra.mxu0 0.0
    %7441 = vmatprep.subr.mxu0 0.0
    %7442 = vmatpush2.msra.mxu0 0.0
    %7443 = vmatprep.subr.mxu0 0.0
    %7444 = vmatpush2.msra.mxu0 0.0
    %7445 = vmatprep.subr.mxu0 0.0
    %7446 = vmatpush2.msra.mxu0 0.0
    %7447 = vmatprep.subr.mxu0 0.0
    %7448 = vmatpush2.msra.mxu0 0.0
    %7449 = vmatprep.subr.mxu0 0.0
    %7450 = vmatpush2.msra.mxu0 0.0
    %7451 = vmatprep.subr.mxu0 0.0
    %7452 = vmatpush2.msra.mxu0 0.0
    %7453 = vmatprep.subr.mxu0 0.0
    %7454 = vmatpush2.msra.mxu0 0.0
    %7455 = vmatprep.subr.mxu0 0.0
    %7456 = vmatpush2.msra.mxu0 0.0
    %7457 = vmatprep.subr.mxu0 0.0
    %7458 = vmatpush2.msra.mxu0 0.0
    %7459 = vmatprep.subr.mxu0 0.0
    %7460 = vmatpush2.msra.mxu0 0.0
    %7461 = vmatprep.subr.mxu0 0.0
    %7462 = vmatpush2.msra.mxu0 0.0
    %7463 = vmatprep.mubr.f32.mxu0 0.0
    %7464 = vmatmul.mubr.f32.gmra.mxu0 %v7385
    %v7465 = vpop.f32.mrf.mxu0
    %v7466 = vadd.f32 0.0, %v7465
    %v7467 = vpop.f32.mrf.mxu0
    %7468 = vmatprep.mubr.f32.mxu0 0.0
    %7469 = vmatmul.mubr.f32.gmra.mxu0 %v7387
    %v7470 = vpop.f32.mrf.mxu0
    %v7471 = vadd.f32 0.0, %v7470
    %v7472 = vpop.f32.mrf.mxu0
    %7473 = vmatprep.mubr.f32.mxu0 0.0
    %7474 = vmatmul.mubr.f32.gmra.mxu0 %v7389
    %v7475 = vpop.f32.mrf.mxu0
    %v7476 = vadd.f32 0.0, %v7475
    %v7477 = vpop.f32.mrf.mxu0
    %7478 = vmatprep.mubr.f32.mxu0 0.0
    %7479 = vmatmul.mubr.f32.gmra.mxu0 %v7391
    %v7480 = vpop.f32.mrf.mxu0
    %v7481 = vadd.f32 0.0, %v7480
    %v7482 = vpop.f32.mrf.mxu0
    %7483 = vmatprep.mubr.f32.mxu0 0.0
    %7484 = vmatmul.mubr.f32.gmra.mxu0 %v7393
    %v7485 = vpop.f32.mrf.mxu0
    %v7486 = vadd.f32 0.0, %v7485
    %v7487 = vpop.f32.mrf.mxu0
    %7488 = vmatprep.mubr.f32.mxu0 0.0
    %7489 = vmatmul.mubr.f32.gmra.mxu0 %v7395
    %v7490 = vpop.f32.mrf.mxu0
    %v7491 = vadd.f32 0.0, %v7490
    %v7492 = vpop.f32.mrf.mxu0
    %7493 = vmatprep.mubr.f32.mxu0 0.0
    %7494 = vmatmul.mubr.f32.gmra.mxu0 %v7397
    %v7495 = vpop.f32.mrf.mxu0
    %v7496 = vadd.f32 0.0, %v7495
    %v7497 = vpop.f32.mrf.mxu0
    %7498 = vdwg.mxu0
    %v7499 = vadd.f32 %v7353, %v7466
    %v7500 = vadd.f32 %v7354, %v7471
    %v7501 = vadd.f32 %v7355, %v7476
    %v7502 = vadd.f32 %v7356, %v7481
    %v7503 = vadd.f32 %v7357, %v7486
    %v7504 = vadd.f32 %v7358, %v7491
    %v7505 = vadd.f32 %v7359, %v7496
    %s7506 = scalar_lea.vmem %s9, 240
    %v7507 = vld [vmem:[%s7506] sm:$0xff]
    %v7508 = vld [vmem:[%s7506 + $0x8] sm:$0xff]
    %v7515 = vrot.slane %v4970, 2
    %v7516 = vrot.slane %v4975, 2
    %v7517 = vsel %vm4394, %v7515, %v7516
    %v7518 = vrot.slane %v4980, 2
    %v7519 = vsel %vm4394, %v7516, %v7518
    %v7520 = vrot.slane %v4985, 2
    %v7521 = vsel %vm4394, %v7518, %v7520
    %v7522 = vrot.slane %v4990, 2
    %v7523 = vsel %vm4394, %v7520, %v7522
    %v7524 = vrot.slane %v4995, 2
    %v7525 = vsel %vm4394, %v7522, %v7524
    %v7526 = vrot.slane %v5000, 2
    %v7527 = vsel %vm4394, %v7524, %v7526
    %v7528 = vsel %vm639, %v7517, 0
    %v7530 = vsel %vm639, %v7519, 0
    %v7532 = vsel %vm639, %v7521, 0
    %v7534 = vsel %vm639, %v7523, 0
    %v7536 = vsel %vm639, %v7525, 0
    %v7538 = vsel %vm639, %v7527, 0
    %v7540 = vsel %vm639, %v7526, 0
    %7542 = vmatprep.subr.mxu0 0.0
    %7543 = vmatpush1.msra.mxu0 0.0
    %7544 = vmatprep.subr.mxu0 0.0
    %7545 = vmatpush1.msra.mxu0 0.0
    %7546 = vmatprep.subr.mxu0 0.0
    %7547 = vmatpush1.msra.mxu0 0.0
    %7548 = vmatprep.subr.mxu0 0.0
    %7549 = vmatpush1.msra.mxu0 0.0
    %7550 = vmatprep.subr.mxu0 0.0
    %7551 = vmatpush1.msra.mxu0 0.0
    %7552 = vmatprep.subr.mxu0 0.0
    %7553 = vmatpush1.msra.mxu0 0.0
    %7554 = vmatprep.subr.mxu0 0.0
    %7555 = vmatpush1.msra.mxu0 0.0
    %7556 = vmatprep.subr.mxu0 0.0
    %7557 = vmatpush1.msra.mxu0 0.0
    %7558 = vmatprep.subr.mxu0 0.0
    %7559 = vmatpush1.msra.mxu0 0.0
    %7560 = vmatprep.subr.mxu0 0.0
    %7561 = vmatpush1.msra.mxu0 0.0
    %7562 = vmatprep.subr.mxu0 0.0
    %7563 = vmatpush1.msra.mxu0 0.0
    %7564 = vmatprep.subr.mxu0 0.0
    %7565 = vmatpush1.msra.mxu0 0.0
    %7566 = vmatprep.subr.mxu0 0.0
    %7567 = vmatpush1.msra.mxu0 0.0
    %7568 = vmatprep.subr.mxu0 0.0
    %7569 = vmatpush1.msra.mxu0 0.0
    %7570 = vmatprep.subr.mxu0 0.0
    %7571 = vmatpush1.msra.mxu0 %v7508
    %7572 = vmatprep.subr.mxu0 0.0
    %7573 = vmatpush1.msra.mxu0 %v7507
    %7574 = vmatprep.subr.mxu0 0.0
    %7575 = vmatpush2.msra.mxu0 0.0
    %7576 = vmatprep.subr.mxu0 0.0
    %7577 = vmatpush2.msra.mxu0 0.0
    %7578 = vmatprep.subr.mxu0 0.0
    %7579 = vmatpush2.msra.mxu0 0.0
    %7580 = vmatprep.subr.mxu0 0.0
    %7581 = vmatpush2.msra.mxu0 0.0
    %7582 = vmatprep.subr.mxu0 0.0
    %7583 = vmatpush2.msra.mxu0 0.0
    %7584 = vmatprep.subr.mxu0 0.0
    %7585 = vmatpush2.msra.mxu0 0.0
    %7586 = vmatprep.subr.mxu0 0.0
    %7587 = vmatpush2.msra.mxu0 0.0
    %7588 = vmatprep.subr.mxu0 0.0
    %7589 = vmatpush2.msra.mxu0 0.0
    %7590 = vmatprep.subr.mxu0 0.0
    %7591 = vmatpush2.msra.mxu0 0.0
    %7592 = vmatprep.subr.mxu0 0.0
    %7593 = vmatpush2.msra.mxu0 0.0
    %7594 = vmatprep.subr.mxu0 0.0
    %7595 = vmatpush2.msra.mxu0 0.0
    %7596 = vmatprep.subr.mxu0 0.0
    %7597 = vmatpush2.msra.mxu0 0.0
    %7598 = vmatprep.subr.mxu0 0.0
    %7599 = vmatpush2.msra.mxu0 0.0
    %7600 = vmatprep.subr.mxu0 0.0
    %7601 = vmatpush2.msra.mxu0 0.0
    %7602 = vmatprep.subr.mxu0 0.0
    %7603 = vmatpush2.msra.mxu0 0.0
    %7604 = vmatprep.subr.mxu0 0.0
    %7605 = vmatpush2.msra.mxu0 0.0
    %7606 = vmatprep.mubr.f32.mxu0 0.0
    %7607 = vmatmul.mubr.f32.gmra.mxu0 %v7528
    %v7608 = vpop.f32.mrf.mxu0
    %v7609 = vadd.f32 0.0, %v7608
    %v7610 = vpop.f32.mrf.mxu0
    %7611 = vmatprep.mubr.f32.mxu0 0.0
    %7612 = vmatmul.mubr.f32.gmra.mxu0 %v7530
    %v7613 = vpop.f32.mrf.mxu0
    %v7614 = vadd.f32 0.0, %v7613
    %v7615 = vpop.f32.mrf.mxu0
    %7616 = vmatprep.mubr.f32.mxu0 0.0
    %7617 = vmatmul.mubr.f32.gmra.mxu0 %v7532
    %v7618 = vpop.f32.mrf.mxu0
    %v7619 = vadd.f32 0.0, %v7618
    %v7620 = vpop.f32.mrf.mxu0
    %7621 = vmatprep.mubr.f32.mxu0 0.0
    %7622 = vmatmul.mubr.f32.gmra.mxu0 %v7534
    %v7623 = vpop.f32.mrf.mxu0
    %v7624 = vadd.f32 0.0, %v7623
    %v7625 = vpop.f32.mrf.mxu0
    %7626 = vmatprep.mubr.f32.mxu0 0.0
    %7627 = vmatmul.mubr.f32.gmra.mxu0 %v7536
    %v7628 = vpop.f32.mrf.mxu0
    %v7629 = vadd.f32 0.0, %v7628
    %v7630 = vpop.f32.mrf.mxu0
    %7631 = vmatprep.mubr.f32.mxu0 0.0
    %7632 = vmatmul.mubr.f32.gmra.mxu0 %v7538
    %v7633 = vpop.f32.mrf.mxu0
    %v7634 = vadd.f32 0.0, %v7633
    %v7635 = vpop.f32.mrf.mxu0
    %7636 = vmatprep.mubr.f32.mxu0 0.0
    %7637 = vmatmul.mubr.f32.gmra.mxu0 %v7540
    %v7638 = vpop.f32.mrf.mxu0
    %v7639 = vadd.f32 0.0, %v7638
    %v7640 = vpop.f32.mrf.mxu0
    %7641 = vdwg.mxu0
    %v7642 = vadd.f32 %v7499, %v7609
    %v7643 = vadd.f32 %v7500, %v7614
    %v7644 = vadd.f32 %v7501, %v7619
    %v7645 = vadd.f32 %v7502, %v7624
    %v7646 = vadd.f32 %v7503, %v7629
    %v7647 = vadd.f32 %v7504, %v7634
    %v7648 = vadd.f32 %v7505, %v7639
    %s7649 = scalar_lea.vmem %s9, 256
    %v7650 = vld [vmem:[%s7649] sm:$0xff]
    %v7651 = vld [vmem:[%s7649 + $0x8] sm:$0xff]
    %v7653 = vsel %vm639, %v5005, 0
    %v7656 = vsel %vm639, %v5010, 0
    %v7659 = vsel %vm639, %v5015, 0
    %v7662 = vsel %vm639, %v5020, 0
    %v7665 = vsel %vm639, %v5025, 0
    %v7668 = vsel %vm639, %v5030, 0
    %v7671 = vsel %vm639, %v5035, 0
    %7673 = vmatprep.subr.mxu0 0.0
    %7674 = vmatpush1.msra.mxu0 0.0
    %7675 = vmatprep.subr.mxu0 0.0
    %7676 = vmatpush1.msra.mxu0 0.0
    %7677 = vmatprep.subr.mxu0 0.0
    %7678 = vmatpush1.msra.mxu0 0.0
    %7679 = vmatprep.subr.mxu0 0.0
    %7680 = vmatpush1.msra.mxu0 0.0
    %7681 = vmatprep.subr.mxu0 0.0
    %7682 = vmatpush1.msra.mxu0 0.0
    %7683 = vmatprep.subr.mxu0 0.0
    %7684 = vmatpush1.msra.mxu0 0.0
    %7685 = vmatprep.subr.mxu0 0.0
    %7686 = vmatpush1.msra.mxu0 0.0
    %7687 = vmatprep.subr.mxu0 0.0
    %7688 = vmatpush1.msra.mxu0 0.0
    %7689 = vmatprep.subr.mxu0 0.0
    %7690 = vmatpush1.msra.mxu0 0.0
    %7691 = vmatprep.subr.mxu0 0.0
    %7692 = vmatpush1.msra.mxu0 0.0
    %7693 = vmatprep.subr.mxu0 0.0
    %7694 = vmatpush1.msra.mxu0 0.0
    %7695 = vmatprep.subr.mxu0 0.0
    %7696 = vmatpush1.msra.mxu0 0.0
    %7697 = vmatprep.subr.mxu0 0.0
    %7698 = vmatpush1.msra.mxu0 0.0
    %7699 = vmatprep.subr.mxu0 0.0
    %7700 = vmatpush1.msra.mxu0 0.0
    %7701 = vmatprep.subr.mxu0 0.0
    %7702 = vmatpush1.msra.mxu0 %v7651
    %7703 = vmatprep.subr.mxu0 0.0
    %7704 = vmatpush1.msra.mxu0 %v7650
    %7705 = vmatprep.subr.mxu0 0.0
    %7706 = vmatpush2.msra.mxu0 0.0
    %7707 = vmatprep.subr.mxu0 0.0
    %7708 = vmatpush2.msra.mxu0 0.0
    %7709 = vmatprep.subr.mxu0 0.0
    %7710 = vmatpush2.msra.mxu0 0.0
    %7711 = vmatprep.subr.mxu0 0.0
    %7712 = vmatpush2.msra.mxu0 0.0
    %7713 = vmatprep.subr.mxu0 0.0
    %7714 = vmatpush2.msra.mxu0 0.0
    %7715 = vmatprep.subr.mxu0 0.0
    %7716 = vmatpush2.msra.mxu0 0.0
    %7717 = vmatprep.subr.mxu0 0.0
    %7718 = vmatpush2.msra.mxu0 0.0
    %7719 = vmatprep.subr.mxu0 0.0
    %7720 = vmatpush2.msra.mxu0 0.0
    %7721 = vmatprep.subr.mxu0 0.0
    %7722 = vmatpush2.msra.mxu0 0.0
    %7723 = vmatprep.subr.mxu0 0.0
    %7724 = vmatpush2.msra.mxu0 0.0
    %7725 = vmatprep.subr.mxu0 0.0
    %7726 = vmatpush2.msra.mxu0 0.0
    %7727 = vmatprep.subr.mxu0 0.0
    %7728 = vmatpush2.msra.mxu0 0.0
    %7729 = vmatprep.subr.mxu0 0.0
    %7730 = vmatpush2.msra.mxu0 0.0
    %7731 = vmatprep.subr.mxu0 0.0
    %7732 = vmatpush2.msra.mxu0 0.0
    %7733 = vmatprep.subr.mxu0 0.0
    %7734 = vmatpush2.msra.mxu0 0.0
    %7735 = vmatprep.subr.mxu0 0.0
    %7736 = vmatpush2.msra.mxu0 0.0
    %7737 = vmatprep.mubr.f32.mxu0 0.0
    %7738 = vmatmul.mubr.f32.gmra.mxu0 %v7653
    %v7739 = vpop.f32.mrf.mxu0
    %v7740 = vadd.f32 0.0, %v7739
    %v7741 = vpop.f32.mrf.mxu0
    %7742 = vmatprep.mubr.f32.mxu0 0.0
    %7743 = vmatmul.mubr.f32.gmra.mxu0 %v7656
    %v7744 = vpop.f32.mrf.mxu0
    %v7745 = vadd.f32 0.0, %v7744
    %v7746 = vpop.f32.mrf.mxu0
    %7747 = vmatprep.mubr.f32.mxu0 0.0
    %7748 = vmatmul.mubr.f32.gmra.mxu0 %v7659
    %v7749 = vpop.f32.mrf.mxu0
    %v7750 = vadd.f32 0.0, %v7749
    %v7751 = vpop.f32.mrf.mxu0
    %7752 = vmatprep.mubr.f32.mxu0 0.0
    %7753 = vmatmul.mubr.f32.gmra.mxu0 %v7662
    %v7754 = vpop.f32.mrf.mxu0
    %v7755 = vadd.f32 0.0, %v7754
    %v7756 = vpop.f32.mrf.mxu0
    %7757 = vmatprep.mubr.f32.mxu0 0.0
    %7758 = vmatmul.mubr.f32.gmra.mxu0 %v7665
    %v7759 = vpop.f32.mrf.mxu0
    %v7760 = vadd.f32 0.0, %v7759
    %v7761 = vpop.f32.mrf.mxu0
    %7762 = vmatprep.mubr.f32.mxu0 0.0
    %7763 = vmatmul.mubr.f32.gmra.mxu0 %v7668
    %v7764 = vpop.f32.mrf.mxu0
    %v7765 = vadd.f32 0.0, %v7764
    %v7766 = vpop.f32.mrf.mxu0
    %7767 = vmatprep.mubr.f32.mxu0 0.0
    %7768 = vmatmul.mubr.f32.gmra.mxu0 %v7671
    %v7769 = vpop.f32.mrf.mxu0
    %v7770 = vadd.f32 0.0, %v7769
    %v7771 = vpop.f32.mrf.mxu0
    %7772 = vdwg.mxu0
    %v7773 = vadd.f32 %v7642, %v7740
    %v7774 = vadd.f32 %v7643, %v7745
    %v7775 = vadd.f32 %v7644, %v7750
    %v7776 = vadd.f32 %v7645, %v7755
    %v7777 = vadd.f32 %v7646, %v7760
    %v7778 = vadd.f32 %v7647, %v7765
    %v7779 = vadd.f32 %v7648, %v7770
    %s7780 = scalar_lea.vmem %s9, 272
    %v7781 = vld [vmem:[%s7780] sm:$0xff]
    %v7782 = vld [vmem:[%s7780 + $0x8] sm:$0xff]
    %v7790 = vrot.slane %v5035, 6
    %v7791 = vrot.slane %v5040, 6
    %v7792 = vsel %vm3595, %v7790, %v7791
    %v7793 = vrot.slane %v5045, 6
    %v7794 = vsel %vm3595, %v7791, %v7793
    %v7795 = vrot.slane %v5050, 6
    %v7796 = vsel %vm3595, %v7793, %v7795
    %v7797 = vrot.slane %v5055, 6
    %v7798 = vsel %vm3595, %v7795, %v7797
    %v7799 = vrot.slane %v5060, 6
    %v7800 = vsel %vm3595, %v7797, %v7799
    %v7801 = vrot.slane %v5065, 6
    %v7802 = vsel %vm3595, %v7799, %v7801
    %v7803 = vrot.slane %v5070, 6
    %v7804 = vsel %vm3595, %v7801, %v7803
    %v7805 = vsel %vm639, %v7792, 0
    %v7807 = vsel %vm639, %v7794, 0
    %v7809 = vsel %vm639, %v7796, 0
    %v7811 = vsel %vm639, %v7798, 0
    %v7813 = vsel %vm639, %v7800, 0
    %v7815 = vsel %vm639, %v7802, 0
    %v7817 = vsel %vm639, %v7804, 0
    %7819 = vmatprep.subr.mxu0 0.0
    %7820 = vmatpush1.msra.mxu0 0.0
    %7821 = vmatprep.subr.mxu0 0.0
    %7822 = vmatpush1.msra.mxu0 0.0
    %7823 = vmatprep.subr.mxu0 0.0
    %7824 = vmatpush1.msra.mxu0 0.0
    %7825 = vmatprep.subr.mxu0 0.0
    %7826 = vmatpush1.msra.mxu0 0.0
    %7827 = vmatprep.subr.mxu0 0.0
    %7828 = vmatpush1.msra.mxu0 0.0
    %7829 = vmatprep.subr.mxu0 0.0
    %7830 = vmatpush1.msra.mxu0 0.0
    %7831 = vmatprep.subr.mxu0 0.0
    %7832 = vmatpush1.msra.mxu0 0.0
    %7833 = vmatprep.subr.mxu0 0.0
    %7834 = vmatpush1.msra.mxu0 0.0
    %7835 = vmatprep.subr.mxu0 0.0
    %7836 = vmatpush1.msra.mxu0 0.0
    %7837 = vmatprep.subr.mxu0 0.0
    %7838 = vmatpush1.msra.mxu0 0.0
    %7839 = vmatprep.subr.mxu0 0.0
    %7840 = vmatpush1.msra.mxu0 0.0
    %7841 = vmatprep.subr.mxu0 0.0
    %7842 = vmatpush1.msra.mxu0 0.0
    %7843 = vmatprep.subr.mxu0 0.0
    %7844 = vmatpush1.msra.mxu0 0.0
    %7845 = vmatprep.subr.mxu0 0.0
    %7846 = vmatpush1.msra.mxu0 0.0
    %7847 = vmatprep.subr.mxu0 0.0
    %7848 = vmatpush1.msra.mxu0 %v7782
    %7849 = vmatprep.subr.mxu0 0.0
    %7850 = vmatpush1.msra.mxu0 %v7781
    %7851 = vmatprep.subr.mxu0 0.0
    %7852 = vmatpush2.msra.mxu0 0.0
    %7853 = vmatprep.subr.mxu0 0.0
    %7854 = vmatpush2.msra.mxu0 0.0
    %7855 = vmatprep.subr.mxu0 0.0
    %7856 = vmatpush2.msra.mxu0 0.0
    %7857 = vmatprep.subr.mxu0 0.0
    %7858 = vmatpush2.msra.mxu0 0.0
    %7859 = vmatprep.subr.mxu0 0.0
    %7860 = vmatpush2.msra.mxu0 0.0
    %7861 = vmatprep.subr.mxu0 0.0
    %7862 = vmatpush2.msra.mxu0 0.0
    %7863 = vmatprep.subr.mxu0 0.0
    %7864 = vmatpush2.msra.mxu0 0.0
    %7865 = vmatprep.subr.mxu0 0.0
    %7866 = vmatpush2.msra.mxu0 0.0
    %7867 = vmatprep.subr.mxu0 0.0
    %7868 = vmatpush2.msra.mxu0 0.0
    %7869 = vmatprep.subr.mxu0 0.0
    %7870 = vmatpush2.msra.mxu0 0.0
    %7871 = vmatprep.subr.mxu0 0.0
    %7872 = vmatpush2.msra.mxu0 0.0
    %7873 = vmatprep.subr.mxu0 0.0
    %7874 = vmatpush2.msra.mxu0 0.0
    %7875 = vmatprep.subr.mxu0 0.0
    %7876 = vmatpush2.msra.mxu0 0.0
    %7877 = vmatprep.subr.mxu0 0.0
    %7878 = vmatpush2.msra.mxu0 0.0
    %7879 = vmatprep.subr.mxu0 0.0
    %7880 = vmatpush2.msra.mxu0 0.0
    %7881 = vmatprep.subr.mxu0 0.0
    %7882 = vmatpush2.msra.mxu0 0.0
    %7883 = vmatprep.mubr.f32.mxu0 0.0
    %7884 = vmatmul.mubr.f32.gmra.mxu0 %v7805
    %v7885 = vpop.f32.mrf.mxu0
    %v7886 = vadd.f32 0.0, %v7885
    %v7887 = vpop.f32.mrf.mxu0
    %7888 = vmatprep.mubr.f32.mxu0 0.0
    %7889 = vmatmul.mubr.f32.gmra.mxu0 %v7807
    %v7890 = vpop.f32.mrf.mxu0
    %v7891 = vadd.f32 0.0, %v7890
    %v7892 = vpop.f32.mrf.mxu0
    %7893 = vmatprep.mubr.f32.mxu0 0.0
    %7894 = vmatmul.mubr.f32.gmra.mxu0 %v7809
    %v7895 = vpop.f32.mrf.mxu0
    %v7896 = vadd.f32 0.0, %v7895
    %v7897 = vpop.f32.mrf.mxu0
    %7898 = vmatprep.mubr.f32.mxu0 0.0
    %7899 = vmatmul.mubr.f32.gmra.mxu0 %v7811
    %v7900 = vpop.f32.mrf.mxu0
    %v7901 = vadd.f32 0.0, %v7900
    %v7902 = vpop.f32.mrf.mxu0
    %7903 = vmatprep.mubr.f32.mxu0 0.0
    %7904 = vmatmul.mubr.f32.gmra.mxu0 %v7813
    %v7905 = vpop.f32.mrf.mxu0
    %v7906 = vadd.f32 0.0, %v7905
    %v7907 = vpop.f32.mrf.mxu0
    %7908 = vmatprep.mubr.f32.mxu0 0.0
    %7909 = vmatmul.mubr.f32.gmra.mxu0 %v7815
    %v7910 = vpop.f32.mrf.mxu0
    %v7911 = vadd.f32 0.0, %v7910
    %v7912 = vpop.f32.mrf.mxu0
    %7913 = vmatprep.mubr.f32.mxu0 0.0
    %7914 = vmatmul.mubr.f32.gmra.mxu0 %v7817
    %v7915 = vpop.f32.mrf.mxu0
    %v7916 = vadd.f32 0.0, %v7915
    %v7917 = vpop.f32.mrf.mxu0
    %7918 = vdwg.mxu0
    %v7919 = vadd.f32 %v7773, %v7886
    %v7920 = vadd.f32 %v7774, %v7891
    %v7921 = vadd.f32 %v7775, %v7896
    %v7922 = vadd.f32 %v7776, %v7901
    %v7923 = vadd.f32 %v7777, %v7906
    %v7924 = vadd.f32 %v7778, %v7911
    %v7925 = vadd.f32 %v7779, %v7916
    %s7926 = scalar_lea.vmem %s9, 288
    %v7927 = vld [vmem:[%s7926] sm:$0xff]
    %v7928 = vld [vmem:[%s7926 + $0x8] sm:$0xff]
    %v7936 = vrot.slane %v5070, 4
    %v7937 = vrot.slane %v5075, 4
    %v7938 = vsel %vm3259, %v7936, %v7937
    %v7939 = vrot.slane %v5080, 4
    %v7940 = vsel %vm3259, %v7937, %v7939
    %v7941 = vrot.slane %v5085, 4
    %v7942 = vsel %vm3259, %v7939, %v7941
    %v7943 = vrot.slane %v5090, 4
    %v7944 = vsel %vm3259, %v7941, %v7943
    %v7945 = vrot.slane %v5095, 4
    %v7946 = vsel %vm3259, %v7943, %v7945
    %v7947 = vrot.slane %v5100, 4
    %v7948 = vsel %vm3259, %v7945, %v7947
    %v7949 = vrot.slane %v5105, 4
    %v7950 = vsel %vm3259, %v7947, %v7949
    %v7951 = vsel %vm639, %v7938, 0
    %v7953 = vsel %vm639, %v7940, 0
    %v7955 = vsel %vm639, %v7942, 0
    %v7957 = vsel %vm639, %v7944, 0
    %v7959 = vsel %vm639, %v7946, 0
    %v7961 = vsel %vm639, %v7948, 0
    %v7963 = vsel %vm639, %v7950, 0
    %7965 = vmatprep.subr.mxu0 0.0
    %7966 = vmatpush1.msra.mxu0 0.0
    %7967 = vmatprep.subr.mxu0 0.0
    %7968 = vmatpush1.msra.mxu0 0.0
    %7969 = vmatprep.subr.mxu0 0.0
    %7970 = vmatpush1.msra.mxu0 0.0
    %7971 = vmatprep.subr.mxu0 0.0
    %7972 = vmatpush1.msra.mxu0 0.0
    %7973 = vmatprep.subr.mxu0 0.0
    %7974 = vmatpush1.msra.mxu0 0.0
    %7975 = vmatprep.subr.mxu0 0.0
    %7976 = vmatpush1.msra.mxu0 0.0
    %7977 = vmatprep.subr.mxu0 0.0
    %7978 = vmatpush1.msra.mxu0 0.0
    %7979 = vmatprep.subr.mxu0 0.0
    %7980 = vmatpush1.msra.mxu0 0.0
    %7981 = vmatprep.subr.mxu0 0.0
    %7982 = vmatpush1.msra.mxu0 0.0
    %7983 = vmatprep.subr.mxu0 0.0
    %7984 = vmatpush1.msra.mxu0 0.0
    %7985 = vmatprep.subr.mxu0 0.0
    %7986 = vmatpush1.msra.mxu0 0.0
    %7987 = vmatprep.subr.mxu0 0.0
    %7988 = vmatpush1.msra.mxu0 0.0
    %7989 = vmatprep.subr.mxu0 0.0
    %7990 = vmatpush1.msra.mxu0 0.0
    %7991 = vmatprep.subr.mxu0 0.0
    %7992 = vmatpush1.msra.mxu0 0.0
    %7993 = vmatprep.subr.mxu0 0.0
    %7994 = vmatpush1.msra.mxu0 %v7928
    %7995 = vmatprep.subr.mxu0 0.0
    %7996 = vmatpush1.msra.mxu0 %v7927
    %7997 = vmatprep.subr.mxu0 0.0
    %7998 = vmatpush2.msra.mxu0 0.0
    %7999 = vmatprep.subr.mxu0 0.0
    %8000 = vmatpush2.msra.mxu0 0.0
    %8001 = vmatprep.subr.mxu0 0.0
    %8002 = vmatpush2.msra.mxu0 0.0
    %8003 = vmatprep.subr.mxu0 0.0
    %8004 = vmatpush2.msra.mxu0 0.0
    %8005 = vmatprep.subr.mxu0 0.0
    %8006 = vmatpush2.msra.mxu0 0.0
    %8007 = vmatprep.subr.mxu0 0.0
    %8008 = vmatpush2.msra.mxu0 0.0
    %8009 = vmatprep.subr.mxu0 0.0
    %8010 = vmatpush2.msra.mxu0 0.0
    %8011 = vmatprep.subr.mxu0 0.0
    %8012 = vmatpush2.msra.mxu0 0.0
    %8013 = vmatprep.subr.mxu0 0.0
    %8014 = vmatpush2.msra.mxu0 0.0
    %8015 = vmatprep.subr.mxu0 0.0
    %8016 = vmatpush2.msra.mxu0 0.0
    %8017 = vmatprep.subr.mxu0 0.0
    %8018 = vmatpush2.msra.mxu0 0.0
    %8019 = vmatprep.subr.mxu0 0.0
    %8020 = vmatpush2.msra.mxu0 0.0
    %8021 = vmatprep.subr.mxu0 0.0
    %8022 = vmatpush2.msra.mxu0 0.0
    %8023 = vmatprep.subr.mxu0 0.0
    %8024 = vmatpush2.msra.mxu0 0.0
    %8025 = vmatprep.subr.mxu0 0.0
    %8026 = vmatpush2.msra.mxu0 0.0
    %8027 = vmatprep.subr.mxu0 0.0
    %8028 = vmatpush2.msra.mxu0 0.0
    %8029 = vmatprep.mubr.f32.mxu0 0.0
    %8030 = vmatmul.mubr.f32.gmra.mxu0 %v7951
    %v8031 = vpop.f32.mrf.mxu0
    %v8032 = vadd.f32 0.0, %v8031
    %v8033 = vpop.f32.mrf.mxu0
    %8034 = vmatprep.mubr.f32.mxu0 0.0
    %8035 = vmatmul.mubr.f32.gmra.mxu0 %v7953
    %v8036 = vpop.f32.mrf.mxu0
    %v8037 = vadd.f32 0.0, %v8036
    %v8038 = vpop.f32.mrf.mxu0
    %8039 = vmatprep.mubr.f32.mxu0 0.0
    %8040 = vmatmul.mubr.f32.gmra.mxu0 %v7955
    %v8041 = vpop.f32.mrf.mxu0
    %v8042 = vadd.f32 0.0, %v8041
    %v8043 = vpop.f32.mrf.mxu0
    %8044 = vmatprep.mubr.f32.mxu0 0.0
    %8045 = vmatmul.mubr.f32.gmra.mxu0 %v7957
    %v8046 = vpop.f32.mrf.mxu0
    %v8047 = vadd.f32 0.0, %v8046
    %v8048 = vpop.f32.mrf.mxu0
    %8049 = vmatprep.mubr.f32.mxu0 0.0
    %8050 = vmatmul.mubr.f32.gmra.mxu0 %v7959
    %v8051 = vpop.f32.mrf.mxu0
    %v8052 = vadd.f32 0.0, %v8051
    %v8053 = vpop.f32.mrf.mxu0
    %8054 = vmatprep.mubr.f32.mxu0 0.0
    %8055 = vmatmul.mubr.f32.gmra.mxu0 %v7961
    %v8056 = vpop.f32.mrf.mxu0
    %v8057 = vadd.f32 0.0, %v8056
    %v8058 = vpop.f32.mrf.mxu0
    %8059 = vmatprep.mubr.f32.mxu0 0.0
    %8060 = vmatmul.mubr.f32.gmra.mxu0 %v7963
    %v8061 = vpop.f32.mrf.mxu0
    %v8062 = vadd.f32 0.0, %v8061
    %v8063 = vpop.f32.mrf.mxu0
    %8064 = vdwg.mxu0
    %v8065 = vadd.f32 %v7919, %v8032
    %v8066 = vadd.f32 %v7920, %v8037
    %v8067 = vadd.f32 %v7921, %v8042
    %v8068 = vadd.f32 %v7922, %v8047
    %v8069 = vadd.f32 %v7923, %v8052
    %v8070 = vadd.f32 %v7924, %v8057
    %v8071 = vadd.f32 %v7925, %v8062
    %s8072 = scalar_lea.vmem %s9, 304
    %v8073 = vld [vmem:[%s8072] sm:$0xff]
    %v8074 = vld [vmem:[%s8072 + $0x8] sm:$0xff]
    %v8081 = vrot.slane %v5105, 2
    %v8082 = vrot.slane %v5110, 2
    %v8083 = vsel %vm4394, %v8081, %v8082
    %v8084 = vrot.slane %v5115, 2
    %v8085 = vsel %vm4394, %v8082, %v8084
    %v8086 = vrot.slane %v5120, 2
    %v8087 = vsel %vm4394, %v8084, %v8086
    %v8088 = vrot.slane %v5125, 2
    %v8089 = vsel %vm4394, %v8086, %v8088
    %v8090 = vrot.slane %v5130, 2
    %v8091 = vsel %vm4394, %v8088, %v8090
    %v8092 = vrot.slane %v5135, 2
    %v8093 = vsel %vm4394, %v8090, %v8092
    %v8094 = vsel %vm639, %v8083, 0
    %v8096 = vsel %vm639, %v8085, 0
    %v8098 = vsel %vm639, %v8087, 0
    %v8100 = vsel %vm639, %v8089, 0
    %v8102 = vsel %vm639, %v8091, 0
    %v8104 = vsel %vm639, %v8093, 0
    %v8106 = vsel %vm639, %v8092, 0
    %8108 = vmatprep.subr.mxu0 0.0
    %8109 = vmatpush1.msra.mxu0 0.0
    %8110 = vmatprep.subr.mxu0 0.0
    %8111 = vmatpush1.msra.mxu0 0.0
    %8112 = vmatprep.subr.mxu0 0.0
    %8113 = vmatpush1.msra.mxu0 0.0
    %8114 = vmatprep.subr.mxu0 0.0
    %8115 = vmatpush1.msra.mxu0 0.0
    %8116 = vmatprep.subr.mxu0 0.0
    %8117 = vmatpush1.msra.mxu0 0.0
    %8118 = vmatprep.subr.mxu0 0.0
    %8119 = vmatpush1.msra.mxu0 0.0
    %8120 = vmatprep.subr.mxu0 0.0
    %8121 = vmatpush1.msra.mxu0 0.0
    %8122 = vmatprep.subr.mxu0 0.0
    %8123 = vmatpush1.msra.mxu0 0.0
    %8124 = vmatprep.subr.mxu0 0.0
    %8125 = vmatpush1.msra.mxu0 0.0
    %8126 = vmatprep.subr.mxu0 0.0
    %8127 = vmatpush1.msra.mxu0 0.0
    %8128 = vmatprep.subr.mxu0 0.0
    %8129 = vmatpush1.msra.mxu0 0.0
    %8130 = vmatprep.subr.mxu0 0.0
    %8131 = vmatpush1.msra.mxu0 0.0
    %8132 = vmatprep.subr.mxu0 0.0
    %8133 = vmatpush1.msra.mxu0 0.0
    %8134 = vmatprep.subr.mxu0 0.0
    %8135 = vmatpush1.msra.mxu0 0.0
    %8136 = vmatprep.subr.mxu0 0.0
    %8137 = vmatpush1.msra.mxu0 %v8074
    %8138 = vmatprep.subr.mxu0 0.0
    %8139 = vmatpush1.msra.mxu0 %v8073
    %8140 = vmatprep.subr.mxu0 0.0
    %8141 = vmatpush2.msra.mxu0 0.0
    %8142 = vmatprep.subr.mxu0 0.0
    %8143 = vmatpush2.msra.mxu0 0.0
    %8144 = vmatprep.subr.mxu0 0.0
    %8145 = vmatpush2.msra.mxu0 0.0
    %8146 = vmatprep.subr.mxu0 0.0
    %8147 = vmatpush2.msra.mxu0 0.0
    %8148 = vmatprep.subr.mxu0 0.0
    %8149 = vmatpush2.msra.mxu0 0.0
    %8150 = vmatprep.subr.mxu0 0.0
    %8151 = vmatpush2.msra.mxu0 0.0
    %8152 = vmatprep.subr.mxu0 0.0
    %8153 = vmatpush2.msra.mxu0 0.0
    %8154 = vmatprep.subr.mxu0 0.0
    %8155 = vmatpush2.msra.mxu0 0.0
    %8156 = vmatprep.subr.mxu0 0.0
    %8157 = vmatpush2.msra.mxu0 0.0
    %8158 = vmatprep.subr.mxu0 0.0
    %8159 = vmatpush2.msra.mxu0 0.0
    %8160 = vmatprep.subr.mxu0 0.0
    %8161 = vmatpush2.msra.mxu0 0.0
    %8162 = vmatprep.subr.mxu0 0.0
    %8163 = vmatpush2.msra.mxu0 0.0
    %8164 = vmatprep.subr.mxu0 0.0
    %8165 = vmatpush2.msra.mxu0 0.0
    %8166 = vmatprep.subr.mxu0 0.0
    %8167 = vmatpush2.msra.mxu0 0.0
    %8168 = vmatprep.subr.mxu0 0.0
    %8169 = vmatpush2.msra.mxu0 0.0
    %8170 = vmatprep.subr.mxu0 0.0
    %8171 = vmatpush2.msra.mxu0 0.0
    %8172 = vmatprep.mubr.f32.mxu0 0.0
    %8173 = vmatmul.mubr.f32.gmra.mxu0 %v8094
    %v8174 = vpop.f32.mrf.mxu0
    %v8175 = vadd.f32 0.0, %v8174
    %v8176 = vpop.f32.mrf.mxu0
    %8177 = vmatprep.mubr.f32.mxu0 0.0
    %8178 = vmatmul.mubr.f32.gmra.mxu0 %v8096
    %v8179 = vpop.f32.mrf.mxu0
    %v8180 = vadd.f32 0.0, %v8179
    %v8181 = vpop.f32.mrf.mxu0
    %8182 = vmatprep.mubr.f32.mxu0 0.0
    %8183 = vmatmul.mubr.f32.gmra.mxu0 %v8098
    %v8184 = vpop.f32.mrf.mxu0
    %v8185 = vadd.f32 0.0, %v8184
    %v8186 = vpop.f32.mrf.mxu0
    %8187 = vmatprep.mubr.f32.mxu0 0.0
    %8188 = vmatmul.mubr.f32.gmra.mxu0 %v8100
    %v8189 = vpop.f32.mrf.mxu0
    %v8190 = vadd.f32 0.0, %v8189
    %v8191 = vpop.f32.mrf.mxu0
    %8192 = vmatprep.mubr.f32.mxu0 0.0
    %8193 = vmatmul.mubr.f32.gmra.mxu0 %v8102
    %v8194 = vpop.f32.mrf.mxu0
    %v8195 = vadd.f32 0.0, %v8194
    %v8196 = vpop.f32.mrf.mxu0
    %8197 = vmatprep.mubr.f32.mxu0 0.0
    %8198 = vmatmul.mubr.f32.gmra.mxu0 %v8104
    %v8199 = vpop.f32.mrf.mxu0
    %v8200 = vadd.f32 0.0, %v8199
    %v8201 = vpop.f32.mrf.mxu0
    %8202 = vmatprep.mubr.f32.mxu0 0.0
    %8203 = vmatmul.mubr.f32.gmra.mxu0 %v8106
    %v8204 = vpop.f32.mrf.mxu0
    %v8205 = vadd.f32 0.0, %v8204
    %v8206 = vpop.f32.mrf.mxu0
    %8207 = vdwg.mxu0
    %v8208 = vadd.f32 %v8065, %v8175
    %v8209 = vadd.f32 %v8066, %v8180
    %v8210 = vadd.f32 %v8067, %v8185
    %v8211 = vadd.f32 %v8068, %v8190
    %v8212 = vadd.f32 %v8069, %v8195
    %v8213 = vadd.f32 %v8070, %v8200
    %v8214 = vadd.f32 %v8071, %v8205
    %s8215 = scalar_lea.vmem %s9, 320
    %v8216 = vld [vmem:[%s8215] sm:$0xff]
    %v8217 = vld [vmem:[%s8215 + $0x8] sm:$0xff]
    %v8219 = vsel %vm639, %v5140, 0
    %v8222 = vsel %vm639, %v5145, 0
    %v8225 = vsel %vm639, %v5150, 0
    %v8228 = vsel %vm639, %v5155, 0
    %v8231 = vsel %vm639, %v5160, 0
    %v8234 = vsel %vm639, %v5165, 0
    %v8237 = vsel %vm639, %v5170, 0
    %8239 = vmatprep.subr.mxu0 0.0
    %8240 = vmatpush1.msra.mxu0 0.0
    %8241 = vmatprep.subr.mxu0 0.0
    %8242 = vmatpush1.msra.mxu0 0.0
    %8243 = vmatprep.subr.mxu0 0.0
    %8244 = vmatpush1.msra.mxu0 0.0
    %8245 = vmatprep.subr.mxu0 0.0
    %8246 = vmatpush1.msra.mxu0 0.0
    %8247 = vmatprep.subr.mxu0 0.0
    %8248 = vmatpush1.msra.mxu0 0.0
    %8249 = vmatprep.subr.mxu0 0.0
    %8250 = vmatpush1.msra.mxu0 0.0
    %8251 = vmatprep.subr.mxu0 0.0
    %8252 = vmatpush1.msra.mxu0 0.0
    %8253 = vmatprep.subr.mxu0 0.0
    %8254 = vmatpush1.msra.mxu0 0.0
    %8255 = vmatprep.subr.mxu0 0.0
    %8256 = vmatpush1.msra.mxu0 0.0
    %8257 = vmatprep.subr.mxu0 0.0
    %8258 = vmatpush1.msra.mxu0 0.0
    %8259 = vmatprep.subr.mxu0 0.0
    %8260 = vmatpush1.msra.mxu0 0.0
    %8261 = vmatprep.subr.mxu0 0.0
    %8262 = vmatpush1.msra.mxu0 0.0
    %8263 = vmatprep.subr.mxu0 0.0
    %8264 = vmatpush1.msra.mxu0 0.0
    %8265 = vmatprep.subr.mxu0 0.0
    %8266 = vmatpush1.msra.mxu0 0.0
    %8267 = vmatprep.subr.mxu0 0.0
    %8268 = vmatpush1.msra.mxu0 %v8217
    %8269 = vmatprep.subr.mxu0 0.0
    %8270 = vmatpush1.msra.mxu0 %v8216
    %8271 = vmatprep.subr.mxu0 0.0
    %8272 = vmatpush2.msra.mxu0 0.0
    %8273 = vmatprep.subr.mxu0 0.0
    %8274 = vmatpush2.msra.mxu0 0.0
    %8275 = vmatprep.subr.mxu0 0.0
    %8276 = vmatpush2.msra.mxu0 0.0
    %8277 = vmatprep.subr.mxu0 0.0
    %8278 = vmatpush2.msra.mxu0 0.0
    %8279 = vmatprep.subr.mxu0 0.0
    %8280 = vmatpush2.msra.mxu0 0.0
    %8281 = vmatprep.subr.mxu0 0.0
    %8282 = vmatpush2.msra.mxu0 0.0
    %8283 = vmatprep.subr.mxu0 0.0
    %8284 = vmatpush2.msra.mxu0 0.0
    %8285 = vmatprep.subr.mxu0 0.0
    %8286 = vmatpush2.msra.mxu0 0.0
    %8287 = vmatprep.subr.mxu0 0.0
    %8288 = vmatpush2.msra.mxu0 0.0
    %8289 = vmatprep.subr.mxu0 0.0
    %8290 = vmatpush2.msra.mxu0 0.0
    %8291 = vmatprep.subr.mxu0 0.0
    %8292 = vmatpush2.msra.mxu0 0.0
    %8293 = vmatprep.subr.mxu0 0.0
    %8294 = vmatpush2.msra.mxu0 0.0
    %8295 = vmatprep.subr.mxu0 0.0
    %8296 = vmatpush2.msra.mxu0 0.0
    %8297 = vmatprep.subr.mxu0 0.0
    %8298 = vmatpush2.msra.mxu0 0.0
    %8299 = vmatprep.subr.mxu0 0.0
    %8300 = vmatpush2.msra.mxu0 0.0
    %8301 = vmatprep.subr.mxu0 0.0
    %8302 = vmatpush2.msra.mxu0 0.0
    %8303 = vmatprep.mubr.f32.mxu0 0.0
    %8304 = vmatmul.mubr.f32.gmra.mxu0 %v8219
    %v8305 = vpop.f32.mrf.mxu0
    %v8306 = vadd.f32 0.0, %v8305
    %v8307 = vpop.f32.mrf.mxu0
    %8308 = vmatprep.mubr.f32.mxu0 0.0
    %8309 = vmatmul.mubr.f32.gmra.mxu0 %v8222
    %v8310 = vpop.f32.mrf.mxu0
    %v8311 = vadd.f32 0.0, %v8310
    %v8312 = vpop.f32.mrf.mxu0
    %8313 = vmatprep.mubr.f32.mxu0 0.0
    %8314 = vmatmul.mubr.f32.gmra.mxu0 %v8225
    %v8315 = vpop.f32.mrf.mxu0
    %v8316 = vadd.f32 0.0, %v8315
    %v8317 = vpop.f32.mrf.mxu0
    %8318 = vmatprep.mubr.f32.mxu0 0.0
    %8319 = vmatmul.mubr.f32.gmra.mxu0 %v8228
    %v8320 = vpop.f32.mrf.mxu0
    %v8321 = vadd.f32 0.0, %v8320
    %v8322 = vpop.f32.mrf.mxu0
    %8323 = vmatprep.mubr.f32.mxu0 0.0
    %8324 = vmatmul.mubr.f32.gmra.mxu0 %v8231
    %v8325 = vpop.f32.mrf.mxu0
    %v8326 = vadd.f32 0.0, %v8325
    %v8327 = vpop.f32.mrf.mxu0
    %8328 = vmatprep.mubr.f32.mxu0 0.0
    %8329 = vmatmul.mubr.f32.gmra.mxu0 %v8234
    %v8330 = vpop.f32.mrf.mxu0
    %v8331 = vadd.f32 0.0, %v8330
    %v8332 = vpop.f32.mrf.mxu0
    %8333 = vmatprep.mubr.f32.mxu0 0.0
    %8334 = vmatmul.mubr.f32.gmra.mxu0 %v8237
    %v8335 = vpop.f32.mrf.mxu0
    %v8336 = vadd.f32 0.0, %v8335
    %v8337 = vpop.f32.mrf.mxu0
    %8338 = vdwg.mxu0
    %v8339 = vadd.f32 %v8208, %v8306
    %v8340 = vadd.f32 %v8209, %v8311
    %v8341 = vadd.f32 %v8210, %v8316
    %v8342 = vadd.f32 %v8211, %v8321
    %v8343 = vadd.f32 %v8212, %v8326
    %v8344 = vadd.f32 %v8213, %v8331
    %v8345 = vadd.f32 %v8214, %v8336
    %s8346 = scalar_lea.vmem %s9, 336
    %v8347 = vld [vmem:[%s8346] sm:$0xff]
    %v8348 = vld [vmem:[%s8346 + $0x8] sm:$0xff]
    %v8356 = vrot.slane %v5170, 6
    %v8357 = vrot.slane %v5175, 6
    %v8358 = vsel %vm3595, %v8356, %v8357
    %v8359 = vrot.slane %v5180, 6
    %v8360 = vsel %vm3595, %v8357, %v8359
    %v8361 = vrot.slane %v5185, 6
    %v8362 = vsel %vm3595, %v8359, %v8361
    %v8363 = vrot.slane %v5190, 6
    %v8364 = vsel %vm3595, %v8361, %v8363
    %v8365 = vrot.slane %v5195, 6
    %v8366 = vsel %vm3595, %v8363, %v8365
    %v8367 = vrot.slane %v5200, 6
    %v8368 = vsel %vm3595, %v8365, %v8367
    %v8369 = vrot.slane %v5205, 6
    %v8370 = vsel %vm3595, %v8367, %v8369
    %v8371 = vsel %vm639, %v8358, 0
    %v8373 = vsel %vm639, %v8360, 0
    %v8375 = vsel %vm639, %v8362, 0
    %v8377 = vsel %vm639, %v8364, 0
    %v8379 = vsel %vm639, %v8366, 0
    %v8381 = vsel %vm639, %v8368, 0
    %v8383 = vsel %vm639, %v8370, 0
    %8385 = vmatprep.subr.mxu0 0.0
    %8386 = vmatpush1.msra.mxu0 0.0
    %8387 = vmatprep.subr.mxu0 0.0
    %8388 = vmatpush1.msra.mxu0 0.0
    %8389 = vmatprep.subr.mxu0 0.0
    %8390 = vmatpush1.msra.mxu0 0.0
    %8391 = vmatprep.subr.mxu0 0.0
    %8392 = vmatpush1.msra.mxu0 0.0
    %8393 = vmatprep.subr.mxu0 0.0
    %8394 = vmatpush1.msra.mxu0 0.0
    %8395 = vmatprep.subr.mxu0 0.0
    %8396 = vmatpush1.msra.mxu0 0.0
    %8397 = vmatprep.subr.mxu0 0.0
    %8398 = vmatpush1.msra.mxu0 0.0
    %8399 = vmatprep.subr.mxu0 0.0
    %8400 = vmatpush1.msra.mxu0 0.0
    %8401 = vmatprep.subr.mxu0 0.0
    %8402 = vmatpush1.msra.mxu0 0.0
    %8403 = vmatprep.subr.mxu0 0.0
    %8404 = vmatpush1.msra.mxu0 0.0
    %8405 = vmatprep.subr.mxu0 0.0
    %8406 = vmatpush1.msra.mxu0 0.0
    %8407 = vmatprep.subr.mxu0 0.0
    %8408 = vmatpush1.msra.mxu0 0.0
    %8409 = vmatprep.subr.mxu0 0.0
    %8410 = vmatpush1.msra.mxu0 0.0
    %8411 = vmatprep.subr.mxu0 0.0
    %8412 = vmatpush1.msra.mxu0 0.0
    %8413 = vmatprep.subr.mxu0 0.0
    %8414 = vmatpush1.msra.mxu0 %v8348
    %8415 = vmatprep.subr.mxu0 0.0
    %8416 = vmatpush1.msra.mxu0 %v8347
    %8417 = vmatprep.subr.mxu0 0.0
    %8418 = vmatpush2.msra.mxu0 0.0
    %8419 = vmatprep.subr.mxu0 0.0
    %8420 = vmatpush2.msra.mxu0 0.0
    %8421 = vmatprep.subr.mxu0 0.0
    %8422 = vmatpush2.msra.mxu0 0.0
    %8423 = vmatprep.subr.mxu0 0.0
    %8424 = vmatpush2.msra.mxu0 0.0
    %8425 = vmatprep.subr.mxu0 0.0
    %8426 = vmatpush2.msra.mxu0 0.0
    %8427 = vmatprep.subr.mxu0 0.0
    %8428 = vmatpush2.msra.mxu0 0.0
    %8429 = vmatprep.subr.mxu0 0.0
    %8430 = vmatpush2.msra.mxu0 0.0
    %8431 = vmatprep.subr.mxu0 0.0
    %8432 = vmatpush2.msra.mxu0 0.0
    %8433 = vmatprep.subr.mxu0 0.0
    %8434 = vmatpush2.msra.mxu0 0.0
    %8435 = vmatprep.subr.mxu0 0.0
    %8436 = vmatpush2.msra.mxu0 0.0
    %8437 = vmatprep.subr.mxu0 0.0
    %8438 = vmatpush2.msra.mxu0 0.0
    %8439 = vmatprep.subr.mxu0 0.0
    %8440 = vmatpush2.msra.mxu0 0.0
    %8441 = vmatprep.subr.mxu0 0.0
    %8442 = vmatpush2.msra.mxu0 0.0
    %8443 = vmatprep.subr.mxu0 0.0
    %8444 = vmatpush2.msra.mxu0 0.0
    %8445 = vmatprep.subr.mxu0 0.0
    %8446 = vmatpush2.msra.mxu0 0.0
    %8447 = vmatprep.subr.mxu0 0.0
    %8448 = vmatpush2.msra.mxu0 0.0
    %8449 = vmatprep.mubr.f32.mxu0 0.0
    %8450 = vmatmul.mubr.f32.gmra.mxu0 %v8371
    %v8451 = vpop.f32.mrf.mxu0
    %v8452 = vadd.f32 0.0, %v8451
    %v8453 = vpop.f32.mrf.mxu0
    %8454 = vmatprep.mubr.f32.mxu0 0.0
    %8455 = vmatmul.mubr.f32.gmra.mxu0 %v8373
    %v8456 = vpop.f32.mrf.mxu0
    %v8457 = vadd.f32 0.0, %v8456
    %v8458 = vpop.f32.mrf.mxu0
    %8459 = vmatprep.mubr.f32.mxu0 0.0
    %8460 = vmatmul.mubr.f32.gmra.mxu0 %v8375
    %v8461 = vpop.f32.mrf.mxu0
    %v8462 = vadd.f32 0.0, %v8461
    %v8463 = vpop.f32.mrf.mxu0
    %8464 = vmatprep.mubr.f32.mxu0 0.0
    %8465 = vmatmul.mubr.f32.gmra.mxu0 %v8377
    %v8466 = vpop.f32.mrf.mxu0
    %v8467 = vadd.f32 0.0, %v8466
    %v8468 = vpop.f32.mrf.mxu0
    %8469 = vmatprep.mubr.f32.mxu0 0.0
    %8470 = vmatmul.mubr.f32.gmra.mxu0 %v8379
    %v8471 = vpop.f32.mrf.mxu0
    %v8472 = vadd.f32 0.0, %v8471
    %v8473 = vpop.f32.mrf.mxu0
    %8474 = vmatprep.mubr.f32.mxu0 0.0
    %8475 = vmatmul.mubr.f32.gmra.mxu0 %v8381
    %v8476 = vpop.f32.mrf.mxu0
    %v8477 = vadd.f32 0.0, %v8476
    %v8478 = vpop.f32.mrf.mxu0
    %8479 = vmatprep.mubr.f32.mxu0 0.0
    %8480 = vmatmul.mubr.f32.gmra.mxu0 %v8383
    %v8481 = vpop.f32.mrf.mxu0
    %v8482 = vadd.f32 0.0, %v8481
    %v8483 = vpop.f32.mrf.mxu0
    %8484 = vdwg.mxu0
    %v8485 = vadd.f32 %v8339, %v8452
    %v8486 = vadd.f32 %v8340, %v8457
    %v8487 = vadd.f32 %v8341, %v8462
    %v8488 = vadd.f32 %v8342, %v8467
    %v8489 = vadd.f32 %v8343, %v8472
    %v8490 = vadd.f32 %v8344, %v8477
    %v8491 = vadd.f32 %v8345, %v8482
    %s8492 = scalar_lea.vmem %s9, 352
    %v8493 = vld [vmem:[%s8492] sm:$0xff]
    %v8494 = vld [vmem:[%s8492 + $0x8] sm:$0xff]
    %v8502 = vrot.slane %v5205, 4
    %v8503 = vrot.slane %v5210, 4
    %v8504 = vsel %vm3259, %v8502, %v8503
    %v8505 = vrot.slane %v5215, 4
    %v8506 = vsel %vm3259, %v8503, %v8505
    %v8507 = vrot.slane %v5220, 4
    %v8508 = vsel %vm3259, %v8505, %v8507
    %v8509 = vrot.slane %v5225, 4
    %v8510 = vsel %vm3259, %v8507, %v8509
    %v8511 = vrot.slane %v5230, 4
    %v8512 = vsel %vm3259, %v8509, %v8511
    %v8513 = vrot.slane %v5235, 4
    %v8514 = vsel %vm3259, %v8511, %v8513
    %v8515 = vrot.slane %v5240, 4
    %v8516 = vsel %vm3259, %v8513, %v8515
    %v8517 = vsel %vm639, %v8504, 0
    %v8519 = vsel %vm639, %v8506, 0
    %v8521 = vsel %vm639, %v8508, 0
    %v8523 = vsel %vm639, %v8510, 0
    %v8525 = vsel %vm639, %v8512, 0
    %v8527 = vsel %vm639, %v8514, 0
    %v8529 = vsel %vm639, %v8516, 0
    %8531 = vmatprep.subr.mxu0 0.0
    %8532 = vmatpush1.msra.mxu0 0.0
    %8533 = vmatprep.subr.mxu0 0.0
    %8534 = vmatpush1.msra.mxu0 0.0
    %8535 = vmatprep.subr.mxu0 0.0
    %8536 = vmatpush1.msra.mxu0 0.0
    %8537 = vmatprep.subr.mxu0 0.0
    %8538 = vmatpush1.msra.mxu0 0.0
    %8539 = vmatprep.subr.mxu0 0.0
    %8540 = vmatpush1.msra.mxu0 0.0
    %8541 = vmatprep.subr.mxu0 0.0
    %8542 = vmatpush1.msra.mxu0 0.0
    %8543 = vmatprep.subr.mxu0 0.0
    %8544 = vmatpush1.msra.mxu0 0.0
    %8545 = vmatprep.subr.mxu0 0.0
    %8546 = vmatpush1.msra.mxu0 0.0
    %8547 = vmatprep.subr.mxu0 0.0
    %8548 = vmatpush1.msra.mxu0 0.0
    %8549 = vmatprep.subr.mxu0 0.0
    %8550 = vmatpush1.msra.mxu0 0.0
    %8551 = vmatprep.subr.mxu0 0.0
    %8552 = vmatpush1.msra.mxu0 0.0
    %8553 = vmatprep.subr.mxu0 0.0
    %8554 = vmatpush1.msra.mxu0 0.0
    %8555 = vmatprep.subr.mxu0 0.0
    %8556 = vmatpush1.msra.mxu0 0.0
    %8557 = vmatprep.subr.mxu0 0.0
    %8558 = vmatpush1.msra.mxu0 0.0
    %8559 = vmatprep.subr.mxu0 0.0
    %8560 = vmatpush1.msra.mxu0 %v8494
    %8561 = vmatprep.subr.mxu0 0.0
    %8562 = vmatpush1.msra.mxu0 %v8493
    %8563 = vmatprep.subr.mxu0 0.0
    %8564 = vmatpush2.msra.mxu0 0.0
    %8565 = vmatprep.subr.mxu0 0.0
    %8566 = vmatpush2.msra.mxu0 0.0
    %8567 = vmatprep.subr.mxu0 0.0
    %8568 = vmatpush2.msra.mxu0 0.0
    %8569 = vmatprep.subr.mxu0 0.0
    %8570 = vmatpush2.msra.mxu0 0.0
    %8571 = vmatprep.subr.mxu0 0.0
    %8572 = vmatpush2.msra.mxu0 0.0
    %8573 = vmatprep.subr.mxu0 0.0
    %8574 = vmatpush2.msra.mxu0 0.0
    %8575 = vmatprep.subr.mxu0 0.0
    %8576 = vmatpush2.msra.mxu0 0.0
    %8577 = vmatprep.subr.mxu0 0.0
    %8578 = vmatpush2.msra.mxu0 0.0
    %8579 = vmatprep.subr.mxu0 0.0
    %8580 = vmatpush2.msra.mxu0 0.0
    %8581 = vmatprep.subr.mxu0 0.0
    %8582 = vmatpush2.msra.mxu0 0.0
    %8583 = vmatprep.subr.mxu0 0.0
    %8584 = vmatpush2.msra.mxu0 0.0
    %8585 = vmatprep.subr.mxu0 0.0
    %8586 = vmatpush2.msra.mxu0 0.0
    %8587 = vmatprep.subr.mxu0 0.0
    %8588 = vmatpush2.msra.mxu0 0.0
    %8589 = vmatprep.subr.mxu0 0.0
    %8590 = vmatpush2.msra.mxu0 0.0
    %8591 = vmatprep.subr.mxu0 0.0
    %8592 = vmatpush2.msra.mxu0 0.0
    %8593 = vmatprep.subr.mxu0 0.0
    %8594 = vmatpush2.msra.mxu0 0.0
    %8595 = vmatprep.mubr.f32.mxu0 0.0
    %8596 = vmatmul.mubr.f32.gmra.mxu0 %v8517
    %v8597 = vpop.f32.mrf.mxu0
    %v8598 = vadd.f32 0.0, %v8597
    %v8599 = vpop.f32.mrf.mxu0
    %8600 = vmatprep.mubr.f32.mxu0 0.0
    %8601 = vmatmul.mubr.f32.gmra.mxu0 %v8519
    %v8602 = vpop.f32.mrf.mxu0
    %v8603 = vadd.f32 0.0, %v8602
    %v8604 = vpop.f32.mrf.mxu0
    %8605 = vmatprep.mubr.f32.mxu0 0.0
    %8606 = vmatmul.mubr.f32.gmra.mxu0 %v8521
    %v8607 = vpop.f32.mrf.mxu0
    %v8608 = vadd.f32 0.0, %v8607
    %v8609 = vpop.f32.mrf.mxu0
    %8610 = vmatprep.mubr.f32.mxu0 0.0
    %8611 = vmatmul.mubr.f32.gmra.mxu0 %v8523
    %v8612 = vpop.f32.mrf.mxu0
    %v8613 = vadd.f32 0.0, %v8612
    %v8614 = vpop.f32.mrf.mxu0
    %8615 = vmatprep.mubr.f32.mxu0 0.0
    %8616 = vmatmul.mubr.f32.gmra.mxu0 %v8525
    %v8617 = vpop.f32.mrf.mxu0
    %v8618 = vadd.f32 0.0, %v8617
    %v8619 = vpop.f32.mrf.mxu0
    %8620 = vmatprep.mubr.f32.mxu0 0.0
    %8621 = vmatmul.mubr.f32.gmra.mxu0 %v8527
    %v8622 = vpop.f32.mrf.mxu0
    %v8623 = vadd.f32 0.0, %v8622
    %v8624 = vpop.f32.mrf.mxu0
    %8625 = vmatprep.mubr.f32.mxu0 0.0
    %8626 = vmatmul.mubr.f32.gmra.mxu0 %v8529
    %v8627 = vpop.f32.mrf.mxu0
    %v8628 = vadd.f32 0.0, %v8627
    %v8629 = vpop.f32.mrf.mxu0
    %8630 = vdwg.mxu0
    %v8631 = vadd.f32 %v8485, %v8598
    %v8632 = vadd.f32 %v8486, %v8603
    %v8633 = vadd.f32 %v8487, %v8608
    %v8634 = vadd.f32 %v8488, %v8613
    %v8635 = vadd.f32 %v8489, %v8618
    %v8636 = vadd.f32 %v8490, %v8623
    %v8637 = vadd.f32 %v8491, %v8628
    %s8638 = scalar_lea.vmem %s9, 368
    %v8639 = vld [vmem:[%s8638] sm:$0xff]
    %v8640 = vld [vmem:[%s8638 + $0x8] sm:$0xff]
    %v8647 = vrot.slane %v5240, 2
    %v8648 = vrot.slane %v5245, 2
    %v8649 = vsel %vm4394, %v8647, %v8648
    %v8650 = vrot.slane %v5250, 2
    %v8651 = vsel %vm4394, %v8648, %v8650
    %v8652 = vrot.slane %v5255, 2
    %v8653 = vsel %vm4394, %v8650, %v8652
    %v8654 = vrot.slane %v5260, 2
    %v8655 = vsel %vm4394, %v8652, %v8654
    %v8656 = vrot.slane %v5265, 2
    %v8657 = vsel %vm4394, %v8654, %v8656
    %v8658 = vrot.slane %v5270, 2
    %v8659 = vsel %vm4394, %v8656, %v8658
    %v8660 = vsel %vm639, %v8649, 0
    %v8662 = vsel %vm639, %v8651, 0
    %v8664 = vsel %vm639, %v8653, 0
    %v8666 = vsel %vm639, %v8655, 0
    %v8668 = vsel %vm639, %v8657, 0
    %v8670 = vsel %vm639, %v8659, 0
    %v8672 = vsel %vm639, %v8658, 0
    %8674 = vmatprep.subr.mxu0 0.0
    %8675 = vmatpush1.msra.mxu0 0.0
    %8676 = vmatprep.subr.mxu0 0.0
    %8677 = vmatpush1.msra.mxu0 0.0
    %8678 = vmatprep.subr.mxu0 0.0
    %8679 = vmatpush1.msra.mxu0 0.0
    %8680 = vmatprep.subr.mxu0 0.0
    %8681 = vmatpush1.msra.mxu0 0.0
    %8682 = vmatprep.subr.mxu0 0.0
    %8683 = vmatpush1.msra.mxu0 0.0
    %8684 = vmatprep.subr.mxu0 0.0
    %8685 = vmatpush1.msra.mxu0 0.0
    %8686 = vmatprep.subr.mxu0 0.0
    %8687 = vmatpush1.msra.mxu0 0.0
    %8688 = vmatprep.subr.mxu0 0.0
    %8689 = vmatpush1.msra.mxu0 0.0
    %8690 = vmatprep.subr.mxu0 0.0
    %8691 = vmatpush1.msra.mxu0 0.0
    %8692 = vmatprep.subr.mxu0 0.0
    %8693 = vmatpush1.msra.mxu0 0.0
    %8694 = vmatprep.subr.mxu0 0.0
    %8695 = vmatpush1.msra.mxu0 0.0
    %8696 = vmatprep.subr.mxu0 0.0
    %8697 = vmatpush1.msra.mxu0 0.0
    %8698 = vmatprep.subr.mxu0 0.0
    %8699 = vmatpush1.msra.mxu0 0.0
    %8700 = vmatprep.subr.mxu0 0.0
    %8701 = vmatpush1.msra.mxu0 0.0
    %8702 = vmatprep.subr.mxu0 0.0
    %8703 = vmatpush1.msra.mxu0 %v8640
    %8704 = vmatprep.subr.mxu0 0.0
    %8705 = vmatpush1.msra.mxu0 %v8639
    %8706 = vmatprep.subr.mxu0 0.0
    %8707 = vmatpush2.msra.mxu0 0.0
    %8708 = vmatprep.subr.mxu0 0.0
    %8709 = vmatpush2.msra.mxu0 0.0
    %8710 = vmatprep.subr.mxu0 0.0
    %8711 = vmatpush2.msra.mxu0 0.0
    %8712 = vmatprep.subr.mxu0 0.0
    %8713 = vmatpush2.msra.mxu0 0.0
    %8714 = vmatprep.subr.mxu0 0.0
    %8715 = vmatpush2.msra.mxu0 0.0
    %8716 = vmatprep.subr.mxu0 0.0
    %8717 = vmatpush2.msra.mxu0 0.0
    %8718 = vmatprep.subr.mxu0 0.0
    %8719 = vmatpush2.msra.mxu0 0.0
    %8720 = vmatprep.subr.mxu0 0.0
    %8721 = vmatpush2.msra.mxu0 0.0
    %8722 = vmatprep.subr.mxu0 0.0
    %8723 = vmatpush2.msra.mxu0 0.0
    %8724 = vmatprep.subr.mxu0 0.0
    %8725 = vmatpush2.msra.mxu0 0.0
    %8726 = vmatprep.subr.mxu0 0.0
    %8727 = vmatpush2.msra.mxu0 0.0
    %8728 = vmatprep.subr.mxu0 0.0
    %8729 = vmatpush2.msra.mxu0 0.0
    %8730 = vmatprep.subr.mxu0 0.0
    %8731 = vmatpush2.msra.mxu0 0.0
    %8732 = vmatprep.subr.mxu0 0.0
    %8733 = vmatpush2.msra.mxu0 0.0
    %8734 = vmatprep.subr.mxu0 0.0
    %8735 = vmatpush2.msra.mxu0 0.0
    %8736 = vmatprep.subr.mxu0 0.0
    %8737 = vmatpush2.msra.mxu0 0.0
    %8738 = vmatprep.mubr.f32.mxu0 0.0
    %8739 = vmatmul.mubr.f32.gmra.mxu0 %v8660
    %v8740 = vpop.f32.mrf.mxu0
    %v8741 = vadd.f32 0.0, %v8740
    %v8742 = vpop.f32.mrf.mxu0
    %8743 = vmatprep.mubr.f32.mxu0 0.0
    %8744 = vmatmul.mubr.f32.gmra.mxu0 %v8662
    %v8745 = vpop.f32.mrf.mxu0
    %v8746 = vadd.f32 0.0, %v8745
    %v8747 = vpop.f32.mrf.mxu0
    %8748 = vmatprep.mubr.f32.mxu0 0.0
    %8749 = vmatmul.mubr.f32.gmra.mxu0 %v8664
    %v8750 = vpop.f32.mrf.mxu0
    %v8751 = vadd.f32 0.0, %v8750
    %v8752 = vpop.f32.mrf.mxu0
    %8753 = vmatprep.mubr.f32.mxu0 0.0
    %8754 = vmatmul.mubr.f32.gmra.mxu0 %v8666
    %v8755 = vpop.f32.mrf.mxu0
    %v8756 = vadd.f32 0.0, %v8755
    %v8757 = vpop.f32.mrf.mxu0
    %8758 = vmatprep.mubr.f32.mxu0 0.0
    %8759 = vmatmul.mubr.f32.gmra.mxu0 %v8668
    %v8760 = vpop.f32.mrf.mxu0
    %v8761 = vadd.f32 0.0, %v8760
    %v8762 = vpop.f32.mrf.mxu0
    %8763 = vmatprep.mubr.f32.mxu0 0.0
    %8764 = vmatmul.mubr.f32.gmra.mxu0 %v8670
    %v8765 = vpop.f32.mrf.mxu0
    %v8766 = vadd.f32 0.0, %v8765
    %v8767 = vpop.f32.mrf.mxu0
    %8768 = vmatprep.mubr.f32.mxu0 0.0
    %8769 = vmatmul.mubr.f32.gmra.mxu0 %v8672
    %v8770 = vpop.f32.mrf.mxu0
    %v8771 = vadd.f32 0.0, %v8770
    %v8772 = vpop.f32.mrf.mxu0
    %8773 = vdwg.mxu0
    %v8774 = vadd.f32 %v8631, %v8741
    %v8775 = vadd.f32 %v8632, %v8746
    %v8776 = vadd.f32 %v8633, %v8751
    %v8777 = vadd.f32 %v8634, %v8756
    %v8778 = vadd.f32 %v8635, %v8761
    %v8779 = vadd.f32 %v8636, %v8766
    %v8780 = vadd.f32 %v8637, %v8771
    %s8781 = scalar_lea.vmem %s9, 384
    %v8782 = vld [vmem:[%s8781] sm:$0xff]
    %v8783 = vld [vmem:[%s8781 + $0x8] sm:$0xff]
    %v8785 = vsel %vm639, %v5275, 0
    %v8788 = vsel %vm639, %v5280, 0
    %v8791 = vsel %vm639, %v5285, 0
    %v8794 = vsel %vm639, %v5290, 0
    %v8797 = vsel %vm639, %v5295, 0
    %v8800 = vsel %vm639, %v5300, 0
    %v8803 = vsel %vm639, %v5305, 0
    %8805 = vmatprep.subr.mxu0 0.0
    %8806 = vmatpush1.msra.mxu0 0.0
    %8807 = vmatprep.subr.mxu0 0.0
    %8808 = vmatpush1.msra.mxu0 0.0
    %8809 = vmatprep.subr.mxu0 0.0
    %8810 = vmatpush1.msra.mxu0 0.0
    %8811 = vmatprep.subr.mxu0 0.0
    %8812 = vmatpush1.msra.mxu0 0.0
    %8813 = vmatprep.subr.mxu0 0.0
    %8814 = vmatpush1.msra.mxu0 0.0
    %8815 = vmatprep.subr.mxu0 0.0
    %8816 = vmatpush1.msra.mxu0 0.0
    %8817 = vmatprep.subr.mxu0 0.0
    %8818 = vmatpush1.msra.mxu0 0.0
    %8819 = vmatprep.subr.mxu0 0.0
    %8820 = vmatpush1.msra.mxu0 0.0
    %8821 = vmatprep.subr.mxu0 0.0
    %8822 = vmatpush1.msra.mxu0 0.0
    %8823 = vmatprep.subr.mxu0 0.0
    %8824 = vmatpush1.msra.mxu0 0.0
    %8825 = vmatprep.subr.mxu0 0.0
    %8826 = vmatpush1.msra.mxu0 0.0
    %8827 = vmatprep.subr.mxu0 0.0
    %8828 = vmatpush1.msra.mxu0 0.0
    %8829 = vmatprep.subr.mxu0 0.0
    %8830 = vmatpush1.msra.mxu0 0.0
    %8831 = vmatprep.subr.mxu0 0.0
    %8832 = vmatpush1.msra.mxu0 0.0
    %8833 = vmatprep.subr.mxu0 0.0
    %8834 = vmatpush1.msra.mxu0 %v8783
    %8835 = vmatprep.subr.mxu0 0.0
    %8836 = vmatpush1.msra.mxu0 %v8782
    %8837 = vmatprep.subr.mxu0 0.0
    %8838 = vmatpush2.msra.mxu0 0.0
    %8839 = vmatprep.subr.mxu0 0.0
    %8840 = vmatpush2.msra.mxu0 0.0
    %8841 = vmatprep.subr.mxu0 0.0
    %8842 = vmatpush2.msra.mxu0 0.0
    %8843 = vmatprep.subr.mxu0 0.0
    %8844 = vmatpush2.msra.mxu0 0.0
    %8845 = vmatprep.subr.mxu0 0.0
    %8846 = vmatpush2.msra.mxu0 0.0
    %8847 = vmatprep.subr.mxu0 0.0
    %8848 = vmatpush2.msra.mxu0 0.0
    %8849 = vmatprep.subr.mxu0 0.0
    %8850 = vmatpush2.msra.mxu0 0.0
    %8851 = vmatprep.subr.mxu0 0.0
    %8852 = vmatpush2.msra.mxu0 0.0
    %8853 = vmatprep.subr.mxu0 0.0
    %8854 = vmatpush2.msra.mxu0 0.0
    %8855 = vmatprep.subr.mxu0 0.0
    %8856 = vmatpush2.msra.mxu0 0.0
    %8857 = vmatprep.subr.mxu0 0.0
    %8858 = vmatpush2.msra.mxu0 0.0
    %8859 = vmatprep.subr.mxu0 0.0
    %8860 = vmatpush2.msra.mxu0 0.0
    %8861 = vmatprep.subr.mxu0 0.0
    %8862 = vmatpush2.msra.mxu0 0.0
    %8863 = vmatprep.subr.mxu0 0.0
    %8864 = vmatpush2.msra.mxu0 0.0
    %8865 = vmatprep.subr.mxu0 0.0
    %8866 = vmatpush2.msra.mxu0 0.0
    %8867 = vmatprep.subr.mxu0 0.0
    %8868 = vmatpush2.msra.mxu0 0.0
    %8869 = vmatprep.mubr.f32.mxu0 0.0
    %8870 = vmatmul.mubr.f32.gmra.mxu0 %v8785
    %v8871 = vpop.f32.mrf.mxu0
    %v8872 = vadd.f32 0.0, %v8871
    %v8873 = vpop.f32.mrf.mxu0
    %8874 = vmatprep.mubr.f32.mxu0 0.0
    %8875 = vmatmul.mubr.f32.gmra.mxu0 %v8788
    %v8876 = vpop.f32.mrf.mxu0
    %v8877 = vadd.f32 0.0, %v8876
    %v8878 = vpop.f32.mrf.mxu0
    %8879 = vmatprep.mubr.f32.mxu0 0.0
    %8880 = vmatmul.mubr.f32.gmra.mxu0 %v8791
    %v8881 = vpop.f32.mrf.mxu0
    %v8882 = vadd.f32 0.0, %v8881
    %v8883 = vpop.f32.mrf.mxu0
    %8884 = vmatprep.mubr.f32.mxu0 0.0
    %8885 = vmatmul.mubr.f32.gmra.mxu0 %v8794
    %v8886 = vpop.f32.mrf.mxu0
    %v8887 = vadd.f32 0.0, %v8886
    %v8888 = vpop.f32.mrf.mxu0
    %8889 = vmatprep.mubr.f32.mxu0 0.0
    %8890 = vmatmul.mubr.f32.gmra.mxu0 %v8797
    %v8891 = vpop.f32.mrf.mxu0
    %v8892 = vadd.f32 0.0, %v8891
    %v8893 = vpop.f32.mrf.mxu0
    %8894 = vmatprep.mubr.f32.mxu0 0.0
    %8895 = vmatmul.mubr.f32.gmra.mxu0 %v8800
    %v8896 = vpop.f32.mrf.mxu0
    %v8897 = vadd.f32 0.0, %v8896
    %v8898 = vpop.f32.mrf.mxu0
    %8899 = vmatprep.mubr.f32.mxu0 0.0
    %8900 = vmatmul.mubr.f32.gmra.mxu0 %v8803
    %v8901 = vpop.f32.mrf.mxu0
    %v8902 = vadd.f32 0.0, %v8901
    %v8903 = vpop.f32.mrf.mxu0
    %8904 = vdwg.mxu0
    %v8905 = vadd.f32 %v8774, %v8872
    %v8906 = vadd.f32 %v8775, %v8877
    %v8907 = vadd.f32 %v8776, %v8882
    %v8908 = vadd.f32 %v8777, %v8887
    %v8909 = vadd.f32 %v8778, %v8892
    %v8910 = vadd.f32 %v8779, %v8897
    %v8911 = vadd.f32 %v8780, %v8902
    %s8912 = scalar_lea.vmem %s9, 400
    %v8913 = vld [vmem:[%s8912] sm:$0xff]
    %v8914 = vld [vmem:[%s8912 + $0x8] sm:$0xff]
    %v8922 = vrot.slane %v5305, 6
    %v8923 = vrot.slane %v5310, 6
    %v8924 = vsel %vm3595, %v8922, %v8923
    %v8925 = vrot.slane %v5315, 6
    %v8926 = vsel %vm3595, %v8923, %v8925
    %v8927 = vrot.slane %v5320, 6
    %v8928 = vsel %vm3595, %v8925, %v8927
    %v8929 = vrot.slane %v5325, 6
    %v8930 = vsel %vm3595, %v8927, %v8929
    %v8931 = vrot.slane %v5330, 6
    %v8932 = vsel %vm3595, %v8929, %v8931
    %v8933 = vrot.slane %v5335, 6
    %v8934 = vsel %vm3595, %v8931, %v8933
    %v8935 = vrot.slane %v5340, 6
    %v8936 = vsel %vm3595, %v8933, %v8935
    %v8937 = vsel %vm639, %v8924, 0
    %v8939 = vsel %vm639, %v8926, 0
    %v8941 = vsel %vm639, %v8928, 0
    %v8943 = vsel %vm639, %v8930, 0
    %v8945 = vsel %vm639, %v8932, 0
    %v8947 = vsel %vm639, %v8934, 0
    %v8949 = vsel %vm639, %v8936, 0
    %8951 = vmatprep.subr.mxu0 0.0
    %8952 = vmatpush1.msra.mxu0 0.0
    %8953 = vmatprep.subr.mxu0 0.0
    %8954 = vmatpush1.msra.mxu0 0.0
    %8955 = vmatprep.subr.mxu0 0.0
    %8956 = vmatpush1.msra.mxu0 0.0
    %8957 = vmatprep.subr.mxu0 0.0
    %8958 = vmatpush1.msra.mxu0 0.0
    %8959 = vmatprep.subr.mxu0 0.0
    %8960 = vmatpush1.msra.mxu0 0.0
    %8961 = vmatprep.subr.mxu0 0.0
    %8962 = vmatpush1.msra.mxu0 0.0
    %8963 = vmatprep.subr.mxu0 0.0
    %8964 = vmatpush1.msra.mxu0 0.0
    %8965 = vmatprep.subr.mxu0 0.0
    %8966 = vmatpush1.msra.mxu0 0.0
    %8967 = vmatprep.subr.mxu0 0.0
    %8968 = vmatpush1.msra.mxu0 0.0
    %8969 = vmatprep.subr.mxu0 0.0
    %8970 = vmatpush1.msra.mxu0 0.0
    %8971 = vmatprep.subr.mxu0 0.0
    %8972 = vmatpush1.msra.mxu0 0.0
    %8973 = vmatprep.subr.mxu0 0.0
    %8974 = vmatpush1.msra.mxu0 0.0
    %8975 = vmatprep.subr.mxu0 0.0
    %8976 = vmatpush1.msra.mxu0 0.0
    %8977 = vmatprep.subr.mxu0 0.0
    %8978 = vmatpush1.msra.mxu0 0.0
    %8979 = vmatprep.subr.mxu0 0.0
    %8980 = vmatpush1.msra.mxu0 %v8914
    %8981 = vmatprep.subr.mxu0 0.0
    %8982 = vmatpush1.msra.mxu0 %v8913
    %8983 = vmatprep.subr.mxu0 0.0
    %8984 = vmatpush2.msra.mxu0 0.0
    %8985 = vmatprep.subr.mxu0 0.0
    %8986 = vmatpush2.msra.mxu0 0.0
    %8987 = vmatprep.subr.mxu0 0.0
    %8988 = vmatpush2.msra.mxu0 0.0
    %8989 = vmatprep.subr.mxu0 0.0
    %8990 = vmatpush2.msra.mxu0 0.0
    %8991 = vmatprep.subr.mxu0 0.0
    %8992 = vmatpush2.msra.mxu0 0.0
    %8993 = vmatprep.subr.mxu0 0.0
    %8994 = vmatpush2.msra.mxu0 0.0
    %8995 = vmatprep.subr.mxu0 0.0
    %8996 = vmatpush2.msra.mxu0 0.0
    %8997 = vmatprep.subr.mxu0 0.0
    %8998 = vmatpush2.msra.mxu0 0.0
    %8999 = vmatprep.subr.mxu0 0.0
    %9000 = vmatpush2.msra.mxu0 0.0
    %9001 = vmatprep.subr.mxu0 0.0
    %9002 = vmatpush2.msra.mxu0 0.0
    %9003 = vmatprep.subr.mxu0 0.0
    %9004 = vmatpush2.msra.mxu0 0.0
    %9005 = vmatprep.subr.mxu0 0.0
    %9006 = vmatpush2.msra.mxu0 0.0
    %9007 = vmatprep.subr.mxu0 0.0
    %9008 = vmatpush2.msra.mxu0 0.0
    %9009 = vmatprep.subr.mxu0 0.0
    %9010 = vmatpush2.msra.mxu0 0.0
    %9011 = vmatprep.subr.mxu0 0.0
    %9012 = vmatpush2.msra.mxu0 0.0
    %9013 = vmatprep.subr.mxu0 0.0
    %9014 = vmatpush2.msra.mxu0 0.0
    %9015 = vmatprep.mubr.f32.mxu0 0.0
    %9016 = vmatmul.mubr.f32.gmra.mxu0 %v8937
    %v9017 = vpop.f32.mrf.mxu0
    %v9018 = vadd.f32 0.0, %v9017
    %v9019 = vpop.f32.mrf.mxu0
    %9020 = vmatprep.mubr.f32.mxu0 0.0
    %9021 = vmatmul.mubr.f32.gmra.mxu0 %v8939
    %v9022 = vpop.f32.mrf.mxu0
    %v9023 = vadd.f32 0.0, %v9022
    %v9024 = vpop.f32.mrf.mxu0
    %9025 = vmatprep.mubr.f32.mxu0 0.0
    %9026 = vmatmul.mubr.f32.gmra.mxu0 %v8941
    %v9027 = vpop.f32.mrf.mxu0
    %v9028 = vadd.f32 0.0, %v9027
    %v9029 = vpop.f32.mrf.mxu0
    %9030 = vmatprep.mubr.f32.mxu0 0.0
    %9031 = vmatmul.mubr.f32.gmra.mxu0 %v8943
    %v9032 = vpop.f32.mrf.mxu0
    %v9033 = vadd.f32 0.0, %v9032
    %v9034 = vpop.f32.mrf.mxu0
    %9035 = vmatprep.mubr.f32.mxu0 0.0
    %9036 = vmatmul.mubr.f32.gmra.mxu0 %v8945
    %v9037 = vpop.f32.mrf.mxu0
    %v9038 = vadd.f32 0.0, %v9037
    %v9039 = vpop.f32.mrf.mxu0
    %9040 = vmatprep.mubr.f32.mxu0 0.0
    %9041 = vmatmul.mubr.f32.gmra.mxu0 %v8947
    %v9042 = vpop.f32.mrf.mxu0
    %v9043 = vadd.f32 0.0, %v9042
    %v9044 = vpop.f32.mrf.mxu0
    %9045 = vmatprep.mubr.f32.mxu0 0.0
    %9046 = vmatmul.mubr.f32.gmra.mxu0 %v8949
    %v9047 = vpop.f32.mrf.mxu0
    %v9048 = vadd.f32 0.0, %v9047
    %v9049 = vpop.f32.mrf.mxu0
    %9050 = vdwg.mxu0
    %v9051 = vadd.f32 %v8905, %v9018
    %v9052 = vadd.f32 %v8906, %v9023
    %v9053 = vadd.f32 %v8907, %v9028
    %v9054 = vadd.f32 %v8908, %v9033
    %v9055 = vadd.f32 %v8909, %v9038
    %v9056 = vadd.f32 %v8910, %v9043
    %v9057 = vadd.f32 %v8911, %v9048
    %s9058 = scalar_lea.vmem %s9, 416
    %v9059 = vld [vmem:[%s9058] sm:$0xff]
    %v9060 = vld [vmem:[%s9058 + $0x8] sm:$0xff]
    %v9068 = vrot.slane %v5340, 4
    %v9069 = vrot.slane %v5345, 4
    %v9070 = vsel %vm3259, %v9068, %v9069
    %v9071 = vrot.slane %v5350, 4
    %v9072 = vsel %vm3259, %v9069, %v9071
    %v9073 = vrot.slane %v5355, 4
    %v9074 = vsel %vm3259, %v9071, %v9073
    %v9075 = vrot.slane %v5360, 4
    %v9076 = vsel %vm3259, %v9073, %v9075
    %v9077 = vrot.slane %v5365, 4
    %v9078 = vsel %vm3259, %v9075, %v9077
    %v9079 = vrot.slane %v5370, 4
    %v9080 = vsel %vm3259, %v9077, %v9079
    %v9081 = vrot.slane %v5375, 4
    %v9082 = vsel %vm3259, %v9079, %v9081
    %v9083 = vsel %vm639, %v9070, 0
    %v9085 = vsel %vm639, %v9072, 0
    %v9087 = vsel %vm639, %v9074, 0
    %v9089 = vsel %vm639, %v9076, 0
    %v9091 = vsel %vm639, %v9078, 0
    %v9093 = vsel %vm639, %v9080, 0
    %v9095 = vsel %vm639, %v9082, 0
    %9097 = vmatprep.subr.mxu0 0.0
    %9098 = vmatpush1.msra.mxu0 0.0
    %9099 = vmatprep.subr.mxu0 0.0
    %9100 = vmatpush1.msra.mxu0 0.0
    %9101 = vmatprep.subr.mxu0 0.0
    %9102 = vmatpush1.msra.mxu0 0.0
    %9103 = vmatprep.subr.mxu0 0.0
    %9104 = vmatpush1.msra.mxu0 0.0
    %9105 = vmatprep.subr.mxu0 0.0
    %9106 = vmatpush1.msra.mxu0 0.0
    %9107 = vmatprep.subr.mxu0 0.0
    %9108 = vmatpush1.msra.mxu0 0.0
    %9109 = vmatprep.subr.mxu0 0.0
    %9110 = vmatpush1.msra.mxu0 0.0
    %9111 = vmatprep.subr.mxu0 0.0
    %9112 = vmatpush1.msra.mxu0 0.0
    %9113 = vmatprep.subr.mxu0 0.0
    %9114 = vmatpush1.msra.mxu0 0.0
    %9115 = vmatprep.subr.mxu0 0.0
    %9116 = vmatpush1.msra.mxu0 0.0
    %9117 = vmatprep.subr.mxu0 0.0
    %9118 = vmatpush1.msra.mxu0 0.0
    %9119 = vmatprep.subr.mxu0 0.0
    %9120 = vmatpush1.msra.mxu0 0.0
    %9121 = vmatprep.subr.mxu0 0.0
    %9122 = vmatpush1.msra.mxu0 0.0
    %9123 = vmatprep.subr.mxu0 0.0
    %9124 = vmatpush1.msra.mxu0 0.0
    %9125 = vmatprep.subr.mxu0 0.0
    %9126 = vmatpush1.msra.mxu0 %v9060
    %9127 = vmatprep.subr.mxu0 0.0
    %9128 = vmatpush1.msra.mxu0 %v9059
    %9129 = vmatprep.subr.mxu0 0.0
    %9130 = vmatpush2.msra.mxu0 0.0
    %9131 = vmatprep.subr.mxu0 0.0
    %9132 = vmatpush2.msra.mxu0 0.0
    %9133 = vmatprep.subr.mxu0 0.0
    %9134 = vmatpush2.msra.mxu0 0.0
    %9135 = vmatprep.subr.mxu0 0.0
    %9136 = vmatpush2.msra.mxu0 0.0
    %9137 = vmatprep.subr.mxu0 0.0
    %9138 = vmatpush2.msra.mxu0 0.0
    %9139 = vmatprep.subr.mxu0 0.0
    %9140 = vmatpush2.msra.mxu0 0.0
    %9141 = vmatprep.subr.mxu0 0.0
    %9142 = vmatpush2.msra.mxu0 0.0
    %9143 = vmatprep.subr.mxu0 0.0
    %9144 = vmatpush2.msra.mxu0 0.0
    %9145 = vmatprep.subr.mxu0 0.0
    %9146 = vmatpush2.msra.mxu0 0.0
    %9147 = vmatprep.subr.mxu0 0.0
    %9148 = vmatpush2.msra.mxu0 0.0
    %9149 = vmatprep.subr.mxu0 0.0
    %9150 = vmatpush2.msra.mxu0 0.0
    %9151 = vmatprep.subr.mxu0 0.0
    %9152 = vmatpush2.msra.mxu0 0.0
    %9153 = vmatprep.subr.mxu0 0.0
    %9154 = vmatpush2.msra.mxu0 0.0
    %9155 = vmatprep.subr.mxu0 0.0
    %9156 = vmatpush2.msra.mxu0 0.0
    %9157 = vmatprep.subr.mxu0 0.0
    %9158 = vmatpush2.msra.mxu0 0.0
    %9159 = vmatprep.subr.mxu0 0.0
    %9160 = vmatpush2.msra.mxu0 0.0
    %9161 = vmatprep.mubr.f32.mxu0 0.0
    %9162 = vmatmul.mubr.f32.gmra.mxu0 %v9083
    %v9163 = vpop.f32.mrf.mxu0
    %v9164 = vadd.f32 0.0, %v9163
    %v9165 = vpop.f32.mrf.mxu0
    %9166 = vmatprep.mubr.f32.mxu0 0.0
    %9167 = vmatmul.mubr.f32.gmra.mxu0 %v9085
    %v9168 = vpop.f32.mrf.mxu0
    %v9169 = vadd.f32 0.0, %v9168
    %v9170 = vpop.f32.mrf.mxu0
    %9171 = vmatprep.mubr.f32.mxu0 0.0
    %9172 = vmatmul.mubr.f32.gmra.mxu0 %v9087
    %v9173 = vpop.f32.mrf.mxu0
    %v9174 = vadd.f32 0.0, %v9173
    %v9175 = vpop.f32.mrf.mxu0
    %9176 = vmatprep.mubr.f32.mxu0 0.0
    %9177 = vmatmul.mubr.f32.gmra.mxu0 %v9089
    %v9178 = vpop.f32.mrf.mxu0
    %v9179 = vadd.f32 0.0, %v9178
    %v9180 = vpop.f32.mrf.mxu0
    %9181 = vmatprep.mubr.f32.mxu0 0.0
    %9182 = vmatmul.mubr.f32.gmra.mxu0 %v9091
    %v9183 = vpop.f32.mrf.mxu0
    %v9184 = vadd.f32 0.0, %v9183
    %v9185 = vpop.f32.mrf.mxu0
    %9186 = vmatprep.mubr.f32.mxu0 0.0
    %9187 = vmatmul.mubr.f32.gmra.mxu0 %v9093
    %v9188 = vpop.f32.mrf.mxu0
    %v9189 = vadd.f32 0.0, %v9188
    %v9190 = vpop.f32.mrf.mxu0
    %9191 = vmatprep.mubr.f32.mxu0 0.0
    %9192 = vmatmul.mubr.f32.gmra.mxu0 %v9095
    %v9193 = vpop.f32.mrf.mxu0
    %v9194 = vadd.f32 0.0, %v9193
    %v9195 = vpop.f32.mrf.mxu0
    %9196 = vdwg.mxu0
    %v9197 = vadd.f32 %v9051, %v9164
    %v9198 = vadd.f32 %v9052, %v9169
    %v9199 = vadd.f32 %v9053, %v9174
    %v9200 = vadd.f32 %v9054, %v9179
    %v9201 = vadd.f32 %v9055, %v9184
    %v9202 = vadd.f32 %v9056, %v9189
    %v9203 = vadd.f32 %v9057, %v9194
    %v9204 = vld [vmem:[%s11] sm:$0x1]
    %v9205 = vld [vmem:[%s12] sm:$0x1]
    %vm9206 = vcmask 261120
    %v9207 = vsel %vm9206, %v9197, 0.0
    %v9208 = vsel %vm9206, %v9198, 0.0
    %v9209 = vadd.f32 %v9207, %v9208
    %v9210 = vsel %vm9206, %v9199, 0.0
    %v9211 = vadd.f32 %v9209, %v9210
    %v9212 = vsel %vm9206, %v9200, 0.0
    %v9213 = vadd.f32 %v9211, %v9212
    %v9214 = vsel %vm9206, %v9201, 0.0
    %v9215 = vadd.f32 %v9213, %v9214
    %v9216 = vsel %vm9206, %v9202, 0.0
    %v9217 = vadd.f32 %v9215, %v9216
    %vm9218 = vcmask 259072
    %v9219 = vsel %vm9218, %v9203, 0.0
    %v9220 = vadd.f32 %v9217, %v9219
    %v9221 = vrot.slane %v9220, 4
    %v9222 = vadd.f32 %v9220, %v9221
    %v9223 = vrot.slane %v9222, 2
    %v9224 = vadd.f32 %v9222, %v9223
    %v9225 = vrot.slane %v9224, 1
    %v9226 = vadd.f32 %v9224, %v9225
    %v9227 = vrcp.pop 54.0
    %v9228 = vmul.f32 %v9226, %v9227
    %v9229 = vsub.f32 %v9197, %v9228
    %v9230 = vsub.f32 %v9198, %v9228
    %v9231 = vsub.f32 %v9199, %v9228
    %v9232 = vsub.f32 %v9200, %v9228
    %v9233 = vsub.f32 %v9201, %v9228
    %v9234 = vsub.f32 %v9202, %v9228
    %v9235 = vsub.f32 %v9203, %v9228
    %v9236 = vmul.f32 %v9229, %v9229
    %v9237 = vmul.f32 %v9230, %v9230
    %v9238 = vmul.f32 %v9231, %v9231
    %v9239 = vmul.f32 %v9232, %v9232
    %v9240 = vmul.f32 %v9233, %v9233
    %v9241 = vmul.f32 %v9234, %v9234
    %v9242 = vmul.f32 %v9235, %v9235
    %v9243 = vsel %vm9206, %v9236, 0.0
    %v9244 = vsel %vm9206, %v9237, 0.0
    %v9245 = vadd.f32 %v9243, %v9244
    %v9246 = vsel %vm9206, %v9238, 0.0
    %v9247 = vadd.f32 %v9245, %v9246
    %v9248 = vsel %vm9206, %v9239, 0.0
    %v9249 = vadd.f32 %v9247, %v9248
    %v9250 = vsel %vm9206, %v9240, 0.0
    %v9251 = vadd.f32 %v9249, %v9250
    %v9252 = vsel %vm9206, %v9241, 0.0
    %v9253 = vadd.f32 %v9251, %v9252
    %v9254 = vsel %vm9218, %v9242, 0.0
    %v9255 = vadd.f32 %v9253, %v9254
    %v9256 = vrot.slane %v9255, 4
    %v9257 = vadd.f32 %v9255, %v9256
    %v9258 = vrot.slane %v9257, 2
    %v9259 = vadd.f32 %v9257, %v9258
    %v9260 = vrot.slane %v9259, 1
    %v9261 = vadd.f32 %v9259, %v9260
    %v9262 = vmul.f32 %v9261, %v9227
    %v9263 = vadd.f32 %v9262, 1e-05
    %v9264 = vrsqrt.pop %v9263
    %v9265 = vmul.f32 %v9229, %v9264
    %v9266 = vmul.f32 %v9230, %v9264
    %v9267 = vmul.f32 %v9231, %v9264
    %v9268 = vmul.f32 %v9232, %v9264
    %v9269 = vmul.f32 %v9233, %v9264
    %v9270 = vmul.f32 %v9234, %v9264
    %v9271 = vmul.f32 %v9235, %v9264
    %v9273 = vlaneseq
    %v9274 = vshrl.u32 %v9273, 7
    %v9275 = vsub.s32 0, %v9274
    %v9276 = vrot.slane %v9204, %v9275
    %v9278 = vmul.f32 %v9265, %v9276
    %v9279 = vmul.f32 %v9266, %v9276
    %v9280 = vmul.f32 %v9267, %v9276
    %v9281 = vmul.f32 %v9268, %v9276
    %v9282 = vmul.f32 %v9269, %v9276
    %v9283 = vmul.f32 %v9270, %v9276
    %v9284 = vmul.f32 %v9271, %v9276
    %v9286 = vlaneseq
    %v9287 = vshrl.u32 %v9286, 7
    %v9288 = vsub.s32 0, %v9287
    %v9289 = vrot.slane %v9205, %v9288
    %v9291 = vadd.f32 %v9278, %v9289
    %v9292 = vadd.f32 %v9279, %v9289
    %v9293 = vadd.f32 %v9280, %v9289
    %v9294 = vadd.f32 %v9281, %v9289
    %v9295 = vadd.f32 %v9282, %v9289
    %v9296 = vadd.f32 %v9283, %v9289
    %v9297 = vadd.f32 %v9284, %v9289
    %v9298 = vmax.f32 %v9291, 0.0
    %v9299 = vmax.f32 %v9292, 0.0
    %v9300 = vmax.f32 %v9293, 0.0
    %v9301 = vmax.f32 %v9294, 0.0
    %v9302 = vmax.f32 %v9295, 0.0
    %v9303 = vmax.f32 %v9296, 0.0
    %v9304 = vmax.f32 %v9297, 0.0
    %v9305 = vsel %vm9206, %v9298, -inf
    %v9306 = vsel %vm9206, %v9299, -inf
    %v9307 = vsel %vm9206, %v9300, -inf
    %vm9308 = vcmask 256000
    %v9309 = vsel %vm9308, %v9301, -inf
    %v9310 = vmax.f32 %v9305, %v9306
    %v9311 = vmax.f32 %v9307, %v9309
    %v9312 = vmax.f32 %v9310, %v9311
    %v9313 = vrot.slane %v9312, 4
    %v9314 = vmax.f32 %v9312, %v9313
    %v9315 = vrot.slane %v9314, 2
    %v9316 = vmax.f32 %v9314, %v9315
    %v9317 = vrot.slane %v9316, 1
    %v9318 = vmax.f32 %v9316, %v9317
    %vm9319 = vcmask 261123
    %v9320 = vsel %vm9319, %v9301, -inf
    %v9321 = vsel %vm9206, %v9302, -inf
    %v9322 = vsel %vm9206, %v9303, -inf
    %v9323 = vsel %vm9218, %v9304, -inf
    %v9324 = vmax.f32 %v9320, %v9321
    %v9325 = vmax.f32 %v9322, %v9323
    %v9326 = vmax.f32 %v9324, %v9325
    %v9327 = vrot.slane %v9326, 4
    %v9328 = vmax.f32 %v9326, %v9327
    %v9329 = vrot.slane %v9328, 2
    %v9330 = vmax.f32 %v9328, %v9329
    %v9331 = vrot.slane %v9330, 1
    %v9332 = vmax.f32 %v9330, %v9331
    %vm9333 = vcmask 1040384
    %v9334 = vsel %vm9333, %v9318, %v9332
    %v9335 = vld [vmem:[%s13] sm:$0xff]
    %v9336 = vld [vmem:[%s13 + $0x8] sm:$0xff]
    %v9337 = vld [vmem:[%s13 + $0x10] sm:$0xff]
    %v9338 = vld [vmem:[%s13 + $0x18] sm:$0xff]
    %v9339 = vld [vmem:[%s14] sm:$0x1]
    %v9341 = vlaneseq
    %v9342 = vshrl.u32 %v9341, 7
    %v9343 = vsub.s32 0, %v9342
    %v9344 = vrot.slane %v9339, %v9343
    %v9347 = vsel %vm9206, %v9334, 0
    %9349 = vmatprep.subr.mxu0 0.0
    %9350 = vmatpush1.msra.mxu0 0.0
    %9351 = vmatprep.subr.mxu0 0.0
    %9352 = vmatpush1.msra.mxu0 0.0
    %9353 = vmatprep.subr.mxu0 0.0
    %9354 = vmatpush1.msra.mxu0 0.0
    %9355 = vmatprep.subr.mxu0 0.0
    %9356 = vmatpush1.msra.mxu0 0.0
    %9357 = vmatprep.subr.mxu0 0.0
    %9358 = vmatpush1.msra.mxu0 0.0
    %9359 = vmatprep.subr.mxu0 0.0
    %9360 = vmatpush1.msra.mxu0 0.0
    %9361 = vmatprep.subr.mxu0 0.0
    %9362 = vmatpush1.msra.mxu0 0.0
    %9363 = vmatprep.subr.mxu0 0.0
    %9364 = vmatpush1.msra.mxu0 0.0
    %9365 = vmatprep.subr.mxu0 0.0
    %9366 = vmatpush1.msra.mxu0 0.0
    %9367 = vmatprep.subr.mxu0 0.0
    %9368 = vmatpush1.msra.mxu0 0.0
    %9369 = vmatprep.subr.mxu0 0.0
    %9370 = vmatpush1.msra.mxu0 0.0
    %9371 = vmatprep.subr.mxu0 0.0
    %9372 = vmatpush1.msra.mxu0 0.0
    %9373 = vmatprep.subr.mxu0 0.0
    %9374 = vmatpush1.msra.mxu0 %v9338
    %9375 = vmatprep.subr.mxu0 0.0
    %9376 = vmatpush1.msra.mxu0 %v9337
    %9377 = vmatprep.subr.mxu0 0.0
    %9378 = vmatpush1.msra.mxu0 %v9336
    %9379 = vmatprep.subr.mxu0 0.0
    %9380 = vmatpush1.msra.mxu0 %v9335
    %9381 = vmatprep.subr.mxu0 0.0
    %9382 = vmatpush2.msra.mxu0 0.0
    %9383 = vmatprep.subr.mxu0 0.0
    %9384 = vmatpush2.msra.mxu0 0.0
    %9385 = vmatprep.subr.mxu0 0.0
    %9386 = vmatpush2.msra.mxu0 0.0
    %9387 = vmatprep.subr.mxu0 0.0
    %9388 = vmatpush2.msra.mxu0 0.0
    %9389 = vmatprep.subr.mxu0 0.0
    %9390 = vmatpush2.msra.mxu0 0.0
    %9391 = vmatprep.subr.mxu0 0.0
    %9392 = vmatpush2.msra.mxu0 0.0
    %9393 = vmatprep.subr.mxu0 0.0
    %9394 = vmatpush2.msra.mxu0 0.0
    %9395 = vmatprep.subr.mxu0 0.0
    %9396 = vmatpush2.msra.mxu0 0.0
    %9397 = vmatprep.subr.mxu0 0.0
    %9398 = vmatpush2.msra.mxu0 0.0
    %9399 = vmatprep.subr.mxu0 0.0
    %9400 = vmatpush2.msra.mxu0 0.0
    %9401 = vmatprep.subr.mxu0 0.0
    %9402 = vmatpush2.msra.mxu0 0.0
    %9403 = vmatprep.subr.mxu0 0.0
    %9404 = vmatpush2.msra.mxu0 0.0
    %9405 = vmatprep.subr.mxu0 0.0
    %9406 = vmatpush2.msra.mxu0 0.0
    %9407 = vmatprep.subr.mxu0 0.0
    %9408 = vmatpush2.msra.mxu0 0.0
    %9409 = vmatprep.subr.mxu0 0.0
    %9410 = vmatpush2.msra.mxu0 0.0
    %9411 = vmatprep.subr.mxu0 0.0
    %9412 = vmatpush2.msra.mxu0 0.0
    %9413 = vmatprep.mubr.f32.mxu0 0.0
    %9414 = vmatmul.mubr.f32.gmra.mxu0 %v9347
    %v9415 = vpop.f32.mrf.mxu0
    %v9416 = vadd.f32 %v9344, %v9415
    %v9417 = vpop.f32.mrf.mxu0
    %9418 = vdwg.mxu0
    %v9419 = vmul.f32 %v9416, 1.442695
    %v9420 = vpow.pop %v9419
    %v9421 = vld [vmem:[%s15] sm:$0x1]
    %v9423 = vlaneseq
    %v9424 = vshrl.u32 %v9423, 7
    %v9425 = vsub.s32 0, %v9424
    %v9426 = vrot.slane %v9421, %v9425
    %9427 = vrot.lane.b32.xlu0 %v9426, 32
    %v9428 = vpop.permute.xlu0 %9427
    %v9430 = vmul.f32 %v9420, %v9428
    %9432 = vrot.lane.b32.xlu0 %v9430, 96
    %v9433 = vpop.permute.xlu0 %9432
    %v9435 = vadd.f32 %v9416, %v9433
    %v9436 = vld [vmem:[%s16] sm:$0xff]
    %v9437 = vld [vmem:[%s16 + $0x8] sm:$0xff]
    %v9438 = vld [vmem:[%s16 + $0x10] sm:$0xff]
    %v9439 = vld [vmem:[%s16 + $0x18] sm:$0xff]
    %v9440 = vld [vmem:[%s17] sm:$0x1]
    %v9442 = vlaneseq
    %v9443 = vshrl.u32 %v9442, 7
    %v9444 = vsub.s32 0, %v9443
    %v9445 = vrot.slane %v9440, %v9444
    %v9448 = vsel %vm9206, %v9435, 0
    %9450 = vmatprep.subr.mxu0 0.0
    %9451 = vmatpush1.msra.mxu0 0.0
    %9452 = vmatprep.subr.mxu0 0.0
    %9453 = vmatpush1.msra.mxu0 0.0
    %9454 = vmatprep.subr.mxu0 0.0
    %9455 = vmatpush1.msra.mxu0 0.0
    %9456 = vmatprep.subr.mxu0 0.0
    %9457 = vmatpush1.msra.mxu0 0.0
    %9458 = vmatprep.subr.mxu0 0.0
    %9459 = vmatpush1.msra.mxu0 0.0
    %9460 = vmatprep.subr.mxu0 0.0
    %9461 = vmatpush1.msra.mxu0 0.0
    %9462 = vmatprep.subr.mxu0 0.0
    %9463 = vmatpush1.msra.mxu0 0.0
    %9464 = vmatprep.subr.mxu0 0.0
    %9465 = vmatpush1.msra.mxu0 0.0
    %9466 = vmatprep.subr.mxu0 0.0
    %9467 = vmatpush1.msra.mxu0 0.0
    %9468 = vmatprep.subr.mxu0 0.0
    %9469 = vmatpush1.msra.mxu0 0.0
    %9470 = vmatprep.subr.mxu0 0.0
    %9471 = vmatpush1.msra.mxu0 0.0
    %9472 = vmatprep.subr.mxu0 0.0
    %9473 = vmatpush1.msra.mxu0 0.0
    %9474 = vmatprep.subr.mxu0 0.0
    %9475 = vmatpush1.msra.mxu0 %v9439
    %9476 = vmatprep.subr.mxu0 0.0
    %9477 = vmatpush1.msra.mxu0 %v9438
    %9478 = vmatprep.subr.mxu0 0.0
    %9479 = vmatpush1.msra.mxu0 %v9437
    %9480 = vmatprep.subr.mxu0 0.0
    %9481 = vmatpush1.msra.mxu0 %v9436
    %9482 = vmatprep.subr.mxu0 0.0
    %9483 = vmatpush2.msra.mxu0 0.0
    %9484 = vmatprep.subr.mxu0 0.0
    %9485 = vmatpush2.msra.mxu0 0.0
    %9486 = vmatprep.subr.mxu0 0.0
    %9487 = vmatpush2.msra.mxu0 0.0
    %9488 = vmatprep.subr.mxu0 0.0
    %9489 = vmatpush2.msra.mxu0 0.0
    %9490 = vmatprep.subr.mxu0 0.0
    %9491 = vmatpush2.msra.mxu0 0.0
    %9492 = vmatprep.subr.mxu0 0.0
    %9493 = vmatpush2.msra.mxu0 0.0
    %9494 = vmatprep.subr.mxu0 0.0
    %9495 = vmatpush2.msra.mxu0 0.0
    %9496 = vmatprep.subr.mxu0 0.0
    %9497 = vmatpush2.msra.mxu0 0.0
    %9498 = vmatprep.subr.mxu0 0.0
    %9499 = vmatpush2.msra.mxu0 0.0
    %9500 = vmatprep.subr.mxu0 0.0
    %9501 = vmatpush2.msra.mxu0 0.0
    %9502 = vmatprep.subr.mxu0 0.0
    %9503 = vmatpush2.msra.mxu0 0.0
    %9504 = vmatprep.subr.mxu0 0.0
    %9505 = vmatpush2.msra.mxu0 0.0
    %9506 = vmatprep.subr.mxu0 0.0
    %9507 = vmatpush2.msra.mxu0 0.0
    %9508 = vmatprep.subr.mxu0 0.0
    %9509 = vmatpush2.msra.mxu0 0.0
    %9510 = vmatprep.subr.mxu0 0.0
    %9511 = vmatpush2.msra.mxu0 0.0
    %9512 = vmatprep.subr.mxu0 0.0
    %9513 = vmatpush2.msra.mxu0 0.0
    %9514 = vmatprep.mubr.f32.mxu0 0.0
    %9515 = vmatmul.mubr.f32.gmra.mxu0 %v9448
    %v9516 = vpop.f32.mrf.mxu0
    %v9517 = vadd.f32 %v9445, %v9516
    %v9518 = vpop.f32.mrf.mxu0
    %9519 = vdwg.mxu0
    %v9520 = vmax.f32 %v9517, 0.0
    %v9521 = vld [vmem:[%s18] sm:$0xff]
    %v9522 = vld [vmem:[%s18 + $0x8] sm:$0xff]
    %v9523 = vld [vmem:[%s18 + $0x10] sm:$0xff]
    %v9524 = vld [vmem:[%s18 + $0x18] sm:$0xff]
    %v9525 = vld [vmem:[%s19] sm:$0x1]
    %v9527 = vlaneseq
    %v9528 = vshrl.u32 %v9527, 7
    %v9529 = vsub.s32 0, %v9528
    %v9530 = vrot.slane %v9525, %v9529
    %v9533 = vsel %vm9206, %v9520, 0
    %9535 = vmatprep.subr.mxu0 0.0
    %9536 = vmatpush1.msra.mxu0 0.0
    %9537 = vmatprep.subr.mxu0 0.0
    %9538 = vmatpush1.msra.mxu0 0.0
    %9539 = vmatprep.subr.mxu0 0.0
    %9540 = vmatpush1.msra.mxu0 0.0
    %9541 = vmatprep.subr.mxu0 0.0
    %9542 = vmatpush1.msra.mxu0 0.0
    %9543 = vmatprep.subr.mxu0 0.0
    %9544 = vmatpush1.msra.mxu0 0.0
    %9545 = vmatprep.subr.mxu0 0.0
    %9546 = vmatpush1.msra.mxu0 0.0
    %9547 = vmatprep.subr.mxu0 0.0
    %9548 = vmatpush1.msra.mxu0 0.0
    %9549 = vmatprep.subr.mxu0 0.0
    %9550 = vmatpush1.msra.mxu0 0.0
    %9551 = vmatprep.subr.mxu0 0.0
    %9552 = vmatpush1.msra.mxu0 0.0
    %9553 = vmatprep.subr.mxu0 0.0
    %9554 = vmatpush1.msra.mxu0 0.0
    %9555 = vmatprep.subr.mxu0 0.0
    %9556 = vmatpush1.msra.mxu0 0.0
    %9557 = vmatprep.subr.mxu0 0.0
    %9558 = vmatpush1.msra.mxu0 0.0
    %9559 = vmatprep.subr.mxu0 0.0
    %9560 = vmatpush1.msra.mxu0 %v9524
    %9561 = vmatprep.subr.mxu0 0.0
    %9562 = vmatpush1.msra.mxu0 %v9523
    %9563 = vmatprep.subr.mxu0 0.0
    %9564 = vmatpush1.msra.mxu0 %v9522
    %9565 = vmatprep.subr.mxu0 0.0
    %9566 = vmatpush1.msra.mxu0 %v9521
    %9567 = vmatprep.subr.mxu0 0.0
    %9568 = vmatpush2.msra.mxu0 0.0
    %9569 = vmatprep.subr.mxu0 0.0
    %9570 = vmatpush2.msra.mxu0 0.0
    %9571 = vmatprep.subr.mxu0 0.0
    %9572 = vmatpush2.msra.mxu0 0.0
    %9573 = vmatprep.subr.mxu0 0.0
    %9574 = vmatpush2.msra.mxu0 0.0
    %9575 = vmatprep.subr.mxu0 0.0
    %9576 = vmatpush2.msra.mxu0 0.0
    %9577 = vmatprep.subr.mxu0 0.0
    %9578 = vmatpush2.msra.mxu0 0.0
    %9579 = vmatprep.subr.mxu0 0.0
    %9580 = vmatpush2.msra.mxu0 0.0
    %9581 = vmatprep.subr.mxu0 0.0
    %9582 = vmatpush2.msra.mxu0 0.0
    %9583 = vmatprep.subr.mxu0 0.0
    %9584 = vmatpush2.msra.mxu0 0.0
    %9585 = vmatprep.subr.mxu0 0.0
    %9586 = vmatpush2.msra.mxu0 0.0
    %9587 = vmatprep.subr.mxu0 0.0
    %9588 = vmatpush2.msra.mxu0 0.0
    %9589 = vmatprep.subr.mxu0 0.0
    %9590 = vmatpush2.msra.mxu0 0.0
    %9591 = vmatprep.subr.mxu0 0.0
    %9592 = vmatpush2.msra.mxu0 0.0
    %9593 = vmatprep.subr.mxu0 0.0
    %9594 = vmatpush2.msra.mxu0 0.0
    %9595 = vmatprep.subr.mxu0 0.0
    %9596 = vmatpush2.msra.mxu0 0.0
    %9597 = vmatprep.subr.mxu0 0.0
    %9598 = vmatpush2.msra.mxu0 0.0
    %9599 = vmatprep.mubr.f32.mxu0 0.0
    %9600 = vmatmul.mubr.f32.gmra.mxu0 %v9533
    %v9601 = vpop.f32.mrf.mxu0
    %v9602 = vadd.f32 %v9530, %v9601
    %v9603 = vpop.f32.mrf.mxu0
    %9604 = vdwg.mxu0
    %9605 = vst [vmem:[%s20] sm:$0x3] %v9602
    %vm9606 = vcmask 254976
    %9607 = vst.msk [vmem:[#allocation2] sm:$0x3] %vm9606, %v9416
    %9609 = vrot.lane.b32.xlu0 %v9416, 96
    %v9610 = vpop.permute.xlu0 %9609
    %9612 = vst.msk [vmem:[#allocation4] sm:$0x3] %vm9606, %v9610
    // Predicated region
    $region82: #{vae_forward.1} parent=1 // pred_check
      _
    $region83: #{vae_forward.1} parent=1 // pred_check_branch
      %9614 = sbr.rel (0) target = $region85
    $region84: #{vae_forward.1} parent=1 // pred_region
      _
    $region85: #{vae_forward.1} parent=1 // pred_fallthru
      _
    // Predicated region
    $region86: #{vae_forward.1} parent=1 // pred_check
      _
    $region87: #{vae_forward.1} parent=1 // pred_check_branch
      %9616 = sbr.rel (0) target = $region89
    $region88: #{vae_forward.1} parent=1 // pred_region
      %s9618 = ssub.s32 32, 32
      %9619 = vsyncadd [#allocation3], %s9618
      %s9621 = sshll.u32 [#allocation2], 4
      %s9622 = int_to_ptr.vmem [resolvable:$true] %s9621
      %9624 = dma.vmem_to_hbm [thread:$0]  %s9622, 32, %s21, [#allocation3]
    $region89: #{vae_forward.1} parent=1 // pred_fallthru
      _
    // Predicated region
    $region90: #{vae_forward.1} parent=1 // pred_check
      _
    $region91: #{vae_forward.1} parent=1 // pred_check_branch
      %9626 = sbr.rel (0) target = $region93
    $region92: #{vae_forward.1} parent=1 // pred_region
      %s9628 = ssub.s32 32, 32
      %9629 = vsyncadd [#allocation5], %s9628
      %s9631 = sshll.u32 [#allocation4], 4
      %s9632 = int_to_ptr.vmem [resolvable:$true] %s9631
      %9634 = dma.vmem_to_hbm [thread:$0]  %s9632, 32, %s22, [#allocation5]
    $region93: #{vae_forward.1} parent=1 // pred_fallthru
      _
    // Predicated region
    $region94: #{vae_forward.1} parent=1 // pred_check
      _
    $region95: #{vae_forward.1} parent=1 // pred_check_branch
      %9636 = sbr.rel (0) target = $region97
    $region96: #{vae_forward.1} parent=1 // pred_region
      _
    $region97: #{vae_forward.1} parent=1 // pred_fallthru
      _
    // Predicated region
    $region98: #{vae_forward.1} parent=1 // pred_check
      _
    $region99: #{vae_forward.1} parent=1 // pred_check_branch
      %9638 = sbr.rel (0) target = $region101
    $region100: #{vae_forward.1} parent=1 // pred_region
      %9639 = dma.done [#allocation3], 32
    $region101: #{vae_forward.1} parent=1 // pred_fallthru
      _
    // Predicated region
    $region102: #{vae_forward.1} parent=1 // pred_check
      _
    $region103: #{vae_forward.1} parent=1 // pred_check_branch
      %9641 = sbr.rel (0) target = $region105
    $region104: #{vae_forward.1} parent=1 // pred_region
      %9642 = dma.done [#allocation5], 32
    $region105: #{vae_forward.1} parent=1 // pred_fallthru
      _
    %9643 = vsyncpa [#allocation3], 1
    %9644 = vsyncpa [#allocation5], 1

</llo_original>
